<compile_context>
chip_gen: v7x
topology: tpu7x:2x2x1
jax: 0.10.0
libtpu: 0.0.40
codegen_flags: <defaults>
</compile_context>

<pallas_src>
import math
import functools

import jax
import jax.numpy as jnp
from jax.experimental import pallas as pl
from jax.experimental.pallas import tpu as pltpu


# ----------------------------------------------------------------------------
# Tiled, fused matmul kernels (bf16 MXU, f32 accumulate)
# ----------------------------------------------------------------------------

def _pick_tile(dim, preferred, align):
    """Largest `align`-multiple <= preferred that evenly divides dim; else full dim."""
    if dim <= preferred:
        return dim
    t = (preferred // align) * align
    while t >= align:
        if dim % t == 0:
            return t
        t -= align
    return dim


def _matmul_kernel(x_ref, w_ref, b_ref, o_ref, acc_ref, *, activation, n_k):
    """o = act(x @ w + b), tiled over (M, N, K); f32 acc in VMEM scratch."""
    k = pl.program_id(2)

    @pl.when(k == 0)
    def _():
        acc_ref[...] = jnp.zeros_like(acc_ref)

    acc_ref[...] += jnp.dot(x_ref[...], w_ref[...],
                            preferred_element_type=jnp.float32)

    @pl.when(k == n_k - 1)
    def _():
        y = acc_ref[...] + b_ref[...]
        if activation == "relu":
            y = jnp.maximum(y, 0.0)
        o_ref[...] = y.astype(o_ref.dtype)


def _matmul_ln_kernel(x_ref, w_ref, b_ref, r_ref, g_ref, bt_ref, o_ref, acc_ref,
                      *, eps, n_k):
    """o = LayerNorm((x @ w + b) + residual) fused into the matmul epilogue.

    Requires the full feature (N) dimension in one tile (tn == N).
    """
    k = pl.program_id(2)

    @pl.when(k == 0)
    def _():
        acc_ref[...] = jnp.zeros_like(acc_ref)

    acc_ref[...] += jnp.dot(x_ref[...], w_ref[...],
                            preferred_element_type=jnp.float32)

    @pl.when(k == n_k - 1)
    def _():
        y = acc_ref[...] + b_ref[...] + r_ref[...].astype(jnp.float32)
        mu = jnp.mean(y, axis=-1, keepdims=True)
        ms = jnp.mean(y * y, axis=-1, keepdims=True)
        var = ms - mu * mu
        y = (y - mu) * jax.lax.rsqrt(var + eps)
        o_ref[...] = (y * g_ref[...] + bt_ref[...]).astype(o_ref.dtype)


def fused_linear(x2d, w, b, *, activation=None, residual=None,
                 ln_gamma=None, ln_beta=None, eps=1e-5,
                 out_dtype=jnp.bfloat16, tm=256, tn=256, tk=512):
    """y = act(x @ w + b) or LayerNorm(x @ w + b + residual), tiled & pipelined.

    x2d / w are bf16 (MXU native); bias / LN params f32; accumulation in f32.
    """
    M, K = x2d.shape
    N = w.shape[1]
    fuse_ln = ln_gamma is not None

    tm = _pick_tile(M, tm, 16)                       # bf16 sublane packing
    tk = _pick_tile(K, tk, 128)
    tn = N if fuse_ln else _pick_tile(N, tn, 128)    # LN needs full feature row
    gm, gn, gk = M // tm, N // tn, K // tk

    b2 = b.reshape(1, N).astype(jnp.float32)
    in_specs = [
        pl.BlockSpec((tm, tk), lambda i, j, k: (i, k)),
        pl.BlockSpec((tk, tn), lambda i, j, k: (k, j)),
        pl.BlockSpec((1, tn), lambda i, j, k: (0, j)),
    ]
    args = [x2d, w, b2]

    if fuse_ln:
        kernel = functools.partial(_matmul_ln_kernel, eps=eps, n_k=gk)
        in_specs += [
            pl.BlockSpec((tm, tn), lambda i, j, k: (i, j)),
            pl.BlockSpec((1, tn), lambda i, j, k: (0, j)),
            pl.BlockSpec((1, tn), lambda i, j, k: (0, j)),
        ]
        args += [residual, ln_gamma.reshape(1, N).astype(jnp.float32),
                 ln_beta.reshape(1, N).astype(jnp.float32)]
    else:
        kernel = functools.partial(_matmul_kernel, activation=activation, n_k=gk)

    return pl.pallas_call(
        kernel,
        out_shape=jax.ShapeDtypeStruct((M, N), out_dtype),
        grid=(gm, gn, gk),
        in_specs=in_specs,
        out_specs=pl.BlockSpec((tm, tn), lambda i, j, k: (i, j)),
        scratch_shapes=[pltpu.VMEM((tm, tn), jnp.float32)],
        compiler_params=pltpu.CompilerParams(
            dimension_semantics=("parallel", "parallel", "arbitrary"),
            vmem_limit_bytes=64 * 1024 * 1024),
    )(*args)


# ----------------------------------------------------------------------------
# Attention kernels: per-batch, all heads, with wo + Add + LayerNorm fused.
# The 1/sqrt(Dh) scale is folded into the Q projection weights at init time.
# ----------------------------------------------------------------------------

def _attend_project(qkv_or_q, kv, wo_ref, key_bias, heads, d_model, causal,
                    self_attn):
    """Returns the f32 [Sq, D] out-projected attention (sum over heads).

    self_attn: qkv_or_q is a ref view holding [S, 3D] fused QKV.
    cross    : qkv_or_q holds Q [Sq, D]; kv holds fused [Sk, 2D] K|V.
    """
    D = d_model
    Dh = D // heads
    if self_attn:
        Sq = qkv_or_q.shape[1]
        Sk = Sq
    else:
        Sq = qkv_or_q.shape[1]
        Sk = kv.shape[1]

    bias = key_bias.astype(jnp.float32)                       # [1, Sk]
    if causal:
        qi = jax.lax.broadcasted_iota(jnp.int32, (Sq, Sk), 0)
        ki = jax.lax.broadcasted_iota(jnp.int32, (Sq, Sk), 1)
        bias = bias + jnp.where(ki > qi, jnp.float32(-1e30), jnp.float32(0.0))

    proj = jnp.zeros((Sq, D), jnp.float32)
    for h in range(heads):
        lo, hi = h * Dh, (h + 1) * Dh
        if self_attn:
            q = qkv_or_q[0, :, lo:hi]                         # [Sq, Dh] bf16
            k = qkv_or_q[0, :, D + lo:D + hi]                 # [Sk, Dh]
            v = qkv_or_q[0, :, 2 * D + lo:2 * D + hi]         # [Sk, Dh]
        else:
            q = qkv_or_q[0, :, lo:hi]
            k = kv[0, :, lo:hi]
            v = kv[0, :, D + lo:D + hi]
        # scores: contraction on the last dims (no transposes); scale pre-folded
        s = jax.lax.dot_general(q, k, (((1,), (1,)), ((), ())),
                                preferred_element_type=jnp.float32)   # [Sq,Sk]
        s = s + bias
        s = s - jnp.max(s, axis=-1, keepdims=True)
        p = jnp.exp(s)
        p = p * pl.reciprocal(jnp.sum(p, axis=-1, keepdims=True), approx=True)
        o_h = jnp.dot(p.astype(v.dtype), v,
                      preferred_element_type=jnp.float32)             # [Sq,Dh]
        # fuse the output projection per-head: attn @ wo == sum_h attn_h @ wo_h
        proj = proj + jnp.dot(o_h.astype(wo_ref.dtype), wo_ref[lo:hi, :],
                              preferred_element_type=jnp.float32)     # [Sq,D]
    return proj


def _add_layernorm(y, res, g_ref, b_ref, eps, out_dtype):
    y = y + res.astype(jnp.float32)
    mu = jnp.mean(y, axis=-1, keepdims=True)
    ms = jnp.mean(y * y, axis=-1, keepdims=True)
    var = ms - mu * mu
    y = (y - mu) * jax.lax.rsqrt(var + eps)
    return (y * g_ref[...] + b_ref[...]).astype(out_dtype)


def _self_attn_kernel(qkv_ref, bias_ref, res_ref, wo_ref, bo_ref, g_ref, bl_ref,
                      o_ref, *, heads, causal, d_model, eps):
    proj = _attend_project(qkv_ref, None, wo_ref, bias_ref[0], heads, d_model,
                           causal, self_attn=True)
    o_ref[0] = _add_layernorm(proj + bo_ref[...], res_ref[0], g_ref, bl_ref,
                              eps, o_ref.dtype)


def _cross_attn_kernel(q_ref, kv_ref, bias_ref, res_ref, wo_ref, bo_ref, g_ref,
                       bl_ref, o_ref, *, heads, d_model, eps):
    proj = _attend_project(q_ref, kv_ref, wo_ref, bias_ref[0], heads, d_model,
                           False, self_attn=False)
    o_ref[0] = _add_layernorm(proj + bo_ref[...], res_ref[0], g_ref, bl_ref,
                              eps, o_ref.dtype)


# ----------------------------------------------------------------------------
# Model building blocks
# ----------------------------------------------------------------------------

def self_attention_block(x, key_pad_bias, p, heads, *, causal, ln_g, ln_b, eps):
    """MHA(self) -> out-proj -> Add(x) -> LayerNorm, all fused in one kernel."""
    B, S, D = x.shape
    qkv = fused_linear(x.reshape(B * S, D), p["w_qkv"], p["b_qkv"])
    qkv = qkv.reshape(B, S, 3 * D)

    # TODO(synk): for v7x / long S, tile Sq on the grid with an online softmax.
    return pl.pallas_call(
        functools.partial(_self_attn_kernel, heads=heads, causal=causal,
                          d_model=D, eps=eps),
        out_shape=jax.ShapeDtypeStruct((B, S, D), jnp.bfloat16),
        grid=(B,),
        in_specs=[
            pl.BlockSpec((1, S, 3 * D), lambda b: (b, 0, 0)),
            pl.BlockSpec((1, 1, S), lambda b: (b, 0, 0)),
            pl.BlockSpec((1, S, D), lambda b: (b, 0, 0)),
            pl.BlockSpec((D, D), lambda b: (0, 0)),
            pl.BlockSpec((1, D), lambda b: (0, 0)),
            pl.BlockSpec((1, D), lambda b: (0, 0)),
            pl.BlockSpec((1, D), lambda b: (0, 0)),
        ],
        out_specs=pl.BlockSpec((1, S, D), lambda b: (b, 0, 0)),
        compiler_params=pltpu.CompilerParams(
            dimension_semantics=("parallel",),
            vmem_limit_bytes=64 * 1024 * 1024),
    )(qkv, key_pad_bias, x, p["wo"], p["bo"].reshape(1, D).astype(jnp.float32),
      ln_g.reshape(1, D).astype(jnp.float32),
      ln_b.reshape(1, D).astype(jnp.float32))


def cross_attention_block(x, memory, key_pad_bias, p, heads, *, ln_g, ln_b, eps):
    """MHA(cross) -> out-proj -> Add(x) -> LayerNorm, fused in one kernel."""
    B, Sq, D = x.shape
    Sk = memory.shape[1]
    q = fused_linear(x.reshape(B * Sq, D), p["wq"], p["bq"]).reshape(B, Sq, D)
    kv = fused_linear(memory.reshape(B * Sk, D), p["w_kv"], p["b_kv"])
    kv = kv.reshape(B, Sk, 2 * D)

    return pl.pallas_call(
        functools.partial(_cross_attn_kernel, heads=heads, d_model=D, eps=eps),
        out_shape=jax.ShapeDtypeStruct((B, Sq, D), jnp.bfloat16),
        grid=(B,),
        in_specs=[
            pl.BlockSpec((1, Sq, D), lambda b: (b, 0, 0)),
            pl.BlockSpec((1, Sk, 2 * D), lambda b: (b, 0, 0)),
            pl.BlockSpec((1, 1, Sk), lambda b: (b, 0, 0)),
            pl.BlockSpec((1, Sq, D), lambda b: (b, 0, 0)),
            pl.BlockSpec((D, D), lambda b: (0, 0)),
            pl.BlockSpec((1, D), lambda b: (0, 0)),
            pl.BlockSpec((1, D), lambda b: (0, 0)),
            pl.BlockSpec((1, D), lambda b: (0, 0)),
        ],
        out_specs=pl.BlockSpec((1, Sq, D), lambda b: (b, 0, 0)),
        compiler_params=pltpu.CompilerParams(
            dimension_semantics=("parallel",),
            vmem_limit_bytes=64 * 1024 * 1024),
    )(q, kv, key_pad_bias, x, p["wo"],
      p["bo"].reshape(1, D).astype(jnp.float32),
      ln_g.reshape(1, D).astype(jnp.float32),
      ln_b.reshape(1, D).astype(jnp.float32))


def ffn_block(x, p, ln_g, ln_b, eps):
    """FFN(ReLU) -> Add(x) -> LayerNorm (second matmul fused with Add+LN)."""
    B, S, D = x.shape
    h = fused_linear(x.reshape(B * S, D), p["w1"], p["b1"], activation="relu")
    o = fused_linear(h, p["w2"], p["b2"], residual=x.reshape(B * S, D),
                     ln_gamma=ln_g, ln_beta=ln_b, eps=eps)
    return o.reshape(B, S, D)


def encoder_layer(x, src_key_bias, p, heads, eps):
    x = self_attention_block(x, src_key_bias, p["attn"], heads, causal=False,
                             ln_g=p["ln1_g"], ln_b=p["ln1_b"], eps=eps)
    x = ffn_block(x, p["ffn"], p["ln2_g"], p["ln2_b"], eps)
    return x


def decoder_layer(x, memory, tgt_key_bias, src_key_bias, p, heads, eps):
    x = self_attention_block(x, tgt_key_bias, p["self_attn"], heads, causal=True,
                             ln_g=p["ln1_g"], ln_b=p["ln1_b"], eps=eps)
    x = cross_attention_block(x, memory, src_key_bias, p["cross_attn"], heads,
                              ln_g=p["ln2_g"], ln_b=p["ln2_b"], eps=eps)
    x = ffn_block(x, p["ffn"], p["ln3_g"], p["ln3_b"], eps)
    return x


# ----------------------------------------------------------------------------
# Embedding / masks / forward (plain-JAX glue)
# ----------------------------------------------------------------------------

def positional_encoding(max_len, d_model):
    pos = jnp.arange(max_len, dtype=jnp.float32)[:, None]
    i = jnp.arange(d_model, dtype=jnp.float32)[None, :]
    angle = pos / jnp.power(10000.0, (2.0 * jnp.floor(i / 2.0)) / d_model)
    pe = jnp.where((jnp.arange(d_model) % 2) == 0, jnp.sin(angle), jnp.cos(angle))
    return pe.astype(jnp.float32)  # [max_len, d_model]


def embed(ids, table, d_model, pe):
    # TODO(synk): embedding gather stays in plain JAX (jnp.take); a Pallas DMA
    # gather brings no benefit at these sizes.
    x = jnp.take(table, ids, axis=0) * math.sqrt(d_model)  # [B, S, D] f32
    x = x + pe[None, : ids.shape[1], :]
    return x.astype(jnp.bfloat16)


def key_pad_bias(ids, pad_idx):
    """[B, 1, S] additive bias: -1e30 where key position is padding."""
    return jnp.where(ids == pad_idx, jnp.float32(-1e30),
                     jnp.float32(0.0))[:, None, :]


def transformer_forward(params, src, tgt, cfg):
    B, S_src = src.shape
    S_tgt = tgt.shape[1]
    D, heads, eps = cfg["d_model"], cfg["heads_num"], cfg["layer_norm_eps"]
    pe = params["pe"]

    src_bias = key_pad_bias(src, cfg["pad_idx"])   # encoder + cross-attn keys
    tgt_bias = key_pad_bias(tgt, cfg["pad_idx"])   # decoder self-attn keys
    # (causal part of the decoder self-attention mask is generated in-kernel)

    # encoder
    x = embed(src, params["src_embed"], D, pe)
    for lp in params["enc_layers"]:
        x = encoder_layer(x, src_bias, lp, heads, eps)
    memory = x

    # decoder
    y = embed(tgt, params["tgt_embed"], D, pe)
    for lp in params["dec_layers"]:
        y = decoder_layer(y, memory, tgt_bias, src_bias, lp, heads, eps)

    # final projection to (128-padded) tgt vocab; slice back to true vocab size
    logits = fused_linear(y.reshape(B * S_tgt, D), params["out_w"],
                          params["out_b"], out_dtype=jnp.float32)
    logits = logits.reshape(B, S_tgt, -1)[..., : cfg["tgt_vocab_size"]]
    return logits


# ----------------------------------------------------------------------------
# Deterministic parameter init (weights bf16, biases / LN params f32)
# ----------------------------------------------------------------------------

def _init_linear_params(key, fan_in, fan_out):
    w = jax.random.normal(key, (fan_in, fan_out), jnp.float32) * 0.02
    b = jnp.zeros((fan_out,), jnp.float32)
    return w, b


def _init_self_attn_params(key, D, heads):
    ks = jax.random.split(key, 4)
    wq, bq = _init_linear_params(ks[0], D, D)
    wk, bk = _init_linear_params(ks[1], D, D)
    wv, bv = _init_linear_params(ks[2], D, D)
    wo, bo = _init_linear_params(ks[3], D, D)
    scale = 1.0 / math.sqrt(D // heads)
    wq, bq = wq * scale, bq * scale        # fold 1/sqrt(Dh) into Q projection
    return dict(w_qkv=jnp.concatenate([wq, wk, wv], axis=1).astype(jnp.bfloat16),
                b_qkv=jnp.concatenate([bq, bk, bv]),
                wo=wo.astype(jnp.bfloat16), bo=bo)


def _init_cross_attn_params(key, D, heads):
    ks = jax.random.split(key, 4)
    wq, bq = _init_linear_params(ks[0], D, D)
    wk, bk = _init_linear_params(ks[1], D, D)
    wv, bv = _init_linear_params(ks[2], D, D)
    wo, bo = _init_linear_params(ks[3], D, D)
    scale = 1.0 / math.sqrt(D // heads)
    wq, bq = wq * scale, bq * scale
    return dict(wq=wq.astype(jnp.bfloat16), bq=bq,
                w_kv=jnp.concatenate([wk, wv], axis=1).astype(jnp.bfloat16),
                b_kv=jnp.concatenate([bk, bv]),
                wo=wo.astype(jnp.bfloat16), bo=bo)


def _init_ffn_params(key, D, d_ff):
    k1, k2 = jax.random.split(key)
    w1, b1 = _init_linear_params(k1, D, d_ff)
    w2, b2 = _init_linear_params(k2, d_ff, D)
    return dict(w1=w1.astype(jnp.bfloat16), b1=b1,
                w2=w2.astype(jnp.bfloat16), b2=b2)


def init_params(key, cfg):
    D, d_ff, N = cfg["d_model"], cfg["d_ff"], cfg["N"]
    heads = cfg["heads_num"]
    keys = jax.random.split(key, 4 + 2 * N)
    src_embed = jax.random.normal(keys[0], (cfg["src_vocab_size"], D), jnp.float32) * 0.02
    tgt_embed = jax.random.normal(keys[1], (cfg["tgt_vocab_size"], D), jnp.float32) * 0.02
    # padding_idx semantics: pad row is zero
    src_embed = src_embed.at[cfg["pad_idx"]].set(0.0)
    tgt_embed = tgt_embed.at[cfg["pad_idx"]].set(0.0)

    enc_layers = []
    for i in range(N):
        k_a, k_f = jax.random.split(keys[2 + i])
        enc_layers.append(dict(
            attn=_init_self_attn_params(k_a, D, heads),
            ffn=_init_ffn_params(k_f, D, d_ff),
            ln1_g=jnp.ones((D,), jnp.float32), ln1_b=jnp.zeros((D,), jnp.float32),
            ln2_g=jnp.ones((D,), jnp.float32), ln2_b=jnp.zeros((D,), jnp.float32),
        ))
    dec_layers = []
    for i in range(N):
        k_s, k_c, k_f = jax.random.split(keys[2 + N + i], 3)
        dec_layers.append(dict(
            self_attn=_init_self_attn_params(k_s, D, heads),
            cross_attn=_init_cross_attn_params(k_c, D, heads),
            ffn=_init_ffn_params(k_f, D, d_ff),
            ln1_g=jnp.ones((D,), jnp.float32), ln1_b=jnp.zeros((D,), jnp.float32),
            ln2_g=jnp.ones((D,), jnp.float32), ln2_b=jnp.zeros((D,), jnp.float32),
            ln3_g=jnp.ones((D,), jnp.float32), ln3_b=jnp.zeros((D,), jnp.float32),
        ))

    # final projection, zero-padded to a lane-dense (128-multiple) output width
    Nv = cfg["tgt_vocab_size"]
    Nv_pad = ((Nv + 127) // 128) * 128
    ow, ob = _init_linear_params(keys[2 + 2 * N], D, Nv)
    out_w = jnp.zeros((D, Nv_pad), jnp.float32).at[:, :Nv].set(ow).astype(jnp.bfloat16)
    out_b = jnp.zeros((Nv_pad,), jnp.float32).at[:Nv].set(ob)

    pe = positional_encoding(cfg["max_len"], D)
    return dict(src_embed=src_embed, tgt_embed=tgt_embed,
                enc_layers=enc_layers, dec_layers=dec_layers,
                out_w=out_w, out_b=out_b, pe=pe)


# ----------------------------------------------------------------------------
# Main
# ----------------------------------------------------------------------------

if __name__ == "__main__":
    cfg = dict(
        src_vocab_size=50,
        tgt_vocab_size=48,
        max_len=8,
        d_model=32,
        heads_num=4,
        d_ff=64,
        N=2,
        layer_norm_eps=1e-5,
        pad_idx=0,
    )
    B = 2

    key = jax.random.PRNGKey(0)
    k_params, k_src, k_tgt = jax.random.split(key, 3)
    params = init_params(k_params, cfg)

    src = jax.random.randint(k_src, (B, cfg["max_len"]), 1, cfg["src_vocab_size"],
                             dtype=jnp.int32)
    tgt = jax.random.randint(k_tgt, (B, cfg["max_len"]), 1, cfg["tgt_vocab_size"],
                             dtype=jnp.int32)
    # introduce padding at the tail so the pad masks are exercised
    src = src.at[:, -2:].set(cfg["pad_idx"])
    tgt = tgt.at[:, -3:].set(cfg["pad_idx"])

    fwd = jax.jit(lambda p, s, t: transformer_forward(p, s, t, cfg))
    out = fwd(params, src, tgt)
    out = jax.block_until_ready(out)

    assert out.shape == (B, cfg["max_len"], cfg["tgt_vocab_size"])
    assert bool(jnp.all(jnp.isfinite(out)))
    print("KERNEL_OK")
</pallas_src>

<mosaic_0001>
module attributes {stable_mosaic.version = 11 : i64} {
  func.func @_matmul_kernel(%arg0: i32, %arg1: i32, %arg2: i32, %arg3: memref<16x32xbf16, #tpu.memory_space<vmem>>, %arg4: memref<32x96xbf16, #tpu.memory_space<vmem>>, %arg5: memref<1x96xf32, #tpu.memory_space<vmem>>, %arg6: memref<16x96xbf16, #tpu.memory_space<vmem>>, %arg7: memref<16x96xf32, #tpu.memory_space<vmem>>) attributes {dimension_semantics = [#tpu.dimension_semantics<parallel>, #tpu.dimension_semantics<parallel>, #tpu.dimension_semantics<arbitrary>], iteration_bounds = array<i64: 1, 1, 1>, scalar_prefetch = 0 : i64, scratch_operands = 1 : i64, tpu.core_type = #tpu.core_type<tc>, window_params = [{transform_indices = @transform_0, window_bounds = array<i64: 16, 32>}, {transform_indices = @transform_1, window_bounds = array<i64: 32, 96>}, {transform_indices = @transform_2, window_bounds = array<i64: 1, 96>}, {transform_indices = @transform_3, window_bounds = array<i64: 16, 96>}]} {
    %c0_i32 = arith.constant 0 : i32
    %0 = arith.cmpi eq, %arg2, %c0_i32 : i32
    %1 = arith.extui %0 : i1 to i32
    %c0_i32_0 = arith.constant 0 : i32
    %2 = arith.cmpi ne, %1, %c0_i32_0 : i32
    scf.if %2 {
      %cst_10 = arith.constant 0.000000e+00 : f32
      %12 = vector.broadcast %cst_10 : f32 to vector<16x96xf32>
      %c0_11 = arith.constant 0 : index
      %c0_12 = arith.constant 0 : index
      %13 = vector.load %arg7[%c0_11, %c0_12] : memref<16x96xf32, #tpu.memory_space<vmem>>, vector<16x96xf32>
      tpu.vector_store %arg7[%c0_11, %c0_12], %12 {strides = array<i32>} : memref<16x96xf32, #tpu.memory_space<vmem>>, vector<16x96xf32>,
    } else {
    }
    %c0 = arith.constant 0 : index
    %c0_1 = arith.constant 0 : index
    %3 = vector.load %arg7[%c0, %c0_1] : memref<16x96xf32, #tpu.memory_space<vmem>>, vector<16x96xf32>
    %c0_2 = arith.constant 0 : index
    %c0_3 = arith.constant 0 : index
    %4 = vector.load %arg3[%c0_2, %c0_3] : memref<16x32xbf16, #tpu.memory_space<vmem>>, vector<16x32xbf16>
    %c0_4 = arith.constant 0 : index
    %c0_5 = arith.constant 0 : index
    %5 = vector.load %arg4[%c0_4, %c0_5] : memref<32x96xbf16, #tpu.memory_space<vmem>>, vector<32x96xbf16>
    %cst = arith.constant dense<0.000000e+00> : vector<16x96xf32>
    %6 = tpu.matmul %4, %5, %cst {dimension_numbers = #tpu.dot_dimension_numbers<[1], [0], [0], [1], [0, 0, 1, 1], [], []>} : vector<16x32xbf16>, vector<32x96xbf16>, vector<16x96xf32> -> vector<16x96xf32>
    %7 = arith.addf %3, %6 : vector<16x96xf32>
    %c0_6 = arith.constant 0 : index
    %c0_7 = arith.constant 0 : index
    %8 = vector.load %arg7[%c0_6, %c0_7] : memref<16x96xf32, #tpu.memory_space<vmem>>, vector<16x96xf32>
    tpu.vector_store %arg7[%c0_6, %c0_7], %7 {strides = array<i32>} : memref<16x96xf32, #tpu.memory_space<vmem>>, vector<16x96xf32>,
    %c0_i32_8 = arith.constant 0 : i32
    %9 = arith.cmpi eq, %arg2, %c0_i32_8 : i32
    %10 = arith.extui %9 : i1 to i32
    %c0_i32_9 = arith.constant 0 : i32
    %11 = arith.cmpi ne, %10, %c0_i32_9 : i32
    scf.if %11 {
      %c0_10 = arith.constant 0 : index
      %c0_11 = arith.constant 0 : index
      %12 = vector.load %arg7[%c0_10, %c0_11] : memref<16x96xf32, #tpu.memory_space<vmem>>, vector<16x96xf32>
      %c0_12 = arith.constant 0 : index
      %c0_13 = arith.constant 0 : index
      %13 = vector.load %arg5[%c0_12, %c0_13] : memref<1x96xf32, #tpu.memory_space<vmem>>, vector<1x96xf32>
      %14 = vector.broadcast %13 : vector<1x96xf32> to vector<16x96xf32>
      %15 = arith.addf %12, %14 : vector<16x96xf32>
      %16 = arith.truncf %15 : vector<16x96xf32> to vector<16x96xbf16>
      %c0_14 = arith.constant 0 : index
      %c0_15 = arith.constant 0 : index
      %17 = vector.load %arg6[%c0_14, %c0_15] : memref<16x96xbf16, #tpu.memory_space<vmem>>, vector<16x96xbf16>
      tpu.vector_store %arg6[%c0_14, %c0_15], %16 {strides = array<i32>} : memref<16x96xbf16, #tpu.memory_space<vmem>>, vector<16x96xbf16>,
    } else {
    }
    return
  }
  func.func @transform_0(%arg0: i32, %arg1: i32, %arg2: i32) -> (i32, i32) {
    %c0_i32 = arith.constant 0 : i32
    return %arg0, %arg2 : i32, i32
  }
  func.func @transform_1(%arg0: i32, %arg1: i32, %arg2: i32) -> (i32, i32) {
    %c0_i32 = arith.constant 0 : i32
    return %arg2, %arg1 : i32, i32
  }
  func.func @transform_2(%arg0: i32, %arg1: i32, %arg2: i32) -> (i32, i32) {
    %c0_i32 = arith.constant 0 : i32
    %c0_i32_0 = arith.constant 0 : i32
    return %c0_i32, %arg1 : i32, i32
  }
  func.func @transform_3(%arg0: i32, %arg1: i32, %arg2: i32) -> (i32, i32) {
    %c0_i32 = arith.constant 0 : i32
    return %arg0, %arg1 : i32, i32
  }
}

module attributes {stable_mosaic.version = 11 : i64} {
  func.func @_self_attn_kernel(%arg0: i32, %arg1: memref<1x8x96xbf16, #tpu.memory_space<vmem>>, %arg2: memref<1x1x8xf32, #tpu.memory_space<vmem>>, %arg3: memref<1x8x32xbf16, #tpu.memory_space<vmem>>, %arg4: memref<32x32xbf16, #tpu.memory_space<vmem>>, %arg5: memref<1x32xf32, #tpu.memory_space<vmem>>, %arg6: memref<1x32xf32, #tpu.memory_space<vmem>>, %arg7: memref<1x32xf32, #tpu.memory_space<vmem>>, %arg8: memref<1x8x32xbf16, #tpu.memory_space<vmem>>) attributes {dimension_semantics = [#tpu.dimension_semantics<parallel>], iteration_bounds = array<i64: 2>, scalar_prefetch = 0 : i64, scratch_operands = 0 : i64, tpu.core_type = #tpu.core_type<tc>, window_params = [{transform_indices = @transform_0, window_bounds = array<i64: 1, 8, 96>}, {transform_indices = @transform_1, window_bounds = array<i64: 1, 1, 8>}, {transform_indices = @transform_2, window_bounds = array<i64: 1, 8, 32>}, {pipeline_mode = #tpu.pipeline_mode<synchronous>, transform_indices = @transform_3, window_bounds = array<i64: 32, 32>}, {pipeline_mode = #tpu.pipeline_mode<synchronous>, transform_indices = @transform_4, window_bounds = array<i64: 1, 32>}, {pipeline_mode = #tpu.pipeline_mode<synchronous>, transform_indices = @transform_5, window_bounds = array<i64: 1, 32>}, {pipeline_mode = #tpu.pipeline_mode<synchronous>, transform_indices = @transform_6, window_bounds = array<i64: 1, 32>}, {transform_indices = @transform_7, window_bounds = array<i64: 1, 8, 32>}]} {
    %c0 = arith.constant 0 : index
    %c0_0 = arith.constant 0 : index
    %c0_1 = arith.constant 0 : index
    %0 = vector.load %arg2[%c0, %c0_0, %c0_1] : memref<1x1x8xf32, #tpu.memory_space<vmem>>, vector<1x1x8xf32>
    %1 = vector.shape_cast %0 : vector<1x1x8xf32> to vector<1x8xf32>
    %2 = tpu.iota {dimensions = array<i32: 0>} : vector<8x8xi32>
    %3 = tpu.iota {dimensions = array<i32: 1>} : vector<8x8xi32>
    %4 = arith.cmpi sgt, %3, %2 : vector<8x8xi32>
    %cst = arith.constant -1.000000e+30 : f32
    %cst_2 = arith.constant 0.000000e+00 : f32
    %5 = vector.broadcast %cst : f32 to vector<8x8xf32>
    %6 = vector.broadcast %cst_2 : f32 to vector<8x8xf32>
    %7 = arith.select %4, %5, %6 : vector<8x8xi1>, vector<8x8xf32>
    %8 = vector.broadcast %1 : vector<1x8xf32> to vector<8x8xf32>
    %9 = arith.addf %8, %7 : vector<8x8xf32>
    %cst_3 = arith.constant 0.000000e+00 : f32
    %10 = vector.broadcast %cst_3 : f32 to vector<8x32xf32>
    %c0_4 = arith.constant 0 : index
    %c0_5 = arith.constant 0 : index
    %c0_6 = arith.constant 0 : index
    %11 = vector.load %arg1[%c0_4, %c0_5, %c0_6] : memref<1x8x96xbf16, #tpu.memory_space<vmem>>, vector<1x8x8xbf16>
    %12 = vector.shape_cast %11 : vector<1x8x8xbf16> to vector<8x8xbf16>
    %c0_7 = arith.constant 0 : index
    %c0_8 = arith.constant 0 : index
    %c32 = arith.constant 32 : index
    %13 = vector.load %arg1[%c0_7, %c0_8, %c32] : memref<1x8x96xbf16, #tpu.memory_space<vmem>>, vector<1x8x8xbf16>
    %14 = vector.shape_cast %13 : vector<1x8x8xbf16> to vector<8x8xbf16>
    %c0_9 = arith.constant 0 : index
    %c0_10 = arith.constant 0 : index
    %c64 = arith.constant 64 : index
    %15 = vector.load %arg1[%c0_9, %c0_10, %c64] : memref<1x8x96xbf16, #tpu.memory_space<vmem>>, vector<1x8x8xbf16>
    %16 = vector.shape_cast %15 : vector<1x8x8xbf16> to vector<8x8xbf16>
    %cst_11 = arith.constant dense<0.000000e+00> : vector<8x8xf32>
    %17 = tpu.matmul %12, %14, %cst_11 {dimension_numbers = #tpu.dot_dimension_numbers<[1], [1], [0], [0], [0, 0, 1, 0], [], []>} : vector<8x8xbf16>, vector<8x8xbf16>, vector<8x8xf32> -> vector<8x8xf32>
    %18 = arith.addf %17, %9 : vector<8x8xf32>
    %cst_12 = arith.constant dense<0xFF800000> : vector<8xf32>
    %19 = vector.multi_reduction <maximumf>, %18, %cst_12 [1] : vector<8x8xf32> to vector<8xf32>
    %20 = vector.shape_cast %19 : vector<8xf32> to vector<8x1xf32>
    %21 = vector.broadcast %20 : vector<8x1xf32> to vector<8x8xf32>
    %22 = arith.subf %18, %21 : vector<8x8xf32>
    %23 = math.exp %22 : vector<8x8xf32>
    %cst_13 = arith.constant dense<0.000000e+00> : vector<8xf32>
    %24 = vector.multi_reduction <add>, %23, %cst_13 [1] : vector<8x8xf32> to vector<8xf32>
    %25 = vector.shape_cast %24 : vector<8xf32> to vector<8x1xf32>
    %26 = tpu.reciprocal %25 {approx = true} : vector<8x1xf32> -> vector<8x1xf32>
    %27 = vector.broadcast %26 : vector<8x1xf32> to vector<8x8xf32>
    %28 = arith.mulf %23, %27 : vector<8x8xf32>
    %29 = arith.truncf %28 : vector<8x8xf32> to vector<8x8xbf16>
    %cst_14 = arith.constant dense<0.000000e+00> : vector<8x8xf32>
    %30 = tpu.matmul %29, %16, %cst_14 {dimension_numbers = #tpu.dot_dimension_numbers<[1], [0], [0], [1], [0, 0, 1, 1], [], []>} : vector<8x8xbf16>, vector<8x8xbf16>, vector<8x8xf32> -> vector<8x8xf32>
    %31 = arith.truncf %30 : vector<8x8xf32> to vector<8x8xbf16>
    %c0_15 = arith.constant 0 : index
    %c0_16 = arith.constant 0 : index
    %32 = vector.load %arg4[%c0_15, %c0_16] : memref<32x32xbf16, #tpu.memory_space<vmem>>, vector<8x32xbf16>
    %cst_17 = arith.constant dense<0.000000e+00> : vector<8x32xf32>
    %33 = tpu.matmul %31, %32, %cst_17 {dimension_numbers = #tpu.dot_dimension_numbers<[1], [0], [0], [1], [0, 0, 1, 1], [], []>} : vector<8x8xbf16>, vector<8x32xbf16>, vector<8x32xf32> -> vector<8x32xf32>
    %34 = arith.addf %10, %33 : vector<8x32xf32>
    %c0_18 = arith.constant 0 : index
    %c0_19 = arith.constant 0 : index
    %c8 = arith.constant 8 : index
    %35 = vector.load %arg1[%c0_18, %c0_19, %c8] : memref<1x8x96xbf16, #tpu.memory_space<vmem>>, vector<1x8x8xbf16>
    %36 = vector.shape_cast %35 : vector<1x8x8xbf16> to vector<8x8xbf16>
    %c0_20 = arith.constant 0 : index
    %c0_21 = arith.constant 0 : index
    %c40 = arith.constant 40 : index
    %37 = vector.load %arg1[%c0_20, %c0_21, %c40] : memref<1x8x96xbf16, #tpu.memory_space<vmem>>, vector<1x8x8xbf16>
    %38 = vector.shape_cast %37 : vector<1x8x8xbf16> to vector<8x8xbf16>
    %c0_22 = arith.constant 0 : index
    %c0_23 = arith.constant 0 : index
    %c72 = arith.constant 72 : index
    %39 = vector.load %arg1[%c0_22, %c0_23, %c72] : memref<1x8x96xbf16, #tpu.memory_space<vmem>>, vector<1x8x8xbf16>
    %40 = vector.shape_cast %39 : vector<1x8x8xbf16> to vector<8x8xbf16>
    %cst_24 = arith.constant dense<0.000000e+00> : vector<8x8xf32>
    %41 = tpu.matmul %36, %38, %cst_24 {dimension_numbers = #tpu.dot_dimension_numbers<[1], [1], [0], [0], [0, 0, 1, 0], [], []>} : vector<8x8xbf16>, vector<8x8xbf16>, vector<8x8xf32> -> vector<8x8xf32>
    %42 = arith.addf %41, %9 : vector<8x8xf32>
    %cst_25 = arith.constant dense<0xFF800000> : vector<8xf32>
    %43 = vector.multi_reduction <maximumf>, %42, %cst_25 [1] : vector<8x8xf32> to vector<8xf32>
    %44 = vector.shape_cast %43 : vector<8xf32> to vector<8x1xf32>
    %45 = vector.broadcast %44 : vector<8x1xf32> to vector<8x8xf32>
    %46 = arith.subf %42, %45 : vector<8x8xf32>
    %47 = math.exp %46 : vector<8x8xf32>
    %cst_26 = arith.constant dense<0.000000e+00> : vector<8xf32>
    %48 = vector.multi_reduction <add>, %47, %cst_26 [1] : vector<8x8xf32> to vector<8xf32>
    %49 = vector.shape_cast %48 : vector<8xf32> to vector<8x1xf32>
    %50 = tpu.reciprocal %49 {approx = true} : vector<8x1xf32> -> vector<8x1xf32>
    %51 = vector.broadcast %50 : vector<8x1xf32> to vector<8x8xf32>
    %52 = arith.mulf %47, %51 : vector<8x8xf32>
    %53 = arith.truncf %52 : vector<8x8xf32> to vector<8x8xbf16>
    %cst_27 = arith.constant dense<0.000000e+00> : vector<8x8xf32>
    %54 = tpu.matmul %53, %40, %cst_27 {dimension_numbers = #tpu.dot_dimension_numbers<[1], [0], [0], [1], [0, 0, 1, 1], [], []>} : vector<8x8xbf16>, vector<8x8xbf16>, vector<8x8xf32> -> vector<8x8xf32>
    %55 = arith.truncf %54 : vector<8x8xf32> to vector<8x8xbf16>
    %c8_28 = arith.constant 8 : index
    %c0_29 = arith.constant 0 : index
    %56 = vector.load %arg4[%c8_28, %c0_29] : memref<32x32xbf16, #tpu.memory_space<vmem>>, vector<8x32xbf16>
    %cst_30 = arith.constant dense<0.000000e+00> : vector<8x32xf32>
    %57 = tpu.matmul %55, %56, %cst_30 {dimension_numbers = #tpu.dot_dimension_numbers<[1], [0], [0], [1], [0, 0, 1, 1], [], []>} : vector<8x8xbf16>, vector<8x32xbf16>, vector<8x32xf32> -> vector<8x32xf32>
    %58 = arith.addf %34, %57 : vector<8x32xf32>
    %c0_31 = arith.constant 0 : index
    %c0_32 = arith.constant 0 : index
    %c16 = arith.constant 16 : index
    %59 = vector.load %arg1[%c0_31, %c0_32, %c16] : memref<1x8x96xbf16, #tpu.memory_space<vmem>>, vector<1x8x8xbf16>
    %60 = vector.shape_cast %59 : vector<1x8x8xbf16> to vector<8x8xbf16>
    %c0_33 = arith.constant 0 : index
    %c0_34 = arith.constant 0 : index
    %c48 = arith.constant 48 : index
    %61 = vector.load %arg1[%c0_33, %c0_34, %c48] : memref<1x8x96xbf16, #tpu.memory_space<vmem>>, vector<1x8x8xbf16>
    %62 = vector.shape_cast %61 : vector<1x8x8xbf16> to vector<8x8xbf16>
    %c0_35 = arith.constant 0 : index
    %c0_36 = arith.constant 0 : index
    %c80 = arith.constant 80 : index
    %63 = vector.load %arg1[%c0_35, %c0_36, %c80] : memref<1x8x96xbf16, #tpu.memory_space<vmem>>, vector<1x8x8xbf16>
    %64 = vector.shape_cast %63 : vector<1x8x8xbf16> to vector<8x8xbf16>
    %cst_37 = arith.constant dense<0.000000e+00> : vector<8x8xf32>
    %65 = tpu.matmul %60, %62, %cst_37 {dimension_numbers = #tpu.dot_dimension_numbers<[1], [1], [0], [0], [0, 0, 1, 0], [], []>} : vector<8x8xbf16>, vector<8x8xbf16>, vector<8x8xf32> -> vector<8x8xf32>
    %66 = arith.addf %65, %9 : vector<8x8xf32>
    %cst_38 = arith.constant dense<0xFF800000> : vector<8xf32>
    %67 = vector.multi_reduction <maximumf>, %66, %cst_38 [1] : vector<8x8xf32> to vector<8xf32>
    %68 = vector.shape_cast %67 : vector<8xf32> to vector<8x1xf32>
    %69 = vector.broadcast %68 : vector<8x1xf32> to vector<8x8xf32>
    %70 = arith.subf %66, %69 : vector<8x8xf32>
    %71 = math.exp %70 : vector<8x8xf32>
    %cst_39 = arith.constant dense<0.000000e+00> : vector<8xf32>
    %72 = vector.multi_reduction <add>, %71, %cst_39 [1] : vector<8x8xf32> to vector<8xf32>
    %73 = vector.shape_cast %72 : vector<8xf32> to vector<8x1xf32>
    %74 = tpu.reciprocal %73 {approx = true} : vector<8x1xf32> -> vector<8x1xf32>
    %75 = vector.broadcast %74 : vector<8x1xf32> to vector<8x8xf32>
    %76 = arith.mulf %71, %75 : vector<8x8xf32>
    %77 = arith.truncf %76 : vector<8x8xf32> to vector<8x8xbf16>
    %cst_40 = arith.constant dense<0.000000e+00> : vector<8x8xf32>
    %78 = tpu.matmul %77, %64, %cst_40 {dimension_numbers = #tpu.dot_dimension_numbers<[1], [0], [0], [1], [0, 0, 1, 1], [], []>} : vector<8x8xbf16>, vector<8x8xbf16>, vector<8x8xf32> -> vector<8x8xf32>
    %79 = arith.truncf %78 : vector<8x8xf32> to vector<8x8xbf16>
    %c16_41 = arith.constant 16 : index
    %c0_42 = arith.constant 0 : index
    %80 = vector.load %arg4[%c16_41, %c0_42] : memref<32x32xbf16, #tpu.memory_space<vmem>>, vector<8x32xbf16>
    %cst_43 = arith.constant dense<0.000000e+00> : vector<8x32xf32>
    %81 = tpu.matmul %79, %80, %cst_43 {dimension_numbers = #tpu.dot_dimension_numbers<[1], [0], [0], [1], [0, 0, 1, 1], [], []>} : vector<8x8xbf16>, vector<8x32xbf16>, vector<8x32xf32> -> vector<8x32xf32>
    %82 = arith.addf %58, %81 : vector<8x32xf32>
    %c0_44 = arith.constant 0 : index
    %c0_45 = arith.constant 0 : index
    %c24 = arith.constant 24 : index
    %83 = vector.load %arg1[%c0_44, %c0_45, %c24] : memref<1x8x96xbf16, #tpu.memory_space<vmem>>, vector<1x8x8xbf16>
    %84 = vector.shape_cast %83 : vector<1x8x8xbf16> to vector<8x8xbf16>
    %c0_46 = arith.constant 0 : index
    %c0_47 = arith.constant 0 : index
    %c56 = arith.constant 56 : index
    %85 = vector.load %arg1[%c0_46, %c0_47, %c56] : memref<1x8x96xbf16, #tpu.memory_space<vmem>>, vector<1x8x8xbf16>
    %86 = vector.shape_cast %85 : vector<1x8x8xbf16> to vector<8x8xbf16>
    %c0_48 = arith.constant 0 : index
    %c0_49 = arith.constant 0 : index
    %c88 = arith.constant 88 : index
    %87 = vector.load %arg1[%c0_48, %c0_49, %c88] : memref<1x8x96xbf16, #tpu.memory_space<vmem>>, vector<1x8x8xbf16>
    %88 = vector.shape_cast %87 : vector<1x8x8xbf16> to vector<8x8xbf16>
    %cst_50 = arith.constant dense<0.000000e+00> : vector<8x8xf32>
    %89 = tpu.matmul %84, %86, %cst_50 {dimension_numbers = #tpu.dot_dimension_numbers<[1], [1], [0], [0], [0, 0, 1, 0], [], []>} : vector<8x8xbf16>, vector<8x8xbf16>, vector<8x8xf32> -> vector<8x8xf32>
    %90 = arith.addf %89, %9 : vector<8x8xf32>
    %cst_51 = arith.constant dense<0xFF800000> : vector<8xf32>
    %91 = vector.multi_reduction <maximumf>, %90, %cst_51 [1] : vector<8x8xf32> to vector<8xf32>
    %92 = vector.shape_cast %91 : vector<8xf32> to vector<8x1xf32>
    %93 = vector.broadcast %92 : vector<8x1xf32> to vector<8x8xf32>
    %94 = arith.subf %90, %93 : vector<8x8xf32>
    %95 = math.exp %94 : vector<8x8xf32>
    %cst_52 = arith.constant dense<0.000000e+00> : vector<8xf32>
    %96 = vector.multi_reduction <add>, %95, %cst_52 [1] : vector<8x8xf32> to vector<8xf32>
    %97 = vector.shape_cast %96 : vector<8xf32> to vector<8x1xf32>
    %98 = tpu.reciprocal %97 {approx = true} : vector<8x1xf32> -> vector<8x1xf32>
    %99 = vector.broadcast %98 : vector<8x1xf32> to vector<8x8xf32>
    %100 = arith.mulf %95, %99 : vector<8x8xf32>
    %101 = arith.truncf %100 : vector<8x8xf32> to vector<8x8xbf16>
    %cst_53 = arith.constant dense<0.000000e+00> : vector<8x8xf32>
    %102 = tpu.matmul %101, %88, %cst_53 {dimension_numbers = #tpu.dot_dimension_numbers<[1], [0], [0], [1], [0, 0, 1, 1], [], []>} : vector<8x8xbf16>, vector<8x8xbf16>, vector<8x8xf32> -> vector<8x8xf32>
    %103 = arith.truncf %102 : vector<8x8xf32> to vector<8x8xbf16>
    %c24_54 = arith.constant 24 : index
    %c0_55 = arith.constant 0 : index
    %104 = vector.load %arg4[%c24_54, %c0_55] : memref<32x32xbf16, #tpu.memory_space<vmem>>, vector<8x32xbf16>
    %cst_56 = arith.constant dense<0.000000e+00> : vector<8x32xf32>
    %105 = tpu.matmul %103, %104, %cst_56 {dimension_numbers = #tpu.dot_dimension_numbers<[1], [0], [0], [1], [0, 0, 1, 1], [], []>} : vector<8x8xbf16>, vector<8x32xbf16>, vector<8x32xf32> -> vector<8x32xf32>
    %106 = arith.addf %82, %105 : vector<8x32xf32>
    %c0_57 = arith.constant 0 : index
    %c0_58 = arith.constant 0 : index
    %107 = vector.load %arg5[%c0_57, %c0_58] : memref<1x32xf32, #tpu.memory_space<vmem>>, vector<1x32xf32>
    %108 = vector.broadcast %107 : vector<1x32xf32> to vector<8x32xf32>
    %109 = arith.addf %106, %108 : vector<8x32xf32>
    %c0_59 = arith.constant 0 : index
    %c0_60 = arith.constant 0 : index
    %c0_61 = arith.constant 0 : index
    %110 = vector.load %arg3[%c0_59, %c0_60, %c0_61] : memref<1x8x32xbf16, #tpu.memory_space<vmem>>, vector<1x8x32xbf16>
    %111 = vector.shape_cast %110 : vector<1x8x32xbf16> to vector<8x32xbf16>
    %112 = arith.extf %111 : vector<8x32xbf16> to vector<8x32xf32>
    %113 = arith.addf %109, %112 : vector<8x32xf32>
    %cst_62 = arith.constant dense<0.000000e+00> : vector<8xf32>
    %114 = vector.multi_reduction <add>, %113, %cst_62 [1] : vector<8x32xf32> to vector<8xf32>
    %115 = vector.shape_cast %114 : vector<8xf32> to vector<8x1xf32>
    %cst_63 = arith.constant 3.200000e+01 : f32
    %116 = vector.broadcast %cst_63 : f32 to vector<8x1xf32>
    %117 = arith.divf %115, %116 : vector<8x1xf32>
    %118 = arith.mulf %113, %113 : vector<8x32xf32>
    %cst_64 = arith.constant dense<0.000000e+00> : vector<8xf32>
    %119 = vector.multi_reduction <add>, %118, %cst_64 [1] : vector<8x32xf32> to vector<8xf32>
    %120 = vector.shape_cast %119 : vector<8xf32> to vector<8x1xf32>
    %cst_65 = arith.constant 3.200000e+01 : f32
    %121 = vector.broadcast %cst_65 : f32 to vector<8x1xf32>
    %122 = arith.divf %120, %121 : vector<8x1xf32>
    %123 = arith.mulf %117, %117 : vector<8x1xf32>
    %124 = arith.subf %122, %123 : vector<8x1xf32>
    %125 = vector.broadcast %117 : vector<8x1xf32> to vector<8x32xf32>
    %126 = arith.subf %113, %125 : vector<8x32xf32>
    %cst_66 = arith.constant 9.99999974E-6 : f32
    %127 = vector.broadcast %cst_66 : f32 to vector<8x1xf32>
    %128 = arith.addf %124, %127 : vector<8x1xf32>
    %129 = math.rsqrt %128 : vector<8x1xf32>
    %130 = vector.broadcast %129 : vector<8x1xf32> to vector<8x32xf32>
    %131 = arith.mulf %126, %130 : vector<8x32xf32>
    %c0_67 = arith.constant 0 : index
    %c0_68 = arith.constant 0 : index
    %132 = vector.load %arg6[%c0_67, %c0_68] : memref<1x32xf32, #tpu.memory_space<vmem>>, vector<1x32xf32>
    %133 = vector.broadcast %132 : vector<1x32xf32> to vector<8x32xf32>
    %134 = arith.mulf %131, %133 : vector<8x32xf32>
    %c0_69 = arith.constant 0 : index
    %c0_70 = arith.constant 0 : index
    %135 = vector.load %arg7[%c0_69, %c0_70] : memref<1x32xf32, #tpu.memory_space<vmem>>, vector<1x32xf32>
    %136 = vector.broadcast %135 : vector<1x32xf32> to vector<8x32xf32>
    %137 = arith.addf %134, %136 : vector<8x32xf32>
    %138 = arith.truncf %137 : vector<8x32xf32> to vector<8x32xbf16>
    %c0_71 = arith.constant 0 : index
    %c0_72 = arith.constant 0 : index
    %c0_73 = arith.constant 0 : index
    %139 = vector.load %arg8[%c0_71, %c0_72, %c0_73] : memref<1x8x32xbf16, #tpu.memory_space<vmem>>, vector<1x8x32xbf16>
    %140 = vector.shape_cast %139 : vector<1x8x32xbf16> to vector<8x32xbf16>
    %141 = vector.shape_cast %138 : vector<8x32xbf16> to vector<1x8x32xbf16>
    tpu.vector_store %arg8[%c0_71, %c0_72, %c0_73], %141 {strides = array<i32>} : memref<1x8x32xbf16, #tpu.memory_space<vmem>>, vector<1x8x32xbf16>,
    return
  }
  func.func @transform_0(%arg0: i32) -> (i32, i32, i32) {
    %c0_i32 = arith.constant 0 : i32
    %c0_i32_0 = arith.constant 0 : i32
    %c0_i32_1 = arith.constant 0 : i32
    return %arg0, %c0_i32, %c0_i32_0 : i32, i32, i32
  }
  func.func @transform_1(%arg0: i32) -> (i32, i32, i32) {
    %c0_i32 = arith.constant 0 : i32
    %c0_i32_0 = arith.constant 0 : i32
    %c0_i32_1 = arith.constant 0 : i32
    return %arg0, %c0_i32, %c0_i32_0 : i32, i32, i32
  }
  func.func @transform_2(%arg0: i32) -> (i32, i32, i32) {
    %c0_i32 = arith.constant 0 : i32
    %c0_i32_0 = arith.constant 0 : i32
    %c0_i32_1 = arith.constant 0 : i32
    return %arg0, %c0_i32, %c0_i32_0 : i32, i32, i32
  }
  func.func @transform_3(%arg0: i32) -> (i32, i32) {
    %c0_i32 = arith.constant 0 : i32
    %c0_i32_0 = arith.constant 0 : i32
    %c0_i32_1 = arith.constant 0 : i32
    return %c0_i32, %c0_i32_0 : i32, i32
  }
  func.func @transform_4(%arg0: i32) -> (i32, i32) {
    %c0_i32 = arith.constant 0 : i32
    %c0_i32_0 = arith.constant 0 : i32
    %c0_i32_1 = arith.constant 0 : i32
    return %c0_i32, %c0_i32_0 : i32, i32
  }
  func.func @transform_5(%arg0: i32) -> (i32, i32) {
    %c0_i32 = arith.constant 0 : i32
    %c0_i32_0 = arith.constant 0 : i32
    %c0_i32_1 = arith.constant 0 : i32
    return %c0_i32, %c0_i32_0 : i32, i32
  }
  func.func @transform_6(%arg0: i32) -> (i32, i32) {
    %c0_i32 = arith.constant 0 : i32
    %c0_i32_0 = arith.constant 0 : i32
    %c0_i32_1 = arith.constant 0 : i32
    return %c0_i32, %c0_i32_0 : i32, i32
  }
  func.func @transform_7(%arg0: i32) -> (i32, i32, i32) {
    %c0_i32 = arith.constant 0 : i32
    %c0_i32_0 = arith.constant 0 : i32
    %c0_i32_1 = arith.constant 0 : i32
    return %arg0, %c0_i32, %c0_i32_0 : i32, i32, i32
  }
}

module attributes {stable_mosaic.version = 11 : i64} {
  func.func @_matmul_kernel(%arg0: i32, %arg1: i32, %arg2: i32, %arg3: memref<16x32xbf16, #tpu.memory_space<vmem>>, %arg4: memref<32x32xbf16, #tpu.memory_space<vmem>>, %arg5: memref<1x32xf32, #tpu.memory_space<vmem>>, %arg6: memref<16x32xbf16, #tpu.memory_space<vmem>>, %arg7: memref<16x32xf32, #tpu.memory_space<vmem>>) attributes {dimension_semantics = [#tpu.dimension_semantics<parallel>, #tpu.dimension_semantics<parallel>, #tpu.dimension_semantics<arbitrary>], iteration_bounds = array<i64: 1, 1, 1>, scalar_prefetch = 0 : i64, scratch_operands = 1 : i64, tpu.core_type = #tpu.core_type<tc>, window_params = [{transform_indices = @transform_0, window_bounds = array<i64: 16, 32>}, {transform_indices = @transform_1, window_bounds = array<i64: 32, 32>}, {transform_indices = @transform_2, window_bounds = array<i64: 1, 32>}, {transform_indices = @transform_3, window_bounds = array<i64: 16, 32>}]} {
    %c0_i32 = arith.constant 0 : i32
    %0 = arith.cmpi eq, %arg2, %c0_i32 : i32
    %1 = arith.extui %0 : i1 to i32
    %c0_i32_0 = arith.constant 0 : i32
    %2 = arith.cmpi ne, %1, %c0_i32_0 : i32
    scf.if %2 {
      %cst_10 = arith.constant 0.000000e+00 : f32
      %12 = vector.broadcast %cst_10 : f32 to vector<16x32xf32>
      %c0_11 = arith.constant 0 : index
      %c0_12 = arith.constant 0 : index
      %13 = vector.load %arg7[%c0_11, %c0_12] : memref<16x32xf32, #tpu.memory_space<vmem>>, vector<16x32xf32>
      tpu.vector_store %arg7[%c0_11, %c0_12], %12 {strides = array<i32>} : memref<16x32xf32, #tpu.memory_space<vmem>>, vector<16x32xf32>,
    } else {
    }
    %c0 = arith.constant 0 : index
    %c0_1 = arith.constant 0 : index
    %3 = vector.load %arg7[%c0, %c0_1] : memref<16x32xf32, #tpu.memory_space<vmem>>, vector<16x32xf32>
    %c0_2 = arith.constant 0 : index
    %c0_3 = arith.constant 0 : index
    %4 = vector.load %arg3[%c0_2, %c0_3] : memref<16x32xbf16, #tpu.memory_space<vmem>>, vector<16x32xbf16>
    %c0_4 = arith.constant 0 : index
    %c0_5 = arith.constant 0 : index
    %5 = vector.load %arg4[%c0_4, %c0_5] : memref<32x32xbf16, #tpu.memory_space<vmem>>, vector<32x32xbf16>
    %cst = arith.constant dense<0.000000e+00> : vector<16x32xf32>
    %6 = tpu.matmul %4, %5, %cst {dimension_numbers = #tpu.dot_dimension_numbers<[1], [0], [0], [1], [0, 0, 1, 1], [], []>} : vector<16x32xbf16>, vector<32x32xbf16>, vector<16x32xf32> -> vector<16x32xf32>
    %7 = arith.addf %3, %6 : vector<16x32xf32>
    %c0_6 = arith.constant 0 : index
    %c0_7 = arith.constant 0 : index
    %8 = vector.load %arg7[%c0_6, %c0_7] : memref<16x32xf32, #tpu.memory_space<vmem>>, vector<16x32xf32>
    tpu.vector_store %arg7[%c0_6, %c0_7], %7 {strides = array<i32>} : memref<16x32xf32, #tpu.memory_space<vmem>>, vector<16x32xf32>,
    %c0_i32_8 = arith.constant 0 : i32
    %9 = arith.cmpi eq, %arg2, %c0_i32_8 : i32
    %10 = arith.extui %9 : i1 to i32
    %c0_i32_9 = arith.constant 0 : i32
    %11 = arith.cmpi ne, %10, %c0_i32_9 : i32
    scf.if %11 {
      %c0_10 = arith.constant 0 : index
      %c0_11 = arith.constant 0 : index
      %12 = vector.load %arg7[%c0_10, %c0_11] : memref<16x32xf32, #tpu.memory_space<vmem>>, vector<16x32xf32>
      %c0_12 = arith.constant 0 : index
      %c0_13 = arith.constant 0 : index
      %13 = vector.load %arg5[%c0_12, %c0_13] : memref<1x32xf32, #tpu.memory_space<vmem>>, vector<1x32xf32>
      %14 = vector.broadcast %13 : vector<1x32xf32> to vector<16x32xf32>
      %15 = arith.addf %12, %14 : vector<16x32xf32>
      %16 = arith.truncf %15 : vector<16x32xf32> to vector<16x32xbf16>
      %c0_14 = arith.constant 0 : index
      %c0_15 = arith.constant 0 : index
      %17 = vector.load %arg6[%c0_14, %c0_15] : memref<16x32xbf16, #tpu.memory_space<vmem>>, vector<16x32xbf16>
      tpu.vector_store %arg6[%c0_14, %c0_15], %16 {strides = array<i32>} : memref<16x32xbf16, #tpu.memory_space<vmem>>, vector<16x32xbf16>,
    } else {
    }
    return
  }
  func.func @transform_0(%arg0: i32, %arg1: i32, %arg2: i32) -> (i32, i32) {
    %c0_i32 = arith.constant 0 : i32
    return %arg0, %arg2 : i32, i32
  }
  func.func @transform_1(%arg0: i32, %arg1: i32, %arg2: i32) -> (i32, i32) {
    %c0_i32 = arith.constant 0 : i32
    return %arg2, %arg1 : i32, i32
  }
  func.func @transform_2(%arg0: i32, %arg1: i32, %arg2: i32) -> (i32, i32) {
    %c0_i32 = arith.constant 0 : i32
    %c0_i32_0 = arith.constant 0 : i32
    return %c0_i32, %arg1 : i32, i32
  }
  func.func @transform_3(%arg0: i32, %arg1: i32, %arg2: i32) -> (i32, i32) {
    %c0_i32 = arith.constant 0 : i32
    return %arg0, %arg1 : i32, i32
  }
}

module attributes {stable_mosaic.version = 11 : i64} {
  func.func @_self_attn_kernel(%arg0: i32, %arg1: memref<1x8x96xbf16, #tpu.memory_space<vmem>>, %arg2: memref<1x1x8xf32, #tpu.memory_space<vmem>>, %arg3: memref<1x8x32xbf16, #tpu.memory_space<vmem>>, %arg4: memref<32x32xbf16, #tpu.memory_space<vmem>>, %arg5: memref<1x32xf32, #tpu.memory_space<vmem>>, %arg6: memref<1x32xf32, #tpu.memory_space<vmem>>, %arg7: memref<1x32xf32, #tpu.memory_space<vmem>>, %arg8: memref<1x8x32xbf16, #tpu.memory_space<vmem>>) attributes {dimension_semantics = [#tpu.dimension_semantics<parallel>], iteration_bounds = array<i64: 2>, scalar_prefetch = 0 : i64, scratch_operands = 0 : i64, tpu.core_type = #tpu.core_type<tc>, window_params = [{transform_indices = @transform_0, window_bounds = array<i64: 1, 8, 96>}, {transform_indices = @transform_1, window_bounds = array<i64: 1, 1, 8>}, {transform_indices = @transform_2, window_bounds = array<i64: 1, 8, 32>}, {pipeline_mode = #tpu.pipeline_mode<synchronous>, transform_indices = @transform_3, window_bounds = array<i64: 32, 32>}, {pipeline_mode = #tpu.pipeline_mode<synchronous>, transform_indices = @transform_4, window_bounds = array<i64: 1, 32>}, {pipeline_mode = #tpu.pipeline_mode<synchronous>, transform_indices = @transform_5, window_bounds = array<i64: 1, 32>}, {pipeline_mode = #tpu.pipeline_mode<synchronous>, transform_indices = @transform_6, window_bounds = array<i64: 1, 32>}, {transform_indices = @transform_7, window_bounds = array<i64: 1, 8, 32>}]} {
    %c0 = arith.constant 0 : index
    %c0_0 = arith.constant 0 : index
    %c0_1 = arith.constant 0 : index
    %0 = vector.load %arg2[%c0, %c0_0, %c0_1] : memref<1x1x8xf32, #tpu.memory_space<vmem>>, vector<1x1x8xf32>
    %1 = vector.shape_cast %0 : vector<1x1x8xf32> to vector<1x8xf32>
    %cst = arith.constant 0.000000e+00 : f32
    %2 = vector.broadcast %cst : f32 to vector<8x32xf32>
    %c0_2 = arith.constant 0 : index
    %c0_3 = arith.constant 0 : index
    %c0_4 = arith.constant 0 : index
    %3 = vector.load %arg1[%c0_2, %c0_3, %c0_4] : memref<1x8x96xbf16, #tpu.memory_space<vmem>>, vector<1x8x8xbf16>
    %4 = vector.shape_cast %3 : vector<1x8x8xbf16> to vector<8x8xbf16>
    %c0_5 = arith.constant 0 : index
    %c0_6 = arith.constant 0 : index
    %c32 = arith.constant 32 : index
    %5 = vector.load %arg1[%c0_5, %c0_6, %c32] : memref<1x8x96xbf16, #tpu.memory_space<vmem>>, vector<1x8x8xbf16>
    %6 = vector.shape_cast %5 : vector<1x8x8xbf16> to vector<8x8xbf16>
    %c0_7 = arith.constant 0 : index
    %c0_8 = arith.constant 0 : index
    %c64 = arith.constant 64 : index
    %7 = vector.load %arg1[%c0_7, %c0_8, %c64] : memref<1x8x96xbf16, #tpu.memory_space<vmem>>, vector<1x8x8xbf16>
    %8 = vector.shape_cast %7 : vector<1x8x8xbf16> to vector<8x8xbf16>
    %cst_9 = arith.constant dense<0.000000e+00> : vector<8x8xf32>
    %9 = tpu.matmul %4, %6, %cst_9 {dimension_numbers = #tpu.dot_dimension_numbers<[1], [1], [0], [0], [0, 0, 1, 0], [], []>} : vector<8x8xbf16>, vector<8x8xbf16>, vector<8x8xf32> -> vector<8x8xf32>
    %10 = vector.broadcast %1 : vector<1x8xf32> to vector<8x8xf32>
    %11 = arith.addf %9, %10 : vector<8x8xf32>
    %cst_10 = arith.constant dense<0xFF800000> : vector<8xf32>
    %12 = vector.multi_reduction <maximumf>, %11, %cst_10 [1] : vector<8x8xf32> to vector<8xf32>
    %13 = vector.shape_cast %12 : vector<8xf32> to vector<8x1xf32>
    %14 = vector.broadcast %13 : vector<8x1xf32> to vector<8x8xf32>
    %15 = arith.subf %11, %14 : vector<8x8xf32>
    %16 = math.exp %15 : vector<8x8xf32>
    %cst_11 = arith.constant dense<0.000000e+00> : vector<8xf32>
    %17 = vector.multi_reduction <add>, %16, %cst_11 [1] : vector<8x8xf32> to vector<8xf32>
    %18 = vector.shape_cast %17 : vector<8xf32> to vector<8x1xf32>
    %19 = tpu.reciprocal %18 {approx = true} : vector<8x1xf32> -> vector<8x1xf32>
    %20 = vector.broadcast %19 : vector<8x1xf32> to vector<8x8xf32>
    %21 = arith.mulf %16, %20 : vector<8x8xf32>
    %22 = arith.truncf %21 : vector<8x8xf32> to vector<8x8xbf16>
    %cst_12 = arith.constant dense<0.000000e+00> : vector<8x8xf32>
    %23 = tpu.matmul %22, %8, %cst_12 {dimension_numbers = #tpu.dot_dimension_numbers<[1], [0], [0], [1], [0, 0, 1, 1], [], []>} : vector<8x8xbf16>, vector<8x8xbf16>, vector<8x8xf32> -> vector<8x8xf32>
    %24 = arith.truncf %23 : vector<8x8xf32> to vector<8x8xbf16>
    %c0_13 = arith.constant 0 : index
    %c0_14 = arith.constant 0 : index
    %25 = vector.load %arg4[%c0_13, %c0_14] : memref<32x32xbf16, #tpu.memory_space<vmem>>, vector<8x32xbf16>
    %cst_15 = arith.constant dense<0.000000e+00> : vector<8x32xf32>
    %26 = tpu.matmul %24, %25, %cst_15 {dimension_numbers = #tpu.dot_dimension_numbers<[1], [0], [0], [1], [0, 0, 1, 1], [], []>} : vector<8x8xbf16>, vector<8x32xbf16>, vector<8x32xf32> -> vector<8x32xf32>
    %27 = arith.addf %2, %26 : vector<8x32xf32>
    %c0_16 = arith.constant 0 : index
    %c0_17 = arith.constant 0 : index
    %c8 = arith.constant 8 : index
    %28 = vector.load %arg1[%c0_16, %c0_17, %c8] : memref<1x8x96xbf16, #tpu.memory_space<vmem>>, vector<1x8x8xbf16>
    %29 = vector.shape_cast %28 : vector<1x8x8xbf16> to vector<8x8xbf16>
    %c0_18 = arith.constant 0 : index
    %c0_19 = arith.constant 0 : index
    %c40 = arith.constant 40 : index
    %30 = vector.load %arg1[%c0_18, %c0_19, %c40] : memref<1x8x96xbf16, #tpu.memory_space<vmem>>, vector<1x8x8xbf16>
    %31 = vector.shape_cast %30 : vector<1x8x8xbf16> to vector<8x8xbf16>
    %c0_20 = arith.constant 0 : index
    %c0_21 = arith.constant 0 : index
    %c72 = arith.constant 72 : index
    %32 = vector.load %arg1[%c0_20, %c0_21, %c72] : memref<1x8x96xbf16, #tpu.memory_space<vmem>>, vector<1x8x8xbf16>
    %33 = vector.shape_cast %32 : vector<1x8x8xbf16> to vector<8x8xbf16>
    %cst_22 = arith.constant dense<0.000000e+00> : vector<8x8xf32>
    %34 = tpu.matmul %29, %31, %cst_22 {dimension_numbers = #tpu.dot_dimension_numbers<[1], [1], [0], [0], [0, 0, 1, 0], [], []>} : vector<8x8xbf16>, vector<8x8xbf16>, vector<8x8xf32> -> vector<8x8xf32>
    %35 = vector.broadcast %1 : vector<1x8xf32> to vector<8x8xf32>
    %36 = arith.addf %34, %35 : vector<8x8xf32>
    %cst_23 = arith.constant dense<0xFF800000> : vector<8xf32>
    %37 = vector.multi_reduction <maximumf>, %36, %cst_23 [1] : vector<8x8xf32> to vector<8xf32>
    %38 = vector.shape_cast %37 : vector<8xf32> to vector<8x1xf32>
    %39 = vector.broadcast %38 : vector<8x1xf32> to vector<8x8xf32>
    %40 = arith.subf %36, %39 : vector<8x8xf32>
    %41 = math.exp %40 : vector<8x8xf32>
    %cst_24 = arith.constant dense<0.000000e+00> : vector<8xf32>
    %42 = vector.multi_reduction <add>, %41, %cst_24 [1] : vector<8x8xf32> to vector<8xf32>
    %43 = vector.shape_cast %42 : vector<8xf32> to vector<8x1xf32>
    %44 = tpu.reciprocal %43 {approx = true} : vector<8x1xf32> -> vector<8x1xf32>
    %45 = vector.broadcast %44 : vector<8x1xf32> to vector<8x8xf32>
    %46 = arith.mulf %41, %45 : vector<8x8xf32>
    %47 = arith.truncf %46 : vector<8x8xf32> to vector<8x8xbf16>
    %cst_25 = arith.constant dense<0.000000e+00> : vector<8x8xf32>
    %48 = tpu.matmul %47, %33, %cst_25 {dimension_numbers = #tpu.dot_dimension_numbers<[1], [0], [0], [1], [0, 0, 1, 1], [], []>} : vector<8x8xbf16>, vector<8x8xbf16>, vector<8x8xf32> -> vector<8x8xf32>
    %49 = arith.truncf %48 : vector<8x8xf32> to vector<8x8xbf16>
    %c8_26 = arith.constant 8 : index
    %c0_27 = arith.constant 0 : index
    %50 = vector.load %arg4[%c8_26, %c0_27] : memref<32x32xbf16, #tpu.memory_space<vmem>>, vector<8x32xbf16>
    %cst_28 = arith.constant dense<0.000000e+00> : vector<8x32xf32>
    %51 = tpu.matmul %49, %50, %cst_28 {dimension_numbers = #tpu.dot_dimension_numbers<[1], [0], [0], [1], [0, 0, 1, 1], [], []>} : vector<8x8xbf16>, vector<8x32xbf16>, vector<8x32xf32> -> vector<8x32xf32>
    %52 = arith.addf %27, %51 : vector<8x32xf32>
    %c0_29 = arith.constant 0 : index
    %c0_30 = arith.constant 0 : index
    %c16 = arith.constant 16 : index
    %53 = vector.load %arg1[%c0_29, %c0_30, %c16] : memref<1x8x96xbf16, #tpu.memory_space<vmem>>, vector<1x8x8xbf16>
    %54 = vector.shape_cast %53 : vector<1x8x8xbf16> to vector<8x8xbf16>
    %c0_31 = arith.constant 0 : index
    %c0_32 = arith.constant 0 : index
    %c48 = arith.constant 48 : index
    %55 = vector.load %arg1[%c0_31, %c0_32, %c48] : memref<1x8x96xbf16, #tpu.memory_space<vmem>>, vector<1x8x8xbf16>
    %56 = vector.shape_cast %55 : vector<1x8x8xbf16> to vector<8x8xbf16>
    %c0_33 = arith.constant 0 : index
    %c0_34 = arith.constant 0 : index
    %c80 = arith.constant 80 : index
    %57 = vector.load %arg1[%c0_33, %c0_34, %c80] : memref<1x8x96xbf16, #tpu.memory_space<vmem>>, vector<1x8x8xbf16>
    %58 = vector.shape_cast %57 : vector<1x8x8xbf16> to vector<8x8xbf16>
    %cst_35 = arith.constant dense<0.000000e+00> : vector<8x8xf32>
    %59 = tpu.matmul %54, %56, %cst_35 {dimension_numbers = #tpu.dot_dimension_numbers<[1], [1], [0], [0], [0, 0, 1, 0], [], []>} : vector<8x8xbf16>, vector<8x8xbf16>, vector<8x8xf32> -> vector<8x8xf32>
    %60 = vector.broadcast %1 : vector<1x8xf32> to vector<8x8xf32>
    %61 = arith.addf %59, %60 : vector<8x8xf32>
    %cst_36 = arith.constant dense<0xFF800000> : vector<8xf32>
    %62 = vector.multi_reduction <maximumf>, %61, %cst_36 [1] : vector<8x8xf32> to vector<8xf32>
    %63 = vector.shape_cast %62 : vector<8xf32> to vector<8x1xf32>
    %64 = vector.broadcast %63 : vector<8x1xf32> to vector<8x8xf32>
    %65 = arith.subf %61, %64 : vector<8x8xf32>
    %66 = math.exp %65 : vector<8x8xf32>
    %cst_37 = arith.constant dense<0.000000e+00> : vector<8xf32>
    %67 = vector.multi_reduction <add>, %66, %cst_37 [1] : vector<8x8xf32> to vector<8xf32>
    %68 = vector.shape_cast %67 : vector<8xf32> to vector<8x1xf32>
    %69 = tpu.reciprocal %68 {approx = true} : vector<8x1xf32> -> vector<8x1xf32>
    %70 = vector.broadcast %69 : vector<8x1xf32> to vector<8x8xf32>
    %71 = arith.mulf %66, %70 : vector<8x8xf32>
    %72 = arith.truncf %71 : vector<8x8xf32> to vector<8x8xbf16>
    %cst_38 = arith.constant dense<0.000000e+00> : vector<8x8xf32>
    %73 = tpu.matmul %72, %58, %cst_38 {dimension_numbers = #tpu.dot_dimension_numbers<[1], [0], [0], [1], [0, 0, 1, 1], [], []>} : vector<8x8xbf16>, vector<8x8xbf16>, vector<8x8xf32> -> vector<8x8xf32>
    %74 = arith.truncf %73 : vector<8x8xf32> to vector<8x8xbf16>
    %c16_39 = arith.constant 16 : index
    %c0_40 = arith.constant 0 : index
    %75 = vector.load %arg4[%c16_39, %c0_40] : memref<32x32xbf16, #tpu.memory_space<vmem>>, vector<8x32xbf16>
    %cst_41 = arith.constant dense<0.000000e+00> : vector<8x32xf32>
    %76 = tpu.matmul %74, %75, %cst_41 {dimension_numbers = #tpu.dot_dimension_numbers<[1], [0], [0], [1], [0, 0, 1, 1], [], []>} : vector<8x8xbf16>, vector<8x32xbf16>, vector<8x32xf32> -> vector<8x32xf32>
    %77 = arith.addf %52, %76 : vector<8x32xf32>
    %c0_42 = arith.constant 0 : index
    %c0_43 = arith.constant 0 : index
    %c24 = arith.constant 24 : index
    %78 = vector.load %arg1[%c0_42, %c0_43, %c24] : memref<1x8x96xbf16, #tpu.memory_space<vmem>>, vector<1x8x8xbf16>
    %79 = vector.shape_cast %78 : vector<1x8x8xbf16> to vector<8x8xbf16>
    %c0_44 = arith.constant 0 : index
    %c0_45 = arith.constant 0 : index
    %c56 = arith.constant 56 : index
    %80 = vector.load %arg1[%c0_44, %c0_45, %c56] : memref<1x8x96xbf16, #tpu.memory_space<vmem>>, vector<1x8x8xbf16>
    %81 = vector.shape_cast %80 : vector<1x8x8xbf16> to vector<8x8xbf16>
    %c0_46 = arith.constant 0 : index
    %c0_47 = arith.constant 0 : index
    %c88 = arith.constant 88 : index
    %82 = vector.load %arg1[%c0_46, %c0_47, %c88] : memref<1x8x96xbf16, #tpu.memory_space<vmem>>, vector<1x8x8xbf16>
    %83 = vector.shape_cast %82 : vector<1x8x8xbf16> to vector<8x8xbf16>
    %cst_48 = arith.constant dense<0.000000e+00> : vector<8x8xf32>
    %84 = tpu.matmul %79, %81, %cst_48 {dimension_numbers = #tpu.dot_dimension_numbers<[1], [1], [0], [0], [0, 0, 1, 0], [], []>} : vector<8x8xbf16>, vector<8x8xbf16>, vector<8x8xf32> -> vector<8x8xf32>
    %85 = vector.broadcast %1 : vector<1x8xf32> to vector<8x8xf32>
    %86 = arith.addf %84, %85 : vector<8x8xf32>
    %cst_49 = arith.constant dense<0xFF800000> : vector<8xf32>
    %87 = vector.multi_reduction <maximumf>, %86, %cst_49 [1] : vector<8x8xf32> to vector<8xf32>
    %88 = vector.shape_cast %87 : vector<8xf32> to vector<8x1xf32>
    %89 = vector.broadcast %88 : vector<8x1xf32> to vector<8x8xf32>
    %90 = arith.subf %86, %89 : vector<8x8xf32>
    %91 = math.exp %90 : vector<8x8xf32>
    %cst_50 = arith.constant dense<0.000000e+00> : vector<8xf32>
    %92 = vector.multi_reduction <add>, %91, %cst_50 [1] : vector<8x8xf32> to vector<8xf32>
    %93 = vector.shape_cast %92 : vector<8xf32> to vector<8x1xf32>
    %94 = tpu.reciprocal %93 {approx = true} : vector<8x1xf32> -> vector<8x1xf32>
    %95 = vector.broadcast %94 : vector<8x1xf32> to vector<8x8xf32>
    %96 = arith.mulf %91, %95 : vector<8x8xf32>
    %97 = arith.truncf %96 : vector<8x8xf32> to vector<8x8xbf16>
    %cst_51 = arith.constant dense<0.000000e+00> : vector<8x8xf32>
    %98 = tpu.matmul %97, %83, %cst_51 {dimension_numbers = #tpu.dot_dimension_numbers<[1], [0], [0], [1], [0, 0, 1, 1], [], []>} : vector<8x8xbf16>, vector<8x8xbf16>, vector<8x8xf32> -> vector<8x8xf32>
    %99 = arith.truncf %98 : vector<8x8xf32> to vector<8x8xbf16>
    %c24_52 = arith.constant 24 : index
    %c0_53 = arith.constant 0 : index
    %100 = vector.load %arg4[%c24_52, %c0_53] : memref<32x32xbf16, #tpu.memory_space<vmem>>, vector<8x32xbf16>
    %cst_54 = arith.constant dense<0.000000e+00> : vector<8x32xf32>
    %101 = tpu.matmul %99, %100, %cst_54 {dimension_numbers = #tpu.dot_dimension_numbers<[1], [0], [0], [1], [0, 0, 1, 1], [], []>} : vector<8x8xbf16>, vector<8x32xbf16>, vector<8x32xf32> -> vector<8x32xf32>
    %102 = arith.addf %77, %101 : vector<8x32xf32>
    %c0_55 = arith.constant 0 : index
    %c0_56 = arith.constant 0 : index
    %103 = vector.load %arg5[%c0_55, %c0_56] : memref<1x32xf32, #tpu.memory_space<vmem>>, vector<1x32xf32>
    %104 = vector.broadcast %103 : vector<1x32xf32> to vector<8x32xf32>
    %105 = arith.addf %102, %104 : vector<8x32xf32>
    %c0_57 = arith.constant 0 : index
    %c0_58 = arith.constant 0 : index
    %c0_59 = arith.constant 0 : index
    %106 = vector.load %arg3[%c0_57, %c0_58, %c0_59] : memref<1x8x32xbf16, #tpu.memory_space<vmem>>, vector<1x8x32xbf16>
    %107 = vector.shape_cast %106 : vector<1x8x32xbf16> to vector<8x32xbf16>
    %108 = arith.extf %107 : vector<8x32xbf16> to vector<8x32xf32>
    %109 = arith.addf %105, %108 : vector<8x32xf32>
    %cst_60 = arith.constant dense<0.000000e+00> : vector<8xf32>
    %110 = vector.multi_reduction <add>, %109, %cst_60 [1] : vector<8x32xf32> to vector<8xf32>
    %111 = vector.shape_cast %110 : vector<8xf32> to vector<8x1xf32>
    %cst_61 = arith.constant 3.200000e+01 : f32
    %112 = vector.broadcast %cst_61 : f32 to vector<8x1xf32>
    %113 = arith.divf %111, %112 : vector<8x1xf32>
    %114 = arith.mulf %109, %109 : vector<8x32xf32>
    %cst_62 = arith.constant dense<0.000000e+00> : vector<8xf32>
    %115 = vector.multi_reduction <add>, %114, %cst_62 [1] : vector<8x32xf32> to vector<8xf32>
    %116 = vector.shape_cast %115 : vector<8xf32> to vector<8x1xf32>
    %cst_63 = arith.constant 3.200000e+01 : f32
    %117 = vector.broadcast %cst_63 : f32 to vector<8x1xf32>
    %118 = arith.divf %116, %117 : vector<8x1xf32>
    %119 = arith.mulf %113, %113 : vector<8x1xf32>
    %120 = arith.subf %118, %119 : vector<8x1xf32>
    %121 = vector.broadcast %113 : vector<8x1xf32> to vector<8x32xf32>
    %122 = arith.subf %109, %121 : vector<8x32xf32>
    %cst_64 = arith.constant 9.99999974E-6 : f32
    %123 = vector.broadcast %cst_64 : f32 to vector<8x1xf32>
    %124 = arith.addf %120, %123 : vector<8x1xf32>
    %125 = math.rsqrt %124 : vector<8x1xf32>
    %126 = vector.broadcast %125 : vector<8x1xf32> to vector<8x32xf32>
    %127 = arith.mulf %122, %126 : vector<8x32xf32>
    %c0_65 = arith.constant 0 : index
    %c0_66 = arith.constant 0 : index
    %128 = vector.load %arg6[%c0_65, %c0_66] : memref<1x32xf32, #tpu.memory_space<vmem>>, vector<1x32xf32>
    %129 = vector.broadcast %128 : vector<1x32xf32> to vector<8x32xf32>
    %130 = arith.mulf %127, %129 : vector<8x32xf32>
    %c0_67 = arith.constant 0 : index
    %c0_68 = arith.constant 0 : index
    %131 = vector.load %arg7[%c0_67, %c0_68] : memref<1x32xf32, #tpu.memory_space<vmem>>, vector<1x32xf32>
    %132 = vector.broadcast %131 : vector<1x32xf32> to vector<8x32xf32>
    %133 = arith.addf %130, %132 : vector<8x32xf32>
    %134 = arith.truncf %133 : vector<8x32xf32> to vector<8x32xbf16>
    %c0_69 = arith.constant 0 : index
    %c0_70 = arith.constant 0 : index
    %c0_71 = arith.constant 0 : index
    %135 = vector.load %arg8[%c0_69, %c0_70, %c0_71] : memref<1x8x32xbf16, #tpu.memory_space<vmem>>, vector<1x8x32xbf16>
    %136 = vector.shape_cast %135 : vector<1x8x32xbf16> to vector<8x32xbf16>
    %137 = vector.shape_cast %134 : vector<8x32xbf16> to vector<1x8x32xbf16>
    tpu.vector_store %arg8[%c0_69, %c0_70, %c0_71], %137 {strides = array<i32>} : memref<1x8x32xbf16, #tpu.memory_space<vmem>>, vector<1x8x32xbf16>,
    return
  }
  func.func @transform_0(%arg0: i32) -> (i32, i32, i32) {
    %c0_i32 = arith.constant 0 : i32
    %c0_i32_0 = arith.constant 0 : i32
    %c0_i32_1 = arith.constant 0 : i32
    return %arg0, %c0_i32, %c0_i32_0 : i32, i32, i32
  }
  func.func @transform_1(%arg0: i32) -> (i32, i32, i32) {
    %c0_i32 = arith.constant 0 : i32
    %c0_i32_0 = arith.constant 0 : i32
    %c0_i32_1 = arith.constant 0 : i32
    return %arg0, %c0_i32, %c0_i32_0 : i32, i32, i32
  }
  func.func @transform_2(%arg0: i32) -> (i32, i32, i32) {
    %c0_i32 = arith.constant 0 : i32
    %c0_i32_0 = arith.constant 0 : i32
    %c0_i32_1 = arith.constant 0 : i32
    return %arg0, %c0_i32, %c0_i32_0 : i32, i32, i32
  }
  func.func @transform_3(%arg0: i32) -> (i32, i32) {
    %c0_i32 = arith.constant 0 : i32
    %c0_i32_0 = arith.constant 0 : i32
    %c0_i32_1 = arith.constant 0 : i32
    return %c0_i32, %c0_i32_0 : i32, i32
  }
  func.func @transform_4(%arg0: i32) -> (i32, i32) {
    %c0_i32 = arith.constant 0 : i32
    %c0_i32_0 = arith.constant 0 : i32
    %c0_i32_1 = arith.constant 0 : i32
    return %c0_i32, %c0_i32_0 : i32, i32
  }
  func.func @transform_5(%arg0: i32) -> (i32, i32) {
    %c0_i32 = arith.constant 0 : i32
    %c0_i32_0 = arith.constant 0 : i32
    %c0_i32_1 = arith.constant 0 : i32
    return %c0_i32, %c0_i32_0 : i32, i32
  }
  func.func @transform_6(%arg0: i32) -> (i32, i32) {
    %c0_i32 = arith.constant 0 : i32
    %c0_i32_0 = arith.constant 0 : i32
    %c0_i32_1 = arith.constant 0 : i32
    return %c0_i32, %c0_i32_0 : i32, i32
  }
  func.func @transform_7(%arg0: i32) -> (i32, i32, i32) {
    %c0_i32 = arith.constant 0 : i32
    %c0_i32_0 = arith.constant 0 : i32
    %c0_i32_1 = arith.constant 0 : i32
    return %arg0, %c0_i32, %c0_i32_0 : i32, i32, i32
  }
}

module attributes {stable_mosaic.version = 11 : i64} {
  func.func @_matmul_ln_kernel(%arg0: i32, %arg1: i32, %arg2: i32, %arg3: memref<16x64xbf16, #tpu.memory_space<vmem>>, %arg4: memref<64x32xbf16, #tpu.memory_space<vmem>>, %arg5: memref<1x32xf32, #tpu.memory_space<vmem>>, %arg6: memref<16x32xbf16, #tpu.memory_space<vmem>>, %arg7: memref<1x32xf32, #tpu.memory_space<vmem>>, %arg8: memref<1x32xf32, #tpu.memory_space<vmem>>, %arg9: memref<16x32xbf16, #tpu.memory_space<vmem>>, %arg10: memref<16x32xf32, #tpu.memory_space<vmem>>) attributes {dimension_semantics = [#tpu.dimension_semantics<parallel>, #tpu.dimension_semantics<parallel>, #tpu.dimension_semantics<arbitrary>], iteration_bounds = array<i64: 1, 1, 1>, scalar_prefetch = 0 : i64, scratch_operands = 1 : i64, tpu.core_type = #tpu.core_type<tc>, window_params = [{transform_indices = @transform_0, window_bounds = array<i64: 16, 64>}, {transform_indices = @transform_1, window_bounds = array<i64: 64, 32>}, {transform_indices = @transform_2, window_bounds = array<i64: 1, 32>}, {transform_indices = @transform_3, window_bounds = array<i64: 16, 32>}, {transform_indices = @transform_4, window_bounds = array<i64: 1, 32>}, {transform_indices = @transform_5, window_bounds = array<i64: 1, 32>}, {transform_indices = @transform_6, window_bounds = array<i64: 16, 32>}]} {
    %c0_i32 = arith.constant 0 : i32
    %0 = arith.cmpi eq, %arg2, %c0_i32 : i32
    %1 = arith.extui %0 : i1 to i32
    %c0_i32_0 = arith.constant 0 : i32
    %2 = arith.cmpi ne, %1, %c0_i32_0 : i32
    scf.if %2 {
      %cst_10 = arith.constant 0.000000e+00 : f32
      %12 = vector.broadcast %cst_10 : f32 to vector<16x32xf32>
      %c0_11 = arith.constant 0 : index
      %c0_12 = arith.constant 0 : index
      %13 = vector.load %arg10[%c0_11, %c0_12] : memref<16x32xf32, #tpu.memory_space<vmem>>, vector<16x32xf32>
      tpu.vector_store %arg10[%c0_11, %c0_12], %12 {strides = array<i32>} : memref<16x32xf32, #tpu.memory_space<vmem>>, vector<16x32xf32>,
    } else {
    }
    %c0 = arith.constant 0 : index
    %c0_1 = arith.constant 0 : index
    %3 = vector.load %arg10[%c0, %c0_1] : memref<16x32xf32, #tpu.memory_space<vmem>>, vector<16x32xf32>
    %c0_2 = arith.constant 0 : index
    %c0_3 = arith.constant 0 : index
    %4 = vector.load %arg3[%c0_2, %c0_3] : memref<16x64xbf16, #tpu.memory_space<vmem>>, vector<16x64xbf16>
    %c0_4 = arith.constant 0 : index
    %c0_5 = arith.constant 0 : index
    %5 = vector.load %arg4[%c0_4, %c0_5] : memref<64x32xbf16, #tpu.memory_space<vmem>>, vector<64x32xbf16>
    %cst = arith.constant dense<0.000000e+00> : vector<16x32xf32>
    %6 = tpu.matmul %4, %5, %cst {dimension_numbers = #tpu.dot_dimension_numbers<[1], [0], [0], [1], [0, 0, 1, 1], [], []>} : vector<16x64xbf16>, vector<64x32xbf16>, vector<16x32xf32> -> vector<16x32xf32>
    %7 = arith.addf %3, %6 : vector<16x32xf32>
    %c0_6 = arith.constant 0 : index
    %c0_7 = arith.constant 0 : index
    %8 = vector.load %arg10[%c0_6, %c0_7] : memref<16x32xf32, #tpu.memory_space<vmem>>, vector<16x32xf32>
    tpu.vector_store %arg10[%c0_6, %c0_7], %7 {strides = array<i32>} : memref<16x32xf32, #tpu.memory_space<vmem>>, vector<16x32xf32>,
    %c0_i32_8 = arith.constant 0 : i32
    %9 = arith.cmpi eq, %arg2, %c0_i32_8 : i32
    %10 = arith.extui %9 : i1 to i32
    %c0_i32_9 = arith.constant 0 : i32
    %11 = arith.cmpi ne, %10, %c0_i32_9 : i32
    scf.if %11 {
      %c0_10 = arith.constant 0 : index
      %c0_11 = arith.constant 0 : index
      %12 = vector.load %arg10[%c0_10, %c0_11] : memref<16x32xf32, #tpu.memory_space<vmem>>, vector<16x32xf32>
      %c0_12 = arith.constant 0 : index
      %c0_13 = arith.constant 0 : index
      %13 = vector.load %arg5[%c0_12, %c0_13] : memref<1x32xf32, #tpu.memory_space<vmem>>, vector<1x32xf32>
      %14 = vector.broadcast %13 : vector<1x32xf32> to vector<16x32xf32>
      %15 = arith.addf %12, %14 : vector<16x32xf32>
      %c0_14 = arith.constant 0 : index
      %c0_15 = arith.constant 0 : index
      %16 = vector.load %arg6[%c0_14, %c0_15] : memref<16x32xbf16, #tpu.memory_space<vmem>>, vector<16x32xbf16>
      %17 = arith.extf %16 : vector<16x32xbf16> to vector<16x32xf32>
      %18 = arith.addf %15, %17 : vector<16x32xf32>
      %cst_16 = arith.constant dense<0.000000e+00> : vector<16xf32>
      %19 = vector.multi_reduction <add>, %18, %cst_16 [1] : vector<16x32xf32> to vector<16xf32>
      %20 = vector.shape_cast %19 : vector<16xf32> to vector<16x1xf32>
      %cst_17 = arith.constant 3.200000e+01 : f32
      %21 = vector.broadcast %cst_17 : f32 to vector<16x1xf32>
      %22 = arith.divf %20, %21 : vector<16x1xf32>
      %23 = arith.mulf %18, %18 : vector<16x32xf32>
      %cst_18 = arith.constant dense<0.000000e+00> : vector<16xf32>
      %24 = vector.multi_reduction <add>, %23, %cst_18 [1] : vector<16x32xf32> to vector<16xf32>
      %25 = vector.shape_cast %24 : vector<16xf32> to vector<16x1xf32>
      %cst_19 = arith.constant 3.200000e+01 : f32
      %26 = vector.broadcast %cst_19 : f32 to vector<16x1xf32>
      %27 = arith.divf %25, %26 : vector<16x1xf32>
      %28 = arith.mulf %22, %22 : vector<16x1xf32>
      %29 = arith.subf %27, %28 : vector<16x1xf32>
      %30 = vector.broadcast %22 : vector<16x1xf32> to vector<16x32xf32>
      %31 = arith.subf %18, %30 : vector<16x32xf32>
      %cst_20 = arith.constant 9.99999974E-6 : f32
      %32 = vector.broadcast %cst_20 : f32 to vector<16x1xf32>
      %33 = arith.addf %29, %32 : vector<16x1xf32>
      %34 = math.rsqrt %33 : vector<16x1xf32>
      %35 = vector.broadcast %34 : vector<16x1xf32> to vector<16x32xf32>
      %36 = arith.mulf %31, %35 : vector<16x32xf32>
      %c0_21 = arith.constant 0 : index
      %c0_22 = arith.constant 0 : index
      %37 = vector.load %arg7[%c0_21, %c0_22] : memref<1x32xf32, #tpu.memory_space<vmem>>, vector<1x32xf32>
      %38 = vector.broadcast %37 : vector<1x32xf32> to vector<16x32xf32>
      %39 = arith.mulf %36, %38 : vector<16x32xf32>
      %c0_23 = arith.constant 0 : index
      %c0_24 = arith.constant 0 : index
      %40 = vector.load %arg8[%c0_23, %c0_24] : memref<1x32xf32, #tpu.memory_space<vmem>>, vector<1x32xf32>
      %41 = vector.broadcast %40 : vector<1x32xf32> to vector<16x32xf32>
      %42 = arith.addf %39, %41 : vector<16x32xf32>
      %43 = arith.truncf %42 : vector<16x32xf32> to vector<16x32xbf16>
      %c0_25 = arith.constant 0 : index
      %c0_26 = arith.constant 0 : index
      %44 = vector.load %arg9[%c0_25, %c0_26] : memref<16x32xbf16, #tpu.memory_space<vmem>>, vector<16x32xbf16>
      tpu.vector_store %arg9[%c0_25, %c0_26], %43 {strides = array<i32>} : memref<16x32xbf16, #tpu.memory_space<vmem>>, vector<16x32xbf16>,
    } else {
    }
    return
  }
  func.func @transform_0(%arg0: i32, %arg1: i32, %arg2: i32) -> (i32, i32) {
    %c0_i32 = arith.constant 0 : i32
    return %arg0, %arg2 : i32, i32
  }
  func.func @transform_1(%arg0: i32, %arg1: i32, %arg2: i32) -> (i32, i32) {
    %c0_i32 = arith.constant 0 : i32
    return %arg2, %arg1 : i32, i32
  }
  func.func @transform_2(%arg0: i32, %arg1: i32, %arg2: i32) -> (i32, i32) {
    %c0_i32 = arith.constant 0 : i32
    %c0_i32_0 = arith.constant 0 : i32
    return %c0_i32, %arg1 : i32, i32
  }
  func.func @transform_3(%arg0: i32, %arg1: i32, %arg2: i32) -> (i32, i32) {
    %c0_i32 = arith.constant 0 : i32
    return %arg0, %arg1 : i32, i32
  }
  func.func @transform_4(%arg0: i32, %arg1: i32, %arg2: i32) -> (i32, i32) {
    %c0_i32 = arith.constant 0 : i32
    %c0_i32_0 = arith.constant 0 : i32
    return %c0_i32, %arg1 : i32, i32
  }
  func.func @transform_5(%arg0: i32, %arg1: i32, %arg2: i32) -> (i32, i32) {
    %c0_i32 = arith.constant 0 : i32
    %c0_i32_0 = arith.constant 0 : i32
    return %c0_i32, %arg1 : i32, i32
  }
  func.func @transform_6(%arg0: i32, %arg1: i32, %arg2: i32) -> (i32, i32) {
    %c0_i32 = arith.constant 0 : i32
    return %arg0, %arg1 : i32, i32
  }
}

module attributes {stable_mosaic.version = 11 : i64} {
  func.func @_matmul_kernel(%arg0: i32, %arg1: i32, %arg2: i32, %arg3: memref<16x32xbf16, #tpu.memory_space<vmem>>, %arg4: memref<32x64xbf16, #tpu.memory_space<vmem>>, %arg5: memref<1x64xf32, #tpu.memory_space<vmem>>, %arg6: memref<16x64xbf16, #tpu.memory_space<vmem>>, %arg7: memref<16x64xf32, #tpu.memory_space<vmem>>) attributes {dimension_semantics = [#tpu.dimension_semantics<parallel>, #tpu.dimension_semantics<parallel>, #tpu.dimension_semantics<arbitrary>], iteration_bounds = array<i64: 1, 1, 1>, scalar_prefetch = 0 : i64, scratch_operands = 1 : i64, tpu.core_type = #tpu.core_type<tc>, window_params = [{transform_indices = @transform_0, window_bounds = array<i64: 16, 32>}, {transform_indices = @transform_1, window_bounds = array<i64: 32, 64>}, {transform_indices = @transform_2, window_bounds = array<i64: 1, 64>}, {transform_indices = @transform_3, window_bounds = array<i64: 16, 64>}]} {
    %c0_i32 = arith.constant 0 : i32
    %0 = arith.cmpi eq, %arg2, %c0_i32 : i32
    %1 = arith.extui %0 : i1 to i32
    %c0_i32_0 = arith.constant 0 : i32
    %2 = arith.cmpi ne, %1, %c0_i32_0 : i32
    scf.if %2 {
      %cst_10 = arith.constant 0.000000e+00 : f32
      %12 = vector.broadcast %cst_10 : f32 to vector<16x64xf32>
      %c0_11 = arith.constant 0 : index
      %c0_12 = arith.constant 0 : index
      %13 = vector.load %arg7[%c0_11, %c0_12] : memref<16x64xf32, #tpu.memory_space<vmem>>, vector<16x64xf32>
      tpu.vector_store %arg7[%c0_11, %c0_12], %12 {strides = array<i32>} : memref<16x64xf32, #tpu.memory_space<vmem>>, vector<16x64xf32>,
    } else {
    }
    %c0 = arith.constant 0 : index
    %c0_1 = arith.constant 0 : index
    %3 = vector.load %arg7[%c0, %c0_1] : memref<16x64xf32, #tpu.memory_space<vmem>>, vector<16x64xf32>
    %c0_2 = arith.constant 0 : index
    %c0_3 = arith.constant 0 : index
    %4 = vector.load %arg3[%c0_2, %c0_3] : memref<16x32xbf16, #tpu.memory_space<vmem>>, vector<16x32xbf16>
    %c0_4 = arith.constant 0 : index
    %c0_5 = arith.constant 0 : index
    %5 = vector.load %arg4[%c0_4, %c0_5] : memref<32x64xbf16, #tpu.memory_space<vmem>>, vector<32x64xbf16>
    %cst = arith.constant dense<0.000000e+00> : vector<16x64xf32>
    %6 = tpu.matmul %4, %5, %cst {dimension_numbers = #tpu.dot_dimension_numbers<[1], [0], [0], [1], [0, 0, 1, 1], [], []>} : vector<16x32xbf16>, vector<32x64xbf16>, vector<16x64xf32> -> vector<16x64xf32>
    %7 = arith.addf %3, %6 : vector<16x64xf32>
    %c0_6 = arith.constant 0 : index
    %c0_7 = arith.constant 0 : index
    %8 = vector.load %arg7[%c0_6, %c0_7] : memref<16x64xf32, #tpu.memory_space<vmem>>, vector<16x64xf32>
    tpu.vector_store %arg7[%c0_6, %c0_7], %7 {strides = array<i32>} : memref<16x64xf32, #tpu.memory_space<vmem>>, vector<16x64xf32>,
    %c0_i32_8 = arith.constant 0 : i32
    %9 = arith.cmpi eq, %arg2, %c0_i32_8 : i32
    %10 = arith.extui %9 : i1 to i32
    %c0_i32_9 = arith.constant 0 : i32
    %11 = arith.cmpi ne, %10, %c0_i32_9 : i32
    scf.if %11 {
      %c0_10 = arith.constant 0 : index
      %c0_11 = arith.constant 0 : index
      %12 = vector.load %arg7[%c0_10, %c0_11] : memref<16x64xf32, #tpu.memory_space<vmem>>, vector<16x64xf32>
      %c0_12 = arith.constant 0 : index
      %c0_13 = arith.constant 0 : index
      %13 = vector.load %arg5[%c0_12, %c0_13] : memref<1x64xf32, #tpu.memory_space<vmem>>, vector<1x64xf32>
      %14 = vector.broadcast %13 : vector<1x64xf32> to vector<16x64xf32>
      %15 = arith.addf %12, %14 : vector<16x64xf32>
      %cst_14 = arith.constant 0.000000e+00 : f32
      %16 = vector.broadcast %cst_14 : f32 to vector<16x64xf32>
      %17 = arith.maximumf %15, %16 : vector<16x64xf32>
      %18 = arith.truncf %17 : vector<16x64xf32> to vector<16x64xbf16>
      %c0_15 = arith.constant 0 : index
      %c0_16 = arith.constant 0 : index
      %19 = vector.load %arg6[%c0_15, %c0_16] : memref<16x64xbf16, #tpu.memory_space<vmem>>, vector<16x64xbf16>
      tpu.vector_store %arg6[%c0_15, %c0_16], %18 {strides = array<i32>} : memref<16x64xbf16, #tpu.memory_space<vmem>>, vector<16x64xbf16>,
    } else {
    }
    return
  }
  func.func @transform_0(%arg0: i32, %arg1: i32, %arg2: i32) -> (i32, i32) {
    %c0_i32 = arith.constant 0 : i32
    return %arg0, %arg2 : i32, i32
  }
  func.func @transform_1(%arg0: i32, %arg1: i32, %arg2: i32) -> (i32, i32) {
    %c0_i32 = arith.constant 0 : i32
    return %arg2, %arg1 : i32, i32
  }
  func.func @transform_2(%arg0: i32, %arg1: i32, %arg2: i32) -> (i32, i32) {
    %c0_i32 = arith.constant 0 : i32
    %c0_i32_0 = arith.constant 0 : i32
    return %c0_i32, %arg1 : i32, i32
  }
  func.func @transform_3(%arg0: i32, %arg1: i32, %arg2: i32) -> (i32, i32) {
    %c0_i32 = arith.constant 0 : i32
    return %arg0, %arg1 : i32, i32
  }
}

module attributes {stable_mosaic.version = 11 : i64} {
  func.func @_matmul_kernel(%arg0: i32, %arg1: i32, %arg2: i32, %arg3: memref<16x32xbf16, #tpu.memory_space<vmem>>, %arg4: memref<32x64xbf16, #tpu.memory_space<vmem>>, %arg5: memref<1x64xf32, #tpu.memory_space<vmem>>, %arg6: memref<16x64xbf16, #tpu.memory_space<vmem>>, %arg7: memref<16x64xf32, #tpu.memory_space<vmem>>) attributes {dimension_semantics = [#tpu.dimension_semantics<parallel>, #tpu.dimension_semantics<parallel>, #tpu.dimension_semantics<arbitrary>], iteration_bounds = array<i64: 1, 1, 1>, scalar_prefetch = 0 : i64, scratch_operands = 1 : i64, tpu.core_type = #tpu.core_type<tc>, window_params = [{transform_indices = @transform_0, window_bounds = array<i64: 16, 32>}, {transform_indices = @transform_1, window_bounds = array<i64: 32, 64>}, {transform_indices = @transform_2, window_bounds = array<i64: 1, 64>}, {transform_indices = @transform_3, window_bounds = array<i64: 16, 64>}]} {
    %c0_i32 = arith.constant 0 : i32
    %0 = arith.cmpi eq, %arg2, %c0_i32 : i32
    %1 = arith.extui %0 : i1 to i32
    %c0_i32_0 = arith.constant 0 : i32
    %2 = arith.cmpi ne, %1, %c0_i32_0 : i32
    scf.if %2 {
      %cst_10 = arith.constant 0.000000e+00 : f32
      %12 = vector.broadcast %cst_10 : f32 to vector<16x64xf32>
      %c0_11 = arith.constant 0 : index
      %c0_12 = arith.constant 0 : index
      %13 = vector.load %arg7[%c0_11, %c0_12] : memref<16x64xf32, #tpu.memory_space<vmem>>, vector<16x64xf32>
      tpu.vector_store %arg7[%c0_11, %c0_12], %12 {strides = array<i32>} : memref<16x64xf32, #tpu.memory_space<vmem>>, vector<16x64xf32>,
    } else {
    }
    %c0 = arith.constant 0 : index
    %c0_1 = arith.constant 0 : index
    %3 = vector.load %arg7[%c0, %c0_1] : memref<16x64xf32, #tpu.memory_space<vmem>>, vector<16x64xf32>
    %c0_2 = arith.constant 0 : index
    %c0_3 = arith.constant 0 : index
    %4 = vector.load %arg3[%c0_2, %c0_3] : memref<16x32xbf16, #tpu.memory_space<vmem>>, vector<16x32xbf16>
    %c0_4 = arith.constant 0 : index
    %c0_5 = arith.constant 0 : index
    %5 = vector.load %arg4[%c0_4, %c0_5] : memref<32x64xbf16, #tpu.memory_space<vmem>>, vector<32x64xbf16>
    %cst = arith.constant dense<0.000000e+00> : vector<16x64xf32>
    %6 = tpu.matmul %4, %5, %cst {dimension_numbers = #tpu.dot_dimension_numbers<[1], [0], [0], [1], [0, 0, 1, 1], [], []>} : vector<16x32xbf16>, vector<32x64xbf16>, vector<16x64xf32> -> vector<16x64xf32>
    %7 = arith.addf %3, %6 : vector<16x64xf32>
    %c0_6 = arith.constant 0 : index
    %c0_7 = arith.constant 0 : index
    %8 = vector.load %arg7[%c0_6, %c0_7] : memref<16x64xf32, #tpu.memory_space<vmem>>, vector<16x64xf32>
    tpu.vector_store %arg7[%c0_6, %c0_7], %7 {strides = array<i32>} : memref<16x64xf32, #tpu.memory_space<vmem>>, vector<16x64xf32>,
    %c0_i32_8 = arith.constant 0 : i32
    %9 = arith.cmpi eq, %arg2, %c0_i32_8 : i32
    %10 = arith.extui %9 : i1 to i32
    %c0_i32_9 = arith.constant 0 : i32
    %11 = arith.cmpi ne, %10, %c0_i32_9 : i32
    scf.if %11 {
      %c0_10 = arith.constant 0 : index
      %c0_11 = arith.constant 0 : index
      %12 = vector.load %arg7[%c0_10, %c0_11] : memref<16x64xf32, #tpu.memory_space<vmem>>, vector<16x64xf32>
      %c0_12 = arith.constant 0 : index
      %c0_13 = arith.constant 0 : index
      %13 = vector.load %arg5[%c0_12, %c0_13] : memref<1x64xf32, #tpu.memory_space<vmem>>, vector<1x64xf32>
      %14 = vector.broadcast %13 : vector<1x64xf32> to vector<16x64xf32>
      %15 = arith.addf %12, %14 : vector<16x64xf32>
      %16 = arith.truncf %15 : vector<16x64xf32> to vector<16x64xbf16>
      %c0_14 = arith.constant 0 : index
      %c0_15 = arith.constant 0 : index
      %17 = vector.load %arg6[%c0_14, %c0_15] : memref<16x64xbf16, #tpu.memory_space<vmem>>, vector<16x64xbf16>
      tpu.vector_store %arg6[%c0_14, %c0_15], %16 {strides = array<i32>} : memref<16x64xbf16, #tpu.memory_space<vmem>>, vector<16x64xbf16>,
    } else {
    }
    return
  }
  func.func @transform_0(%arg0: i32, %arg1: i32, %arg2: i32) -> (i32, i32) {
    %c0_i32 = arith.constant 0 : i32
    return %arg0, %arg2 : i32, i32
  }
  func.func @transform_1(%arg0: i32, %arg1: i32, %arg2: i32) -> (i32, i32) {
    %c0_i32 = arith.constant 0 : i32
    return %arg2, %arg1 : i32, i32
  }
  func.func @transform_2(%arg0: i32, %arg1: i32, %arg2: i32) -> (i32, i32) {
    %c0_i32 = arith.constant 0 : i32
    %c0_i32_0 = arith.constant 0 : i32
    return %c0_i32, %arg1 : i32, i32
  }
  func.func @transform_3(%arg0: i32, %arg1: i32, %arg2: i32) -> (i32, i32) {
    %c0_i32 = arith.constant 0 : i32
    return %arg0, %arg1 : i32, i32
  }
}

module attributes {stable_mosaic.version = 11 : i64} {
  func.func @_matmul_kernel(%arg0: i32, %arg1: i32, %arg2: i32, %arg3: memref<16x32xbf16, #tpu.memory_space<vmem>>, %arg4: memref<32x128xbf16, #tpu.memory_space<vmem>>, %arg5: memref<1x128xf32, #tpu.memory_space<vmem>>, %arg6: memref<16x128xf32, #tpu.memory_space<vmem>>, %arg7: memref<16x128xf32, #tpu.memory_space<vmem>>) attributes {dimension_semantics = [#tpu.dimension_semantics<parallel>, #tpu.dimension_semantics<parallel>, #tpu.dimension_semantics<arbitrary>], iteration_bounds = array<i64: 1, 1, 1>, scalar_prefetch = 0 : i64, scratch_operands = 1 : i64, tpu.core_type = #tpu.core_type<tc>, window_params = [{transform_indices = @transform_0, window_bounds = array<i64: 16, 32>}, {transform_indices = @transform_1, window_bounds = array<i64: 32, 128>}, {transform_indices = @transform_2, window_bounds = array<i64: 1, 128>}, {transform_indices = @transform_3, window_bounds = array<i64: 16, 128>}]} {
    %c0_i32 = arith.constant 0 : i32
    %0 = arith.cmpi eq, %arg2, %c0_i32 : i32
    %1 = arith.extui %0 : i1 to i32
    %c0_i32_0 = arith.constant 0 : i32
    %2 = arith.cmpi ne, %1, %c0_i32_0 : i32
    scf.if %2 {
      %cst_10 = arith.constant 0.000000e+00 : f32
      %12 = vector.broadcast %cst_10 : f32 to vector<16x128xf32>
      %c0_11 = arith.constant 0 : index
      %c0_12 = arith.constant 0 : index
      %13 = vector.load %arg7[%c0_11, %c0_12] : memref<16x128xf32, #tpu.memory_space<vmem>>, vector<16x128xf32>
      tpu.vector_store %arg7[%c0_11, %c0_12], %12 {strides = array<i32>} : memref<16x128xf32, #tpu.memory_space<vmem>>, vector<16x128xf32>,
    } else {
    }
    %c0 = arith.constant 0 : index
    %c0_1 = arith.constant 0 : index
    %3 = vector.load %arg7[%c0, %c0_1] : memref<16x128xf32, #tpu.memory_space<vmem>>, vector<16x128xf32>
    %c0_2 = arith.constant 0 : index
    %c0_3 = arith.constant 0 : index
    %4 = vector.load %arg3[%c0_2, %c0_3] : memref<16x32xbf16, #tpu.memory_space<vmem>>, vector<16x32xbf16>
    %c0_4 = arith.constant 0 : index
    %c0_5 = arith.constant 0 : index
    %5 = vector.load %arg4[%c0_4, %c0_5] : memref<32x128xbf16, #tpu.memory_space<vmem>>, vector<32x128xbf16>
    %cst = arith.constant dense<0.000000e+00> : vector<16x128xf32>
    %6 = tpu.matmul %4, %5, %cst {dimension_numbers = #tpu.dot_dimension_numbers<[1], [0], [0], [1], [0, 0, 1, 1], [], []>} : vector<16x32xbf16>, vector<32x128xbf16>, vector<16x128xf32> -> vector<16x128xf32>
    %7 = arith.addf %3, %6 : vector<16x128xf32>
    %c0_6 = arith.constant 0 : index
    %c0_7 = arith.constant 0 : index
    %8 = vector.load %arg7[%c0_6, %c0_7] : memref<16x128xf32, #tpu.memory_space<vmem>>, vector<16x128xf32>
    tpu.vector_store %arg7[%c0_6, %c0_7], %7 {strides = array<i32>} : memref<16x128xf32, #tpu.memory_space<vmem>>, vector<16x128xf32>,
    %c0_i32_8 = arith.constant 0 : i32
    %9 = arith.cmpi eq, %arg2, %c0_i32_8 : i32
    %10 = arith.extui %9 : i1 to i32
    %c0_i32_9 = arith.constant 0 : i32
    %11 = arith.cmpi ne, %10, %c0_i32_9 : i32
    scf.if %11 {
      %c0_10 = arith.constant 0 : index
      %c0_11 = arith.constant 0 : index
      %12 = vector.load %arg7[%c0_10, %c0_11] : memref<16x128xf32, #tpu.memory_space<vmem>>, vector<16x128xf32>
      %c0_12 = arith.constant 0 : index
      %c0_13 = arith.constant 0 : index
      %13 = vector.load %arg5[%c0_12, %c0_13] : memref<1x128xf32, #tpu.memory_space<vmem>>, vector<1x128xf32>
      %14 = vector.broadcast %13 : vector<1x128xf32> to vector<16x128xf32>
      %15 = arith.addf %12, %14 : vector<16x128xf32>
      %c0_14 = arith.constant 0 : index
      %c0_15 = arith.constant 0 : index
      %16 = vector.load %arg6[%c0_14, %c0_15] : memref<16x128xf32, #tpu.memory_space<vmem>>, vector<16x128xf32>
      tpu.vector_store %arg6[%c0_14, %c0_15], %15 {strides = array<i32>} : memref<16x128xf32, #tpu.memory_space<vmem>>, vector<16x128xf32>,
    } else {
    }
    return
  }
  func.func @transform_0(%arg0: i32, %arg1: i32, %arg2: i32) -> (i32, i32) {
    %c0_i32 = arith.constant 0 : i32
    return %arg0, %arg2 : i32, i32
  }
  func.func @transform_1(%arg0: i32, %arg1: i32, %arg2: i32) -> (i32, i32) {
    %c0_i32 = arith.constant 0 : i32
    return %arg2, %arg1 : i32, i32
  }
  func.func @transform_2(%arg0: i32, %arg1: i32, %arg2: i32) -> (i32, i32) {
    %c0_i32 = arith.constant 0 : i32
    %c0_i32_0 = arith.constant 0 : i32
    return %c0_i32, %arg1 : i32, i32
  }
  func.func @transform_3(%arg0: i32, %arg1: i32, %arg2: i32) -> (i32, i32) {
    %c0_i32 = arith.constant 0 : i32
    return %arg0, %arg1 : i32, i32
  }
}

module attributes {stable_mosaic.version = 11 : i64} {
  func.func @_cross_attn_kernel(%arg0: i32, %arg1: memref<1x8x32xbf16, #tpu.memory_space<vmem>>, %arg2: memref<1x8x64xbf16, #tpu.memory_space<vmem>>, %arg3: memref<1x1x8xf32, #tpu.memory_space<vmem>>, %arg4: memref<1x8x32xbf16, #tpu.memory_space<vmem>>, %arg5: memref<32x32xbf16, #tpu.memory_space<vmem>>, %arg6: memref<1x32xf32, #tpu.memory_space<vmem>>, %arg7: memref<1x32xf32, #tpu.memory_space<vmem>>, %arg8: memref<1x32xf32, #tpu.memory_space<vmem>>, %arg9: memref<1x8x32xbf16, #tpu.memory_space<vmem>>) attributes {dimension_semantics = [#tpu.dimension_semantics<parallel>], iteration_bounds = array<i64: 2>, scalar_prefetch = 0 : i64, scratch_operands = 0 : i64, tpu.core_type = #tpu.core_type<tc>, window_params = [{transform_indices = @transform_0, window_bounds = array<i64: 1, 8, 32>}, {transform_indices = @transform_1, window_bounds = array<i64: 1, 8, 64>}, {transform_indices = @transform_2, window_bounds = array<i64: 1, 1, 8>}, {transform_indices = @transform_3, window_bounds = array<i64: 1, 8, 32>}, {pipeline_mode = #tpu.pipeline_mode<synchronous>, transform_indices = @transform_4, window_bounds = array<i64: 32, 32>}, {pipeline_mode = #tpu.pipeline_mode<synchronous>, transform_indices = @transform_5, window_bounds = array<i64: 1, 32>}, {pipeline_mode = #tpu.pipeline_mode<synchronous>, transform_indices = @transform_6, window_bounds = array<i64: 1, 32>}, {pipeline_mode = #tpu.pipeline_mode<synchronous>, transform_indices = @transform_7, window_bounds = array<i64: 1, 32>}, {transform_indices = @transform_8, window_bounds = array<i64: 1, 8, 32>}]} {
    %c0 = arith.constant 0 : index
    %c0_0 = arith.constant 0 : index
    %c0_1 = arith.constant 0 : index
    %0 = vector.load %arg3[%c0, %c0_0, %c0_1] : memref<1x1x8xf32, #tpu.memory_space<vmem>>, vector<1x1x8xf32>
    %1 = vector.shape_cast %0 : vector<1x1x8xf32> to vector<1x8xf32>
    %cst = arith.constant 0.000000e+00 : f32
    %2 = vector.broadcast %cst : f32 to vector<8x32xf32>
    %c0_2 = arith.constant 0 : index
    %c0_3 = arith.constant 0 : index
    %c0_4 = arith.constant 0 : index
    %3 = vector.load %arg1[%c0_2, %c0_3, %c0_4] : memref<1x8x32xbf16, #tpu.memory_space<vmem>>, vector<1x8x8xbf16>
    %4 = vector.shape_cast %3 : vector<1x8x8xbf16> to vector<8x8xbf16>
    %c0_5 = arith.constant 0 : index
    %c0_6 = arith.constant 0 : index
    %c0_7 = arith.constant 0 : index
    %5 = vector.load %arg2[%c0_5, %c0_6, %c0_7] : memref<1x8x64xbf16, #tpu.memory_space<vmem>>, vector<1x8x8xbf16>
    %6 = vector.shape_cast %5 : vector<1x8x8xbf16> to vector<8x8xbf16>
    %c0_8 = arith.constant 0 : index
    %c0_9 = arith.constant 0 : index
    %c32 = arith.constant 32 : index
    %7 = vector.load %arg2[%c0_8, %c0_9, %c32] : memref<1x8x64xbf16, #tpu.memory_space<vmem>>, vector<1x8x8xbf16>
    %8 = vector.shape_cast %7 : vector<1x8x8xbf16> to vector<8x8xbf16>
    %cst_10 = arith.constant dense<0.000000e+00> : vector<8x8xf32>
    %9 = tpu.matmul %4, %6, %cst_10 {dimension_numbers = #tpu.dot_dimension_numbers<[1], [1], [0], [0], [0, 0, 1, 0], [], []>} : vector<8x8xbf16>, vector<8x8xbf16>, vector<8x8xf32> -> vector<8x8xf32>
    %10 = vector.broadcast %1 : vector<1x8xf32> to vector<8x8xf32>
    %11 = arith.addf %9, %10 : vector<8x8xf32>
    %cst_11 = arith.constant dense<0xFF800000> : vector<8xf32>
    %12 = vector.multi_reduction <maximumf>, %11, %cst_11 [1] : vector<8x8xf32> to vector<8xf32>
    %13 = vector.shape_cast %12 : vector<8xf32> to vector<8x1xf32>
    %14 = vector.broadcast %13 : vector<8x1xf32> to vector<8x8xf32>
    %15 = arith.subf %11, %14 : vector<8x8xf32>
    %16 = math.exp %15 : vector<8x8xf32>
    %cst_12 = arith.constant dense<0.000000e+00> : vector<8xf32>
    %17 = vector.multi_reduction <add>, %16, %cst_12 [1] : vector<8x8xf32> to vector<8xf32>
    %18 = vector.shape_cast %17 : vector<8xf32> to vector<8x1xf32>
    %19 = tpu.reciprocal %18 {approx = true} : vector<8x1xf32> -> vector<8x1xf32>
    %20 = vector.broadcast %19 : vector<8x1xf32> to vector<8x8xf32>
    %21 = arith.mulf %16, %20 : vector<8x8xf32>
    %22 = arith.truncf %21 : vector<8x8xf32> to vector<8x8xbf16>
    %cst_13 = arith.constant dense<0.000000e+00> : vector<8x8xf32>
    %23 = tpu.matmul %22, %8, %cst_13 {dimension_numbers = #tpu.dot_dimension_numbers<[1], [0], [0], [1], [0, 0, 1, 1], [], []>} : vector<8x8xbf16>, vector<8x8xbf16>, vector<8x8xf32> -> vector<8x8xf32>
    %24 = arith.truncf %23 : vector<8x8xf32> to vector<8x8xbf16>
    %c0_14 = arith.constant 0 : index
    %c0_15 = arith.constant 0 : index
    %25 = vector.load %arg5[%c0_14, %c0_15] : memref<32x32xbf16, #tpu.memory_space<vmem>>, vector<8x32xbf16>
    %cst_16 = arith.constant dense<0.000000e+00> : vector<8x32xf32>
    %26 = tpu.matmul %24, %25, %cst_16 {dimension_numbers = #tpu.dot_dimension_numbers<[1], [0], [0], [1], [0, 0, 1, 1], [], []>} : vector<8x8xbf16>, vector<8x32xbf16>, vector<8x32xf32> -> vector<8x32xf32>
    %27 = arith.addf %2, %26 : vector<8x32xf32>
    %c0_17 = arith.constant 0 : index
    %c0_18 = arith.constant 0 : index
    %c8 = arith.constant 8 : index
    %28 = vector.load %arg1[%c0_17, %c0_18, %c8] : memref<1x8x32xbf16, #tpu.memory_space<vmem>>, vector<1x8x8xbf16>
    %29 = vector.shape_cast %28 : vector<1x8x8xbf16> to vector<8x8xbf16>
    %c0_19 = arith.constant 0 : index
    %c0_20 = arith.constant 0 : index
    %c8_21 = arith.constant 8 : index
    %30 = vector.load %arg2[%c0_19, %c0_20, %c8_21] : memref<1x8x64xbf16, #tpu.memory_space<vmem>>, vector<1x8x8xbf16>
    %31 = vector.shape_cast %30 : vector<1x8x8xbf16> to vector<8x8xbf16>
    %c0_22 = arith.constant 0 : index
    %c0_23 = arith.constant 0 : index
    %c40 = arith.constant 40 : index
    %32 = vector.load %arg2[%c0_22, %c0_23, %c40] : memref<1x8x64xbf16, #tpu.memory_space<vmem>>, vector<1x8x8xbf16>
    %33 = vector.shape_cast %32 : vector<1x8x8xbf16> to vector<8x8xbf16>
    %cst_24 = arith.constant dense<0.000000e+00> : vector<8x8xf32>
    %34 = tpu.matmul %29, %31, %cst_24 {dimension_numbers = #tpu.dot_dimension_numbers<[1], [1], [0], [0], [0, 0, 1, 0], [], []>} : vector<8x8xbf16>, vector<8x8xbf16>, vector<8x8xf32> -> vector<8x8xf32>
    %35 = vector.broadcast %1 : vector<1x8xf32> to vector<8x8xf32>
    %36 = arith.addf %34, %35 : vector<8x8xf32>
    %cst_25 = arith.constant dense<0xFF800000> : vector<8xf32>
    %37 = vector.multi_reduction <maximumf>, %36, %cst_25 [1] : vector<8x8xf32> to vector<8xf32>
    %38 = vector.shape_cast %37 : vector<8xf32> to vector<8x1xf32>
    %39 = vector.broadcast %38 : vector<8x1xf32> to vector<8x8xf32>
    %40 = arith.subf %36, %39 : vector<8x8xf32>
    %41 = math.exp %40 : vector<8x8xf32>
    %cst_26 = arith.constant dense<0.000000e+00> : vector<8xf32>
    %42 = vector.multi_reduction <add>, %41, %cst_26 [1] : vector<8x8xf32> to vector<8xf32>
    %43 = vector.shape_cast %42 : vector<8xf32> to vector<8x1xf32>
    %44 = tpu.reciprocal %43 {approx = true} : vector<8x1xf32> -> vector<8x1xf32>
    %45 = vector.broadcast %44 : vector<8x1xf32> to vector<8x8xf32>
    %46 = arith.mulf %41, %45 : vector<8x8xf32>
    %47 = arith.truncf %46 : vector<8x8xf32> to vector<8x8xbf16>
    %cst_27 = arith.constant dense<0.000000e+00> : vector<8x8xf32>
    %48 = tpu.matmul %47, %33, %cst_27 {dimension_numbers = #tpu.dot_dimension_numbers<[1], [0], [0], [1], [0, 0, 1, 1], [], []>} : vector<8x8xbf16>, vector<8x8xbf16>, vector<8x8xf32> -> vector<8x8xf32>
    %49 = arith.truncf %48 : vector<8x8xf32> to vector<8x8xbf16>
    %c8_28 = arith.constant 8 : index
    %c0_29 = arith.constant 0 : index
    %50 = vector.load %arg5[%c8_28, %c0_29] : memref<32x32xbf16, #tpu.memory_space<vmem>>, vector<8x32xbf16>
    %cst_30 = arith.constant dense<0.000000e+00> : vector<8x32xf32>
    %51 = tpu.matmul %49, %50, %cst_30 {dimension_numbers = #tpu.dot_dimension_numbers<[1], [0], [0], [1], [0, 0, 1, 1], [], []>} : vector<8x8xbf16>, vector<8x32xbf16>, vector<8x32xf32> -> vector<8x32xf32>
    %52 = arith.addf %27, %51 : vector<8x32xf32>
    %c0_31 = arith.constant 0 : index
    %c0_32 = arith.constant 0 : index
    %c16 = arith.constant 16 : index
    %53 = vector.load %arg1[%c0_31, %c0_32, %c16] : memref<1x8x32xbf16, #tpu.memory_space<vmem>>, vector<1x8x8xbf16>
    %54 = vector.shape_cast %53 : vector<1x8x8xbf16> to vector<8x8xbf16>
    %c0_33 = arith.constant 0 : index
    %c0_34 = arith.constant 0 : index
    %c16_35 = arith.constant 16 : index
    %55 = vector.load %arg2[%c0_33, %c0_34, %c16_35] : memref<1x8x64xbf16, #tpu.memory_space<vmem>>, vector<1x8x8xbf16>
    %56 = vector.shape_cast %55 : vector<1x8x8xbf16> to vector<8x8xbf16>
    %c0_36 = arith.constant 0 : index
    %c0_37 = arith.constant 0 : index
    %c48 = arith.constant 48 : index
    %57 = vector.load %arg2[%c0_36, %c0_37, %c48] : memref<1x8x64xbf16, #tpu.memory_space<vmem>>, vector<1x8x8xbf16>
    %58 = vector.shape_cast %57 : vector<1x8x8xbf16> to vector<8x8xbf16>
    %cst_38 = arith.constant dense<0.000000e+00> : vector<8x8xf32>
    %59 = tpu.matmul %54, %56, %cst_38 {dimension_numbers = #tpu.dot_dimension_numbers<[1], [1], [0], [0], [0, 0, 1, 0], [], []>} : vector<8x8xbf16>, vector<8x8xbf16>, vector<8x8xf32> -> vector<8x8xf32>
    %60 = vector.broadcast %1 : vector<1x8xf32> to vector<8x8xf32>
    %61 = arith.addf %59, %60 : vector<8x8xf32>
    %cst_39 = arith.constant dense<0xFF800000> : vector<8xf32>
    %62 = vector.multi_reduction <maximumf>, %61, %cst_39 [1] : vector<8x8xf32> to vector<8xf32>
    %63 = vector.shape_cast %62 : vector<8xf32> to vector<8x1xf32>
    %64 = vector.broadcast %63 : vector<8x1xf32> to vector<8x8xf32>
    %65 = arith.subf %61, %64 : vector<8x8xf32>
    %66 = math.exp %65 : vector<8x8xf32>
    %cst_40 = arith.constant dense<0.000000e+00> : vector<8xf32>
    %67 = vector.multi_reduction <add>, %66, %cst_40 [1] : vector<8x8xf32> to vector<8xf32>
    %68 = vector.shape_cast %67 : vector<8xf32> to vector<8x1xf32>
    %69 = tpu.reciprocal %68 {approx = true} : vector<8x1xf32> -> vector<8x1xf32>
    %70 = vector.broadcast %69 : vector<8x1xf32> to vector<8x8xf32>
    %71 = arith.mulf %66, %70 : vector<8x8xf32>
    %72 = arith.truncf %71 : vector<8x8xf32> to vector<8x8xbf16>
    %cst_41 = arith.constant dense<0.000000e+00> : vector<8x8xf32>
    %73 = tpu.matmul %72, %58, %cst_41 {dimension_numbers = #tpu.dot_dimension_numbers<[1], [0], [0], [1], [0, 0, 1, 1], [], []>} : vector<8x8xbf16>, vector<8x8xbf16>, vector<8x8xf32> -> vector<8x8xf32>
    %74 = arith.truncf %73 : vector<8x8xf32> to vector<8x8xbf16>
    %c16_42 = arith.constant 16 : index
    %c0_43 = arith.constant 0 : index
    %75 = vector.load %arg5[%c16_42, %c0_43] : memref<32x32xbf16, #tpu.memory_space<vmem>>, vector<8x32xbf16>
    %cst_44 = arith.constant dense<0.000000e+00> : vector<8x32xf32>
    %76 = tpu.matmul %74, %75, %cst_44 {dimension_numbers = #tpu.dot_dimension_numbers<[1], [0], [0], [1], [0, 0, 1, 1], [], []>} : vector<8x8xbf16>, vector<8x32xbf16>, vector<8x32xf32> -> vector<8x32xf32>
    %77 = arith.addf %52, %76 : vector<8x32xf32>
    %c0_45 = arith.constant 0 : index
    %c0_46 = arith.constant 0 : index
    %c24 = arith.constant 24 : index
    %78 = vector.load %arg1[%c0_45, %c0_46, %c24] : memref<1x8x32xbf16, #tpu.memory_space<vmem>>, vector<1x8x8xbf16>
    %79 = vector.shape_cast %78 : vector<1x8x8xbf16> to vector<8x8xbf16>
    %c0_47 = arith.constant 0 : index
    %c0_48 = arith.constant 0 : index
    %c24_49 = arith.constant 24 : index
    %80 = vector.load %arg2[%c0_47, %c0_48, %c24_49] : memref<1x8x64xbf16, #tpu.memory_space<vmem>>, vector<1x8x8xbf16>
    %81 = vector.shape_cast %80 : vector<1x8x8xbf16> to vector<8x8xbf16>
    %c0_50 = arith.constant 0 : index
    %c0_51 = arith.constant 0 : index
    %c56 = arith.constant 56 : index
    %82 = vector.load %arg2[%c0_50, %c0_51, %c56] : memref<1x8x64xbf16, #tpu.memory_space<vmem>>, vector<1x8x8xbf16>
    %83 = vector.shape_cast %82 : vector<1x8x8xbf16> to vector<8x8xbf16>
    %cst_52 = arith.constant dense<0.000000e+00> : vector<8x8xf32>
    %84 = tpu.matmul %79, %81, %cst_52 {dimension_numbers = #tpu.dot_dimension_numbers<[1], [1], [0], [0], [0, 0, 1, 0], [], []>} : vector<8x8xbf16>, vector<8x8xbf16>, vector<8x8xf32> -> vector<8x8xf32>
    %85 = vector.broadcast %1 : vector<1x8xf32> to vector<8x8xf32>
    %86 = arith.addf %84, %85 : vector<8x8xf32>
    %cst_53 = arith.constant dense<0xFF800000> : vector<8xf32>
    %87 = vector.multi_reduction <maximumf>, %86, %cst_53 [1] : vector<8x8xf32> to vector<8xf32>
    %88 = vector.shape_cast %87 : vector<8xf32> to vector<8x1xf32>
    %89 = vector.broadcast %88 : vector<8x1xf32> to vector<8x8xf32>
    %90 = arith.subf %86, %89 : vector<8x8xf32>
    %91 = math.exp %90 : vector<8x8xf32>
    %cst_54 = arith.constant dense<0.000000e+00> : vector<8xf32>
    %92 = vector.multi_reduction <add>, %91, %cst_54 [1] : vector<8x8xf32> to vector<8xf32>
    %93 = vector.shape_cast %92 : vector<8xf32> to vector<8x1xf32>
    %94 = tpu.reciprocal %93 {approx = true} : vector<8x1xf32> -> vector<8x1xf32>
    %95 = vector.broadcast %94 : vector<8x1xf32> to vector<8x8xf32>
    %96 = arith.mulf %91, %95 : vector<8x8xf32>
    %97 = arith.truncf %96 : vector<8x8xf32> to vector<8x8xbf16>
    %cst_55 = arith.constant dense<0.000000e+00> : vector<8x8xf32>
    %98 = tpu.matmul %97, %83, %cst_55 {dimension_numbers = #tpu.dot_dimension_numbers<[1], [0], [0], [1], [0, 0, 1, 1], [], []>} : vector<8x8xbf16>, vector<8x8xbf16>, vector<8x8xf32> -> vector<8x8xf32>
    %99 = arith.truncf %98 : vector<8x8xf32> to vector<8x8xbf16>
    %c24_56 = arith.constant 24 : index
    %c0_57 = arith.constant 0 : index
    %100 = vector.load %arg5[%c24_56, %c0_57] : memref<32x32xbf16, #tpu.memory_space<vmem>>, vector<8x32xbf16>
    %cst_58 = arith.constant dense<0.000000e+00> : vector<8x32xf32>
    %101 = tpu.matmul %99, %100, %cst_58 {dimension_numbers = #tpu.dot_dimension_numbers<[1], [0], [0], [1], [0, 0, 1, 1], [], []>} : vector<8x8xbf16>, vector<8x32xbf16>, vector<8x32xf32> -> vector<8x32xf32>
    %102 = arith.addf %77, %101 : vector<8x32xf32>
    %c0_59 = arith.constant 0 : index
    %c0_60 = arith.constant 0 : index
    %103 = vector.load %arg6[%c0_59, %c0_60] : memref<1x32xf32, #tpu.memory_space<vmem>>, vector<1x32xf32>
    %104 = vector.broadcast %103 : vector<1x32xf32> to vector<8x32xf32>
    %105 = arith.addf %102, %104 : vector<8x32xf32>
    %c0_61 = arith.constant 0 : index
    %c0_62 = arith.constant 0 : index
    %c0_63 = arith.constant 0 : index
    %106 = vector.load %arg4[%c0_61, %c0_62, %c0_63] : memref<1x8x32xbf16, #tpu.memory_space<vmem>>, vector<1x8x32xbf16>
    %107 = vector.shape_cast %106 : vector<1x8x32xbf16> to vector<8x32xbf16>
    %108 = arith.extf %107 : vector<8x32xbf16> to vector<8x32xf32>
    %109 = arith.addf %105, %108 : vector<8x32xf32>
    %cst_64 = arith.constant dense<0.000000e+00> : vector<8xf32>
    %110 = vector.multi_reduction <add>, %109, %cst_64 [1] : vector<8x32xf32> to vector<8xf32>
    %111 = vector.shape_cast %110 : vector<8xf32> to vector<8x1xf32>
    %cst_65 = arith.constant 3.200000e+01 : f32
    %112 = vector.broadcast %cst_65 : f32 to vector<8x1xf32>
    %113 = arith.divf %111, %112 : vector<8x1xf32>
    %114 = arith.mulf %109, %109 : vector<8x32xf32>
    %cst_66 = arith.constant dense<0.000000e+00> : vector<8xf32>
    %115 = vector.multi_reduction <add>, %114, %cst_66 [1] : vector<8x32xf32> to vector<8xf32>
    %116 = vector.shape_cast %115 : vector<8xf32> to vector<8x1xf32>
    %cst_67 = arith.constant 3.200000e+01 : f32
    %117 = vector.broadcast %cst_67 : f32 to vector<8x1xf32>
    %118 = arith.divf %116, %117 : vector<8x1xf32>
    %119 = arith.mulf %113, %113 : vector<8x1xf32>
    %120 = arith.subf %118, %119 : vector<8x1xf32>
    %121 = vector.broadcast %113 : vector<8x1xf32> to vector<8x32xf32>
    %122 = arith.subf %109, %121 : vector<8x32xf32>
    %cst_68 = arith.constant 9.99999974E-6 : f32
    %123 = vector.broadcast %cst_68 : f32 to vector<8x1xf32>
    %124 = arith.addf %120, %123 : vector<8x1xf32>
    %125 = math.rsqrt %124 : vector<8x1xf32>
    %126 = vector.broadcast %125 : vector<8x1xf32> to vector<8x32xf32>
    %127 = arith.mulf %122, %126 : vector<8x32xf32>
    %c0_69 = arith.constant 0 : index
    %c0_70 = arith.constant 0 : index
    %128 = vector.load %arg7[%c0_69, %c0_70] : memref<1x32xf32, #tpu.memory_space<vmem>>, vector<1x32xf32>
    %129 = vector.broadcast %128 : vector<1x32xf32> to vector<8x32xf32>
    %130 = arith.mulf %127, %129 : vector<8x32xf32>
    %c0_71 = arith.constant 0 : index
    %c0_72 = arith.constant 0 : index
    %131 = vector.load %arg8[%c0_71, %c0_72] : memref<1x32xf32, #tpu.memory_space<vmem>>, vector<1x32xf32>
    %132 = vector.broadcast %131 : vector<1x32xf32> to vector<8x32xf32>
    %133 = arith.addf %130, %132 : vector<8x32xf32>
    %134 = arith.truncf %133 : vector<8x32xf32> to vector<8x32xbf16>
    %c0_73 = arith.constant 0 : index
    %c0_74 = arith.constant 0 : index
    %c0_75 = arith.constant 0 : index
    %135 = vector.load %arg9[%c0_73, %c0_74, %c0_75] : memref<1x8x32xbf16, #tpu.memory_space<vmem>>, vector<1x8x32xbf16>
    %136 = vector.shape_cast %135 : vector<1x8x32xbf16> to vector<8x32xbf16>
    %137 = vector.shape_cast %134 : vector<8x32xbf16> to vector<1x8x32xbf16>
    tpu.vector_store %arg9[%c0_73, %c0_74, %c0_75], %137 {strides = array<i32>} : memref<1x8x32xbf16, #tpu.memory_space<vmem>>, vector<1x8x32xbf16>,
    return
  }
  func.func @transform_0(%arg0: i32) -> (i32, i32, i32) {
    %c0_i32 = arith.constant 0 : i32
    %c0_i32_0 = arith.constant 0 : i32
    %c0_i32_1 = arith.constant 0 : i32
    return %arg0, %c0_i32, %c0_i32_0 : i32, i32, i32
  }
  func.func @transform_1(%arg0: i32) -> (i32, i32, i32) {
    %c0_i32 = arith.constant 0 : i32
    %c0_i32_0 = arith.constant 0 : i32
    %c0_i32_1 = arith.constant 0 : i32
    return %arg0, %c0_i32, %c0_i32_0 : i32, i32, i32
  }
  func.func @transform_2(%arg0: i32) -> (i32, i32, i32) {
    %c0_i32 = arith.constant 0 : i32
    %c0_i32_0 = arith.constant 0 : i32
    %c0_i32_1 = arith.constant 0 : i32
    return %arg0, %c0_i32, %c0_i32_0 : i32, i32, i32
  }
  func.func @transform_3(%arg0: i32) -> (i32, i32, i32) {
    %c0_i32 = arith.constant 0 : i32
    %c0_i32_0 = arith.constant 0 : i32
    %c0_i32_1 = arith.constant 0 : i32
    return %arg0, %c0_i32, %c0_i32_0 : i32, i32, i32
  }
  func.func @transform_4(%arg0: i32) -> (i32, i32) {
    %c0_i32 = arith.constant 0 : i32
    %c0_i32_0 = arith.constant 0 : i32
    %c0_i32_1 = arith.constant 0 : i32
    return %c0_i32, %c0_i32_0 : i32, i32
  }
  func.func @transform_5(%arg0: i32) -> (i32, i32) {
    %c0_i32 = arith.constant 0 : i32
    %c0_i32_0 = arith.constant 0 : i32
    %c0_i32_1 = arith.constant 0 : i32
    return %c0_i32, %c0_i32_0 : i32, i32
  }
  func.func @transform_6(%arg0: i32) -> (i32, i32) {
    %c0_i32 = arith.constant 0 : i32
    %c0_i32_0 = arith.constant 0 : i32
    %c0_i32_1 = arith.constant 0 : i32
    return %c0_i32, %c0_i32_0 : i32, i32
  }
  func.func @transform_7(%arg0: i32) -> (i32, i32) {
    %c0_i32 = arith.constant 0 : i32
    %c0_i32_0 = arith.constant 0 : i32
    %c0_i32_1 = arith.constant 0 : i32
    return %c0_i32, %c0_i32_0 : i32, i32
  }
  func.func @transform_8(%arg0: i32) -> (i32, i32, i32) {
    %c0_i32 = arith.constant 0 : i32
    %c0_i32_0 = arith.constant 0 : i32
    %c0_i32_1 = arith.constant 0 : i32
    return %arg0, %c0_i32, %c0_i32_0 : i32, i32, i32
  }
}

</mosaic_0001>

<llo_original>
// kernel: _lambda_.31
$region0: #{_lambda_.31}
  #allocation0 [shape = 'u32[]', space=smem, size = 0x4, offset = 0x4, fixed_abs, tag = 'smem constant byte address 0x4 - core index']
  #allocation1 [shape = 'u32[144,128]{1,0:T(1,128)}', space=vmem, size = 0x12000, scoped, tag = 'internal scratch']
  #allocation2 [shape = 'f32[16,96]{1,0:T(8,128)}', space=vmem, size = 0x2000, scoped, tag = 'scratch operand']
  %s0 = inlined_call_operand.hbm [shape: bf16[16,32], index: 0, kind: input, shape index: {}]
  %s1 = inlined_call_operand.hbm [shape: bf16[32,96], index: 1, kind: input, shape index: {}]
  %s2 = inlined_call_operand.hbm [shape: f32[1,96], index: 2, kind: input, shape index: {}]
  %s3 = inlined_call_operand.hbm [shape: bf16[16,96], index: 3, kind: output, shape index: {}]
  %s4 = sld [smem:[#allocation0]]
  $region42: #{_lambda_.31} parent=0
    _
  %s6 = ssub.s32 1, %s4
  %s7 = scalar_select 0, %s6, %s4
  $region1: #{_lambda_.31} parent=0
    #allocation3 [shape = 'u8[4096]{0}', space=vmem, size = 0x1000, scoped, tag = 'input window, operand 0, single buffered']
    #allocation4 [shape = 's32[1]{0}', space=sflag, size = 0x4, scoped, tag = 'scoped memory for _lambda_.31']
    #allocation5 [shape = 's32[1]{0}', space=sflag, size = 0x4, scoped, tag = 'scoped memory for _lambda_.31']
    #allocation6 [shape = 'u8[8192]{0}', space=vmem, size = 0x2000, scoped, tag = 'input window, operand 1, single buffered']
    #allocation7 [shape = 's32[1]{0}', space=sflag, size = 0x4, scoped, tag = 'scoped memory for _lambda_.31']
    #allocation8 [shape = 'u8[512]{0}', space=vmem, size = 0x400, scoped, tag = 'input window, operand 2, single buffered']
    #allocation9 [shape = 'u8[4096]{0}', space=vmem, size = 0x1000, scoped, tag = 'output window, operand 0, single buffered']
    %8 = vsyncpa [#allocation4], 0
    %9 = vsyncpa [#allocation7], 0
    %10 = vsyncpa [#allocation5], 0
    // Predicated region
    $region2: #{_lambda_.31} parent=1 // pred_check
      _
    $region3: #{_lambda_.31} parent=1 // pred_check_branch
      %12 = sbr.rel (0) target = $region5
    $region4: #{_lambda_.31} parent=1 // pred_region
      %s14 = ssub.s32 128, 128
      %15 = vsyncadd [#allocation4], %s14
      %s16 = sshll.u32 [#allocation3], 4
      %s17 = int_to_ptr.vmem [resolvable:$true] %s16
      %22 = dma.hbm_to_vmem [thread:$0]  %s0, 128, %s17, [#allocation4], 64, 64, 4
    $region5: #{_lambda_.31} parent=1 // pred_fallthru
      _
    // Predicated region
    $region6: #{_lambda_.31} parent=1 // pred_check
      _
    $region7: #{_lambda_.31} parent=1 // pred_check_branch
      %24 = sbr.rel (0) target = $region9
    $region8: #{_lambda_.31} parent=1 // pred_region
      %s26 = ssub.s32 256, 256
      %27 = vsyncadd [#allocation7], %s26
      %s28 = sshll.u32 [#allocation6], 4
      %s29 = int_to_ptr.vmem [resolvable:$true] %s28
      %34 = dma.hbm_to_vmem [thread:$0]  %s1, 256, %s29, [#allocation7], 64, 64, 4
    $region9: #{_lambda_.31} parent=1 // pred_fallthru
      _
    // Predicated region
    $region10: #{_lambda_.31} parent=1 // pred_check
      _
    $region11: #{_lambda_.31} parent=1 // pred_check_branch
      %36 = sbr.rel (0) target = $region13
    $region12: #{_lambda_.31} parent=1 // pred_region
      %s38 = ssub.s32 16, 16
      %39 = vsyncadd [#allocation7], %s38
      %s41 = sshll.u32 [#allocation8], 4
      %s42 = int_to_ptr.vmem [resolvable:$true] %s41
      %44 = dma.hbm_to_vmem [thread:$0]  %s2, 16, %s42, [#allocation7]
    $region13: #{_lambda_.31} parent=1 // pred_fallthru
      _
    // Predicated region
    $region14: #{_lambda_.31} parent=1 // pred_check
      _
    $region15: #{_lambda_.31} parent=1 // pred_check_branch
      %46 = sbr.rel (0) target = $region17
    $region16: #{_lambda_.31} parent=1 // pred_region
      %47 = dma.done [#allocation4], 128
    $region17: #{_lambda_.31} parent=1 // pred_fallthru
      _
    // Predicated region
    $region18: #{_lambda_.31} parent=1 // pred_check
      _
    $region19: #{_lambda_.31} parent=1 // pred_check_branch
      %49 = sbr.rel (0) target = $region21
    $region20: #{_lambda_.31} parent=1 // pred_region
      %50 = dma.done [#allocation7], 256
    $region21: #{_lambda_.31} parent=1 // pred_fallthru
      _
    // Predicated region
    $region22: #{_lambda_.31} parent=1 // pred_check
      _
    $region23: #{_lambda_.31} parent=1 // pred_check_branch
      %52 = sbr.rel (0) target = $region25
    $region24: #{_lambda_.31} parent=1 // pred_region
      %53 = dma.done [#allocation7], 16
    $region25: #{_lambda_.31} parent=1 // pred_fallthru
      _
    %p55 = scmp.eq.s32.totalorder 0, 0
    // Predicated region
    $region26: #{_lambda_.31} parent=1 // pred_check
      %p56 = pneg %p55
    $region27: #{_lambda_.31} parent=1 // pred_check_branch
      %58 = sbr.rel (%p56) target = $region29
    $region28: #{_lambda_.31} parent=1 // pred_region
      %vm59 = vcmask 785408
      %60 = vst.msk [vmem:[#allocation2] sm:$0xff] %vm59, 0.0
      %61 = vst.msk [vmem:[#allocation2 + $0x8] sm:$0xff] %vm59, 0.0
    $region29: #{_lambda_.31} parent=1 // pred_fallthru
      _
    %v62 = vld [vmem:[#allocation2] sm:$0xff]
    %v63 = vld [vmem:[#allocation2 + $0x8] sm:$0xff]
    %v64 = vld [vmem:[#allocation3] sm:$0xf]
    %v65 = vld [vmem:[#allocation3 + $0x4] sm:$0xf]
    %v66 = vld [vmem:[#allocation6] sm:$0xf]
    %v67 = vld [vmem:[#allocation6 + $0x4] sm:$0xf]
    %v68 = vld [vmem:[#allocation6 + $0x8] sm:$0xf]
    %v69 = vld [vmem:[#allocation6 + $0xc] sm:$0xf]
    %v72 = vunpack.c.l.b16 %v64
    %v73 = vunpack.c.l.b16 %v65
    %v74 = vpack.c.b16 %v73, %v72
    %v79 = vunpack.c.l.b16 %v66
    %v80 = vunpack.c.l.b16 %v67
    %v81 = vunpack.c.l.b16 %v68
    %v82 = vunpack.c.l.b16 %v69
    %v83 = vpack.c.b16 %v80, %v79
    %v84 = vpack.c.b16 %v82, %v81
    %vm87 = vcmask 261120
    %v89 = vsel %vm87, %v74, 0
    %91 = vmatprep.subr.bf16.mxu0 0
    %92 = vmatpush1.bf16.msra.mxu0 %v83
    %93 = vmatprep.subr.bf16.mxu0 0
    %94 = vmatpush1.bf16.msra.mxu0 %v84
    %95 = vmatprep.subr.bf16.mxu0 0
    %96 = vmatpush1.bf16.msra.mxu0 0
    %97 = vmatprep.subr.bf16.mxu0 0
    %98 = vmatpush1.bf16.msra.mxu0 0
    %99 = vmatprep.subr.bf16.mxu0 0
    %100 = vmatpush1.bf16.msra.mxu0 0
    %101 = vmatprep.subr.bf16.mxu0 0
    %102 = vmatpush1.bf16.msra.mxu0 0
    %103 = vmatprep.subr.bf16.mxu0 0
    %104 = vmatpush1.bf16.msra.mxu0 0
    %105 = vmatprep.subr.bf16.mxu0 0
    %106 = vmatpush1.bf16.msra.mxu0 0
    %107 = vmatprep.subr.bf16.mxu0 0
    %108 = vmatpush1.bf16.msra.mxu0 0
    %109 = vmatprep.subr.bf16.mxu0 0
    %110 = vmatpush1.bf16.msra.mxu0 0
    %111 = vmatprep.subr.bf16.mxu0 0
    %112 = vmatpush1.bf16.msra.mxu0 0
    %113 = vmatprep.subr.bf16.mxu0 0
    %114 = vmatpush1.bf16.msra.mxu0 0
    %115 = vmatprep.subr.bf16.mxu0 0
    %116 = vmatpush1.bf16.msra.mxu0 0
    %117 = vmatprep.subr.bf16.mxu0 0
    %118 = vmatpush1.bf16.msra.mxu0 0
    %119 = vmatprep.subr.bf16.mxu0 0
    %120 = vmatpush1.bf16.msra.mxu0 0
    %121 = vmatprep.subr.bf16.mxu0 0
    %122 = vmatpush1.bf16.msra.mxu0 0
    %123 = vmatprep.mubr.bf16.mxu0 0
    %124 = vmatmul.mubr.bf16.gmra.mrb[0].mxu0 %v89
    %v125 = vpop.f32.mrb[0].mxu0
    %v126 = vadd.f32 0.0, %v125
    %v127 = vpop.f32.mrb[0].mxu0
    %v128 = vpop.f32.mrb[0].mxu0
    %v129 = vadd.f32 0.0, %v128
    %v130 = vpop.f32.mrb[0].mxu0
    %131 = vdwg.mxu0
    %v132 = vadd.f32 %v62, %v126
    %v133 = vadd.f32 %v63, %v129
    %vm134 = vcmask 785408
    %135 = vst.msk [vmem:[#allocation2] sm:$0xff] %vm134, %v132
    %136 = vst.msk [vmem:[#allocation2 + $0x8] sm:$0xff] %vm134, %v133
    // Predicated region
    $region30: #{_lambda_.31} parent=1 // pred_check
      %p137 = pneg %p55
    $region31: #{_lambda_.31} parent=1 // pred_check_branch
      %139 = sbr.rel (%p137) target = $region33
    $region32: #{_lambda_.31} parent=1 // pred_region
      %v140 = vld [vmem:[#allocation2] sm:$0xff]
      %v141 = vld [vmem:[#allocation2 + $0x8] sm:$0xff]
      %v142 = vld [vmem:[#allocation8] sm:$0x1]
      %v144 = vlaneseq
      %v145 = vshrl.u32 %v144, 7
      %v146 = vsub.s32 0, %v145
      %v147 = vrot.slane %v142, %v146
      %v149 = vadd.f32 %v140, %v147
      %v150 = vadd.f32 %v141, %v147
      %v151 = vpack.c.bf16 %v150, %v149
      %v153 = vunpack.c.l.b16 %v151
      %v154 = vunpack.c.h.b16 %v151
      %v155 = vpack.c.b16 %v153, %v153
      %v156 = vpack.c.b16 %v154, %v154
      %vm159 = vcmask 781312
      %160 = vst.msk [vmem:[#allocation9] sm:$0xf] %vm159, %v155
      %161 = vst.msk [vmem:[#allocation9 + $0x4] sm:$0xf] %vm159, %v156
    $region33: #{_lambda_.31} parent=1 // pred_fallthru
      _
    // Predicated region
    $region34: #{_lambda_.31} parent=1 // pred_check
      _
    $region35: #{_lambda_.31} parent=1 // pred_check_branch
      %163 = sbr.rel (0) target = $region37
    $region36: #{_lambda_.31} parent=1 // pred_region
      %s165 = ssub.s32 128, 128
      %166 = vsyncadd [#allocation5], %s165
      %s167 = sshll.u32 [#allocation9], 4
      %s168 = int_to_ptr.vmem [resolvable:$true] %s167
      %173 = dma.vmem_to_hbm [thread:$0]  %s168, 128, %s3, [#allocation5], 64, 64, 4
    $region37: #{_lambda_.31} parent=1 // pred_fallthru
      _
    // Predicated region
    $region38: #{_lambda_.31} parent=1 // pred_check
      _
    $region39: #{_lambda_.31} parent=1 // pred_check_branch
      %175 = sbr.rel (0) target = $region41
    $region40: #{_lambda_.31} parent=1 // pred_region
      %176 = dma.done [#allocation5], 128
    $region41: #{_lambda_.31} parent=1 // pred_fallthru
      _
    %177 = vsyncpa [#allocation4], 1
    %178 = vsyncpa [#allocation7], 1
    %179 = vsyncpa [#allocation5], 1

// kernel: _lambda_.33
$region0: #{_lambda_.33}
  #allocation0 [shape = 'u32[]', space=smem, size = 0x4, offset = 0x4, fixed_abs, tag = 'smem constant byte address 0x4 - core index']
  #allocation1 [shape = 'u32[144,128]{1,0:T(1,128)}', space=vmem, size = 0x12000, scoped, tag = 'internal scratch']
  #allocation2 [shape = 'f32[16,32]{1,0:T(8,128)}', space=vmem, size = 0x2000, scoped, tag = 'scratch operand']
  %s0 = inlined_call_operand.hbm [shape: bf16[16,32], index: 0, kind: input, shape index: {}]
  %s1 = inlined_call_operand.hbm [shape: bf16[32,32], index: 1, kind: input, shape index: {}]
  %s2 = inlined_call_operand.hbm [shape: f32[1,32], index: 2, kind: input, shape index: {}]
  %s3 = inlined_call_operand.hbm [shape: bf16[16,32], index: 3, kind: output, shape index: {}]
  %s4 = sld [smem:[#allocation0]]
  $region42: #{_lambda_.33} parent=0
    _
  %s6 = ssub.s32 1, %s4
  %s7 = scalar_select 0, %s6, %s4
  $region1: #{_lambda_.33} parent=0
    #allocation3 [shape = 'u8[4096]{0}', space=vmem, size = 0x1000, scoped, tag = 'input window, operand 0, single buffered']
    #allocation4 [shape = 's32[1]{0}', space=sflag, size = 0x4, scoped, tag = 'scoped memory for _lambda_.33']
    #allocation5 [shape = 's32[1]{0}', space=sflag, size = 0x4, scoped, tag = 'scoped memory for _lambda_.33']
    #allocation6 [shape = 'u8[8192]{0}', space=vmem, size = 0x2000, scoped, tag = 'input window, operand 1, single buffered']
    #allocation7 [shape = 's32[1]{0}', space=sflag, size = 0x4, scoped, tag = 'scoped memory for _lambda_.33']
    #allocation8 [shape = 'u8[512]{0}', space=vmem, size = 0x400, scoped, tag = 'input window, operand 2, single buffered']
    #allocation9 [shape = 'u8[4096]{0}', space=vmem, size = 0x1000, scoped, tag = 'output window, operand 0, single buffered']
    %8 = vsyncpa [#allocation4], 0
    %9 = vsyncpa [#allocation7], 0
    %10 = vsyncpa [#allocation5], 0
    // Predicated region
    $region2: #{_lambda_.33} parent=1 // pred_check
      _
    $region3: #{_lambda_.33} parent=1 // pred_check_branch
      %12 = sbr.rel (0) target = $region5
    $region4: #{_lambda_.33} parent=1 // pred_region
      %s14 = ssub.s32 128, 128
      %15 = vsyncadd [#allocation4], %s14
      %s16 = sshll.u32 [#allocation3], 4
      %s17 = int_to_ptr.vmem [resolvable:$true] %s16
      %22 = dma.hbm_to_vmem [thread:$0]  %s0, 128, %s17, [#allocation4], 64, 64, 4
    $region5: #{_lambda_.33} parent=1 // pred_fallthru
      _
    // Predicated region
    $region6: #{_lambda_.33} parent=1 // pred_check
      _
    $region7: #{_lambda_.33} parent=1 // pred_check_branch
      %24 = sbr.rel (0) target = $region9
    $region8: #{_lambda_.33} parent=1 // pred_region
      %s26 = ssub.s32 256, 256
      %27 = vsyncadd [#allocation7], %s26
      %s28 = sshll.u32 [#allocation6], 4
      %s29 = int_to_ptr.vmem [resolvable:$true] %s28
      %34 = dma.hbm_to_vmem [thread:$0]  %s1, 256, %s29, [#allocation7], 64, 64, 4
    $region9: #{_lambda_.33} parent=1 // pred_fallthru
      _
    // Predicated region
    $region10: #{_lambda_.33} parent=1 // pred_check
      _
    $region11: #{_lambda_.33} parent=1 // pred_check_branch
      %36 = sbr.rel (0) target = $region13
    $region12: #{_lambda_.33} parent=1 // pred_region
      %s38 = ssub.s32 16, 16
      %39 = vsyncadd [#allocation7], %s38
      %s41 = sshll.u32 [#allocation8], 4
      %s42 = int_to_ptr.vmem [resolvable:$true] %s41
      %44 = dma.hbm_to_vmem [thread:$0]  %s2, 16, %s42, [#allocation7]
    $region13: #{_lambda_.33} parent=1 // pred_fallthru
      _
    // Predicated region
    $region14: #{_lambda_.33} parent=1 // pred_check
      _
    $region15: #{_lambda_.33} parent=1 // pred_check_branch
      %46 = sbr.rel (0) target = $region17
    $region16: #{_lambda_.33} parent=1 // pred_region
      %47 = dma.done [#allocation4], 128
    $region17: #{_lambda_.33} parent=1 // pred_fallthru
      _
    // Predicated region
    $region18: #{_lambda_.33} parent=1 // pred_check
      _
    $region19: #{_lambda_.33} parent=1 // pred_check_branch
      %49 = sbr.rel (0) target = $region21
    $region20: #{_lambda_.33} parent=1 // pred_region
      %50 = dma.done [#allocation7], 256
    $region21: #{_lambda_.33} parent=1 // pred_fallthru
      _
    // Predicated region
    $region22: #{_lambda_.33} parent=1 // pred_check
      _
    $region23: #{_lambda_.33} parent=1 // pred_check_branch
      %52 = sbr.rel (0) target = $region25
    $region24: #{_lambda_.33} parent=1 // pred_region
      %53 = dma.done [#allocation7], 16
    $region25: #{_lambda_.33} parent=1 // pred_fallthru
      _
    %p55 = scmp.eq.s32.totalorder 0, 0
    // Predicated region
    $region26: #{_lambda_.33} parent=1 // pred_check
      %p56 = pneg %p55
    $region27: #{_lambda_.33} parent=1 // pred_check_branch
      %58 = sbr.rel (%p56) target = $region29
    $region28: #{_lambda_.33} parent=1 // pred_region
      %vm59 = vcmask 261120
      %60 = vst.msk [vmem:[#allocation2] sm:$0xff] %vm59, 0.0
      %61 = vst.msk [vmem:[#allocation2 + $0x8] sm:$0xff] %vm59, 0.0
    $region29: #{_lambda_.33} parent=1 // pred_fallthru
      _
    %v62 = vld [vmem:[#allocation2] sm:$0xff]
    %v63 = vld [vmem:[#allocation2 + $0x8] sm:$0xff]
    %v64 = vld [vmem:[#allocation3] sm:$0xf]
    %v65 = vld [vmem:[#allocation3 + $0x4] sm:$0xf]
    %v66 = vld [vmem:[#allocation6] sm:$0xf]
    %v67 = vld [vmem:[#allocation6 + $0x4] sm:$0xf]
    %v68 = vld [vmem:[#allocation6 + $0x8] sm:$0xf]
    %v69 = vld [vmem:[#allocation6 + $0xc] sm:$0xf]
    %v72 = vunpack.c.l.b16 %v64
    %v73 = vunpack.c.l.b16 %v65
    %v74 = vpack.c.b16 %v73, %v72
    %v79 = vunpack.c.l.b16 %v66
    %v80 = vunpack.c.l.b16 %v67
    %v81 = vunpack.c.l.b16 %v68
    %v82 = vunpack.c.l.b16 %v69
    %v83 = vpack.c.b16 %v80, %v79
    %v84 = vpack.c.b16 %v82, %v81
    %vm87 = vcmask 261120
    %v89 = vsel %vm87, %v74, 0
    %91 = vmatprep.subr.bf16.mxu0 0
    %92 = vmatpush1.bf16.msra.mxu0 %v83
    %93 = vmatprep.subr.bf16.mxu0 0
    %94 = vmatpush1.bf16.msra.mxu0 %v84
    %95 = vmatprep.subr.bf16.mxu0 0
    %96 = vmatpush1.bf16.msra.mxu0 0
    %97 = vmatprep.subr.bf16.mxu0 0
    %98 = vmatpush1.bf16.msra.mxu0 0
    %99 = vmatprep.subr.bf16.mxu0 0
    %100 = vmatpush1.bf16.msra.mxu0 0
    %101 = vmatprep.subr.bf16.mxu0 0
    %102 = vmatpush1.bf16.msra.mxu0 0
    %103 = vmatprep.subr.bf16.mxu0 0
    %104 = vmatpush1.bf16.msra.mxu0 0
    %105 = vmatprep.subr.bf16.mxu0 0
    %106 = vmatpush1.bf16.msra.mxu0 0
    %107 = vmatprep.subr.bf16.mxu0 0
    %108 = vmatpush1.bf16.msra.mxu0 0
    %109 = vmatprep.subr.bf16.mxu0 0
    %110 = vmatpush1.bf16.msra.mxu0 0
    %111 = vmatprep.subr.bf16.mxu0 0
    %112 = vmatpush1.bf16.msra.mxu0 0
    %113 = vmatprep.subr.bf16.mxu0 0
    %114 = vmatpush1.bf16.msra.mxu0 0
    %115 = vmatprep.subr.bf16.mxu0 0
    %116 = vmatpush1.bf16.msra.mxu0 0
    %117 = vmatprep.subr.bf16.mxu0 0
    %118 = vmatpush1.bf16.msra.mxu0 0
    %119 = vmatprep.subr.bf16.mxu0 0
    %120 = vmatpush1.bf16.msra.mxu0 0
    %121 = vmatprep.subr.bf16.mxu0 0
    %122 = vmatpush1.bf16.msra.mxu0 0
    %123 = vmatprep.mubr.bf16.mxu0 0
    %124 = vmatmul.mubr.bf16.gmra.mrb[0].mxu0 %v89
    %v125 = vpop.f32.mrb[0].mxu0
    %v126 = vadd.f32 0.0, %v125
    %v127 = vpop.f32.mrb[0].mxu0
    %v128 = vpop.f32.mrb[0].mxu0
    %v129 = vadd.f32 0.0, %v128
    %v130 = vpop.f32.mrb[0].mxu0
    %131 = vdwg.mxu0
    %v132 = vadd.f32 %v62, %v126
    %v133 = vadd.f32 %v63, %v129
    %134 = vst.msk [vmem:[#allocation2] sm:$0xff] %vm87, %v132
    %135 = vst.msk [vmem:[#allocation2 + $0x8] sm:$0xff] %vm87, %v133
    // Predicated region
    $region30: #{_lambda_.33} parent=1 // pred_check
      %p136 = pneg %p55
    $region31: #{_lambda_.33} parent=1 // pred_check_branch
      %138 = sbr.rel (%p136) target = $region33
    $region32: #{_lambda_.33} parent=1 // pred_region
      %v139 = vld [vmem:[#allocation2] sm:$0xff]
      %v140 = vld [vmem:[#allocation2 + $0x8] sm:$0xff]
      %v141 = vld [vmem:[#allocation8] sm:$0x1]
      %v143 = vlaneseq
      %v144 = vshrl.u32 %v143, 7
      %v145 = vsub.s32 0, %v144
      %v146 = vrot.slane %v141, %v145
      %v148 = vadd.f32 %v139, %v146
      %v149 = vadd.f32 %v140, %v146
      %v150 = vpack.c.bf16 %v149, %v148
      %v152 = vunpack.c.l.b16 %v150
      %v153 = vunpack.c.h.b16 %v150
      %v154 = vpack.c.b16 %v152, %v152
      %v155 = vpack.c.b16 %v153, %v153
      %vm158 = vcmask 257024
      %159 = vst.msk [vmem:[#allocation9] sm:$0xf] %vm158, %v154
      %160 = vst.msk [vmem:[#allocation9 + $0x4] sm:$0xf] %vm158, %v155
    $region33: #{_lambda_.33} parent=1 // pred_fallthru
      _
    // Predicated region
    $region34: #{_lambda_.33} parent=1 // pred_check
      _
    $region35: #{_lambda_.33} parent=1 // pred_check_branch
      %162 = sbr.rel (0) target = $region37
    $region36: #{_lambda_.33} parent=1 // pred_region
      %s164 = ssub.s32 128, 128
      %165 = vsyncadd [#allocation5], %s164
      %s166 = sshll.u32 [#allocation9], 4
      %s167 = int_to_ptr.vmem [resolvable:$true] %s166
      %172 = dma.vmem_to_hbm [thread:$0]  %s167, 128, %s3, [#allocation5], 64, 64, 4
    $region37: #{_lambda_.33} parent=1 // pred_fallthru
      _
    // Predicated region
    $region38: #{_lambda_.33} parent=1 // pred_check
      _
    $region39: #{_lambda_.33} parent=1 // pred_check_branch
      %174 = sbr.rel (0) target = $region41
    $region40: #{_lambda_.33} parent=1 // pred_region
      %175 = dma.done [#allocation5], 128
    $region41: #{_lambda_.33} parent=1 // pred_fallthru
      _
    %176 = vsyncpa [#allocation4], 1
    %177 = vsyncpa [#allocation7], 1
    %178 = vsyncpa [#allocation5], 1

// kernel: _lambda_.32
$region0: #{_lambda_.32}
  #allocation0 [shape = 'u32[]', space=smem, size = 0x4, offset = 0x4, fixed_abs, tag = 'smem constant byte address 0x4 - core index']
  #allocation1 [shape = 'u32[144,128]{1,0:T(1,128)}', space=vmem, size = 0x12000, scoped, tag = 'internal scratch']
  %s0 = inlined_call_operand.hbm [shape: bf16[2,8,96], index: 0, kind: input, shape index: {}]
  %s1 = inlined_call_operand.hbm [shape: f32[2,1,8], index: 1, kind: input, shape index: {}]
  %s2 = inlined_call_operand.hbm [shape: bf16[2,8,32], index: 2, kind: input, shape index: {}]
  %s3 = inlined_call_operand.hbm [shape: bf16[32,32], index: 3, kind: input, shape index: {}]
  %s4 = inlined_call_operand.hbm [shape: f32[1,32], index: 4, kind: input, shape index: {}]
  %s5 = inlined_call_operand.hbm [shape: f32[1,32], index: 5, kind: input, shape index: {}]
  %s6 = inlined_call_operand.hbm [shape: f32[1,32], index: 6, kind: input, shape index: {}]
  %s7 = inlined_call_operand.hbm [shape: bf16[2,8,32], index: 7, kind: output, shape index: {}]
  %s8 = sld [smem:[#allocation0]]
  $region89: #{_lambda_.32} parent=0
    _
  %s10 = ssub.s32 1, %s8
  %s11 = scalar_select 0, %s10, %s8
  $region1: #{_lambda_.32} parent=0
    #allocation2 [shape = 'u8[4096]{0}', space=vmem, size = 0x1000, scoped, tag = 'input window, operand 0']
    #allocation3 [shape = 's32[2]{0}', space=sflag, size = 0x8, scoped, tag = 'scoped memory for _lambda_.32']
    #allocation4 [shape = 's32[2]{0}', space=sflag, size = 0x8, scoped, tag = 'scoped memory for _lambda_.32']
    #allocation5 [shape = 'u8[1024]{0}', space=vmem, size = 0x400, scoped, tag = 'input window, operand 1']
    #allocation6 [shape = 's32[2]{0}', space=sflag, size = 0x8, scoped, tag = 'scoped memory for _lambda_.32']
    #allocation7 [shape = 'u8[4096]{0}', space=vmem, size = 0x1000, scoped, tag = 'input window, operand 2']
    #allocation8 [shape = 'u8[8192]{0}', space=vmem, size = 0x2000, scoped, tag = 'input window, operand 3, single buffered']
    #allocation9 [shape = 's32[1]{0}', space=sflag, size = 0x4, scoped, tag = 'scoped memory for _lambda_.32']
    #allocation10 [shape = 'u8[512]{0}', space=vmem, size = 0x400, scoped, tag = 'input window, operand 4, single buffered']
    #allocation11 [shape = 'u8[512]{0}', space=vmem, size = 0x400, scoped, tag = 'input window, operand 5, single buffered']
    #allocation12 [shape = 's32[1]{0}', space=sflag, size = 0x4, scoped, tag = 'scoped memory for _lambda_.32']
    #allocation13 [shape = 'u8[512]{0}', space=vmem, size = 0x400, scoped, tag = 'input window, operand 6, single buffered']
    #allocation14 [shape = 'u8[4096]{0}', space=vmem, size = 0x1000, scoped, tag = 'output window, operand 0']
    %12 = vsyncpa [#allocation3], 0
    %s13 = scalar_lea.sflag [#allocation3], 1
    %14 = vsyncpa %s13, 0
    %15 = vsyncpa [#allocation6], 0
    %s16 = scalar_lea.sflag [#allocation6], 1
    %17 = vsyncpa %s16, 0
    %18 = vsyncpa [#allocation9], 0
    %19 = vsyncpa [#allocation12], 0
    %20 = vsyncpa [#allocation4], 0
    %s21 = scalar_lea.sflag [#allocation4], 1
    %22 = vsyncpa %s21, 0
    loop: start=0, step=1, limit=4
    $region2: #{_lambda_.32} parent=1 // loop_pre_header
      _
    $region3: #{_lambda_.32} parent=1 // loop_header
      %s24 = sphi 0, %s28
      %p25 = scmp.ge.s32.totalorder %s24, 4
      %s34 = sphi 0, %s36
      %s37 = sphi 0, %s34
      %s38 = sphi 0, %s37
      %s54 = sphi 0, %s38
      %s60 = sphi 0, %s62
      %s63 = sphi 0, %s60
      %s64 = sphi 0, %s63
      %s80 = sphi 0, %s64
      %s86 = sphi 0, %s88
      %s89 = sphi 0, %s86
      %s90 = sphi 0, %s89
      %s106 = sphi 0, %s90
      %s110 = sphi 0, %s110
      %s112 = sphi 0, %s110
      %s113 = sphi 0, %s112
      %s127 = sphi 0, %s113
      %s131 = sphi 0, %s131
      %s133 = sphi 0, %s131
      %s134 = sphi 0, %s133
      %s148 = sphi 0, %s134
      %s152 = sphi 0, %s152
      %s154 = sphi 0, %s152
      %s155 = sphi 0, %s154
      %s169 = sphi 0, %s155
      %s173 = sphi 0, %s173
      %s175 = sphi 0, %s173
      %s176 = sphi 0, %s175
      %s190 = sphi 0, %s176
      %s196 = sphi 0, %s198
      %s199 = sphi 0, %s196
      %s200 = sphi 0, %s199
      %s216 = sphi 0, %s200
    $region4: #{_lambda_.32} parent=1 // loop_header_branch
      %27 = sbr.rel (%p25) target = $region8
    $region5: #{_lambda_.32} parent=1 // loop_body
      %s29 = ssub.s32 %s24, 1
      %s30 = ssub.s32 %s24, 2
      %s31 = sadd.s32 %s24, 1
      %s32 = ssub.s32 %s24, %s31
      %p33 = scmp.eq.s32.totalorder %s32, 0
      %s35 = sadd.s32 %s34, 1
      %s36 = scalar_select %p33, %s34, %s35
      %p39 = pneg %p33
      %p40 = scmp.eq.s32.totalorder %s24, 1
      %p41 = por %p39, %p40
      %p42 = scmp.ne.s32.totalorder %s34, %s37
      %p43 = scmp.eq.s32.totalorder %s24, 0
      %p44 = por %p42, %p43
      %p45 = scmp.ne.s32.totalorder %s34, %s37
      %p46 = scmp.eq.s32.totalorder %s29, 1
      %p47 = por %p45, %p46
      %p48 = scmp.ne.s32.totalorder %s37, %s38
      %p49 = scmp.eq.s32.totalorder %s29, 0
      %p50 = por %p48, %p49
      %p51 = scmp.ne.s32.totalorder %s37, %s38
      %p52 = scmp.eq.s32.totalorder %s30, 1
      %p53 = por %p51, %p52
      %p55 = scmp.ne.s32.totalorder %s38, %s54
      %p56 = scmp.eq.s32.totalorder %s30, 0
      %p57 = por %p55, %p56
      %s58 = ssub.s32 %s24, %s31
      %p59 = scmp.eq.s32.totalorder %s58, 0
      %s61 = sadd.s32 %s60, 1
      %s62 = scalar_select %p59, %s60, %s61
      %p65 = pneg %p59
      %p66 = scmp.eq.s32.totalorder %s24, 1
      %p67 = por %p65, %p66
      %p68 = scmp.ne.s32.totalorder %s60, %s63
      %p69 = scmp.eq.s32.totalorder %s24, 0
      %p70 = por %p68, %p69
      %p71 = scmp.ne.s32.totalorder %s60, %s63
      %p72 = scmp.eq.s32.totalorder %s29, 1
      %p73 = por %p71, %p72
      %p74 = scmp.ne.s32.totalorder %s63, %s64
      %p75 = scmp.eq.s32.totalorder %s29, 0
      %p76 = por %p74, %p75
      %p77 = scmp.ne.s32.totalorder %s63, %s64
      %p78 = scmp.eq.s32.totalorder %s30, 1
      %p79 = por %p77, %p78
      %p81 = scmp.ne.s32.totalorder %s64, %s80
      %p82 = scmp.eq.s32.totalorder %s30, 0
      %p83 = por %p81, %p82
      %s84 = ssub.s32 %s24, %s31
      %p85 = scmp.eq.s32.totalorder %s84, 0
      %s87 = sadd.s32 %s86, 1
      %s88 = scalar_select %p85, %s86, %s87
      %p91 = pneg %p85
      %p92 = scmp.eq.s32.totalorder %s24, 1
      %p93 = por %p91, %p92
      %p94 = scmp.ne.s32.totalorder %s86, %s89
      %p95 = scmp.eq.s32.totalorder %s24, 0
      %p96 = por %p94, %p95
      %p97 = scmp.ne.s32.totalorder %s86, %s89
      %p98 = scmp.eq.s32.totalorder %s29, 1
      %p99 = por %p97, %p98
      %p100 = scmp.ne.s32.totalorder %s89, %s90
      %p101 = scmp.eq.s32.totalorder %s29, 0
      %p102 = por %p100, %p101
      %p103 = scmp.ne.s32.totalorder %s89, %s90
      %p104 = scmp.eq.s32.totalorder %s30, 1
      %p105 = por %p103, %p104
      %p107 = scmp.ne.s32.totalorder %s90, %s106
      %p108 = scmp.eq.s32.totalorder %s30, 0
      %p109 = por %p107, %p108
      %s111 = sadd.s32 %s110, 1
      %p114 = scmp.eq.s32.totalorder %s24, 1
      %p115 = scmp.ne.s32.totalorder %s110, %s112
      %p116 = scmp.eq.s32.totalorder %s24, 0
      %p117 = por %p115, %p116
      %p118 = scmp.ne.s32.totalorder %s110, %s112
      %p119 = scmp.eq.s32.totalorder %s29, 1
      %p120 = por %p118, %p119
      %p121 = scmp.ne.s32.totalorder %s112, %s113
      %p122 = scmp.eq.s32.totalorder %s29, 0
      %p123 = por %p121, %p122
      %p124 = scmp.ne.s32.totalorder %s112, %s113
      %p125 = scmp.eq.s32.totalorder %s30, 1
      %p126 = por %p124, %p125
      %p128 = scmp.ne.s32.totalorder %s113, %s127
      %p129 = scmp.eq.s32.totalorder %s30, 0
      %p130 = por %p128, %p129
      %s132 = sadd.s32 %s131, 1
      %p135 = scmp.eq.s32.totalorder %s24, 1
      %p136 = scmp.ne.s32.totalorder %s131, %s133
      %p137 = scmp.eq.s32.totalorder %s24, 0
      %p138 = por %p136, %p137
      %p139 = scmp.ne.s32.totalorder %s131, %s133
      %p140 = scmp.eq.s32.totalorder %s29, 1
      %p141 = por %p139, %p140
      %p142 = scmp.ne.s32.totalorder %s133, %s134
      %p143 = scmp.eq.s32.totalorder %s29, 0
      %p144 = por %p142, %p143
      %p145 = scmp.ne.s32.totalorder %s133, %s134
      %p146 = scmp.eq.s32.totalorder %s30, 1
      %p147 = por %p145, %p146
      %p149 = scmp.ne.s32.totalorder %s134, %s148
      %p150 = scmp.eq.s32.totalorder %s30, 0
      %p151 = por %p149, %p150
      %s153 = sadd.s32 %s152, 1
      %p156 = scmp.eq.s32.totalorder %s24, 1
      %p157 = scmp.ne.s32.totalorder %s152, %s154
      %p158 = scmp.eq.s32.totalorder %s24, 0
      %p159 = por %p157, %p158
      %p160 = scmp.ne.s32.totalorder %s152, %s154
      %p161 = scmp.eq.s32.totalorder %s29, 1
      %p162 = por %p160, %p161
      %p163 = scmp.ne.s32.totalorder %s154, %s155
      %p164 = scmp.eq.s32.totalorder %s29, 0
      %p165 = por %p163, %p164
      %p166 = scmp.ne.s32.totalorder %s154, %s155
      %p167 = scmp.eq.s32.totalorder %s30, 1
      %p168 = por %p166, %p167
      %p170 = scmp.ne.s32.totalorder %s155, %s169
      %p171 = scmp.eq.s32.totalorder %s30, 0
      %p172 = por %p170, %p171
      %s174 = sadd.s32 %s173, 1
      %p177 = scmp.eq.s32.totalorder %s24, 1
      %p178 = scmp.ne.s32.totalorder %s173, %s175
      %p179 = scmp.eq.s32.totalorder %s24, 0
      %p180 = por %p178, %p179
      %p181 = scmp.ne.s32.totalorder %s173, %s175
      %p182 = scmp.eq.s32.totalorder %s29, 1
      %p183 = por %p181, %p182
      %p184 = scmp.ne.s32.totalorder %s175, %s176
      %p185 = scmp.eq.s32.totalorder %s29, 0
      %p186 = por %p184, %p185
      %p187 = scmp.ne.s32.totalorder %s175, %s176
      %p188 = scmp.eq.s32.totalorder %s30, 1
      %p189 = por %p187, %p188
      %p191 = scmp.ne.s32.totalorder %s176, %s190
      %p192 = scmp.eq.s32.totalorder %s30, 0
      %p193 = por %p191, %p192
      %s194 = ssub.s32 %s24, %s31
      %p195 = scmp.eq.s32.totalorder %s194, 0
      %s197 = sadd.s32 %s196, 1
      %s198 = scalar_select %p195, %s196, %s197
      %p201 = pneg %p195
      %p202 = scmp.eq.s32.totalorder %s24, 1
      %p203 = por %p201, %p202
      %p204 = scmp.ne.s32.totalorder %s196, %s199
      %p205 = scmp.eq.s32.totalorder %s24, 0
      %p206 = por %p204, %p205
      %p207 = scmp.ne.s32.totalorder %s196, %s199
      %p208 = scmp.eq.s32.totalorder %s29, 1
      %p209 = por %p207, %p208
      %p210 = scmp.ne.s32.totalorder %s199, %s200
      %p211 = scmp.eq.s32.totalorder %s29, 0
      %p212 = por %p210, %p211
      %p213 = scmp.ne.s32.totalorder %s199, %s200
      %p214 = scmp.eq.s32.totalorder %s30, 1
      %p215 = por %p213, %p214
      %p217 = scmp.ne.s32.totalorder %s200, %s216
      %p218 = scmp.eq.s32.totalorder %s30, 0
      %p219 = por %p217, %p218
      %p220 = scmp.le.s32.totalorder 1, %s24
      %p221 = scmp.lt.s32.totalorder %s24, 3
      %p222 = pnand %p220, %p221
      %p223 = pneg %p222
      // Predicated region
      $region9: #{_lambda_.32} parent=5 // pred_check
        _
      $region10: #{_lambda_.32} parent=5 // pred_check_branch
        %225 = sbr.rel (%p222) target = $region12
      $region11: #{_lambda_.32} parent=5 // pred_region
        %s226 = ssub.s32 %s24, 1
        // Predicated region
        $region13: #{_lambda_.32} parent=11 // pred_check
          %p227 = pneg %p123
        $region14: #{_lambda_.32} parent=11 // pred_check_branch
          %229 = sbr.rel (%p227) target = $region16
        $region15: #{_lambda_.32} parent=11 // pred_region
          %s231 = ssub.s32 256, 256
          %232 = vsyncadd [#allocation9], %s231
          %s233 = sshll.u32 [#allocation8], 4
          %s234 = int_to_ptr.vmem [resolvable:$true] %s233
          %239 = dma.hbm_to_vmem [thread:$0]  %s3, 256, %s234, [#allocation9], 64, 64, 4
        $region16: #{_lambda_.32} parent=11 // pred_fallthru
          _
        // Predicated region
        $region17: #{_lambda_.32} parent=11 // pred_check
          %p240 = pneg %p144
        $region18: #{_lambda_.32} parent=11 // pred_check_branch
          %242 = sbr.rel (%p240) target = $region20
        $region19: #{_lambda_.32} parent=11 // pred_region
          %s244 = ssub.s32 16, 16
          %245 = vsyncadd [#allocation9], %s244
          %s247 = sshll.u32 [#allocation10], 4
          %s248 = int_to_ptr.vmem [resolvable:$true] %s247
          %250 = dma.hbm_to_vmem [thread:$0]  %s4, 16, %s248, [#allocation9]
        $region20: #{_lambda_.32} parent=11 // pred_fallthru
          _
        // Predicated region
        $region21: #{_lambda_.32} parent=11 // pred_check
          %p251 = pneg %p165
        $region22: #{_lambda_.32} parent=11 // pred_check_branch
          %253 = sbr.rel (%p251) target = $region24
        $region23: #{_lambda_.32} parent=11 // pred_region
          %s255 = ssub.s32 16, 16
          %256 = vsyncadd [#allocation12], %s255
          %s258 = sshll.u32 [#allocation11], 4
          %s259 = int_to_ptr.vmem [resolvable:$true] %s258
          %261 = dma.hbm_to_vmem [thread:$0]  %s5, 16, %s259, [#allocation12]
        $region24: #{_lambda_.32} parent=11 // pred_fallthru
          _
        // Predicated region
        $region25: #{_lambda_.32} parent=11 // pred_check
          %p262 = pneg %p186
        $region26: #{_lambda_.32} parent=11 // pred_check_branch
          %264 = sbr.rel (%p262) target = $region28
        $region27: #{_lambda_.32} parent=11 // pred_region
          %s266 = ssub.s32 16, 16
          %267 = vsyncadd [#allocation12], %s266
          %s269 = sshll.u32 [#allocation13], 4
          %s270 = int_to_ptr.vmem [resolvable:$true] %s269
          %272 = dma.hbm_to_vmem [thread:$0]  %s6, 16, %s270, [#allocation12]
        $region28: #{_lambda_.32} parent=11 // pred_fallthru
          _
      $region12: #{_lambda_.32} parent=5 // pred_fallthru
        _
      %p273 = scmp.lt.s32.totalorder %s24, 2
      // Predicated region
      $region29: #{_lambda_.32} parent=5 // pred_check
        %p274 = pneg %p273
      $region30: #{_lambda_.32} parent=5 // pred_check_branch
        %276 = sbr.rel (%p274) target = $region32
      $region31: #{_lambda_.32} parent=5 // pred_region
        // Predicated region
        $region33: #{_lambda_.32} parent=31 // pred_check
          %p277 = pneg %p44
        $region34: #{_lambda_.32} parent=31 // pred_check_branch
          %279 = sbr.rel (%p277) target = $region36
        $region35: #{_lambda_.32} parent=31 // pred_region
          %s280 = sand.u32 %s34, 1
          %s281 = scalar_lea.sflag [#allocation3], %s280
          %s282 = sand.u32 %s34, 1
          %s283 = smul.addr %s282, 4
          %s284 = scalar_lea.vmem [#allocation2], %s283
          %s286 = ssub.s32 64, 64
          %287 = vsyncadd %s281, %s286
          %s288 = smul.addr %s24, 64
          %s289 = scalar_lea.hbm %s0, %s288
          %s291 = sshll.u32 %s284, 4
          %s292 = int_to_ptr.vmem [resolvable:$true] %s291
          %294 = dma.hbm_to_vmem [thread:$0]  %s289, 64, %s292, %s281
        $region36: #{_lambda_.32} parent=31 // pred_fallthru
          _
        // Predicated region
        $region37: #{_lambda_.32} parent=31 // pred_check
          %p295 = pneg %p70
        $region38: #{_lambda_.32} parent=31 // pred_check_branch
          %297 = sbr.rel (%p295) target = $region40
        $region39: #{_lambda_.32} parent=31 // pred_region
          %s298 = sand.u32 %s24, 1
          %s299 = scalar_lea.sflag [#allocation6], %s298
          %s300 = sand.u32 %s60, 1
          %s301 = scalar_lea.vmem [#allocation5], %s300
          %s303 = ssub.s32 16, 16
          %304 = vsyncadd %s299, %s303
          %s305 = smul.addr %s24, 16
          %s306 = scalar_lea.hbm %s1, %s305
          %s308 = sshll.u32 %s301, 4
          %s309 = int_to_ptr.vmem [resolvable:$true] %s308
          %311 = dma.hbm_to_vmem [thread:$0]  %s306, 16, %s309, %s299
        $region40: #{_lambda_.32} parent=31 // pred_fallthru
          _
        // Predicated region
        $region41: #{_lambda_.32} parent=31 // pred_check
          %p312 = pneg %p96
        $region42: #{_lambda_.32} parent=31 // pred_check_branch
          %314 = sbr.rel (%p312) target = $region44
        $region43: #{_lambda_.32} parent=31 // pred_region
          %s315 = sand.u32 %s24, 1
          %s316 = scalar_lea.sflag [#allocation6], %s315
          %s317 = sand.u32 %s86, 1
          %s318 = smul.addr %s317, 4
          %s319 = scalar_lea.vmem [#allocation7], %s318
          %s321 = ssub.s32 64, 64
          %322 = vsyncadd %s316, %s321
          %s323 = smul.addr %s24, 64
          %s324 = scalar_lea.hbm %s2, %s323
          %s326 = sshll.u32 %s319, 4
          %s327 = int_to_ptr.vmem [resolvable:$true] %s326
          %329 = dma.hbm_to_vmem [thread:$0]  %s324, 64, %s327, %s316
        $region44: #{_lambda_.32} parent=31 // pred_fallthru
          _
      $region32: #{_lambda_.32} parent=5 // pred_fallthru
        _
      %p330 = scmp.le.s32.totalorder 1, %s24
      %p331 = scmp.lt.s32.totalorder %s24, 3
      %p332 = pnand %p330, %p331
      %p333 = pneg %p332
      // Predicated region
      $region45: #{_lambda_.32} parent=5 // pred_check
        _
      $region46: #{_lambda_.32} parent=5 // pred_check_branch
        %335 = sbr.rel (%p332) target = $region48
      $region47: #{_lambda_.32} parent=5 // pred_region
        %s336 = ssub.s32 %s24, 1
        %s337 = sand.u32 %s37, 1
        %s338 = scalar_lea.sflag [#allocation3], %s337
        %s339 = sand.u32 %s37, 1
        %s340 = smul.addr %s339, 4
        %s341 = scalar_lea.vmem [#allocation2], %s340
        // Predicated region
        $region49: #{_lambda_.32} parent=47 // pred_check
          %p342 = pneg %p50
        $region50: #{_lambda_.32} parent=47 // pred_check_branch
          %344 = sbr.rel (%p342) target = $region52
        $region51: #{_lambda_.32} parent=47 // pred_region
          %345 = dma.done %s338, 64
        $region52: #{_lambda_.32} parent=47 // pred_fallthru
          _
        %s346 = sand.u32 %s29, 1
        %s347 = scalar_lea.sflag [#allocation6], %s346
        %s348 = sand.u32 %s63, 1
        %s349 = scalar_lea.vmem [#allocation5], %s348
        // Predicated region
        $region53: #{_lambda_.32} parent=47 // pred_check
          %p350 = pneg %p76
        $region54: #{_lambda_.32} parent=47 // pred_check_branch
          %352 = sbr.rel (%p350) target = $region56
        $region55: #{_lambda_.32} parent=47 // pred_region
          %353 = dma.done %s347, 16
        $region56: #{_lambda_.32} parent=47 // pred_fallthru
          _
        %s354 = sand.u32 %s29, 1
        %s355 = scalar_lea.sflag [#allocation6], %s354
        %s356 = sand.u32 %s89, 1
        %s357 = smul.addr %s356, 4
        %s358 = scalar_lea.vmem [#allocation7], %s357
        // Predicated region
        $region57: #{_lambda_.32} parent=47 // pred_check
          %p359 = pneg %p102
        $region58: #{_lambda_.32} parent=47 // pred_check_branch
          %361 = sbr.rel (%p359) target = $region60
        $region59: #{_lambda_.32} parent=47 // pred_region
          %362 = dma.done %s355, 64
        $region60: #{_lambda_.32} parent=47 // pred_fallthru
          _
        // Predicated region
        $region61: #{_lambda_.32} parent=47 // pred_check
          %p363 = pneg %p123
        $region62: #{_lambda_.32} parent=47 // pred_check_branch
          %365 = sbr.rel (%p363) target = $region64
        $region63: #{_lambda_.32} parent=47 // pred_region
          %366 = dma.done [#allocation9], 256
        $region64: #{_lambda_.32} parent=47 // pred_fallthru
          _
        // Predicated region
        $region65: #{_lambda_.32} parent=47 // pred_check
          %p367 = pneg %p144
        $region66: #{_lambda_.32} parent=47 // pred_check_branch
          %369 = sbr.rel (%p367) target = $region68
        $region67: #{_lambda_.32} parent=47 // pred_region
          %370 = dma.done [#allocation9], 16
        $region68: #{_lambda_.32} parent=47 // pred_fallthru
          _
        // Predicated region
        $region69: #{_lambda_.32} parent=47 // pred_check
          %p371 = pneg %p165
        $region70: #{_lambda_.32} parent=47 // pred_check_branch
          %373 = sbr.rel (%p371) target = $region72
        $region71: #{_lambda_.32} parent=47 // pred_region
          %374 = dma.done [#allocation12], 16
        $region72: #{_lambda_.32} parent=47 // pred_fallthru
          _
        // Predicated region
        $region73: #{_lambda_.32} parent=47 // pred_check
          %p375 = pneg %p186
        $region74: #{_lambda_.32} parent=47 // pred_check_branch
          %377 = sbr.rel (%p375) target = $region76
        $region75: #{_lambda_.32} parent=47 // pred_region
          %378 = dma.done [#allocation12], 16
        $region76: #{_lambda_.32} parent=47 // pred_fallthru
          _
        %s379 = sand.u32 %s37, 1
        %s380 = scalar_lea.sflag [#allocation3], %s379
        %s381 = sand.u32 %s37, 1
        %s382 = smul.addr %s381, 4
        %s383 = scalar_lea.vmem [#allocation2], %s382
        %p384 = pneg %p50
        %p385 = pneg %p47
        %s386 = sand.u32 %s29, 1
        %s387 = scalar_lea.sflag [#allocation6], %s386
        %s388 = sand.u32 %s63, 1
        %s389 = scalar_lea.vmem [#allocation5], %s388
        %p390 = pneg %p76
        %p391 = pneg %p73
        %s392 = sand.u32 %s29, 1
        %s393 = scalar_lea.sflag [#allocation6], %s392
        %s394 = sand.u32 %s89, 1
        %s395 = smul.addr %s394, 4
        %s396 = scalar_lea.vmem [#allocation7], %s395
        %p397 = pneg %p102
        %p398 = pneg %p99
        %p399 = pneg %p123
        %p400 = pneg %p120
        %p401 = pneg %p144
        %p402 = pneg %p141
        %p403 = pneg %p165
        %p404 = pneg %p162
        %p405 = pneg %p186
        %p406 = pneg %p183
        %p407 = pneg %p212
        %p408 = pneg %p209
        %s409 = sand.u32 %s199, 1
        %s410 = scalar_lea.sflag [#allocation4], %s409
        %s411 = sand.u32 %s199, 1
        %s412 = smul.addr %s411, 4
        %s413 = scalar_lea.vmem [#allocation14], %s412
        %v415 = vld [vmem:[%s349] sm:$0x1]
        %v416 = vlaneseq
        %v417 = vshrl.u32 %v416, 7
        %v418 = vlaneseq
        %v419 = vand.u32 %v418, 127
        %vm420 = vcmp.gt.s32.totalorder %v419, %v417
        %v421 = vsel %vm420, -1e+30, 0.0
        %v423 = vlaneseq
        %v424 = vshrl.u32 %v423, 7
        %v425 = vsub.s32 0, %v424
        %v426 = vrot.slane %v415, %v425
        %v428 = vadd.f32 %v426, %v421
        %v429 = vld [vmem:[%s341] sm:$0xf]
        %v431 = vunpack.c.l.b16 %v429
        %v432 = vpack.c.b16 %v431, %v431
        %433 = vrot.lane.b32.xlu0 %v432, 96
        %v434 = vpop.permute.xlu0 %433
        %vm435 = vcmask 64512
        %v437 = vsel %vm435, %v429, 0
        %v440 = vsel %vm435, %v434, 0
        %442 = vmatprep.subr.bf16.mxu0 0
        %443 = vmatpush1.bf16.xpose.msra.mxu0 %v440
        %444 = vmatprep.subr.bf16.mxu0 0
        %445 = vmatpush1.bf16.xpose.msra.mxu0 0
        %446 = vmatprep.subr.bf16.mxu0 0
        %447 = vmatpush1.bf16.xpose.msra.mxu0 0
        %448 = vmatprep.subr.bf16.mxu0 0
        %449 = vmatpush1.bf16.xpose.msra.mxu0 0
        %450 = vmatprep.subr.bf16.mxu0 0
        %451 = vmatpush1.bf16.xpose.msra.mxu0 0
        %452 = vmatprep.subr.bf16.mxu0 0
        %453 = vmatpush1.bf16.xpose.msra.mxu0 0
        %454 = vmatprep.subr.bf16.mxu0 0
        %455 = vmatpush1.bf16.xpose.msra.mxu0 0
        %456 = vmatprep.subr.bf16.mxu0 0
        %457 = vmatpush1.bf16.xpose.msra.mxu0 0
        %458 = vmatprep.subr.bf16.mxu0 0
        %459 = vmatpush1.bf16.xpose.msra.mxu0 0
        %460 = vmatprep.subr.bf16.mxu0 0
        %461 = vmatpush1.bf16.xpose.msra.mxu0 0
        %462 = vmatprep.subr.bf16.mxu0 0
        %463 = vmatpush1.bf16.xpose.msra.mxu0 0
        %464 = vmatprep.subr.bf16.mxu0 0
        %465 = vmatpush1.bf16.xpose.msra.mxu0 0
        %466 = vmatprep.subr.bf16.mxu0 0
        %467 = vmatpush1.bf16.xpose.msra.mxu0 0
        %468 = vmatprep.subr.bf16.mxu0 0
        %469 = vmatpush1.bf16.xpose.msra.mxu0 0
        %470 = vmatprep.subr.bf16.mxu0 0
        %471 = vmatpush1.bf16.xpose.msra.mxu0 0
        %472 = vmatprep.subr.bf16.mxu0 0
        %473 = vmatpush1.bf16.xpose.msra.mxu0 0
        %474 = vmatprep.mubr.bf16.mxu0 0
        %475 = vmatmul.mubr.bf16.gmra.mrb[0].mxu0 %v437
        %v476 = vpop.f32.mrb[0].mxu0
        %v477 = vadd.f32 %v428, %v476
        %v478 = vpop.f32.mrb[0].mxu0
        %v479 = vpop.f32.mrb[0].mxu0
        %v480 = vpop.f32.mrb[0].mxu0
        %481 = vdwg.mxu0
        %v482 = vsel %vm435, %v477, -inf
        %483 = vmax.xlane.f32.xlu0 %v482
        %v484 = vpop.xlane.xlu0 %483
        %v485 = vsub.f32 %v477, %v484
        %v486 = vmul.f32 %v485, 1.442695
        %v487 = vpow.pop %v486
        %v488 = vsel %vm435, %v487, 0.0
        %489 = vadd.xlane.f32.xlu0 %v488
        %v490 = vpop.xlane.xlu0 %489
        %v491 = vrcp.pop %v490
        %v492 = vmul.f32 %v487, %v491
        %v493 = vpack.c.bf16 %v492, %v492
        %494 = vrot.lane.b32.xlu0 %v432, 64
        %v495 = vpop.permute.xlu0 %494
        %v497 = vsel %vm435, %v493, 0
        %vm499 = vcmask 1043456
        %v501 = vsel %vm499, %v495, 0
        %503 = vmatprep.subr.bf16.mxu0 0
        %504 = vmatpush1.bf16.msra.mxu0 %v501
        %505 = vmatprep.subr.bf16.mxu0 0
        %506 = vmatpush1.bf16.msra.mxu0 0
        %507 = vmatprep.subr.bf16.mxu0 0
        %508 = vmatpush1.bf16.msra.mxu0 0
        %509 = vmatprep.subr.bf16.mxu0 0
        %510 = vmatpush1.bf16.msra.mxu0 0
        %511 = vmatprep.subr.bf16.mxu0 0
        %512 = vmatpush1.bf16.msra.mxu0 0
        %513 = vmatprep.subr.bf16.mxu0 0
        %514 = vmatpush1.bf16.msra.mxu0 0
        %515 = vmatprep.subr.bf16.mxu0 0
        %516 = vmatpush1.bf16.msra.mxu0 0
        %517 = vmatprep.subr.bf16.mxu0 0
        %518 = vmatpush1.bf16.msra.mxu0 0
        %519 = vmatprep.subr.bf16.mxu0 0
        %520 = vmatpush1.bf16.msra.mxu0 0
        %521 = vmatprep.subr.bf16.mxu0 0
        %522 = vmatpush1.bf16.msra.mxu0 0
        %523 = vmatprep.subr.bf16.mxu0 0
        %524 = vmatpush1.bf16.msra.mxu0 0
        %525 = vmatprep.subr.bf16.mxu0 0
        %526 = vmatpush1.bf16.msra.mxu0 0
        %527 = vmatprep.subr.bf16.mxu0 0
        %528 = vmatpush1.bf16.msra.mxu0 0
        %529 = vmatprep.subr.bf16.mxu0 0
        %530 = vmatpush1.bf16.msra.mxu0 0
        %531 = vmatprep.subr.bf16.mxu0 0
        %532 = vmatpush1.bf16.msra.mxu0 0
        %533 = vmatprep.subr.bf16.mxu0 0
        %534 = vmatpush1.bf16.msra.mxu0 0
        %535 = vmatprep.mubr.bf16.mxu0 0
        %536 = vmatmul.mubr.bf16.gmra.mrb[0].mxu0 %v497
        %v537 = vpop.f32.mrb[0].mxu0
        %v538 = vadd.f32 0.0, %v537
        %v539 = vpop.f32.mrb[0].mxu0
        %v540 = vpop.f32.mrb[0].mxu0
        %v541 = vpop.f32.mrb[0].mxu0
        %542 = vdwg.mxu0
        %v543 = vpack.c.bf16 %v538, %v538
        %v544 = vld [vmem:[#allocation8] sm:$0xf]
        %545 = vrot.lane.b32.xlu0 %v432, 120
        %v546 = vpop.permute.xlu0 %545
        %547 = vrot.lane.b32.xlu0 %v432, 88
        %v548 = vpop.permute.xlu0 %547
        %v550 = vsel %vm435, %v546, 0
        %v553 = vsel %vm435, %v548, 0
        %555 = vmatprep.subr.bf16.mxu0 0
        %556 = vmatpush1.bf16.xpose.msra.mxu0 %v553
        %557 = vmatprep.subr.bf16.mxu0 0
        %558 = vmatpush1.bf16.xpose.msra.mxu0 0
        %559 = vmatprep.subr.bf16.mxu0 0
        %560 = vmatpush1.bf16.xpose.msra.mxu0 0
        %561 = vmatprep.subr.bf16.mxu0 0
        %562 = vmatpush1.bf16.xpose.msra.mxu0 0
        %563 = vmatprep.subr.bf16.mxu0 0
        %564 = vmatpush1.bf16.xpose.msra.mxu0 0
        %565 = vmatprep.subr.bf16.mxu0 0
        %566 = vmatpush1.bf16.xpose.msra.mxu0 0
        %567 = vmatprep.subr.bf16.mxu0 0
        %568 = vmatpush1.bf16.xpose.msra.mxu0 0
        %569 = vmatprep.subr.bf16.mxu0 0
        %570 = vmatpush1.bf16.xpose.msra.mxu0 0
        %571 = vmatprep.subr.bf16.mxu0 0
        %572 = vmatpush1.bf16.xpose.msra.mxu0 0
        %573 = vmatprep.subr.bf16.mxu0 0
        %574 = vmatpush1.bf16.xpose.msra.mxu0 0
        %575 = vmatprep.subr.bf16.mxu0 0
        %576 = vmatpush1.bf16.xpose.msra.mxu0 0
        %577 = vmatprep.subr.bf16.mxu0 0
        %578 = vmatpush1.bf16.xpose.msra.mxu0 0
        %579 = vmatprep.subr.bf16.mxu0 0
        %580 = vmatpush1.bf16.xpose.msra.mxu0 0
        %581 = vmatprep.subr.bf16.mxu0 0
        %582 = vmatpush1.bf16.xpose.msra.mxu0 0
        %583 = vmatprep.subr.bf16.mxu0 0
        %584 = vmatpush1.bf16.xpose.msra.mxu0 0
        %585 = vmatprep.subr.bf16.mxu0 0
        %586 = vmatpush1.bf16.xpose.msra.mxu0 0
        %587 = vmatprep.mubr.bf16.mxu0 0
        %588 = vmatmul.mubr.bf16.gmra.mrb[0].mxu0 %v550
        %v589 = vpop.f32.mrb[0].mxu0
        %v590 = vadd.f32 %v428, %v589
        %v591 = vpop.f32.mrb[0].mxu0
        %v592 = vpop.f32.mrb[0].mxu0
        %v593 = vpop.f32.mrb[0].mxu0
        %594 = vdwg.mxu0
        %v595 = vsel %vm435, %v590, -inf
        %596 = vmax.xlane.f32.xlu0 %v595
        %v597 = vpop.xlane.xlu0 %596
        %v598 = vsub.f32 %v590, %v597
        %v599 = vmul.f32 %v598, 1.442695
        %v600 = vpow.pop %v599
        %v601 = vsel %vm435, %v600, 0.0
        %602 = vadd.xlane.f32.xlu0 %v601
        %v603 = vpop.xlane.xlu0 %602
        %v604 = vrcp.pop %v603
        %v605 = vmul.f32 %v600, %v604
        %v606 = vpack.c.bf16 %v605, %v605
        %607 = vrot.lane.b32.xlu0 %v432, 56
        %v608 = vpop.permute.xlu0 %607
        %v610 = vsel %vm435, %v606, 0
        %v613 = vsel %vm499, %v608, 0
        %615 = vmatprep.subr.bf16.mxu0 0
        %616 = vmatpush1.bf16.msra.mxu0 %v613
        %617 = vmatprep.subr.bf16.mxu0 0
        %618 = vmatpush1.bf16.msra.mxu0 0
        %619 = vmatprep.subr.bf16.mxu0 0
        %620 = vmatpush1.bf16.msra.mxu0 0
        %621 = vmatprep.subr.bf16.mxu0 0
        %622 = vmatpush1.bf16.msra.mxu0 0
        %623 = vmatprep.subr.bf16.mxu0 0
        %624 = vmatpush1.bf16.msra.mxu0 0
        %625 = vmatprep.subr.bf16.mxu0 0
        %626 = vmatpush1.bf16.msra.mxu0 0
        %627 = vmatprep.subr.bf16.mxu0 0
        %628 = vmatpush1.bf16.msra.mxu0 0
        %629 = vmatprep.subr.bf16.mxu0 0
        %630 = vmatpush1.bf16.msra.mxu0 0
        %631 = vmatprep.subr.bf16.mxu0 0
        %632 = vmatpush1.bf16.msra.mxu0 0
        %633 = vmatprep.subr.bf16.mxu0 0
        %634 = vmatpush1.bf16.msra.mxu0 0
        %635 = vmatprep.subr.bf16.mxu0 0
        %636 = vmatpush1.bf16.msra.mxu0 0
        %637 = vmatprep.subr.bf16.mxu0 0
        %638 = vmatpush1.bf16.msra.mxu0 0
        %639 = vmatprep.subr.bf16.mxu0 0
        %640 = vmatpush1.bf16.msra.mxu0 0
        %641 = vmatprep.subr.bf16.mxu0 0
        %642 = vmatpush1.bf16.msra.mxu0 0
        %643 = vmatprep.subr.bf16.mxu0 0
        %644 = vmatpush1.bf16.msra.mxu0 0
        %645 = vmatprep.subr.bf16.mxu0 0
        %646 = vmatpush1.bf16.msra.mxu0 0
        %647 = vmatprep.mubr.bf16.mxu0 0
        %648 = vmatmul.mubr.bf16.gmra.mrb[0].mxu0 %v610
        %v649 = vpop.f32.mrb[0].mxu0
        %v650 = vadd.f32 0.0, %v649
        %v651 = vpop.f32.mrb[0].mxu0
        %v652 = vpop.f32.mrb[0].mxu0
        %v653 = vpop.f32.mrb[0].mxu0
        %654 = vdwg.mxu0
        %v655 = vpack.c.bf16 %v650, %v650
        %v656 = vld [vmem:[#allocation8 + $0x4] sm:$0xf]
        %v658 = vsel %vm435, %v655, 0
        %v661 = vsel %vm499, %v656, 0
        %663 = vmatprep.subr.bf16.mxu0 0
        %664 = vmatpush1.bf16.msra.mxu0 %v661
        %665 = vmatprep.subr.bf16.mxu0 0
        %666 = vmatpush1.bf16.msra.mxu0 0
        %667 = vmatprep.subr.bf16.mxu0 0
        %668 = vmatpush1.bf16.msra.mxu0 0
        %669 = vmatprep.subr.bf16.mxu0 0
        %670 = vmatpush1.bf16.msra.mxu0 0
        %671 = vmatprep.subr.bf16.mxu0 0
        %672 = vmatpush1.bf16.msra.mxu0 0
        %673 = vmatprep.subr.bf16.mxu0 0
        %674 = vmatpush1.bf16.msra.mxu0 0
        %675 = vmatprep.subr.bf16.mxu0 0
        %676 = vmatpush1.bf16.msra.mxu0 0
        %677 = vmatprep.subr.bf16.mxu0 0
        %678 = vmatpush1.bf16.msra.mxu0 0
        %679 = vmatprep.subr.bf16.mxu0 0
        %680 = vmatpush1.bf16.msra.mxu0 0
        %681 = vmatprep.subr.bf16.mxu0 0
        %682 = vmatpush1.bf16.msra.mxu0 0
        %683 = vmatprep.subr.bf16.mxu0 0
        %684 = vmatpush1.bf16.msra.mxu0 0
        %685 = vmatprep.subr.bf16.mxu0 0
        %686 = vmatpush1.bf16.msra.mxu0 0
        %687 = vmatprep.subr.bf16.mxu0 0
        %688 = vmatpush1.bf16.msra.mxu0 0
        %689 = vmatprep.subr.bf16.mxu0 0
        %690 = vmatpush1.bf16.msra.mxu0 0
        %691 = vmatprep.subr.bf16.mxu0 0
        %692 = vmatpush1.bf16.msra.mxu0 0
        %693 = vmatprep.subr.bf16.mxu0 0
        %694 = vmatpush1.bf16.msra.mxu0 0
        %695 = vmatprep.mubr.bf16.mxu0 0
        %696 = vmatmul.mubr.bf16.gmra.mrb[0].mxu0 %v658
        %v697 = vpop.f32.mrb[0].mxu0
        %v698 = vadd.f32 0.0, %v697
        %v699 = vpop.f32.mrb[0].mxu0
        %v700 = vpop.f32.mrb[0].mxu0
        %v701 = vpop.f32.mrb[0].mxu0
        %702 = vdwg.mxu0
        %v704 = vsel %vm435, %v543, 0
        %v707 = vsel %vm499, %v544, 0
        %709 = vmatprep.subr.bf16.mxu0 0
        %710 = vmatpush1.bf16.msra.mxu0 %v707
        %711 = vmatprep.subr.bf16.mxu0 0
        %712 = vmatpush1.bf16.msra.mxu0 0
        %713 = vmatprep.subr.bf16.mxu0 0
        %714 = vmatpush1.bf16.msra.mxu0 0
        %715 = vmatprep.subr.bf16.mxu0 0
        %716 = vmatpush1.bf16.msra.mxu0 0
        %717 = vmatprep.subr.bf16.mxu0 0
        %718 = vmatpush1.bf16.msra.mxu0 0
        %719 = vmatprep.subr.bf16.mxu0 0
        %720 = vmatpush1.bf16.msra.mxu0 0
        %721 = vmatprep.subr.bf16.mxu0 0
        %722 = vmatpush1.bf16.msra.mxu0 0
        %723 = vmatprep.subr.bf16.mxu0 0
        %724 = vmatpush1.bf16.msra.mxu0 0
        %725 = vmatprep.subr.bf16.mxu0 0
        %726 = vmatpush1.bf16.msra.mxu0 0
        %727 = vmatprep.subr.bf16.mxu0 0
        %728 = vmatpush1.bf16.msra.mxu0 0
        %729 = vmatprep.subr.bf16.mxu0 0
        %730 = vmatpush1.bf16.msra.mxu0 0
        %731 = vmatprep.subr.bf16.mxu0 0
        %732 = vmatpush1.bf16.msra.mxu0 0
        %733 = vmatprep.subr.bf16.mxu0 0
        %734 = vmatpush1.bf16.msra.mxu0 0
        %735 = vmatprep.subr.bf16.mxu0 0
        %736 = vmatpush1.bf16.msra.mxu0 0
        %737 = vmatprep.subr.bf16.mxu0 0
        %738 = vmatpush1.bf16.msra.mxu0 0
        %739 = vmatprep.subr.bf16.mxu0 0
        %740 = vmatpush1.bf16.msra.mxu0 0
        %741 = vmatprep.mubr.bf16.mxu0 0
        %742 = vmatmul.mubr.bf16.gmra.mrb[0].mxu0 %v704
        %v743 = vpop.f32.mrb[0].mxu0
        %v744 = vadd.f32 %v698, %v743
        %v745 = vpop.f32.mrb[0].mxu0
        %v746 = vpop.f32.mrb[0].mxu0
        %v747 = vpop.f32.mrb[0].mxu0
        %748 = vdwg.mxu0
        %749 = vrot.lane.b32.xlu0 %v432, 112
        %v750 = vpop.permute.xlu0 %749
        %751 = vrot.lane.b32.xlu0 %v432, 80
        %v752 = vpop.permute.xlu0 %751
        %v754 = vsel %vm435, %v750, 0
        %v757 = vsel %vm435, %v752, 0
        %759 = vmatprep.subr.bf16.mxu0 0
        %760 = vmatpush1.bf16.xpose.msra.mxu0 %v757
        %761 = vmatprep.subr.bf16.mxu0 0
        %762 = vmatpush1.bf16.xpose.msra.mxu0 0
        %763 = vmatprep.subr.bf16.mxu0 0
        %764 = vmatpush1.bf16.xpose.msra.mxu0 0
        %765 = vmatprep.subr.bf16.mxu0 0
        %766 = vmatpush1.bf16.xpose.msra.mxu0 0
        %767 = vmatprep.subr.bf16.mxu0 0
        %768 = vmatpush1.bf16.xpose.msra.mxu0 0
        %769 = vmatprep.subr.bf16.mxu0 0
        %770 = vmatpush1.bf16.xpose.msra.mxu0 0
        %771 = vmatprep.subr.bf16.mxu0 0
        %772 = vmatpush1.bf16.xpose.msra.mxu0 0
        %773 = vmatprep.subr.bf16.mxu0 0
        %774 = vmatpush1.bf16.xpose.msra.mxu0 0
        %775 = vmatprep.subr.bf16.mxu0 0
        %776 = vmatpush1.bf16.xpose.msra.mxu0 0
        %777 = vmatprep.subr.bf16.mxu0 0
        %778 = vmatpush1.bf16.xpose.msra.mxu0 0
        %779 = vmatprep.subr.bf16.mxu0 0
        %780 = vmatpush1.bf16.xpose.msra.mxu0 0
        %781 = vmatprep.subr.bf16.mxu0 0
        %782 = vmatpush1.bf16.xpose.msra.mxu0 0
        %783 = vmatprep.subr.bf16.mxu0 0
        %784 = vmatpush1.bf16.xpose.msra.mxu0 0
        %785 = vmatprep.subr.bf16.mxu0 0
        %786 = vmatpush1.bf16.xpose.msra.mxu0 0
        %787 = vmatprep.subr.bf16.mxu0 0
        %788 = vmatpush1.bf16.xpose.msra.mxu0 0
        %789 = vmatprep.subr.bf16.mxu0 0
        %790 = vmatpush1.bf16.xpose.msra.mxu0 0
        %791 = vmatprep.mubr.bf16.mxu0 0
        %792 = vmatmul.mubr.bf16.gmra.mrb[0].mxu0 %v754
        %v793 = vpop.f32.mrb[0].mxu0
        %v794 = vadd.f32 %v428, %v793
        %v795 = vpop.f32.mrb[0].mxu0
        %v796 = vpop.f32.mrb[0].mxu0
        %v797 = vpop.f32.mrb[0].mxu0
        %798 = vdwg.mxu0
        %v799 = vsel %vm435, %v794, -inf
        %800 = vmax.xlane.f32.xlu0 %v799
        %v801 = vpop.xlane.xlu0 %800
        %v802 = vsub.f32 %v794, %v801
        %v803 = vmul.f32 %v802, 1.442695
        %v804 = vpow.pop %v803
        %v805 = vsel %vm435, %v804, 0.0
        %806 = vadd.xlane.f32.xlu0 %v805
        %v807 = vpop.xlane.xlu0 %806
        %v808 = vrcp.pop %v807
        %v809 = vmul.f32 %v804, %v808
        %v810 = vpack.c.bf16 %v809, %v809
        %811 = vrot.lane.b32.xlu0 %v432, 48
        %v812 = vpop.permute.xlu0 %811
        %v814 = vsel %vm435, %v810, 0
        %v817 = vsel %vm499, %v812, 0
        %819 = vmatprep.subr.bf16.mxu0 0
        %820 = vmatpush1.bf16.msra.mxu0 %v817
        %821 = vmatprep.subr.bf16.mxu0 0
        %822 = vmatpush1.bf16.msra.mxu0 0
        %823 = vmatprep.subr.bf16.mxu0 0
        %824 = vmatpush1.bf16.msra.mxu0 0
        %825 = vmatprep.subr.bf16.mxu0 0
        %826 = vmatpush1.bf16.msra.mxu0 0
        %827 = vmatprep.subr.bf16.mxu0 0
        %828 = vmatpush1.bf16.msra.mxu0 0
        %829 = vmatprep.subr.bf16.mxu0 0
        %830 = vmatpush1.bf16.msra.mxu0 0
        %831 = vmatprep.subr.bf16.mxu0 0
        %832 = vmatpush1.bf16.msra.mxu0 0
        %833 = vmatprep.subr.bf16.mxu0 0
        %834 = vmatpush1.bf16.msra.mxu0 0
        %835 = vmatprep.subr.bf16.mxu0 0
        %836 = vmatpush1.bf16.msra.mxu0 0
        %837 = vmatprep.subr.bf16.mxu0 0
        %838 = vmatpush1.bf16.msra.mxu0 0
        %839 = vmatprep.subr.bf16.mxu0 0
        %840 = vmatpush1.bf16.msra.mxu0 0
        %841 = vmatprep.subr.bf16.mxu0 0
        %842 = vmatpush1.bf16.msra.mxu0 0
        %843 = vmatprep.subr.bf16.mxu0 0
        %844 = vmatpush1.bf16.msra.mxu0 0
        %845 = vmatprep.subr.bf16.mxu0 0
        %846 = vmatpush1.bf16.msra.mxu0 0
        %847 = vmatprep.subr.bf16.mxu0 0
        %848 = vmatpush1.bf16.msra.mxu0 0
        %849 = vmatprep.subr.bf16.mxu0 0
        %850 = vmatpush1.bf16.msra.mxu0 0
        %851 = vmatprep.mubr.bf16.mxu0 0
        %852 = vmatmul.mubr.bf16.gmra.mrb[0].mxu0 %v814
        %v853 = vpop.f32.mrb[0].mxu0
        %v854 = vadd.f32 0.0, %v853
        %v855 = vpop.f32.mrb[0].mxu0
        %v856 = vpop.f32.mrb[0].mxu0
        %v857 = vpop.f32.mrb[0].mxu0
        %858 = vdwg.mxu0
        %v859 = vpack.c.bf16 %v854, %v854
        %v860 = vld [vmem:[#allocation8 + $0x8] sm:$0xf]
        %v862 = vsel %vm435, %v859, 0
        %v865 = vsel %vm499, %v860, 0
        %867 = vmatprep.subr.bf16.mxu0 0
        %868 = vmatpush1.bf16.msra.mxu0 %v865
        %869 = vmatprep.subr.bf16.mxu0 0
        %870 = vmatpush1.bf16.msra.mxu0 0
        %871 = vmatprep.subr.bf16.mxu0 0
        %872 = vmatpush1.bf16.msra.mxu0 0
        %873 = vmatprep.subr.bf16.mxu0 0
        %874 = vmatpush1.bf16.msra.mxu0 0
        %875 = vmatprep.subr.bf16.mxu0 0
        %876 = vmatpush1.bf16.msra.mxu0 0
        %877 = vmatprep.subr.bf16.mxu0 0
        %878 = vmatpush1.bf16.msra.mxu0 0
        %879 = vmatprep.subr.bf16.mxu0 0
        %880 = vmatpush1.bf16.msra.mxu0 0
        %881 = vmatprep.subr.bf16.mxu0 0
        %882 = vmatpush1.bf16.msra.mxu0 0
        %883 = vmatprep.subr.bf16.mxu0 0
        %884 = vmatpush1.bf16.msra.mxu0 0
        %885 = vmatprep.subr.bf16.mxu0 0
        %886 = vmatpush1.bf16.msra.mxu0 0
        %887 = vmatprep.subr.bf16.mxu0 0
        %888 = vmatpush1.bf16.msra.mxu0 0
        %889 = vmatprep.subr.bf16.mxu0 0
        %890 = vmatpush1.bf16.msra.mxu0 0
        %891 = vmatprep.subr.bf16.mxu0 0
        %892 = vmatpush1.bf16.msra.mxu0 0
        %893 = vmatprep.subr.bf16.mxu0 0
        %894 = vmatpush1.bf16.msra.mxu0 0
        %895 = vmatprep.subr.bf16.mxu0 0
        %896 = vmatpush1.bf16.msra.mxu0 0
        %897 = vmatprep.subr.bf16.mxu0 0
        %898 = vmatpush1.bf16.msra.mxu0 0
        %899 = vmatprep.mubr.bf16.mxu0 0
        %900 = vmatmul.mubr.bf16.gmra.mrb[0].mxu0 %v862
        %v901 = vpop.f32.mrb[0].mxu0
        %v902 = vadd.f32 0.0, %v901
        %v903 = vpop.f32.mrb[0].mxu0
        %v904 = vpop.f32.mrb[0].mxu0
        %v905 = vpop.f32.mrb[0].mxu0
        %906 = vdwg.mxu0
        %v907 = vadd.f32 %v744, %v902
        %908 = vrot.lane.b32.xlu0 %v432, 104
        %v909 = vpop.permute.xlu0 %908
        %910 = vrot.lane.b32.xlu0 %v432, 72
        %v911 = vpop.permute.xlu0 %910
        %v913 = vsel %vm435, %v909, 0
        %v916 = vsel %vm435, %v911, 0
        %918 = vmatprep.subr.bf16.mxu0 0
        %919 = vmatpush1.bf16.xpose.msra.mxu0 %v916
        %920 = vmatprep.subr.bf16.mxu0 0
        %921 = vmatpush1.bf16.xpose.msra.mxu0 0
        %922 = vmatprep.subr.bf16.mxu0 0
        %923 = vmatpush1.bf16.xpose.msra.mxu0 0
        %924 = vmatprep.subr.bf16.mxu0 0
        %925 = vmatpush1.bf16.xpose.msra.mxu0 0
        %926 = vmatprep.subr.bf16.mxu0 0
        %927 = vmatpush1.bf16.xpose.msra.mxu0 0
        %928 = vmatprep.subr.bf16.mxu0 0
        %929 = vmatpush1.bf16.xpose.msra.mxu0 0
        %930 = vmatprep.subr.bf16.mxu0 0
        %931 = vmatpush1.bf16.xpose.msra.mxu0 0
        %932 = vmatprep.subr.bf16.mxu0 0
        %933 = vmatpush1.bf16.xpose.msra.mxu0 0
        %934 = vmatprep.subr.bf16.mxu0 0
        %935 = vmatpush1.bf16.xpose.msra.mxu0 0
        %936 = vmatprep.subr.bf16.mxu0 0
        %937 = vmatpush1.bf16.xpose.msra.mxu0 0
        %938 = vmatprep.subr.bf16.mxu0 0
        %939 = vmatpush1.bf16.xpose.msra.mxu0 0
        %940 = vmatprep.subr.bf16.mxu0 0
        %941 = vmatpush1.bf16.xpose.msra.mxu0 0
        %942 = vmatprep.subr.bf16.mxu0 0
        %943 = vmatpush1.bf16.xpose.msra.mxu0 0
        %944 = vmatprep.subr.bf16.mxu0 0
        %945 = vmatpush1.bf16.xpose.msra.mxu0 0
        %946 = vmatprep.subr.bf16.mxu0 0
        %947 = vmatpush1.bf16.xpose.msra.mxu0 0
        %948 = vmatprep.subr.bf16.mxu0 0
        %949 = vmatpush1.bf16.xpose.msra.mxu0 0
        %950 = vmatprep.mubr.bf16.mxu0 0
        %951 = vmatmul.mubr.bf16.gmra.mrb[0].mxu0 %v913
        %v952 = vpop.f32.mrb[0].mxu0
        %v953 = vadd.f32 %v428, %v952
        %v954 = vpop.f32.mrb[0].mxu0
        %v955 = vpop.f32.mrb[0].mxu0
        %v956 = vpop.f32.mrb[0].mxu0
        %957 = vdwg.mxu0
        %v958 = vsel %vm435, %v953, -inf
        %959 = vmax.xlane.f32.xlu0 %v958
        %v960 = vpop.xlane.xlu0 %959
        %v961 = vsub.f32 %v953, %v960
        %v962 = vmul.f32 %v961, 1.442695
        %v963 = vpow.pop %v962
        %v964 = vsel %vm435, %v963, 0.0
        %965 = vadd.xlane.f32.xlu0 %v964
        %v966 = vpop.xlane.xlu0 %965
        %v967 = vrcp.pop %v966
        %v968 = vmul.f32 %v963, %v967
        %v969 = vpack.c.bf16 %v968, %v968
        %970 = vrot.lane.b32.xlu0 %v432, 40
        %v971 = vpop.permute.xlu0 %970
        %v973 = vsel %vm435, %v969, 0
        %v976 = vsel %vm499, %v971, 0
        %978 = vmatprep.subr.bf16.mxu0 0
        %979 = vmatpush1.bf16.msra.mxu0 %v976
        %980 = vmatprep.subr.bf16.mxu0 0
        %981 = vmatpush1.bf16.msra.mxu0 0
        %982 = vmatprep.subr.bf16.mxu0 0
        %983 = vmatpush1.bf16.msra.mxu0 0
        %984 = vmatprep.subr.bf16.mxu0 0
        %985 = vmatpush1.bf16.msra.mxu0 0
        %986 = vmatprep.subr.bf16.mxu0 0
        %987 = vmatpush1.bf16.msra.mxu0 0
        %988 = vmatprep.subr.bf16.mxu0 0
        %989 = vmatpush1.bf16.msra.mxu0 0
        %990 = vmatprep.subr.bf16.mxu0 0
        %991 = vmatpush1.bf16.msra.mxu0 0
        %992 = vmatprep.subr.bf16.mxu0 0
        %993 = vmatpush1.bf16.msra.mxu0 0
        %994 = vmatprep.subr.bf16.mxu0 0
        %995 = vmatpush1.bf16.msra.mxu0 0
        %996 = vmatprep.subr.bf16.mxu0 0
        %997 = vmatpush1.bf16.msra.mxu0 0
        %998 = vmatprep.subr.bf16.mxu0 0
        %999 = vmatpush1.bf16.msra.mxu0 0
        %1000 = vmatprep.subr.bf16.mxu0 0
        %1001 = vmatpush1.bf16.msra.mxu0 0
        %1002 = vmatprep.subr.bf16.mxu0 0
        %1003 = vmatpush1.bf16.msra.mxu0 0
        %1004 = vmatprep.subr.bf16.mxu0 0
        %1005 = vmatpush1.bf16.msra.mxu0 0
        %1006 = vmatprep.subr.bf16.mxu0 0
        %1007 = vmatpush1.bf16.msra.mxu0 0
        %1008 = vmatprep.subr.bf16.mxu0 0
        %1009 = vmatpush1.bf16.msra.mxu0 0
        %1010 = vmatprep.mubr.bf16.mxu0 0
        %1011 = vmatmul.mubr.bf16.gmra.mrb[0].mxu0 %v973
        %v1012 = vpop.f32.mrb[0].mxu0
        %v1013 = vadd.f32 0.0, %v1012
        %v1014 = vpop.f32.mrb[0].mxu0
        %v1015 = vpop.f32.mrb[0].mxu0
        %v1016 = vpop.f32.mrb[0].mxu0
        %1017 = vdwg.mxu0
        %v1018 = vpack.c.bf16 %v1013, %v1013
        %v1019 = vld [vmem:[#allocation8 + $0xc] sm:$0xf]
        %v1021 = vsel %vm435, %v1018, 0
        %v1024 = vsel %vm499, %v1019, 0
        %1026 = vmatprep.subr.bf16.mxu0 0
        %1027 = vmatpush1.bf16.msra.mxu0 %v1024
        %1028 = vmatprep.subr.bf16.mxu0 0
        %1029 = vmatpush1.bf16.msra.mxu0 0
        %1030 = vmatprep.subr.bf16.mxu0 0
        %1031 = vmatpush1.bf16.msra.mxu0 0
        %1032 = vmatprep.subr.bf16.mxu0 0
        %1033 = vmatpush1.bf16.msra.mxu0 0
        %1034 = vmatprep.subr.bf16.mxu0 0
        %1035 = vmatpush1.bf16.msra.mxu0 0
        %1036 = vmatprep.subr.bf16.mxu0 0
        %1037 = vmatpush1.bf16.msra.mxu0 0
        %1038 = vmatprep.subr.bf16.mxu0 0
        %1039 = vmatpush1.bf16.msra.mxu0 0
        %1040 = vmatprep.subr.bf16.mxu0 0
        %1041 = vmatpush1.bf16.msra.mxu0 0
        %1042 = vmatprep.subr.bf16.mxu0 0
        %1043 = vmatpush1.bf16.msra.mxu0 0
        %1044 = vmatprep.subr.bf16.mxu0 0
        %1045 = vmatpush1.bf16.msra.mxu0 0
        %1046 = vmatprep.subr.bf16.mxu0 0
        %1047 = vmatpush1.bf16.msra.mxu0 0
        %1048 = vmatprep.subr.bf16.mxu0 0
        %1049 = vmatpush1.bf16.msra.mxu0 0
        %1050 = vmatprep.subr.bf16.mxu0 0
        %1051 = vmatpush1.bf16.msra.mxu0 0
        %1052 = vmatprep.subr.bf16.mxu0 0
        %1053 = vmatpush1.bf16.msra.mxu0 0
        %1054 = vmatprep.subr.bf16.mxu0 0
        %1055 = vmatpush1.bf16.msra.mxu0 0
        %1056 = vmatprep.subr.bf16.mxu0 0
        %1057 = vmatpush1.bf16.msra.mxu0 0
        %1058 = vmatprep.mubr.bf16.mxu0 0
        %1059 = vmatmul.mubr.bf16.gmra.mrb[0].mxu0 %v1021
        %v1060 = vpop.f32.mrb[0].mxu0
        %v1061 = vadd.f32 0.0, %v1060
        %v1062 = vpop.f32.mrb[0].mxu0
        %v1063 = vpop.f32.mrb[0].mxu0
        %v1064 = vpop.f32.mrb[0].mxu0
        %1065 = vdwg.mxu0
        %v1066 = vadd.f32 %v907, %v1061
        %v1067 = vld [vmem:[#allocation10] sm:$0x1]
        %v1069 = vlaneseq
        %v1070 = vshrl.u32 %v1069, 7
        %v1071 = vsub.s32 0, %v1070
        %v1072 = vrot.slane %v1067, %v1071
        %v1074 = vadd.f32 %v1066, %v1072
        %v1075 = vld [vmem:[%s358] sm:$0xf]
        %v1076 = vunpack.c.l.bf16 %v1075
        %v1077 = vadd.f32 %v1074, %v1076
        %vm1078 = vcmask 261120
        %v1079 = vsel %vm1078, %v1077, 0.0
        %1080 = vadd.xlane.f32.xlu0 %v1079
        %v1081 = vpop.xlane.xlu0 %1080
        %v1082 = vrcp.pop 32.0
        %v1083 = vmul.f32 %v1081, %v1082
        %v1084 = vmul.f32 %v1077, %v1077
        %v1085 = vsel %vm1078, %v1084, 0.0
        %1086 = vadd.xlane.f32.xlu0 %v1085
        %v1087 = vpop.xlane.xlu0 %1086
        %v1088 = vmul.f32 %v1087, %v1082
        %v1089 = vmul.f32 %v1083, %v1083
        %v1090 = vsub.f32 %v1088, %v1089
        %v1091 = vsub.f32 %v1077, %v1083
        %v1092 = vadd.f32 %v1090, 1e-05
        %v1093 = vrsqrt.pop %v1092
        %v1094 = vmul.f32 %v1091, %v1093
        %v1095 = vld [vmem:[#allocation11] sm:$0x1]
        %v1097 = vlaneseq
        %v1098 = vshrl.u32 %v1097, 7
        %v1099 = vsub.s32 0, %v1098
        %v1100 = vrot.slane %v1095, %v1099
        %v1102 = vmul.f32 %v1094, %v1100
        %v1103 = vld [vmem:[#allocation13] sm:$0x1]
        %v1105 = vlaneseq
        %v1106 = vshrl.u32 %v1105, 7
        %v1107 = vsub.s32 0, %v1106
        %v1108 = vrot.slane %v1103, %v1107
        %v1110 = vadd.f32 %v1102, %v1108
        %v1111 = vpack.c.bf16 %v1110, %v1110
        %vm1112 = vcmask 257024
        %1113 = vst.msk [vmem:[%s413] sm:$0xf] %vm1112, %v1111
        %s1114 = sand.u32 %s199, 1
        %s1115 = scalar_lea.sflag [#allocation4], %s1114
        %s1116 = sand.u32 %s199, 1
        %s1117 = smul.addr %s1116, 4
        %s1118 = scalar_lea.vmem [#allocation14], %s1117
        // Predicated region
        $region77: #{_lambda_.32} parent=47 // pred_check
          %p1119 = pneg %p209
        $region78: #{_lambda_.32} parent=47 // pred_check_branch
          %1121 = sbr.rel (%p1119) target = $region80
        $region79: #{_lambda_.32} parent=47 // pred_region
          %s1123 = ssub.s32 64, 64
          %1124 = vsyncadd %s1115, %s1123
          %s1125 = smul.addr %s29, 64
          %s1126 = scalar_lea.hbm %s7, %s1125
          %s1128 = sshll.u32 %s1118, 4
          %s1129 = int_to_ptr.vmem [resolvable:$true] %s1128
          %1131 = dma.vmem_to_hbm [thread:$0]  %s1129, 64, %s1126, %s1115
        $region80: #{_lambda_.32} parent=47 // pred_fallthru
          _
      $region48: #{_lambda_.32} parent=5 // pred_fallthru
        _
      %p1132 = scmp.le.s32.totalorder 2, %s24
      // Predicated region
      $region81: #{_lambda_.32} parent=5 // pred_check
        %p1133 = pneg %p1132
      $region82: #{_lambda_.32} parent=5 // pred_check_branch
        %1135 = sbr.rel (%p1133) target = $region84
      $region83: #{_lambda_.32} parent=5 // pred_region
        %s1136 = ssub.s32 %s24, 2
        // Predicated region
        $region85: #{_lambda_.32} parent=83 // pred_check
          %p1137 = pneg %p215
        $region86: #{_lambda_.32} parent=83 // pred_check_branch
          %1139 = sbr.rel (%p1137) target = $region88
        $region87: #{_lambda_.32} parent=83 // pred_region
          %s1140 = sand.u32 %s200, 1
          %s1141 = scalar_lea.sflag [#allocation4], %s1140
          %s1142 = sand.u32 %s200, 1
          %s1143 = smul.addr %s1142, 4
          %s1144 = scalar_lea.vmem [#allocation14], %s1143
          %1145 = dma.done %s1141, 64
        $region88: #{_lambda_.32} parent=83 // pred_fallthru
          _
      $region84: #{_lambda_.32} parent=5 // pred_fallthru
        _
    $region6: #{_lambda_.32} parent=1 // loop_footer
      %s28 = sadd.s32 1, %s24
    $region7: #{_lambda_.32} parent=1 // loop_footer_branch
      %23 = sbr.rel target = $region3
    $region8: #{_lambda_.32} parent=1 // loop_exit
      _
    %1146 = vsyncpa [#allocation3], 1
    %s1147 = scalar_lea.sflag [#allocation3], 1
    %1148 = vsyncpa %s1147, 1
    %1149 = vsyncpa [#allocation6], 1
    %s1150 = scalar_lea.sflag [#allocation6], 1
    %1151 = vsyncpa %s1150, 1
    %1152 = vsyncpa [#allocation9], 1
    %1153 = vsyncpa [#allocation12], 1
    %1154 = vsyncpa [#allocation4], 1
    %s1155 = scalar_lea.sflag [#allocation4], 1
    %1156 = vsyncpa %s1155, 1

// kernel: _lambda_.24
$region0: #{_lambda_.24}
  #allocation0 [shape = 'u32[]', space=smem, size = 0x4, offset = 0x4, fixed_abs, tag = 'smem constant byte address 0x4 - core index']
  #allocation1 [shape = 'u32[144,128]{1,0:T(1,128)}', space=vmem, size = 0x12000, scoped, tag = 'internal scratch']
  %s0 = inlined_call_operand.hbm [shape: bf16[2,8,96], index: 0, kind: input, shape index: {}]
  %s1 = inlined_call_operand.hbm [shape: f32[2,1,8], index: 1, kind: input, shape index: {}]
  %s2 = inlined_call_operand.hbm [shape: bf16[2,8,32], index: 2, kind: input, shape index: {}]
  %s3 = inlined_call_operand.hbm [shape: bf16[32,32], index: 3, kind: input, shape index: {}]
  %s4 = inlined_call_operand.hbm [shape: f32[1,32], index: 4, kind: input, shape index: {}]
  %s5 = inlined_call_operand.hbm [shape: f32[1,32], index: 5, kind: input, shape index: {}]
  %s6 = inlined_call_operand.hbm [shape: f32[1,32], index: 6, kind: input, shape index: {}]
  %s7 = inlined_call_operand.hbm [shape: bf16[2,8,32], index: 7, kind: output, shape index: {}]
  %s8 = sld [smem:[#allocation0]]
  $region89: #{_lambda_.24} parent=0
    _
  %s10 = ssub.s32 1, %s8
  %s11 = scalar_select 0, %s10, %s8
  $region1: #{_lambda_.24} parent=0
    #allocation2 [shape = 'u8[4096]{0}', space=vmem, size = 0x1000, scoped, tag = 'input window, operand 0']
    #allocation3 [shape = 's32[2]{0}', space=sflag, size = 0x8, scoped, tag = 'scoped memory for _lambda_.24']
    #allocation4 [shape = 's32[2]{0}', space=sflag, size = 0x8, scoped, tag = 'scoped memory for _lambda_.24']
    #allocation5 [shape = 'u8[1024]{0}', space=vmem, size = 0x400, scoped, tag = 'input window, operand 1']
    #allocation6 [shape = 's32[2]{0}', space=sflag, size = 0x8, scoped, tag = 'scoped memory for _lambda_.24']
    #allocation7 [shape = 'u8[4096]{0}', space=vmem, size = 0x1000, scoped, tag = 'input window, operand 2']
    #allocation8 [shape = 'u8[8192]{0}', space=vmem, size = 0x2000, scoped, tag = 'input window, operand 3, single buffered']
    #allocation9 [shape = 's32[1]{0}', space=sflag, size = 0x4, scoped, tag = 'scoped memory for _lambda_.24']
    #allocation10 [shape = 'u8[512]{0}', space=vmem, size = 0x400, scoped, tag = 'input window, operand 4, single buffered']
    #allocation11 [shape = 'u8[512]{0}', space=vmem, size = 0x400, scoped, tag = 'input window, operand 5, single buffered']
    #allocation12 [shape = 's32[1]{0}', space=sflag, size = 0x4, scoped, tag = 'scoped memory for _lambda_.24']
    #allocation13 [shape = 'u8[512]{0}', space=vmem, size = 0x400, scoped, tag = 'input window, operand 6, single buffered']
    #allocation14 [shape = 'u8[4096]{0}', space=vmem, size = 0x1000, scoped, tag = 'output window, operand 0']
    %12 = vsyncpa [#allocation3], 0
    %s13 = scalar_lea.sflag [#allocation3], 1
    %14 = vsyncpa %s13, 0
    %15 = vsyncpa [#allocation6], 0
    %s16 = scalar_lea.sflag [#allocation6], 1
    %17 = vsyncpa %s16, 0
    %18 = vsyncpa [#allocation9], 0
    %19 = vsyncpa [#allocation12], 0
    %20 = vsyncpa [#allocation4], 0
    %s21 = scalar_lea.sflag [#allocation4], 1
    %22 = vsyncpa %s21, 0
    loop: start=0, step=1, limit=4
    $region2: #{_lambda_.24} parent=1 // loop_pre_header
      _
    $region3: #{_lambda_.24} parent=1 // loop_header
      %s24 = sphi 0, %s28
      %p25 = scmp.ge.s32.totalorder %s24, 4
      %s34 = sphi 0, %s36
      %s37 = sphi 0, %s34
      %s38 = sphi 0, %s37
      %s54 = sphi 0, %s38
      %s60 = sphi 0, %s62
      %s63 = sphi 0, %s60
      %s64 = sphi 0, %s63
      %s80 = sphi 0, %s64
      %s86 = sphi 0, %s88
      %s89 = sphi 0, %s86
      %s90 = sphi 0, %s89
      %s106 = sphi 0, %s90
      %s110 = sphi 0, %s110
      %s112 = sphi 0, %s110
      %s113 = sphi 0, %s112
      %s127 = sphi 0, %s113
      %s131 = sphi 0, %s131
      %s133 = sphi 0, %s131
      %s134 = sphi 0, %s133
      %s148 = sphi 0, %s134
      %s152 = sphi 0, %s152
      %s154 = sphi 0, %s152
      %s155 = sphi 0, %s154
      %s169 = sphi 0, %s155
      %s173 = sphi 0, %s173
      %s175 = sphi 0, %s173
      %s176 = sphi 0, %s175
      %s190 = sphi 0, %s176
      %s196 = sphi 0, %s198
      %s199 = sphi 0, %s196
      %s200 = sphi 0, %s199
      %s216 = sphi 0, %s200
    $region4: #{_lambda_.24} parent=1 // loop_header_branch
      %27 = sbr.rel (%p25) target = $region8
    $region5: #{_lambda_.24} parent=1 // loop_body
      %s29 = ssub.s32 %s24, 1
      %s30 = ssub.s32 %s24, 2
      %s31 = sadd.s32 %s24, 1
      %s32 = ssub.s32 %s24, %s31
      %p33 = scmp.eq.s32.totalorder %s32, 0
      %s35 = sadd.s32 %s34, 1
      %s36 = scalar_select %p33, %s34, %s35
      %p39 = pneg %p33
      %p40 = scmp.eq.s32.totalorder %s24, 1
      %p41 = por %p39, %p40
      %p42 = scmp.ne.s32.totalorder %s34, %s37
      %p43 = scmp.eq.s32.totalorder %s24, 0
      %p44 = por %p42, %p43
      %p45 = scmp.ne.s32.totalorder %s34, %s37
      %p46 = scmp.eq.s32.totalorder %s29, 1
      %p47 = por %p45, %p46
      %p48 = scmp.ne.s32.totalorder %s37, %s38
      %p49 = scmp.eq.s32.totalorder %s29, 0
      %p50 = por %p48, %p49
      %p51 = scmp.ne.s32.totalorder %s37, %s38
      %p52 = scmp.eq.s32.totalorder %s30, 1
      %p53 = por %p51, %p52
      %p55 = scmp.ne.s32.totalorder %s38, %s54
      %p56 = scmp.eq.s32.totalorder %s30, 0
      %p57 = por %p55, %p56
      %s58 = ssub.s32 %s24, %s31
      %p59 = scmp.eq.s32.totalorder %s58, 0
      %s61 = sadd.s32 %s60, 1
      %s62 = scalar_select %p59, %s60, %s61
      %p65 = pneg %p59
      %p66 = scmp.eq.s32.totalorder %s24, 1
      %p67 = por %p65, %p66
      %p68 = scmp.ne.s32.totalorder %s60, %s63
      %p69 = scmp.eq.s32.totalorder %s24, 0
      %p70 = por %p68, %p69
      %p71 = scmp.ne.s32.totalorder %s60, %s63
      %p72 = scmp.eq.s32.totalorder %s29, 1
      %p73 = por %p71, %p72
      %p74 = scmp.ne.s32.totalorder %s63, %s64
      %p75 = scmp.eq.s32.totalorder %s29, 0
      %p76 = por %p74, %p75
      %p77 = scmp.ne.s32.totalorder %s63, %s64
      %p78 = scmp.eq.s32.totalorder %s30, 1
      %p79 = por %p77, %p78
      %p81 = scmp.ne.s32.totalorder %s64, %s80
      %p82 = scmp.eq.s32.totalorder %s30, 0
      %p83 = por %p81, %p82
      %s84 = ssub.s32 %s24, %s31
      %p85 = scmp.eq.s32.totalorder %s84, 0
      %s87 = sadd.s32 %s86, 1
      %s88 = scalar_select %p85, %s86, %s87
      %p91 = pneg %p85
      %p92 = scmp.eq.s32.totalorder %s24, 1
      %p93 = por %p91, %p92
      %p94 = scmp.ne.s32.totalorder %s86, %s89
      %p95 = scmp.eq.s32.totalorder %s24, 0
      %p96 = por %p94, %p95
      %p97 = scmp.ne.s32.totalorder %s86, %s89
      %p98 = scmp.eq.s32.totalorder %s29, 1
      %p99 = por %p97, %p98
      %p100 = scmp.ne.s32.totalorder %s89, %s90
      %p101 = scmp.eq.s32.totalorder %s29, 0
      %p102 = por %p100, %p101
      %p103 = scmp.ne.s32.totalorder %s89, %s90
      %p104 = scmp.eq.s32.totalorder %s30, 1
      %p105 = por %p103, %p104
      %p107 = scmp.ne.s32.totalorder %s90, %s106
      %p108 = scmp.eq.s32.totalorder %s30, 0
      %p109 = por %p107, %p108
      %s111 = sadd.s32 %s110, 1
      %p114 = scmp.eq.s32.totalorder %s24, 1
      %p115 = scmp.ne.s32.totalorder %s110, %s112
      %p116 = scmp.eq.s32.totalorder %s24, 0
      %p117 = por %p115, %p116
      %p118 = scmp.ne.s32.totalorder %s110, %s112
      %p119 = scmp.eq.s32.totalorder %s29, 1
      %p120 = por %p118, %p119
      %p121 = scmp.ne.s32.totalorder %s112, %s113
      %p122 = scmp.eq.s32.totalorder %s29, 0
      %p123 = por %p121, %p122
      %p124 = scmp.ne.s32.totalorder %s112, %s113
      %p125 = scmp.eq.s32.totalorder %s30, 1
      %p126 = por %p124, %p125
      %p128 = scmp.ne.s32.totalorder %s113, %s127
      %p129 = scmp.eq.s32.totalorder %s30, 0
      %p130 = por %p128, %p129
      %s132 = sadd.s32 %s131, 1
      %p135 = scmp.eq.s32.totalorder %s24, 1
      %p136 = scmp.ne.s32.totalorder %s131, %s133
      %p137 = scmp.eq.s32.totalorder %s24, 0
      %p138 = por %p136, %p137
      %p139 = scmp.ne.s32.totalorder %s131, %s133
      %p140 = scmp.eq.s32.totalorder %s29, 1
      %p141 = por %p139, %p140
      %p142 = scmp.ne.s32.totalorder %s133, %s134
      %p143 = scmp.eq.s32.totalorder %s29, 0
      %p144 = por %p142, %p143
      %p145 = scmp.ne.s32.totalorder %s133, %s134
      %p146 = scmp.eq.s32.totalorder %s30, 1
      %p147 = por %p145, %p146
      %p149 = scmp.ne.s32.totalorder %s134, %s148
      %p150 = scmp.eq.s32.totalorder %s30, 0
      %p151 = por %p149, %p150
      %s153 = sadd.s32 %s152, 1
      %p156 = scmp.eq.s32.totalorder %s24, 1
      %p157 = scmp.ne.s32.totalorder %s152, %s154
      %p158 = scmp.eq.s32.totalorder %s24, 0
      %p159 = por %p157, %p158
      %p160 = scmp.ne.s32.totalorder %s152, %s154
      %p161 = scmp.eq.s32.totalorder %s29, 1
      %p162 = por %p160, %p161
      %p163 = scmp.ne.s32.totalorder %s154, %s155
      %p164 = scmp.eq.s32.totalorder %s29, 0
      %p165 = por %p163, %p164
      %p166 = scmp.ne.s32.totalorder %s154, %s155
      %p167 = scmp.eq.s32.totalorder %s30, 1
      %p168 = por %p166, %p167
      %p170 = scmp.ne.s32.totalorder %s155, %s169
      %p171 = scmp.eq.s32.totalorder %s30, 0
      %p172 = por %p170, %p171
      %s174 = sadd.s32 %s173, 1
      %p177 = scmp.eq.s32.totalorder %s24, 1
      %p178 = scmp.ne.s32.totalorder %s173, %s175
      %p179 = scmp.eq.s32.totalorder %s24, 0
      %p180 = por %p178, %p179
      %p181 = scmp.ne.s32.totalorder %s173, %s175
      %p182 = scmp.eq.s32.totalorder %s29, 1
      %p183 = por %p181, %p182
      %p184 = scmp.ne.s32.totalorder %s175, %s176
      %p185 = scmp.eq.s32.totalorder %s29, 0
      %p186 = por %p184, %p185
      %p187 = scmp.ne.s32.totalorder %s175, %s176
      %p188 = scmp.eq.s32.totalorder %s30, 1
      %p189 = por %p187, %p188
      %p191 = scmp.ne.s32.totalorder %s176, %s190
      %p192 = scmp.eq.s32.totalorder %s30, 0
      %p193 = por %p191, %p192
      %s194 = ssub.s32 %s24, %s31
      %p195 = scmp.eq.s32.totalorder %s194, 0
      %s197 = sadd.s32 %s196, 1
      %s198 = scalar_select %p195, %s196, %s197
      %p201 = pneg %p195
      %p202 = scmp.eq.s32.totalorder %s24, 1
      %p203 = por %p201, %p202
      %p204 = scmp.ne.s32.totalorder %s196, %s199
      %p205 = scmp.eq.s32.totalorder %s24, 0
      %p206 = por %p204, %p205
      %p207 = scmp.ne.s32.totalorder %s196, %s199
      %p208 = scmp.eq.s32.totalorder %s29, 1
      %p209 = por %p207, %p208
      %p210 = scmp.ne.s32.totalorder %s199, %s200
      %p211 = scmp.eq.s32.totalorder %s29, 0
      %p212 = por %p210, %p211
      %p213 = scmp.ne.s32.totalorder %s199, %s200
      %p214 = scmp.eq.s32.totalorder %s30, 1
      %p215 = por %p213, %p214
      %p217 = scmp.ne.s32.totalorder %s200, %s216
      %p218 = scmp.eq.s32.totalorder %s30, 0
      %p219 = por %p217, %p218
      %p220 = scmp.le.s32.totalorder 1, %s24
      %p221 = scmp.lt.s32.totalorder %s24, 3
      %p222 = pnand %p220, %p221
      %p223 = pneg %p222
      // Predicated region
      $region9: #{_lambda_.24} parent=5 // pred_check
        _
      $region10: #{_lambda_.24} parent=5 // pred_check_branch
        %225 = sbr.rel (%p222) target = $region12
      $region11: #{_lambda_.24} parent=5 // pred_region
        %s226 = ssub.s32 %s24, 1
        // Predicated region
        $region13: #{_lambda_.24} parent=11 // pred_check
          %p227 = pneg %p123
        $region14: #{_lambda_.24} parent=11 // pred_check_branch
          %229 = sbr.rel (%p227) target = $region16
        $region15: #{_lambda_.24} parent=11 // pred_region
          %s231 = ssub.s32 256, 256
          %232 = vsyncadd [#allocation9], %s231
          %s233 = sshll.u32 [#allocation8], 4
          %s234 = int_to_ptr.vmem [resolvable:$true] %s233
          %239 = dma.hbm_to_vmem [thread:$0]  %s3, 256, %s234, [#allocation9], 64, 64, 4
        $region16: #{_lambda_.24} parent=11 // pred_fallthru
          _
        // Predicated region
        $region17: #{_lambda_.24} parent=11 // pred_check
          %p240 = pneg %p144
        $region18: #{_lambda_.24} parent=11 // pred_check_branch
          %242 = sbr.rel (%p240) target = $region20
        $region19: #{_lambda_.24} parent=11 // pred_region
          %s244 = ssub.s32 16, 16
          %245 = vsyncadd [#allocation9], %s244
          %s247 = sshll.u32 [#allocation10], 4
          %s248 = int_to_ptr.vmem [resolvable:$true] %s247
          %250 = dma.hbm_to_vmem [thread:$0]  %s4, 16, %s248, [#allocation9]
        $region20: #{_lambda_.24} parent=11 // pred_fallthru
          _
        // Predicated region
        $region21: #{_lambda_.24} parent=11 // pred_check
          %p251 = pneg %p165
        $region22: #{_lambda_.24} parent=11 // pred_check_branch
          %253 = sbr.rel (%p251) target = $region24
        $region23: #{_lambda_.24} parent=11 // pred_region
          %s255 = ssub.s32 16, 16
          %256 = vsyncadd [#allocation12], %s255
          %s258 = sshll.u32 [#allocation11], 4
          %s259 = int_to_ptr.vmem [resolvable:$true] %s258
          %261 = dma.hbm_to_vmem [thread:$0]  %s5, 16, %s259, [#allocation12]
        $region24: #{_lambda_.24} parent=11 // pred_fallthru
          _
        // Predicated region
        $region25: #{_lambda_.24} parent=11 // pred_check
          %p262 = pneg %p186
        $region26: #{_lambda_.24} parent=11 // pred_check_branch
          %264 = sbr.rel (%p262) target = $region28
        $region27: #{_lambda_.24} parent=11 // pred_region
          %s266 = ssub.s32 16, 16
          %267 = vsyncadd [#allocation12], %s266
          %s269 = sshll.u32 [#allocation13], 4
          %s270 = int_to_ptr.vmem [resolvable:$true] %s269
          %272 = dma.hbm_to_vmem [thread:$0]  %s6, 16, %s270, [#allocation12]
        $region28: #{_lambda_.24} parent=11 // pred_fallthru
          _
      $region12: #{_lambda_.24} parent=5 // pred_fallthru
        _
      %p273 = scmp.lt.s32.totalorder %s24, 2
      // Predicated region
      $region29: #{_lambda_.24} parent=5 // pred_check
        %p274 = pneg %p273
      $region30: #{_lambda_.24} parent=5 // pred_check_branch
        %276 = sbr.rel (%p274) target = $region32
      $region31: #{_lambda_.24} parent=5 // pred_region
        // Predicated region
        $region33: #{_lambda_.24} parent=31 // pred_check
          %p277 = pneg %p44
        $region34: #{_lambda_.24} parent=31 // pred_check_branch
          %279 = sbr.rel (%p277) target = $region36
        $region35: #{_lambda_.24} parent=31 // pred_region
          %s280 = sand.u32 %s34, 1
          %s281 = scalar_lea.sflag [#allocation3], %s280
          %s282 = sand.u32 %s34, 1
          %s283 = smul.addr %s282, 4
          %s284 = scalar_lea.vmem [#allocation2], %s283
          %s286 = ssub.s32 64, 64
          %287 = vsyncadd %s281, %s286
          %s288 = smul.addr %s24, 64
          %s289 = scalar_lea.hbm %s0, %s288
          %s291 = sshll.u32 %s284, 4
          %s292 = int_to_ptr.vmem [resolvable:$true] %s291
          %294 = dma.hbm_to_vmem [thread:$0]  %s289, 64, %s292, %s281
        $region36: #{_lambda_.24} parent=31 // pred_fallthru
          _
        // Predicated region
        $region37: #{_lambda_.24} parent=31 // pred_check
          %p295 = pneg %p70
        $region38: #{_lambda_.24} parent=31 // pred_check_branch
          %297 = sbr.rel (%p295) target = $region40
        $region39: #{_lambda_.24} parent=31 // pred_region
          %s298 = sand.u32 %s24, 1
          %s299 = scalar_lea.sflag [#allocation6], %s298
          %s300 = sand.u32 %s60, 1
          %s301 = scalar_lea.vmem [#allocation5], %s300
          %s303 = ssub.s32 16, 16
          %304 = vsyncadd %s299, %s303
          %s305 = smul.addr %s24, 16
          %s306 = scalar_lea.hbm %s1, %s305
          %s308 = sshll.u32 %s301, 4
          %s309 = int_to_ptr.vmem [resolvable:$true] %s308
          %311 = dma.hbm_to_vmem [thread:$0]  %s306, 16, %s309, %s299
        $region40: #{_lambda_.24} parent=31 // pred_fallthru
          _
        // Predicated region
        $region41: #{_lambda_.24} parent=31 // pred_check
          %p312 = pneg %p96
        $region42: #{_lambda_.24} parent=31 // pred_check_branch
          %314 = sbr.rel (%p312) target = $region44
        $region43: #{_lambda_.24} parent=31 // pred_region
          %s315 = sand.u32 %s24, 1
          %s316 = scalar_lea.sflag [#allocation6], %s315
          %s317 = sand.u32 %s86, 1
          %s318 = smul.addr %s317, 4
          %s319 = scalar_lea.vmem [#allocation7], %s318
          %s321 = ssub.s32 64, 64
          %322 = vsyncadd %s316, %s321
          %s323 = smul.addr %s24, 64
          %s324 = scalar_lea.hbm %s2, %s323
          %s326 = sshll.u32 %s319, 4
          %s327 = int_to_ptr.vmem [resolvable:$true] %s326
          %329 = dma.hbm_to_vmem [thread:$0]  %s324, 64, %s327, %s316
        $region44: #{_lambda_.24} parent=31 // pred_fallthru
          _
      $region32: #{_lambda_.24} parent=5 // pred_fallthru
        _
      %p330 = scmp.le.s32.totalorder 1, %s24
      %p331 = scmp.lt.s32.totalorder %s24, 3
      %p332 = pnand %p330, %p331
      %p333 = pneg %p332
      // Predicated region
      $region45: #{_lambda_.24} parent=5 // pred_check
        _
      $region46: #{_lambda_.24} parent=5 // pred_check_branch
        %335 = sbr.rel (%p332) target = $region48
      $region47: #{_lambda_.24} parent=5 // pred_region
        %s336 = ssub.s32 %s24, 1
        %s337 = sand.u32 %s37, 1
        %s338 = scalar_lea.sflag [#allocation3], %s337
        %s339 = sand.u32 %s37, 1
        %s340 = smul.addr %s339, 4
        %s341 = scalar_lea.vmem [#allocation2], %s340
        // Predicated region
        $region49: #{_lambda_.24} parent=47 // pred_check
          %p342 = pneg %p50
        $region50: #{_lambda_.24} parent=47 // pred_check_branch
          %344 = sbr.rel (%p342) target = $region52
        $region51: #{_lambda_.24} parent=47 // pred_region
          %345 = dma.done %s338, 64
        $region52: #{_lambda_.24} parent=47 // pred_fallthru
          _
        %s346 = sand.u32 %s29, 1
        %s347 = scalar_lea.sflag [#allocation6], %s346
        %s348 = sand.u32 %s63, 1
        %s349 = scalar_lea.vmem [#allocation5], %s348
        // Predicated region
        $region53: #{_lambda_.24} parent=47 // pred_check
          %p350 = pneg %p76
        $region54: #{_lambda_.24} parent=47 // pred_check_branch
          %352 = sbr.rel (%p350) target = $region56
        $region55: #{_lambda_.24} parent=47 // pred_region
          %353 = dma.done %s347, 16
        $region56: #{_lambda_.24} parent=47 // pred_fallthru
          _
        %s354 = sand.u32 %s29, 1
        %s355 = scalar_lea.sflag [#allocation6], %s354
        %s356 = sand.u32 %s89, 1
        %s357 = smul.addr %s356, 4
        %s358 = scalar_lea.vmem [#allocation7], %s357
        // Predicated region
        $region57: #{_lambda_.24} parent=47 // pred_check
          %p359 = pneg %p102
        $region58: #{_lambda_.24} parent=47 // pred_check_branch
          %361 = sbr.rel (%p359) target = $region60
        $region59: #{_lambda_.24} parent=47 // pred_region
          %362 = dma.done %s355, 64
        $region60: #{_lambda_.24} parent=47 // pred_fallthru
          _
        // Predicated region
        $region61: #{_lambda_.24} parent=47 // pred_check
          %p363 = pneg %p123
        $region62: #{_lambda_.24} parent=47 // pred_check_branch
          %365 = sbr.rel (%p363) target = $region64
        $region63: #{_lambda_.24} parent=47 // pred_region
          %366 = dma.done [#allocation9], 256
        $region64: #{_lambda_.24} parent=47 // pred_fallthru
          _
        // Predicated region
        $region65: #{_lambda_.24} parent=47 // pred_check
          %p367 = pneg %p144
        $region66: #{_lambda_.24} parent=47 // pred_check_branch
          %369 = sbr.rel (%p367) target = $region68
        $region67: #{_lambda_.24} parent=47 // pred_region
          %370 = dma.done [#allocation9], 16
        $region68: #{_lambda_.24} parent=47 // pred_fallthru
          _
        // Predicated region
        $region69: #{_lambda_.24} parent=47 // pred_check
          %p371 = pneg %p165
        $region70: #{_lambda_.24} parent=47 // pred_check_branch
          %373 = sbr.rel (%p371) target = $region72
        $region71: #{_lambda_.24} parent=47 // pred_region
          %374 = dma.done [#allocation12], 16
        $region72: #{_lambda_.24} parent=47 // pred_fallthru
          _
        // Predicated region
        $region73: #{_lambda_.24} parent=47 // pred_check
          %p375 = pneg %p186
        $region74: #{_lambda_.24} parent=47 // pred_check_branch
          %377 = sbr.rel (%p375) target = $region76
        $region75: #{_lambda_.24} parent=47 // pred_region
          %378 = dma.done [#allocation12], 16
        $region76: #{_lambda_.24} parent=47 // pred_fallthru
          _
        %s379 = sand.u32 %s37, 1
        %s380 = scalar_lea.sflag [#allocation3], %s379
        %s381 = sand.u32 %s37, 1
        %s382 = smul.addr %s381, 4
        %s383 = scalar_lea.vmem [#allocation2], %s382
        %p384 = pneg %p50
        %p385 = pneg %p47
        %s386 = sand.u32 %s29, 1
        %s387 = scalar_lea.sflag [#allocation6], %s386
        %s388 = sand.u32 %s63, 1
        %s389 = scalar_lea.vmem [#allocation5], %s388
        %p390 = pneg %p76
        %p391 = pneg %p73
        %s392 = sand.u32 %s29, 1
        %s393 = scalar_lea.sflag [#allocation6], %s392
        %s394 = sand.u32 %s89, 1
        %s395 = smul.addr %s394, 4
        %s396 = scalar_lea.vmem [#allocation7], %s395
        %p397 = pneg %p102
        %p398 = pneg %p99
        %p399 = pneg %p123
        %p400 = pneg %p120
        %p401 = pneg %p144
        %p402 = pneg %p141
        %p403 = pneg %p165
        %p404 = pneg %p162
        %p405 = pneg %p186
        %p406 = pneg %p183
        %p407 = pneg %p212
        %p408 = pneg %p209
        %s409 = sand.u32 %s199, 1
        %s410 = scalar_lea.sflag [#allocation4], %s409
        %s411 = sand.u32 %s199, 1
        %s412 = smul.addr %s411, 4
        %s413 = scalar_lea.vmem [#allocation14], %s412
        %v415 = vld [vmem:[%s349] sm:$0x1]
        %v416 = vld [vmem:[%s341] sm:$0xf]
        %v418 = vlaneseq
        %v419 = vshrl.u32 %v418, 7
        %v420 = vsub.s32 0, %v419
        %v421 = vrot.slane %v415, %v420
        %v424 = vunpack.c.l.b16 %v416
        %v425 = vpack.c.b16 %v424, %v424
        %426 = vrot.lane.b32.xlu0 %v425, 96
        %v427 = vpop.permute.xlu0 %426
        %vm428 = vcmask 64512
        %v430 = vsel %vm428, %v416, 0
        %v433 = vsel %vm428, %v427, 0
        %435 = vmatprep.subr.bf16.mxu0 0
        %436 = vmatpush1.bf16.xpose.msra.mxu0 %v433
        %437 = vmatprep.subr.bf16.mxu0 0
        %438 = vmatpush1.bf16.xpose.msra.mxu0 0
        %439 = vmatprep.subr.bf16.mxu0 0
        %440 = vmatpush1.bf16.xpose.msra.mxu0 0
        %441 = vmatprep.subr.bf16.mxu0 0
        %442 = vmatpush1.bf16.xpose.msra.mxu0 0
        %443 = vmatprep.subr.bf16.mxu0 0
        %444 = vmatpush1.bf16.xpose.msra.mxu0 0
        %445 = vmatprep.subr.bf16.mxu0 0
        %446 = vmatpush1.bf16.xpose.msra.mxu0 0
        %447 = vmatprep.subr.bf16.mxu0 0
        %448 = vmatpush1.bf16.xpose.msra.mxu0 0
        %449 = vmatprep.subr.bf16.mxu0 0
        %450 = vmatpush1.bf16.xpose.msra.mxu0 0
        %451 = vmatprep.subr.bf16.mxu0 0
        %452 = vmatpush1.bf16.xpose.msra.mxu0 0
        %453 = vmatprep.subr.bf16.mxu0 0
        %454 = vmatpush1.bf16.xpose.msra.mxu0 0
        %455 = vmatprep.subr.bf16.mxu0 0
        %456 = vmatpush1.bf16.xpose.msra.mxu0 0
        %457 = vmatprep.subr.bf16.mxu0 0
        %458 = vmatpush1.bf16.xpose.msra.mxu0 0
        %459 = vmatprep.subr.bf16.mxu0 0
        %460 = vmatpush1.bf16.xpose.msra.mxu0 0
        %461 = vmatprep.subr.bf16.mxu0 0
        %462 = vmatpush1.bf16.xpose.msra.mxu0 0
        %463 = vmatprep.subr.bf16.mxu0 0
        %464 = vmatpush1.bf16.xpose.msra.mxu0 0
        %465 = vmatprep.subr.bf16.mxu0 0
        %466 = vmatpush1.bf16.xpose.msra.mxu0 0
        %467 = vmatprep.mubr.bf16.mxu0 0
        %468 = vmatmul.mubr.bf16.gmra.mrb[0].mxu0 %v430
        %v469 = vpop.f32.mrb[0].mxu0
        %v470 = vadd.f32 %v421, %v469
        %v471 = vpop.f32.mrb[0].mxu0
        %v472 = vpop.f32.mrb[0].mxu0
        %v473 = vpop.f32.mrb[0].mxu0
        %474 = vdwg.mxu0
        %v475 = vsel %vm428, %v470, -inf
        %476 = vmax.xlane.f32.xlu0 %v475
        %v477 = vpop.xlane.xlu0 %476
        %v478 = vsub.f32 %v470, %v477
        %v479 = vmul.f32 %v478, 1.442695
        %v480 = vpow.pop %v479
        %v481 = vsel %vm428, %v480, 0.0
        %482 = vadd.xlane.f32.xlu0 %v481
        %v483 = vpop.xlane.xlu0 %482
        %v484 = vrcp.pop %v483
        %v485 = vmul.f32 %v480, %v484
        %v486 = vpack.c.bf16 %v485, %v485
        %487 = vrot.lane.b32.xlu0 %v425, 64
        %v488 = vpop.permute.xlu0 %487
        %v490 = vsel %vm428, %v486, 0
        %vm492 = vcmask 1043456
        %v494 = vsel %vm492, %v488, 0
        %496 = vmatprep.subr.bf16.mxu0 0
        %497 = vmatpush1.bf16.msra.mxu0 %v494
        %498 = vmatprep.subr.bf16.mxu0 0
        %499 = vmatpush1.bf16.msra.mxu0 0
        %500 = vmatprep.subr.bf16.mxu0 0
        %501 = vmatpush1.bf16.msra.mxu0 0
        %502 = vmatprep.subr.bf16.mxu0 0
        %503 = vmatpush1.bf16.msra.mxu0 0
        %504 = vmatprep.subr.bf16.mxu0 0
        %505 = vmatpush1.bf16.msra.mxu0 0
        %506 = vmatprep.subr.bf16.mxu0 0
        %507 = vmatpush1.bf16.msra.mxu0 0
        %508 = vmatprep.subr.bf16.mxu0 0
        %509 = vmatpush1.bf16.msra.mxu0 0
        %510 = vmatprep.subr.bf16.mxu0 0
        %511 = vmatpush1.bf16.msra.mxu0 0
        %512 = vmatprep.subr.bf16.mxu0 0
        %513 = vmatpush1.bf16.msra.mxu0 0
        %514 = vmatprep.subr.bf16.mxu0 0
        %515 = vmatpush1.bf16.msra.mxu0 0
        %516 = vmatprep.subr.bf16.mxu0 0
        %517 = vmatpush1.bf16.msra.mxu0 0
        %518 = vmatprep.subr.bf16.mxu0 0
        %519 = vmatpush1.bf16.msra.mxu0 0
        %520 = vmatprep.subr.bf16.mxu0 0
        %521 = vmatpush1.bf16.msra.mxu0 0
        %522 = vmatprep.subr.bf16.mxu0 0
        %523 = vmatpush1.bf16.msra.mxu0 0
        %524 = vmatprep.subr.bf16.mxu0 0
        %525 = vmatpush1.bf16.msra.mxu0 0
        %526 = vmatprep.subr.bf16.mxu0 0
        %527 = vmatpush1.bf16.msra.mxu0 0
        %528 = vmatprep.mubr.bf16.mxu0 0
        %529 = vmatmul.mubr.bf16.gmra.mrb[0].mxu0 %v490
        %v530 = vpop.f32.mrb[0].mxu0
        %v531 = vadd.f32 0.0, %v530
        %v532 = vpop.f32.mrb[0].mxu0
        %v533 = vpop.f32.mrb[0].mxu0
        %v534 = vpop.f32.mrb[0].mxu0
        %535 = vdwg.mxu0
        %v536 = vpack.c.bf16 %v531, %v531
        %v537 = vld [vmem:[#allocation8] sm:$0xf]
        %538 = vrot.lane.b32.xlu0 %v425, 120
        %v539 = vpop.permute.xlu0 %538
        %540 = vrot.lane.b32.xlu0 %v425, 88
        %v541 = vpop.permute.xlu0 %540
        %v543 = vsel %vm428, %v539, 0
        %v546 = vsel %vm428, %v541, 0
        %548 = vmatprep.subr.bf16.mxu0 0
        %549 = vmatpush1.bf16.xpose.msra.mxu0 %v546
        %550 = vmatprep.subr.bf16.mxu0 0
        %551 = vmatpush1.bf16.xpose.msra.mxu0 0
        %552 = vmatprep.subr.bf16.mxu0 0
        %553 = vmatpush1.bf16.xpose.msra.mxu0 0
        %554 = vmatprep.subr.bf16.mxu0 0
        %555 = vmatpush1.bf16.xpose.msra.mxu0 0
        %556 = vmatprep.subr.bf16.mxu0 0
        %557 = vmatpush1.bf16.xpose.msra.mxu0 0
        %558 = vmatprep.subr.bf16.mxu0 0
        %559 = vmatpush1.bf16.xpose.msra.mxu0 0
        %560 = vmatprep.subr.bf16.mxu0 0
        %561 = vmatpush1.bf16.xpose.msra.mxu0 0
        %562 = vmatprep.subr.bf16.mxu0 0
        %563 = vmatpush1.bf16.xpose.msra.mxu0 0
        %564 = vmatprep.subr.bf16.mxu0 0
        %565 = vmatpush1.bf16.xpose.msra.mxu0 0
        %566 = vmatprep.subr.bf16.mxu0 0
        %567 = vmatpush1.bf16.xpose.msra.mxu0 0
        %568 = vmatprep.subr.bf16.mxu0 0
        %569 = vmatpush1.bf16.xpose.msra.mxu0 0
        %570 = vmatprep.subr.bf16.mxu0 0
        %571 = vmatpush1.bf16.xpose.msra.mxu0 0
        %572 = vmatprep.subr.bf16.mxu0 0
        %573 = vmatpush1.bf16.xpose.msra.mxu0 0
        %574 = vmatprep.subr.bf16.mxu0 0
        %575 = vmatpush1.bf16.xpose.msra.mxu0 0
        %576 = vmatprep.subr.bf16.mxu0 0
        %577 = vmatpush1.bf16.xpose.msra.mxu0 0
        %578 = vmatprep.subr.bf16.mxu0 0
        %579 = vmatpush1.bf16.xpose.msra.mxu0 0
        %580 = vmatprep.mubr.bf16.mxu0 0
        %581 = vmatmul.mubr.bf16.gmra.mrb[0].mxu0 %v543
        %v582 = vpop.f32.mrb[0].mxu0
        %v583 = vadd.f32 %v421, %v582
        %v584 = vpop.f32.mrb[0].mxu0
        %v585 = vpop.f32.mrb[0].mxu0
        %v586 = vpop.f32.mrb[0].mxu0
        %587 = vdwg.mxu0
        %v588 = vsel %vm428, %v583, -inf
        %589 = vmax.xlane.f32.xlu0 %v588
        %v590 = vpop.xlane.xlu0 %589
        %v591 = vsub.f32 %v583, %v590
        %v592 = vmul.f32 %v591, 1.442695
        %v593 = vpow.pop %v592
        %v594 = vsel %vm428, %v593, 0.0
        %595 = vadd.xlane.f32.xlu0 %v594
        %v596 = vpop.xlane.xlu0 %595
        %v597 = vrcp.pop %v596
        %v598 = vmul.f32 %v593, %v597
        %v599 = vpack.c.bf16 %v598, %v598
        %600 = vrot.lane.b32.xlu0 %v425, 56
        %v601 = vpop.permute.xlu0 %600
        %v603 = vsel %vm428, %v599, 0
        %v606 = vsel %vm492, %v601, 0
        %608 = vmatprep.subr.bf16.mxu0 0
        %609 = vmatpush1.bf16.msra.mxu0 %v606
        %610 = vmatprep.subr.bf16.mxu0 0
        %611 = vmatpush1.bf16.msra.mxu0 0
        %612 = vmatprep.subr.bf16.mxu0 0
        %613 = vmatpush1.bf16.msra.mxu0 0
        %614 = vmatprep.subr.bf16.mxu0 0
        %615 = vmatpush1.bf16.msra.mxu0 0
        %616 = vmatprep.subr.bf16.mxu0 0
        %617 = vmatpush1.bf16.msra.mxu0 0
        %618 = vmatprep.subr.bf16.mxu0 0
        %619 = vmatpush1.bf16.msra.mxu0 0
        %620 = vmatprep.subr.bf16.mxu0 0
        %621 = vmatpush1.bf16.msra.mxu0 0
        %622 = vmatprep.subr.bf16.mxu0 0
        %623 = vmatpush1.bf16.msra.mxu0 0
        %624 = vmatprep.subr.bf16.mxu0 0
        %625 = vmatpush1.bf16.msra.mxu0 0
        %626 = vmatprep.subr.bf16.mxu0 0
        %627 = vmatpush1.bf16.msra.mxu0 0
        %628 = vmatprep.subr.bf16.mxu0 0
        %629 = vmatpush1.bf16.msra.mxu0 0
        %630 = vmatprep.subr.bf16.mxu0 0
        %631 = vmatpush1.bf16.msra.mxu0 0
        %632 = vmatprep.subr.bf16.mxu0 0
        %633 = vmatpush1.bf16.msra.mxu0 0
        %634 = vmatprep.subr.bf16.mxu0 0
        %635 = vmatpush1.bf16.msra.mxu0 0
        %636 = vmatprep.subr.bf16.mxu0 0
        %637 = vmatpush1.bf16.msra.mxu0 0
        %638 = vmatprep.subr.bf16.mxu0 0
        %639 = vmatpush1.bf16.msra.mxu0 0
        %640 = vmatprep.mubr.bf16.mxu0 0
        %641 = vmatmul.mubr.bf16.gmra.mrb[0].mxu0 %v603
        %v642 = vpop.f32.mrb[0].mxu0
        %v643 = vadd.f32 0.0, %v642
        %v644 = vpop.f32.mrb[0].mxu0
        %v645 = vpop.f32.mrb[0].mxu0
        %v646 = vpop.f32.mrb[0].mxu0
        %647 = vdwg.mxu0
        %v648 = vpack.c.bf16 %v643, %v643
        %v649 = vld [vmem:[#allocation8 + $0x4] sm:$0xf]
        %v651 = vsel %vm428, %v648, 0
        %v654 = vsel %vm492, %v649, 0
        %656 = vmatprep.subr.bf16.mxu0 0
        %657 = vmatpush1.bf16.msra.mxu0 %v654
        %658 = vmatprep.subr.bf16.mxu0 0
        %659 = vmatpush1.bf16.msra.mxu0 0
        %660 = vmatprep.subr.bf16.mxu0 0
        %661 = vmatpush1.bf16.msra.mxu0 0
        %662 = vmatprep.subr.bf16.mxu0 0
        %663 = vmatpush1.bf16.msra.mxu0 0
        %664 = vmatprep.subr.bf16.mxu0 0
        %665 = vmatpush1.bf16.msra.mxu0 0
        %666 = vmatprep.subr.bf16.mxu0 0
        %667 = vmatpush1.bf16.msra.mxu0 0
        %668 = vmatprep.subr.bf16.mxu0 0
        %669 = vmatpush1.bf16.msra.mxu0 0
        %670 = vmatprep.subr.bf16.mxu0 0
        %671 = vmatpush1.bf16.msra.mxu0 0
        %672 = vmatprep.subr.bf16.mxu0 0
        %673 = vmatpush1.bf16.msra.mxu0 0
        %674 = vmatprep.subr.bf16.mxu0 0
        %675 = vmatpush1.bf16.msra.mxu0 0
        %676 = vmatprep.subr.bf16.mxu0 0
        %677 = vmatpush1.bf16.msra.mxu0 0
        %678 = vmatprep.subr.bf16.mxu0 0
        %679 = vmatpush1.bf16.msra.mxu0 0
        %680 = vmatprep.subr.bf16.mxu0 0
        %681 = vmatpush1.bf16.msra.mxu0 0
        %682 = vmatprep.subr.bf16.mxu0 0
        %683 = vmatpush1.bf16.msra.mxu0 0
        %684 = vmatprep.subr.bf16.mxu0 0
        %685 = vmatpush1.bf16.msra.mxu0 0
        %686 = vmatprep.subr.bf16.mxu0 0
        %687 = vmatpush1.bf16.msra.mxu0 0
        %688 = vmatprep.mubr.bf16.mxu0 0
        %689 = vmatmul.mubr.bf16.gmra.mrb[0].mxu0 %v651
        %v690 = vpop.f32.mrb[0].mxu0
        %v691 = vadd.f32 0.0, %v690
        %v692 = vpop.f32.mrb[0].mxu0
        %v693 = vpop.f32.mrb[0].mxu0
        %v694 = vpop.f32.mrb[0].mxu0
        %695 = vdwg.mxu0
        %v697 = vsel %vm428, %v536, 0
        %v700 = vsel %vm492, %v537, 0
        %702 = vmatprep.subr.bf16.mxu0 0
        %703 = vmatpush1.bf16.msra.mxu0 %v700
        %704 = vmatprep.subr.bf16.mxu0 0
        %705 = vmatpush1.bf16.msra.mxu0 0
        %706 = vmatprep.subr.bf16.mxu0 0
        %707 = vmatpush1.bf16.msra.mxu0 0
        %708 = vmatprep.subr.bf16.mxu0 0
        %709 = vmatpush1.bf16.msra.mxu0 0
        %710 = vmatprep.subr.bf16.mxu0 0
        %711 = vmatpush1.bf16.msra.mxu0 0
        %712 = vmatprep.subr.bf16.mxu0 0
        %713 = vmatpush1.bf16.msra.mxu0 0
        %714 = vmatprep.subr.bf16.mxu0 0
        %715 = vmatpush1.bf16.msra.mxu0 0
        %716 = vmatprep.subr.bf16.mxu0 0
        %717 = vmatpush1.bf16.msra.mxu0 0
        %718 = vmatprep.subr.bf16.mxu0 0
        %719 = vmatpush1.bf16.msra.mxu0 0
        %720 = vmatprep.subr.bf16.mxu0 0
        %721 = vmatpush1.bf16.msra.mxu0 0
        %722 = vmatprep.subr.bf16.mxu0 0
        %723 = vmatpush1.bf16.msra.mxu0 0
        %724 = vmatprep.subr.bf16.mxu0 0
        %725 = vmatpush1.bf16.msra.mxu0 0
        %726 = vmatprep.subr.bf16.mxu0 0
        %727 = vmatpush1.bf16.msra.mxu0 0
        %728 = vmatprep.subr.bf16.mxu0 0
        %729 = vmatpush1.bf16.msra.mxu0 0
        %730 = vmatprep.subr.bf16.mxu0 0
        %731 = vmatpush1.bf16.msra.mxu0 0
        %732 = vmatprep.subr.bf16.mxu0 0
        %733 = vmatpush1.bf16.msra.mxu0 0
        %734 = vmatprep.mubr.bf16.mxu0 0
        %735 = vmatmul.mubr.bf16.gmra.mrb[0].mxu0 %v697
        %v736 = vpop.f32.mrb[0].mxu0
        %v737 = vadd.f32 %v691, %v736
        %v738 = vpop.f32.mrb[0].mxu0
        %v739 = vpop.f32.mrb[0].mxu0
        %v740 = vpop.f32.mrb[0].mxu0
        %741 = vdwg.mxu0
        %742 = vrot.lane.b32.xlu0 %v425, 112
        %v743 = vpop.permute.xlu0 %742
        %744 = vrot.lane.b32.xlu0 %v425, 80
        %v745 = vpop.permute.xlu0 %744
        %v747 = vsel %vm428, %v743, 0
        %v750 = vsel %vm428, %v745, 0
        %752 = vmatprep.subr.bf16.mxu0 0
        %753 = vmatpush1.bf16.xpose.msra.mxu0 %v750
        %754 = vmatprep.subr.bf16.mxu0 0
        %755 = vmatpush1.bf16.xpose.msra.mxu0 0
        %756 = vmatprep.subr.bf16.mxu0 0
        %757 = vmatpush1.bf16.xpose.msra.mxu0 0
        %758 = vmatprep.subr.bf16.mxu0 0
        %759 = vmatpush1.bf16.xpose.msra.mxu0 0
        %760 = vmatprep.subr.bf16.mxu0 0
        %761 = vmatpush1.bf16.xpose.msra.mxu0 0
        %762 = vmatprep.subr.bf16.mxu0 0
        %763 = vmatpush1.bf16.xpose.msra.mxu0 0
        %764 = vmatprep.subr.bf16.mxu0 0
        %765 = vmatpush1.bf16.xpose.msra.mxu0 0
        %766 = vmatprep.subr.bf16.mxu0 0
        %767 = vmatpush1.bf16.xpose.msra.mxu0 0
        %768 = vmatprep.subr.bf16.mxu0 0
        %769 = vmatpush1.bf16.xpose.msra.mxu0 0
        %770 = vmatprep.subr.bf16.mxu0 0
        %771 = vmatpush1.bf16.xpose.msra.mxu0 0
        %772 = vmatprep.subr.bf16.mxu0 0
        %773 = vmatpush1.bf16.xpose.msra.mxu0 0
        %774 = vmatprep.subr.bf16.mxu0 0
        %775 = vmatpush1.bf16.xpose.msra.mxu0 0
        %776 = vmatprep.subr.bf16.mxu0 0
        %777 = vmatpush1.bf16.xpose.msra.mxu0 0
        %778 = vmatprep.subr.bf16.mxu0 0
        %779 = vmatpush1.bf16.xpose.msra.mxu0 0
        %780 = vmatprep.subr.bf16.mxu0 0
        %781 = vmatpush1.bf16.xpose.msra.mxu0 0
        %782 = vmatprep.subr.bf16.mxu0 0
        %783 = vmatpush1.bf16.xpose.msra.mxu0 0
        %784 = vmatprep.mubr.bf16.mxu0 0
        %785 = vmatmul.mubr.bf16.gmra.mrb[0].mxu0 %v747
        %v786 = vpop.f32.mrb[0].mxu0
        %v787 = vadd.f32 %v421, %v786
        %v788 = vpop.f32.mrb[0].mxu0
        %v789 = vpop.f32.mrb[0].mxu0
        %v790 = vpop.f32.mrb[0].mxu0
        %791 = vdwg.mxu0
        %v792 = vsel %vm428, %v787, -inf
        %793 = vmax.xlane.f32.xlu0 %v792
        %v794 = vpop.xlane.xlu0 %793
        %v795 = vsub.f32 %v787, %v794
        %v796 = vmul.f32 %v795, 1.442695
        %v797 = vpow.pop %v796
        %v798 = vsel %vm428, %v797, 0.0
        %799 = vadd.xlane.f32.xlu0 %v798
        %v800 = vpop.xlane.xlu0 %799
        %v801 = vrcp.pop %v800
        %v802 = vmul.f32 %v797, %v801
        %v803 = vpack.c.bf16 %v802, %v802
        %804 = vrot.lane.b32.xlu0 %v425, 48
        %v805 = vpop.permute.xlu0 %804
        %v807 = vsel %vm428, %v803, 0
        %v810 = vsel %vm492, %v805, 0
        %812 = vmatprep.subr.bf16.mxu0 0
        %813 = vmatpush1.bf16.msra.mxu0 %v810
        %814 = vmatprep.subr.bf16.mxu0 0
        %815 = vmatpush1.bf16.msra.mxu0 0
        %816 = vmatprep.subr.bf16.mxu0 0
        %817 = vmatpush1.bf16.msra.mxu0 0
        %818 = vmatprep.subr.bf16.mxu0 0
        %819 = vmatpush1.bf16.msra.mxu0 0
        %820 = vmatprep.subr.bf16.mxu0 0
        %821 = vmatpush1.bf16.msra.mxu0 0
        %822 = vmatprep.subr.bf16.mxu0 0
        %823 = vmatpush1.bf16.msra.mxu0 0
        %824 = vmatprep.subr.bf16.mxu0 0
        %825 = vmatpush1.bf16.msra.mxu0 0
        %826 = vmatprep.subr.bf16.mxu0 0
        %827 = vmatpush1.bf16.msra.mxu0 0
        %828 = vmatprep.subr.bf16.mxu0 0
        %829 = vmatpush1.bf16.msra.mxu0 0
        %830 = vmatprep.subr.bf16.mxu0 0
        %831 = vmatpush1.bf16.msra.mxu0 0
        %832 = vmatprep.subr.bf16.mxu0 0
        %833 = vmatpush1.bf16.msra.mxu0 0
        %834 = vmatprep.subr.bf16.mxu0 0
        %835 = vmatpush1.bf16.msra.mxu0 0
        %836 = vmatprep.subr.bf16.mxu0 0
        %837 = vmatpush1.bf16.msra.mxu0 0
        %838 = vmatprep.subr.bf16.mxu0 0
        %839 = vmatpush1.bf16.msra.mxu0 0
        %840 = vmatprep.subr.bf16.mxu0 0
        %841 = vmatpush1.bf16.msra.mxu0 0
        %842 = vmatprep.subr.bf16.mxu0 0
        %843 = vmatpush1.bf16.msra.mxu0 0
        %844 = vmatprep.mubr.bf16.mxu0 0
        %845 = vmatmul.mubr.bf16.gmra.mrb[0].mxu0 %v807
        %v846 = vpop.f32.mrb[0].mxu0
        %v847 = vadd.f32 0.0, %v846
        %v848 = vpop.f32.mrb[0].mxu0
        %v849 = vpop.f32.mrb[0].mxu0
        %v850 = vpop.f32.mrb[0].mxu0
        %851 = vdwg.mxu0
        %v852 = vpack.c.bf16 %v847, %v847
        %v853 = vld [vmem:[#allocation8 + $0x8] sm:$0xf]
        %v855 = vsel %vm428, %v852, 0
        %v858 = vsel %vm492, %v853, 0
        %860 = vmatprep.subr.bf16.mxu0 0
        %861 = vmatpush1.bf16.msra.mxu0 %v858
        %862 = vmatprep.subr.bf16.mxu0 0
        %863 = vmatpush1.bf16.msra.mxu0 0
        %864 = vmatprep.subr.bf16.mxu0 0
        %865 = vmatpush1.bf16.msra.mxu0 0
        %866 = vmatprep.subr.bf16.mxu0 0
        %867 = vmatpush1.bf16.msra.mxu0 0
        %868 = vmatprep.subr.bf16.mxu0 0
        %869 = vmatpush1.bf16.msra.mxu0 0
        %870 = vmatprep.subr.bf16.mxu0 0
        %871 = vmatpush1.bf16.msra.mxu0 0
        %872 = vmatprep.subr.bf16.mxu0 0
        %873 = vmatpush1.bf16.msra.mxu0 0
        %874 = vmatprep.subr.bf16.mxu0 0
        %875 = vmatpush1.bf16.msra.mxu0 0
        %876 = vmatprep.subr.bf16.mxu0 0
        %877 = vmatpush1.bf16.msra.mxu0 0
        %878 = vmatprep.subr.bf16.mxu0 0
        %879 = vmatpush1.bf16.msra.mxu0 0
        %880 = vmatprep.subr.bf16.mxu0 0
        %881 = vmatpush1.bf16.msra.mxu0 0
        %882 = vmatprep.subr.bf16.mxu0 0
        %883 = vmatpush1.bf16.msra.mxu0 0
        %884 = vmatprep.subr.bf16.mxu0 0
        %885 = vmatpush1.bf16.msra.mxu0 0
        %886 = vmatprep.subr.bf16.mxu0 0
        %887 = vmatpush1.bf16.msra.mxu0 0
        %888 = vmatprep.subr.bf16.mxu0 0
        %889 = vmatpush1.bf16.msra.mxu0 0
        %890 = vmatprep.subr.bf16.mxu0 0
        %891 = vmatpush1.bf16.msra.mxu0 0
        %892 = vmatprep.mubr.bf16.mxu0 0
        %893 = vmatmul.mubr.bf16.gmra.mrb[0].mxu0 %v855
        %v894 = vpop.f32.mrb[0].mxu0
        %v895 = vadd.f32 0.0, %v894
        %v896 = vpop.f32.mrb[0].mxu0
        %v897 = vpop.f32.mrb[0].mxu0
        %v898 = vpop.f32.mrb[0].mxu0
        %899 = vdwg.mxu0
        %v900 = vadd.f32 %v737, %v895
        %901 = vrot.lane.b32.xlu0 %v425, 104
        %v902 = vpop.permute.xlu0 %901
        %903 = vrot.lane.b32.xlu0 %v425, 72
        %v904 = vpop.permute.xlu0 %903
        %v906 = vsel %vm428, %v902, 0
        %v909 = vsel %vm428, %v904, 0
        %911 = vmatprep.subr.bf16.mxu0 0
        %912 = vmatpush1.bf16.xpose.msra.mxu0 %v909
        %913 = vmatprep.subr.bf16.mxu0 0
        %914 = vmatpush1.bf16.xpose.msra.mxu0 0
        %915 = vmatprep.subr.bf16.mxu0 0
        %916 = vmatpush1.bf16.xpose.msra.mxu0 0
        %917 = vmatprep.subr.bf16.mxu0 0
        %918 = vmatpush1.bf16.xpose.msra.mxu0 0
        %919 = vmatprep.subr.bf16.mxu0 0
        %920 = vmatpush1.bf16.xpose.msra.mxu0 0
        %921 = vmatprep.subr.bf16.mxu0 0
        %922 = vmatpush1.bf16.xpose.msra.mxu0 0
        %923 = vmatprep.subr.bf16.mxu0 0
        %924 = vmatpush1.bf16.xpose.msra.mxu0 0
        %925 = vmatprep.subr.bf16.mxu0 0
        %926 = vmatpush1.bf16.xpose.msra.mxu0 0
        %927 = vmatprep.subr.bf16.mxu0 0
        %928 = vmatpush1.bf16.xpose.msra.mxu0 0
        %929 = vmatprep.subr.bf16.mxu0 0
        %930 = vmatpush1.bf16.xpose.msra.mxu0 0
        %931 = vmatprep.subr.bf16.mxu0 0
        %932 = vmatpush1.bf16.xpose.msra.mxu0 0
        %933 = vmatprep.subr.bf16.mxu0 0
        %934 = vmatpush1.bf16.xpose.msra.mxu0 0
        %935 = vmatprep.subr.bf16.mxu0 0
        %936 = vmatpush1.bf16.xpose.msra.mxu0 0
        %937 = vmatprep.subr.bf16.mxu0 0
        %938 = vmatpush1.bf16.xpose.msra.mxu0 0
        %939 = vmatprep.subr.bf16.mxu0 0
        %940 = vmatpush1.bf16.xpose.msra.mxu0 0
        %941 = vmatprep.subr.bf16.mxu0 0
        %942 = vmatpush1.bf16.xpose.msra.mxu0 0
        %943 = vmatprep.mubr.bf16.mxu0 0
        %944 = vmatmul.mubr.bf16.gmra.mrb[0].mxu0 %v906
        %v945 = vpop.f32.mrb[0].mxu0
        %v946 = vadd.f32 %v421, %v945
        %v947 = vpop.f32.mrb[0].mxu0
        %v948 = vpop.f32.mrb[0].mxu0
        %v949 = vpop.f32.mrb[0].mxu0
        %950 = vdwg.mxu0
        %v951 = vsel %vm428, %v946, -inf
        %952 = vmax.xlane.f32.xlu0 %v951
        %v953 = vpop.xlane.xlu0 %952
        %v954 = vsub.f32 %v946, %v953
        %v955 = vmul.f32 %v954, 1.442695
        %v956 = vpow.pop %v955
        %v957 = vsel %vm428, %v956, 0.0
        %958 = vadd.xlane.f32.xlu0 %v957
        %v959 = vpop.xlane.xlu0 %958
        %v960 = vrcp.pop %v959
        %v961 = vmul.f32 %v956, %v960
        %v962 = vpack.c.bf16 %v961, %v961
        %963 = vrot.lane.b32.xlu0 %v425, 40
        %v964 = vpop.permute.xlu0 %963
        %v966 = vsel %vm428, %v962, 0
        %v969 = vsel %vm492, %v964, 0
        %971 = vmatprep.subr.bf16.mxu0 0
        %972 = vmatpush1.bf16.msra.mxu0 %v969
        %973 = vmatprep.subr.bf16.mxu0 0
        %974 = vmatpush1.bf16.msra.mxu0 0
        %975 = vmatprep.subr.bf16.mxu0 0
        %976 = vmatpush1.bf16.msra.mxu0 0
        %977 = vmatprep.subr.bf16.mxu0 0
        %978 = vmatpush1.bf16.msra.mxu0 0
        %979 = vmatprep.subr.bf16.mxu0 0
        %980 = vmatpush1.bf16.msra.mxu0 0
        %981 = vmatprep.subr.bf16.mxu0 0
        %982 = vmatpush1.bf16.msra.mxu0 0
        %983 = vmatprep.subr.bf16.mxu0 0
        %984 = vmatpush1.bf16.msra.mxu0 0
        %985 = vmatprep.subr.bf16.mxu0 0
        %986 = vmatpush1.bf16.msra.mxu0 0
        %987 = vmatprep.subr.bf16.mxu0 0
        %988 = vmatpush1.bf16.msra.mxu0 0
        %989 = vmatprep.subr.bf16.mxu0 0
        %990 = vmatpush1.bf16.msra.mxu0 0
        %991 = vmatprep.subr.bf16.mxu0 0
        %992 = vmatpush1.bf16.msra.mxu0 0
        %993 = vmatprep.subr.bf16.mxu0 0
        %994 = vmatpush1.bf16.msra.mxu0 0
        %995 = vmatprep.subr.bf16.mxu0 0
        %996 = vmatpush1.bf16.msra.mxu0 0
        %997 = vmatprep.subr.bf16.mxu0 0
        %998 = vmatpush1.bf16.msra.mxu0 0
        %999 = vmatprep.subr.bf16.mxu0 0
        %1000 = vmatpush1.bf16.msra.mxu0 0
        %1001 = vmatprep.subr.bf16.mxu0 0
        %1002 = vmatpush1.bf16.msra.mxu0 0
        %1003 = vmatprep.mubr.bf16.mxu0 0
        %1004 = vmatmul.mubr.bf16.gmra.mrb[0].mxu0 %v966
        %v1005 = vpop.f32.mrb[0].mxu0
        %v1006 = vadd.f32 0.0, %v1005
        %v1007 = vpop.f32.mrb[0].mxu0
        %v1008 = vpop.f32.mrb[0].mxu0
        %v1009 = vpop.f32.mrb[0].mxu0
        %1010 = vdwg.mxu0
        %v1011 = vpack.c.bf16 %v1006, %v1006
        %v1012 = vld [vmem:[#allocation8 + $0xc] sm:$0xf]
        %v1014 = vsel %vm428, %v1011, 0
        %v1017 = vsel %vm492, %v1012, 0
        %1019 = vmatprep.subr.bf16.mxu0 0
        %1020 = vmatpush1.bf16.msra.mxu0 %v1017
        %1021 = vmatprep.subr.bf16.mxu0 0
        %1022 = vmatpush1.bf16.msra.mxu0 0
        %1023 = vmatprep.subr.bf16.mxu0 0
        %1024 = vmatpush1.bf16.msra.mxu0 0
        %1025 = vmatprep.subr.bf16.mxu0 0
        %1026 = vmatpush1.bf16.msra.mxu0 0
        %1027 = vmatprep.subr.bf16.mxu0 0
        %1028 = vmatpush1.bf16.msra.mxu0 0
        %1029 = vmatprep.subr.bf16.mxu0 0
        %1030 = vmatpush1.bf16.msra.mxu0 0
        %1031 = vmatprep.subr.bf16.mxu0 0
        %1032 = vmatpush1.bf16.msra.mxu0 0
        %1033 = vmatprep.subr.bf16.mxu0 0
        %1034 = vmatpush1.bf16.msra.mxu0 0
        %1035 = vmatprep.subr.bf16.mxu0 0
        %1036 = vmatpush1.bf16.msra.mxu0 0
        %1037 = vmatprep.subr.bf16.mxu0 0
        %1038 = vmatpush1.bf16.msra.mxu0 0
        %1039 = vmatprep.subr.bf16.mxu0 0
        %1040 = vmatpush1.bf16.msra.mxu0 0
        %1041 = vmatprep.subr.bf16.mxu0 0
        %1042 = vmatpush1.bf16.msra.mxu0 0
        %1043 = vmatprep.subr.bf16.mxu0 0
        %1044 = vmatpush1.bf16.msra.mxu0 0
        %1045 = vmatprep.subr.bf16.mxu0 0
        %1046 = vmatpush1.bf16.msra.mxu0 0
        %1047 = vmatprep.subr.bf16.mxu0 0
        %1048 = vmatpush1.bf16.msra.mxu0 0
        %1049 = vmatprep.subr.bf16.mxu0 0
        %1050 = vmatpush1.bf16.msra.mxu0 0
        %1051 = vmatprep.mubr.bf16.mxu0 0
        %1052 = vmatmul.mubr.bf16.gmra.mrb[0].mxu0 %v1014
        %v1053 = vpop.f32.mrb[0].mxu0
        %v1054 = vadd.f32 0.0, %v1053
        %v1055 = vpop.f32.mrb[0].mxu0
        %v1056 = vpop.f32.mrb[0].mxu0
        %v1057 = vpop.f32.mrb[0].mxu0
        %1058 = vdwg.mxu0
        %v1059 = vadd.f32 %v900, %v1054
        %v1060 = vld [vmem:[#allocation10] sm:$0x1]
        %v1062 = vlaneseq
        %v1063 = vshrl.u32 %v1062, 7
        %v1064 = vsub.s32 0, %v1063
        %v1065 = vrot.slane %v1060, %v1064
        %v1067 = vadd.f32 %v1059, %v1065
        %v1068 = vld [vmem:[%s358] sm:$0xf]
        %v1069 = vunpack.c.l.bf16 %v1068
        %v1070 = vadd.f32 %v1067, %v1069
        %vm1071 = vcmask 261120
        %v1072 = vsel %vm1071, %v1070, 0.0
        %1073 = vadd.xlane.f32.xlu0 %v1072
        %v1074 = vpop.xlane.xlu0 %1073
        %v1075 = vrcp.pop 32.0
        %v1076 = vmul.f32 %v1074, %v1075
        %v1077 = vmul.f32 %v1070, %v1070
        %v1078 = vsel %vm1071, %v1077, 0.0
        %1079 = vadd.xlane.f32.xlu0 %v1078
        %v1080 = vpop.xlane.xlu0 %1079
        %v1081 = vmul.f32 %v1080, %v1075
        %v1082 = vmul.f32 %v1076, %v1076
        %v1083 = vsub.f32 %v1081, %v1082
        %v1084 = vsub.f32 %v1070, %v1076
        %v1085 = vadd.f32 %v1083, 1e-05
        %v1086 = vrsqrt.pop %v1085
        %v1087 = vmul.f32 %v1084, %v1086
        %v1088 = vld [vmem:[#allocation11] sm:$0x1]
        %v1090 = vlaneseq
        %v1091 = vshrl.u32 %v1090, 7
        %v1092 = vsub.s32 0, %v1091
        %v1093 = vrot.slane %v1088, %v1092
        %v1095 = vmul.f32 %v1087, %v1093
        %v1096 = vld [vmem:[#allocation13] sm:$0x1]
        %v1098 = vlaneseq
        %v1099 = vshrl.u32 %v1098, 7
        %v1100 = vsub.s32 0, %v1099
        %v1101 = vrot.slane %v1096, %v1100
        %v1103 = vadd.f32 %v1095, %v1101
        %v1104 = vpack.c.bf16 %v1103, %v1103
        %vm1105 = vcmask 257024
        %1106 = vst.msk [vmem:[%s413] sm:$0xf] %vm1105, %v1104
        %s1107 = sand.u32 %s199, 1
        %s1108 = scalar_lea.sflag [#allocation4], %s1107
        %s1109 = sand.u32 %s199, 1
        %s1110 = smul.addr %s1109, 4
        %s1111 = scalar_lea.vmem [#allocation14], %s1110
        // Predicated region
        $region77: #{_lambda_.24} parent=47 // pred_check
          %p1112 = pneg %p209
        $region78: #{_lambda_.24} parent=47 // pred_check_branch
          %1114 = sbr.rel (%p1112) target = $region80
        $region79: #{_lambda_.24} parent=47 // pred_region
          %s1116 = ssub.s32 64, 64
          %1117 = vsyncadd %s1108, %s1116
          %s1118 = smul.addr %s29, 64
          %s1119 = scalar_lea.hbm %s7, %s1118
          %s1121 = sshll.u32 %s1111, 4
          %s1122 = int_to_ptr.vmem [resolvable:$true] %s1121
          %1124 = dma.vmem_to_hbm [thread:$0]  %s1122, 64, %s1119, %s1108
        $region80: #{_lambda_.24} parent=47 // pred_fallthru
          _
      $region48: #{_lambda_.24} parent=5 // pred_fallthru
        _
      %p1125 = scmp.le.s32.totalorder 2, %s24
      // Predicated region
      $region81: #{_lambda_.24} parent=5 // pred_check
        %p1126 = pneg %p1125
      $region82: #{_lambda_.24} parent=5 // pred_check_branch
        %1128 = sbr.rel (%p1126) target = $region84
      $region83: #{_lambda_.24} parent=5 // pred_region
        %s1129 = ssub.s32 %s24, 2
        // Predicated region
        $region85: #{_lambda_.24} parent=83 // pred_check
          %p1130 = pneg %p215
        $region86: #{_lambda_.24} parent=83 // pred_check_branch
          %1132 = sbr.rel (%p1130) target = $region88
        $region87: #{_lambda_.24} parent=83 // pred_region
          %s1133 = sand.u32 %s200, 1
          %s1134 = scalar_lea.sflag [#allocation4], %s1133
          %s1135 = sand.u32 %s200, 1
          %s1136 = smul.addr %s1135, 4
          %s1137 = scalar_lea.vmem [#allocation14], %s1136
          %1138 = dma.done %s1134, 64
        $region88: #{_lambda_.24} parent=83 // pred_fallthru
          _
      $region84: #{_lambda_.24} parent=5 // pred_fallthru
        _
    $region6: #{_lambda_.24} parent=1 // loop_footer
      %s28 = sadd.s32 1, %s24
    $region7: #{_lambda_.24} parent=1 // loop_footer_branch
      %23 = sbr.rel target = $region3
    $region8: #{_lambda_.24} parent=1 // loop_exit
      _
    %1139 = vsyncpa [#allocation3], 1
    %s1140 = scalar_lea.sflag [#allocation3], 1
    %1141 = vsyncpa %s1140, 1
    %1142 = vsyncpa [#allocation6], 1
    %s1143 = scalar_lea.sflag [#allocation6], 1
    %1144 = vsyncpa %s1143, 1
    %1145 = vsyncpa [#allocation9], 1
    %1146 = vsyncpa [#allocation12], 1
    %1147 = vsyncpa [#allocation4], 1
    %s1148 = scalar_lea.sflag [#allocation4], 1
    %1149 = vsyncpa %s1148, 1

// kernel: _lambda_.25
$region0: #{_lambda_.25}
  #allocation0 [shape = 'u32[]', space=smem, size = 0x4, offset = 0x4, fixed_abs, tag = 'smem constant byte address 0x4 - core index']
  #allocation1 [shape = 'u32[144,128]{1,0:T(1,128)}', space=vmem, size = 0x12000, scoped, tag = 'internal scratch']
  #allocation2 [shape = 'f32[16,64]{1,0:T(8,128)}', space=vmem, size = 0x2000, scoped, tag = 'scratch operand']
  %s0 = inlined_call_operand.hbm [shape: bf16[16,32], index: 0, kind: input, shape index: {}]
  %s1 = inlined_call_operand.hbm [shape: bf16[32,64], index: 1, kind: input, shape index: {}]
  %s2 = inlined_call_operand.hbm [shape: f32[1,64], index: 2, kind: input, shape index: {}]
  %s3 = inlined_call_operand.hbm [shape: bf16[16,64], index: 3, kind: output, shape index: {}]
  %s4 = sld [smem:[#allocation0]]
  $region42: #{_lambda_.25} parent=0
    _
  %s6 = ssub.s32 1, %s4
  %s7 = scalar_select 0, %s6, %s4
  $region1: #{_lambda_.25} parent=0
    #allocation3 [shape = 'u8[4096]{0}', space=vmem, size = 0x1000, scoped, tag = 'input window, operand 0, single buffered']
    #allocation4 [shape = 's32[1]{0}', space=sflag, size = 0x4, scoped, tag = 'scoped memory for _lambda_.25']
    #allocation5 [shape = 's32[1]{0}', space=sflag, size = 0x4, scoped, tag = 'scoped memory for _lambda_.25']
    #allocation6 [shape = 'u8[8192]{0}', space=vmem, size = 0x2000, scoped, tag = 'input window, operand 1, single buffered']
    #allocation7 [shape = 's32[1]{0}', space=sflag, size = 0x4, scoped, tag = 'scoped memory for _lambda_.25']
    #allocation8 [shape = 'u8[512]{0}', space=vmem, size = 0x400, scoped, tag = 'input window, operand 2, single buffered']
    #allocation9 [shape = 'u8[4096]{0}', space=vmem, size = 0x1000, scoped, tag = 'output window, operand 0, single buffered']
    %8 = vsyncpa [#allocation4], 0
    %9 = vsyncpa [#allocation7], 0
    %10 = vsyncpa [#allocation5], 0
    // Predicated region
    $region2: #{_lambda_.25} parent=1 // pred_check
      _
    $region3: #{_lambda_.25} parent=1 // pred_check_branch
      %12 = sbr.rel (0) target = $region5
    $region4: #{_lambda_.25} parent=1 // pred_region
      %s14 = ssub.s32 128, 128
      %15 = vsyncadd [#allocation4], %s14
      %s16 = sshll.u32 [#allocation3], 4
      %s17 = int_to_ptr.vmem [resolvable:$true] %s16
      %22 = dma.hbm_to_vmem [thread:$0]  %s0, 128, %s17, [#allocation4], 64, 64, 4
    $region5: #{_lambda_.25} parent=1 // pred_fallthru
      _
    // Predicated region
    $region6: #{_lambda_.25} parent=1 // pred_check
      _
    $region7: #{_lambda_.25} parent=1 // pred_check_branch
      %24 = sbr.rel (0) target = $region9
    $region8: #{_lambda_.25} parent=1 // pred_region
      %s26 = ssub.s32 256, 256
      %27 = vsyncadd [#allocation7], %s26
      %s28 = sshll.u32 [#allocation6], 4
      %s29 = int_to_ptr.vmem [resolvable:$true] %s28
      %34 = dma.hbm_to_vmem [thread:$0]  %s1, 256, %s29, [#allocation7], 64, 64, 4
    $region9: #{_lambda_.25} parent=1 // pred_fallthru
      _
    // Predicated region
    $region10: #{_lambda_.25} parent=1 // pred_check
      _
    $region11: #{_lambda_.25} parent=1 // pred_check_branch
      %36 = sbr.rel (0) target = $region13
    $region12: #{_lambda_.25} parent=1 // pred_region
      %s38 = ssub.s32 16, 16
      %39 = vsyncadd [#allocation7], %s38
      %s41 = sshll.u32 [#allocation8], 4
      %s42 = int_to_ptr.vmem [resolvable:$true] %s41
      %44 = dma.hbm_to_vmem [thread:$0]  %s2, 16, %s42, [#allocation7]
    $region13: #{_lambda_.25} parent=1 // pred_fallthru
      _
    // Predicated region
    $region14: #{_lambda_.25} parent=1 // pred_check
      _
    $region15: #{_lambda_.25} parent=1 // pred_check_branch
      %46 = sbr.rel (0) target = $region17
    $region16: #{_lambda_.25} parent=1 // pred_region
      %47 = dma.done [#allocation4], 128
    $region17: #{_lambda_.25} parent=1 // pred_fallthru
      _
    // Predicated region
    $region18: #{_lambda_.25} parent=1 // pred_check
      _
    $region19: #{_lambda_.25} parent=1 // pred_check_branch
      %49 = sbr.rel (0) target = $region21
    $region20: #{_lambda_.25} parent=1 // pred_region
      %50 = dma.done [#allocation7], 256
    $region21: #{_lambda_.25} parent=1 // pred_fallthru
      _
    // Predicated region
    $region22: #{_lambda_.25} parent=1 // pred_check
      _
    $region23: #{_lambda_.25} parent=1 // pred_check_branch
      %52 = sbr.rel (0) target = $region25
    $region24: #{_lambda_.25} parent=1 // pred_region
      %53 = dma.done [#allocation7], 16
    $region25: #{_lambda_.25} parent=1 // pred_fallthru
      _
    %p55 = scmp.eq.s32.totalorder 0, 0
    // Predicated region
    $region26: #{_lambda_.25} parent=1 // pred_check
      %p56 = pneg %p55
    $region27: #{_lambda_.25} parent=1 // pred_check_branch
      %58 = sbr.rel (%p56) target = $region29
    $region28: #{_lambda_.25} parent=1 // pred_region
      %vm59 = vcmask 523264
      %60 = vst.msk [vmem:[#allocation2] sm:$0xff] %vm59, 0.0
      %61 = vst.msk [vmem:[#allocation2 + $0x8] sm:$0xff] %vm59, 0.0
    $region29: #{_lambda_.25} parent=1 // pred_fallthru
      _
    %v62 = vld [vmem:[#allocation2] sm:$0xff]
    %v63 = vld [vmem:[#allocation2 + $0x8] sm:$0xff]
    %v64 = vld [vmem:[#allocation3] sm:$0xf]
    %v65 = vld [vmem:[#allocation3 + $0x4] sm:$0xf]
    %v66 = vld [vmem:[#allocation6] sm:$0xf]
    %v67 = vld [vmem:[#allocation6 + $0x4] sm:$0xf]
    %v68 = vld [vmem:[#allocation6 + $0x8] sm:$0xf]
    %v69 = vld [vmem:[#allocation6 + $0xc] sm:$0xf]
    %v72 = vunpack.c.l.b16 %v64
    %v73 = vunpack.c.l.b16 %v65
    %v74 = vpack.c.b16 %v73, %v72
    %v79 = vunpack.c.l.b16 %v66
    %v80 = vunpack.c.l.b16 %v67
    %v81 = vunpack.c.l.b16 %v68
    %v82 = vunpack.c.l.b16 %v69
    %v83 = vpack.c.b16 %v80, %v79
    %v84 = vpack.c.b16 %v82, %v81
    %vm87 = vcmask 261120
    %v89 = vsel %vm87, %v74, 0
    %91 = vmatprep.subr.bf16.mxu0 0
    %92 = vmatpush1.bf16.msra.mxu0 %v83
    %93 = vmatprep.subr.bf16.mxu0 0
    %94 = vmatpush1.bf16.msra.mxu0 %v84
    %95 = vmatprep.subr.bf16.mxu0 0
    %96 = vmatpush1.bf16.msra.mxu0 0
    %97 = vmatprep.subr.bf16.mxu0 0
    %98 = vmatpush1.bf16.msra.mxu0 0
    %99 = vmatprep.subr.bf16.mxu0 0
    %100 = vmatpush1.bf16.msra.mxu0 0
    %101 = vmatprep.subr.bf16.mxu0 0
    %102 = vmatpush1.bf16.msra.mxu0 0
    %103 = vmatprep.subr.bf16.mxu0 0
    %104 = vmatpush1.bf16.msra.mxu0 0
    %105 = vmatprep.subr.bf16.mxu0 0
    %106 = vmatpush1.bf16.msra.mxu0 0
    %107 = vmatprep.subr.bf16.mxu0 0
    %108 = vmatpush1.bf16.msra.mxu0 0
    %109 = vmatprep.subr.bf16.mxu0 0
    %110 = vmatpush1.bf16.msra.mxu0 0
    %111 = vmatprep.subr.bf16.mxu0 0
    %112 = vmatpush1.bf16.msra.mxu0 0
    %113 = vmatprep.subr.bf16.mxu0 0
    %114 = vmatpush1.bf16.msra.mxu0 0
    %115 = vmatprep.subr.bf16.mxu0 0
    %116 = vmatpush1.bf16.msra.mxu0 0
    %117 = vmatprep.subr.bf16.mxu0 0
    %118 = vmatpush1.bf16.msra.mxu0 0
    %119 = vmatprep.subr.bf16.mxu0 0
    %120 = vmatpush1.bf16.msra.mxu0 0
    %121 = vmatprep.subr.bf16.mxu0 0
    %122 = vmatpush1.bf16.msra.mxu0 0
    %123 = vmatprep.mubr.bf16.mxu0 0
    %124 = vmatmul.mubr.bf16.gmra.mrb[0].mxu0 %v89
    %v125 = vpop.f32.mrb[0].mxu0
    %v126 = vadd.f32 0.0, %v125
    %v127 = vpop.f32.mrb[0].mxu0
    %v128 = vpop.f32.mrb[0].mxu0
    %v129 = vadd.f32 0.0, %v128
    %v130 = vpop.f32.mrb[0].mxu0
    %131 = vdwg.mxu0
    %v132 = vadd.f32 %v62, %v126
    %v133 = vadd.f32 %v63, %v129
    %vm134 = vcmask 523264
    %135 = vst.msk [vmem:[#allocation2] sm:$0xff] %vm134, %v132
    %136 = vst.msk [vmem:[#allocation2 + $0x8] sm:$0xff] %vm134, %v133
    // Predicated region
    $region30: #{_lambda_.25} parent=1 // pred_check
      %p137 = pneg %p55
    $region31: #{_lambda_.25} parent=1 // pred_check_branch
      %139 = sbr.rel (%p137) target = $region33
    $region32: #{_lambda_.25} parent=1 // pred_region
      %v140 = vld [vmem:[#allocation2] sm:$0xff]
      %v141 = vld [vmem:[#allocation2 + $0x8] sm:$0xff]
      %v142 = vld [vmem:[#allocation8] sm:$0x1]
      %v144 = vlaneseq
      %v145 = vshrl.u32 %v144, 7
      %v146 = vsub.s32 0, %v145
      %v147 = vrot.slane %v142, %v146
      %v149 = vadd.f32 %v140, %v147
      %v150 = vadd.f32 %v141, %v147
      %v151 = vmax.f32 %v149, 0.0
      %v152 = vmax.f32 %v150, 0.0
      %v153 = vpack.c.bf16 %v152, %v151
      %v155 = vunpack.c.l.b16 %v153
      %v156 = vunpack.c.h.b16 %v153
      %v157 = vpack.c.b16 %v155, %v155
      %v158 = vpack.c.b16 %v156, %v156
      %vm161 = vcmask 519168
      %162 = vst.msk [vmem:[#allocation9] sm:$0xf] %vm161, %v157
      %163 = vst.msk [vmem:[#allocation9 + $0x4] sm:$0xf] %vm161, %v158
    $region33: #{_lambda_.25} parent=1 // pred_fallthru
      _
    // Predicated region
    $region34: #{_lambda_.25} parent=1 // pred_check
      _
    $region35: #{_lambda_.25} parent=1 // pred_check_branch
      %165 = sbr.rel (0) target = $region37
    $region36: #{_lambda_.25} parent=1 // pred_region
      %s167 = ssub.s32 128, 128
      %168 = vsyncadd [#allocation5], %s167
      %s169 = sshll.u32 [#allocation9], 4
      %s170 = int_to_ptr.vmem [resolvable:$true] %s169
      %175 = dma.vmem_to_hbm [thread:$0]  %s170, 128, %s3, [#allocation5], 64, 64, 4
    $region37: #{_lambda_.25} parent=1 // pred_fallthru
      _
    // Predicated region
    $region38: #{_lambda_.25} parent=1 // pred_check
      _
    $region39: #{_lambda_.25} parent=1 // pred_check_branch
      %177 = sbr.rel (0) target = $region41
    $region40: #{_lambda_.25} parent=1 // pred_region
      %178 = dma.done [#allocation5], 128
    $region41: #{_lambda_.25} parent=1 // pred_fallthru
      _
    %179 = vsyncpa [#allocation4], 1
    %180 = vsyncpa [#allocation7], 1
    %181 = vsyncpa [#allocation5], 1

// kernel: _lambda_.26
$region0: #{_lambda_.26}
  #allocation0 [shape = 'u32[]', space=smem, size = 0x4, offset = 0x4, fixed_abs, tag = 'smem constant byte address 0x4 - core index']
  #allocation1 [shape = 'u32[144,128]{1,0:T(1,128)}', space=vmem, size = 0x12000, scoped, tag = 'internal scratch']
  #allocation2 [shape = 'f32[16,32]{1,0:T(8,128)}', space=vmem, size = 0x2000, scoped, tag = 'scratch operand']
  %s0 = inlined_call_operand.hbm [shape: bf16[16,64], index: 0, kind: input, shape index: {}]
  %s1 = inlined_call_operand.hbm [shape: bf16[64,32], index: 1, kind: input, shape index: {}]
  %s2 = inlined_call_operand.hbm [shape: f32[1,32], index: 2, kind: input, shape index: {}]
  %s3 = inlined_call_operand.hbm [shape: bf16[16,32], index: 3, kind: input, shape index: {}]
  %s4 = inlined_call_operand.hbm [shape: f32[1,32], index: 4, kind: input, shape index: {}]
  %s5 = inlined_call_operand.hbm [shape: f32[1,32], index: 5, kind: input, shape index: {}]
  %s6 = inlined_call_operand.hbm [shape: bf16[16,32], index: 6, kind: output, shape index: {}]
  %s7 = sld [smem:[#allocation0]]
  $region66: #{_lambda_.26} parent=0
    _
  %s9 = ssub.s32 1, %s7
  %s10 = scalar_select 0, %s9, %s7
  $region1: #{_lambda_.26} parent=0
    #allocation3 [shape = 'u8[4096]{0}', space=vmem, size = 0x1000, scoped, tag = 'input window, operand 0, single buffered']
    #allocation4 [shape = 's32[1]{0}', space=sflag, size = 0x4, scoped, tag = 'scoped memory for _lambda_.26']
    #allocation5 [shape = 's32[1]{0}', space=sflag, size = 0x4, scoped, tag = 'scoped memory for _lambda_.26']
    #allocation6 [shape = 'u8[16384]{0}', space=vmem, size = 0x4000, scoped, tag = 'input window, operand 1, single buffered']
    #allocation7 [shape = 's32[1]{0}', space=sflag, size = 0x4, scoped, tag = 'scoped memory for _lambda_.26']
    #allocation8 [shape = 'u8[512]{0}', space=vmem, size = 0x400, scoped, tag = 'input window, operand 2, single buffered']
    #allocation9 [shape = 'u8[4096]{0}', space=vmem, size = 0x1000, scoped, tag = 'input window, operand 3, single buffered']
    #allocation10 [shape = 's32[1]{0}', space=sflag, size = 0x4, scoped, tag = 'scoped memory for _lambda_.26']
    #allocation11 [shape = 'u8[512]{0}', space=vmem, size = 0x400, scoped, tag = 'input window, operand 4, single buffered']
    #allocation12 [shape = 'u8[512]{0}', space=vmem, size = 0x400, scoped, tag = 'input window, operand 5, single buffered']
    #allocation13 [shape = 's32[1]{0}', space=sflag, size = 0x4, scoped, tag = 'scoped memory for _lambda_.26']
    #allocation14 [shape = 'u8[4096]{0}', space=vmem, size = 0x1000, scoped, tag = 'output window, operand 0, single buffered']
    %11 = vsyncpa [#allocation4], 0
    %12 = vsyncpa [#allocation7], 0
    %13 = vsyncpa [#allocation10], 0
    %14 = vsyncpa [#allocation13], 0
    %15 = vsyncpa [#allocation5], 0
    // Predicated region
    $region2: #{_lambda_.26} parent=1 // pred_check
      _
    $region3: #{_lambda_.26} parent=1 // pred_check_branch
      %17 = sbr.rel (0) target = $region5
    $region4: #{_lambda_.26} parent=1 // pred_region
      %s19 = ssub.s32 128, 128
      %20 = vsyncadd [#allocation4], %s19
      %s21 = sshll.u32 [#allocation3], 4
      %s22 = int_to_ptr.vmem [resolvable:$true] %s21
      %27 = dma.hbm_to_vmem [thread:$0]  %s0, 128, %s22, [#allocation4], 64, 64, 4
    $region5: #{_lambda_.26} parent=1 // pred_fallthru
      _
    // Predicated region
    $region6: #{_lambda_.26} parent=1 // pred_check
      _
    $region7: #{_lambda_.26} parent=1 // pred_check_branch
      %29 = sbr.rel (0) target = $region9
    $region8: #{_lambda_.26} parent=1 // pred_region
      %s31 = ssub.s32 512, 512
      %32 = vsyncadd [#allocation7], %s31
      %s33 = sshll.u32 [#allocation6], 4
      %s34 = int_to_ptr.vmem [resolvable:$true] %s33
      %39 = dma.hbm_to_vmem [thread:$0]  %s1, 512, %s34, [#allocation7], 64, 64, 4
    $region9: #{_lambda_.26} parent=1 // pred_fallthru
      _
    // Predicated region
    $region10: #{_lambda_.26} parent=1 // pred_check
      _
    $region11: #{_lambda_.26} parent=1 // pred_check_branch
      %41 = sbr.rel (0) target = $region13
    $region12: #{_lambda_.26} parent=1 // pred_region
      %s43 = ssub.s32 16, 16
      %44 = vsyncadd [#allocation7], %s43
      %s46 = sshll.u32 [#allocation8], 4
      %s47 = int_to_ptr.vmem [resolvable:$true] %s46
      %49 = dma.hbm_to_vmem [thread:$0]  %s2, 16, %s47, [#allocation7]
    $region13: #{_lambda_.26} parent=1 // pred_fallthru
      _
    // Predicated region
    $region14: #{_lambda_.26} parent=1 // pred_check
      _
    $region15: #{_lambda_.26} parent=1 // pred_check_branch
      %51 = sbr.rel (0) target = $region17
    $region16: #{_lambda_.26} parent=1 // pred_region
      %s53 = ssub.s32 128, 128
      %54 = vsyncadd [#allocation10], %s53
      %s55 = sshll.u32 [#allocation9], 4
      %s56 = int_to_ptr.vmem [resolvable:$true] %s55
      %61 = dma.hbm_to_vmem [thread:$0]  %s3, 128, %s56, [#allocation10], 64, 64, 4
    $region17: #{_lambda_.26} parent=1 // pred_fallthru
      _
    // Predicated region
    $region18: #{_lambda_.26} parent=1 // pred_check
      _
    $region19: #{_lambda_.26} parent=1 // pred_check_branch
      %63 = sbr.rel (0) target = $region21
    $region20: #{_lambda_.26} parent=1 // pred_region
      %s65 = ssub.s32 16, 16
      %66 = vsyncadd [#allocation10], %s65
      %s68 = sshll.u32 [#allocation11], 4
      %s69 = int_to_ptr.vmem [resolvable:$true] %s68
      %71 = dma.hbm_to_vmem [thread:$0]  %s4, 16, %s69, [#allocation10]
    $region21: #{_lambda_.26} parent=1 // pred_fallthru
      _
    // Predicated region
    $region22: #{_lambda_.26} parent=1 // pred_check
      _
    $region23: #{_lambda_.26} parent=1 // pred_check_branch
      %73 = sbr.rel (0) target = $region25
    $region24: #{_lambda_.26} parent=1 // pred_region
      %s75 = ssub.s32 16, 16
      %76 = vsyncadd [#allocation13], %s75
      %s78 = sshll.u32 [#allocation12], 4
      %s79 = int_to_ptr.vmem [resolvable:$true] %s78
      %81 = dma.hbm_to_vmem [thread:$0]  %s5, 16, %s79, [#allocation13]
    $region25: #{_lambda_.26} parent=1 // pred_fallthru
      _
    // Predicated region
    $region26: #{_lambda_.26} parent=1 // pred_check
      _
    $region27: #{_lambda_.26} parent=1 // pred_check_branch
      %83 = sbr.rel (0) target = $region29
    $region28: #{_lambda_.26} parent=1 // pred_region
      %84 = dma.done [#allocation4], 128
    $region29: #{_lambda_.26} parent=1 // pred_fallthru
      _
    // Predicated region
    $region30: #{_lambda_.26} parent=1 // pred_check
      _
    $region31: #{_lambda_.26} parent=1 // pred_check_branch
      %86 = sbr.rel (0) target = $region33
    $region32: #{_lambda_.26} parent=1 // pred_region
      %87 = dma.done [#allocation7], 512
    $region33: #{_lambda_.26} parent=1 // pred_fallthru
      _
    // Predicated region
    $region34: #{_lambda_.26} parent=1 // pred_check
      _
    $region35: #{_lambda_.26} parent=1 // pred_check_branch
      %89 = sbr.rel (0) target = $region37
    $region36: #{_lambda_.26} parent=1 // pred_region
      %90 = dma.done [#allocation7], 16
    $region37: #{_lambda_.26} parent=1 // pred_fallthru
      _
    // Predicated region
    $region38: #{_lambda_.26} parent=1 // pred_check
      _
    $region39: #{_lambda_.26} parent=1 // pred_check_branch
      %92 = sbr.rel (0) target = $region41
    $region40: #{_lambda_.26} parent=1 // pred_region
      %93 = dma.done [#allocation10], 128
    $region41: #{_lambda_.26} parent=1 // pred_fallthru
      _
    // Predicated region
    $region42: #{_lambda_.26} parent=1 // pred_check
      _
    $region43: #{_lambda_.26} parent=1 // pred_check_branch
      %95 = sbr.rel (0) target = $region45
    $region44: #{_lambda_.26} parent=1 // pred_region
      %96 = dma.done [#allocation10], 16
    $region45: #{_lambda_.26} parent=1 // pred_fallthru
      _
    // Predicated region
    $region46: #{_lambda_.26} parent=1 // pred_check
      _
    $region47: #{_lambda_.26} parent=1 // pred_check_branch
      %98 = sbr.rel (0) target = $region49
    $region48: #{_lambda_.26} parent=1 // pred_region
      %99 = dma.done [#allocation13], 16
    $region49: #{_lambda_.26} parent=1 // pred_fallthru
      _
    %p101 = scmp.eq.s32.totalorder 0, 0
    // Predicated region
    $region50: #{_lambda_.26} parent=1 // pred_check
      %p102 = pneg %p101
    $region51: #{_lambda_.26} parent=1 // pred_check_branch
      %104 = sbr.rel (%p102) target = $region53
    $region52: #{_lambda_.26} parent=1 // pred_region
      %vm105 = vcmask 261120
      %106 = vst.msk [vmem:[#allocation2] sm:$0xff] %vm105, 0.0
      %107 = vst.msk [vmem:[#allocation2 + $0x8] sm:$0xff] %vm105, 0.0
    $region53: #{_lambda_.26} parent=1 // pred_fallthru
      _
    %v108 = vld [vmem:[#allocation2] sm:$0xff]
    %v109 = vld [vmem:[#allocation2 + $0x8] sm:$0xff]
    %v110 = vld [vmem:[#allocation3] sm:$0xf]
    %v111 = vld [vmem:[#allocation3 + $0x4] sm:$0xf]
    %v112 = vld [vmem:[#allocation6] sm:$0xf]
    %v113 = vld [vmem:[#allocation6 + $0x4] sm:$0xf]
    %v114 = vld [vmem:[#allocation6 + $0x8] sm:$0xf]
    %v115 = vld [vmem:[#allocation6 + $0xc] sm:$0xf]
    %v116 = vld [vmem:[#allocation6 + $0x10] sm:$0xf]
    %v117 = vld [vmem:[#allocation6 + $0x14] sm:$0xf]
    %v118 = vld [vmem:[#allocation6 + $0x18] sm:$0xf]
    %v119 = vld [vmem:[#allocation6 + $0x1c] sm:$0xf]
    %v122 = vunpack.c.l.b16 %v110
    %v123 = vunpack.c.l.b16 %v111
    %v124 = vpack.c.b16 %v123, %v122
    %v133 = vunpack.c.l.b16 %v112
    %v134 = vunpack.c.l.b16 %v113
    %v135 = vunpack.c.l.b16 %v114
    %v136 = vunpack.c.l.b16 %v115
    %v137 = vunpack.c.l.b16 %v116
    %v138 = vunpack.c.l.b16 %v117
    %v139 = vunpack.c.l.b16 %v118
    %v140 = vunpack.c.l.b16 %v119
    %v141 = vpack.c.b16 %v134, %v133
    %v142 = vpack.c.b16 %v136, %v135
    %v143 = vpack.c.b16 %v138, %v137
    %v144 = vpack.c.b16 %v140, %v139
    %vm149 = vcmask 523264
    %v151 = vsel %vm149, %v124, 0
    %153 = vmatprep.subr.bf16.mxu0 0
    %154 = vmatpush1.bf16.msra.mxu0 %v141
    %155 = vmatprep.subr.bf16.mxu0 0
    %156 = vmatpush1.bf16.msra.mxu0 %v142
    %157 = vmatprep.subr.bf16.mxu0 0
    %158 = vmatpush1.bf16.msra.mxu0 %v143
    %159 = vmatprep.subr.bf16.mxu0 0
    %160 = vmatpush1.bf16.msra.mxu0 %v144
    %161 = vmatprep.subr.bf16.mxu0 0
    %162 = vmatpush1.bf16.msra.mxu0 0
    %163 = vmatprep.subr.bf16.mxu0 0
    %164 = vmatpush1.bf16.msra.mxu0 0
    %165 = vmatprep.subr.bf16.mxu0 0
    %166 = vmatpush1.bf16.msra.mxu0 0
    %167 = vmatprep.subr.bf16.mxu0 0
    %168 = vmatpush1.bf16.msra.mxu0 0
    %169 = vmatprep.subr.bf16.mxu0 0
    %170 = vmatpush1.bf16.msra.mxu0 0
    %171 = vmatprep.subr.bf16.mxu0 0
    %172 = vmatpush1.bf16.msra.mxu0 0
    %173 = vmatprep.subr.bf16.mxu0 0
    %174 = vmatpush1.bf16.msra.mxu0 0
    %175 = vmatprep.subr.bf16.mxu0 0
    %176 = vmatpush1.bf16.msra.mxu0 0
    %177 = vmatprep.subr.bf16.mxu0 0
    %178 = vmatpush1.bf16.msra.mxu0 0
    %179 = vmatprep.subr.bf16.mxu0 0
    %180 = vmatpush1.bf16.msra.mxu0 0
    %181 = vmatprep.subr.bf16.mxu0 0
    %182 = vmatpush1.bf16.msra.mxu0 0
    %183 = vmatprep.subr.bf16.mxu0 0
    %184 = vmatpush1.bf16.msra.mxu0 0
    %185 = vmatprep.mubr.bf16.mxu0 0
    %186 = vmatmul.mubr.bf16.gmra.mrb[0].mxu0 %v151
    %v187 = vpop.f32.mrb[0].mxu0
    %v188 = vadd.f32 0.0, %v187
    %v189 = vpop.f32.mrb[0].mxu0
    %v190 = vpop.f32.mrb[0].mxu0
    %v191 = vadd.f32 0.0, %v190
    %v192 = vpop.f32.mrb[0].mxu0
    %193 = vdwg.mxu0
    %v194 = vadd.f32 %v108, %v188
    %v195 = vadd.f32 %v109, %v191
    %vm196 = vcmask 261120
    %197 = vst.msk [vmem:[#allocation2] sm:$0xff] %vm196, %v194
    %198 = vst.msk [vmem:[#allocation2 + $0x8] sm:$0xff] %vm196, %v195
    // Predicated region
    $region54: #{_lambda_.26} parent=1 // pred_check
      %p199 = pneg %p101
    $region55: #{_lambda_.26} parent=1 // pred_check_branch
      %201 = sbr.rel (%p199) target = $region57
    $region56: #{_lambda_.26} parent=1 // pred_region
      %v202 = vld [vmem:[#allocation2] sm:$0xff]
      %v203 = vld [vmem:[#allocation2 + $0x8] sm:$0xff]
      %v204 = vld [vmem:[#allocation8] sm:$0x1]
      %v206 = vlaneseq
      %v207 = vshrl.u32 %v206, 7
      %v208 = vsub.s32 0, %v207
      %v209 = vrot.slane %v204, %v208
      %v211 = vadd.f32 %v202, %v209
      %v212 = vadd.f32 %v203, %v209
      %v213 = vld [vmem:[#allocation9] sm:$0xf]
      %v214 = vld [vmem:[#allocation9 + $0x4] sm:$0xf]
      %v215 = vunpack.c.l.bf16 %v213
      %v216 = vunpack.c.l.bf16 %v214
      %v217 = vadd.f32 %v211, %v215
      %v218 = vadd.f32 %v212, %v216
      %v219 = vsel %vm196, %v217, 0.0
      %220 = vadd.xlane.f32.xlu0 %v219
      %v221 = vpop.xlane.xlu0 %220
      %v222 = vsel %vm196, %v218, 0.0
      %223 = vadd.xlane.f32.xlu0 %v222
      %v224 = vpop.xlane.xlu0 %223
      %v225 = vrcp.pop 32.0
      %v226 = vmul.f32 %v221, %v225
      %v227 = vmul.f32 %v224, %v225
      %v228 = vmul.f32 %v217, %v217
      %v229 = vmul.f32 %v218, %v218
      %v230 = vsel %vm196, %v228, 0.0
      %231 = vadd.xlane.f32.xlu0 %v230
      %v232 = vpop.xlane.xlu0 %231
      %v233 = vsel %vm196, %v229, 0.0
      %234 = vadd.xlane.f32.xlu0 %v233
      %v235 = vpop.xlane.xlu0 %234
      %v236 = vmul.f32 %v232, %v225
      %v237 = vmul.f32 %v235, %v225
      %v238 = vmul.f32 %v226, %v226
      %v239 = vmul.f32 %v227, %v227
      %v240 = vsub.f32 %v236, %v238
      %v241 = vsub.f32 %v237, %v239
      %v242 = vsub.f32 %v217, %v226
      %v243 = vsub.f32 %v218, %v227
      %v244 = vadd.f32 %v240, 1e-05
      %v245 = vadd.f32 %v241, 1e-05
      %v246 = vrsqrt.pop %v244
      %v247 = vrsqrt.pop %v245
      %v248 = vmul.f32 %v242, %v246
      %v249 = vmul.f32 %v243, %v247
      %v250 = vld [vmem:[#allocation11] sm:$0x1]
      %v252 = vlaneseq
      %v253 = vshrl.u32 %v252, 7
      %v254 = vsub.s32 0, %v253
      %v255 = vrot.slane %v250, %v254
      %v257 = vmul.f32 %v248, %v255
      %v258 = vmul.f32 %v249, %v255
      %v259 = vld [vmem:[#allocation12] sm:$0x1]
      %v261 = vlaneseq
      %v262 = vshrl.u32 %v261, 7
      %v263 = vsub.s32 0, %v262
      %v264 = vrot.slane %v259, %v263
      %v266 = vadd.f32 %v257, %v264
      %v267 = vadd.f32 %v258, %v264
      %v268 = vpack.c.bf16 %v267, %v266
      %v270 = vunpack.c.l.b16 %v268
      %v271 = vunpack.c.h.b16 %v268
      %v272 = vpack.c.b16 %v270, %v270
      %v273 = vpack.c.b16 %v271, %v271
      %vm276 = vcmask 257024
      %277 = vst.msk [vmem:[#allocation14] sm:$0xf] %vm276, %v272
      %278 = vst.msk [vmem:[#allocation14 + $0x4] sm:$0xf] %vm276, %v273
    $region57: #{_lambda_.26} parent=1 // pred_fallthru
      _
    // Predicated region
    $region58: #{_lambda_.26} parent=1 // pred_check
      _
    $region59: #{_lambda_.26} parent=1 // pred_check_branch
      %280 = sbr.rel (0) target = $region61
    $region60: #{_lambda_.26} parent=1 // pred_region
      %s282 = ssub.s32 128, 128
      %283 = vsyncadd [#allocation5], %s282
      %s284 = sshll.u32 [#allocation14], 4
      %s285 = int_to_ptr.vmem [resolvable:$true] %s284
      %290 = dma.vmem_to_hbm [thread:$0]  %s285, 128, %s6, [#allocation5], 64, 64, 4
    $region61: #{_lambda_.26} parent=1 // pred_fallthru
      _
    // Predicated region
    $region62: #{_lambda_.26} parent=1 // pred_check
      _
    $region63: #{_lambda_.26} parent=1 // pred_check_branch
      %292 = sbr.rel (0) target = $region65
    $region64: #{_lambda_.26} parent=1 // pred_region
      %293 = dma.done [#allocation5], 128
    $region65: #{_lambda_.26} parent=1 // pred_fallthru
      _
    %294 = vsyncpa [#allocation4], 1
    %295 = vsyncpa [#allocation7], 1
    %296 = vsyncpa [#allocation10], 1
    %297 = vsyncpa [#allocation13], 1
    %298 = vsyncpa [#allocation5], 1

// kernel: _lambda_.34
$region0: #{_lambda_.34}
  #allocation0 [shape = 'u32[]', space=smem, size = 0x4, offset = 0x4, fixed_abs, tag = 'smem constant byte address 0x4 - core index']
  #allocation1 [shape = 'u32[144,128]{1,0:T(1,128)}', space=vmem, size = 0x12000, scoped, tag = 'internal scratch']
  #allocation2 [shape = 'f32[16,64]{1,0:T(8,128)}', space=vmem, size = 0x2000, scoped, tag = 'scratch operand']
  %s0 = inlined_call_operand.hbm [shape: bf16[16,32], index: 0, kind: input, shape index: {}]
  %s1 = inlined_call_operand.hbm [shape: bf16[32,64], index: 1, kind: input, shape index: {}]
  %s2 = inlined_call_operand.hbm [shape: f32[1,64], index: 2, kind: input, shape index: {}]
  %s3 = inlined_call_operand.hbm [shape: bf16[16,64], index: 3, kind: output, shape index: {}]
  %s4 = sld [smem:[#allocation0]]
  $region42: #{_lambda_.34} parent=0
    _
  %s6 = ssub.s32 1, %s4
  %s7 = scalar_select 0, %s6, %s4
  $region1: #{_lambda_.34} parent=0
    #allocation3 [shape = 'u8[4096]{0}', space=vmem, size = 0x1000, scoped, tag = 'input window, operand 0, single buffered']
    #allocation4 [shape = 's32[1]{0}', space=sflag, size = 0x4, scoped, tag = 'scoped memory for _lambda_.34']
    #allocation5 [shape = 's32[1]{0}', space=sflag, size = 0x4, scoped, tag = 'scoped memory for _lambda_.34']
    #allocation6 [shape = 'u8[8192]{0}', space=vmem, size = 0x2000, scoped, tag = 'input window, operand 1, single buffered']
    #allocation7 [shape = 's32[1]{0}', space=sflag, size = 0x4, scoped, tag = 'scoped memory for _lambda_.34']
    #allocation8 [shape = 'u8[512]{0}', space=vmem, size = 0x400, scoped, tag = 'input window, operand 2, single buffered']
    #allocation9 [shape = 'u8[4096]{0}', space=vmem, size = 0x1000, scoped, tag = 'output window, operand 0, single buffered']
    %8 = vsyncpa [#allocation4], 0
    %9 = vsyncpa [#allocation7], 0
    %10 = vsyncpa [#allocation5], 0
    // Predicated region
    $region2: #{_lambda_.34} parent=1 // pred_check
      _
    $region3: #{_lambda_.34} parent=1 // pred_check_branch
      %12 = sbr.rel (0) target = $region5
    $region4: #{_lambda_.34} parent=1 // pred_region
      %s14 = ssub.s32 128, 128
      %15 = vsyncadd [#allocation4], %s14
      %s16 = sshll.u32 [#allocation3], 4
      %s17 = int_to_ptr.vmem [resolvable:$true] %s16
      %22 = dma.hbm_to_vmem [thread:$0]  %s0, 128, %s17, [#allocation4], 64, 64, 4
    $region5: #{_lambda_.34} parent=1 // pred_fallthru
      _
    // Predicated region
    $region6: #{_lambda_.34} parent=1 // pred_check
      _
    $region7: #{_lambda_.34} parent=1 // pred_check_branch
      %24 = sbr.rel (0) target = $region9
    $region8: #{_lambda_.34} parent=1 // pred_region
      %s26 = ssub.s32 256, 256
      %27 = vsyncadd [#allocation7], %s26
      %s28 = sshll.u32 [#allocation6], 4
      %s29 = int_to_ptr.vmem [resolvable:$true] %s28
      %34 = dma.hbm_to_vmem [thread:$0]  %s1, 256, %s29, [#allocation7], 64, 64, 4
    $region9: #{_lambda_.34} parent=1 // pred_fallthru
      _
    // Predicated region
    $region10: #{_lambda_.34} parent=1 // pred_check
      _
    $region11: #{_lambda_.34} parent=1 // pred_check_branch
      %36 = sbr.rel (0) target = $region13
    $region12: #{_lambda_.34} parent=1 // pred_region
      %s38 = ssub.s32 16, 16
      %39 = vsyncadd [#allocation7], %s38
      %s41 = sshll.u32 [#allocation8], 4
      %s42 = int_to_ptr.vmem [resolvable:$true] %s41
      %44 = dma.hbm_to_vmem [thread:$0]  %s2, 16, %s42, [#allocation7]
    $region13: #{_lambda_.34} parent=1 // pred_fallthru
      _
    // Predicated region
    $region14: #{_lambda_.34} parent=1 // pred_check
      _
    $region15: #{_lambda_.34} parent=1 // pred_check_branch
      %46 = sbr.rel (0) target = $region17
    $region16: #{_lambda_.34} parent=1 // pred_region
      %47 = dma.done [#allocation4], 128
    $region17: #{_lambda_.34} parent=1 // pred_fallthru
      _
    // Predicated region
    $region18: #{_lambda_.34} parent=1 // pred_check
      _
    $region19: #{_lambda_.34} parent=1 // pred_check_branch
      %49 = sbr.rel (0) target = $region21
    $region20: #{_lambda_.34} parent=1 // pred_region
      %50 = dma.done [#allocation7], 256
    $region21: #{_lambda_.34} parent=1 // pred_fallthru
      _
    // Predicated region
    $region22: #{_lambda_.34} parent=1 // pred_check
      _
    $region23: #{_lambda_.34} parent=1 // pred_check_branch
      %52 = sbr.rel (0) target = $region25
    $region24: #{_lambda_.34} parent=1 // pred_region
      %53 = dma.done [#allocation7], 16
    $region25: #{_lambda_.34} parent=1 // pred_fallthru
      _
    %p55 = scmp.eq.s32.totalorder 0, 0
    // Predicated region
    $region26: #{_lambda_.34} parent=1 // pred_check
      %p56 = pneg %p55
    $region27: #{_lambda_.34} parent=1 // pred_check_branch
      %58 = sbr.rel (%p56) target = $region29
    $region28: #{_lambda_.34} parent=1 // pred_region
      %vm59 = vcmask 523264
      %60 = vst.msk [vmem:[#allocation2] sm:$0xff] %vm59, 0.0
      %61 = vst.msk [vmem:[#allocation2 + $0x8] sm:$0xff] %vm59, 0.0
    $region29: #{_lambda_.34} parent=1 // pred_fallthru
      _
    %v62 = vld [vmem:[#allocation2] sm:$0xff]
    %v63 = vld [vmem:[#allocation2 + $0x8] sm:$0xff]
    %v64 = vld [vmem:[#allocation3] sm:$0xf]
    %v65 = vld [vmem:[#allocation3 + $0x4] sm:$0xf]
    %v66 = vld [vmem:[#allocation6] sm:$0xf]
    %v67 = vld [vmem:[#allocation6 + $0x4] sm:$0xf]
    %v68 = vld [vmem:[#allocation6 + $0x8] sm:$0xf]
    %v69 = vld [vmem:[#allocation6 + $0xc] sm:$0xf]
    %v72 = vunpack.c.l.b16 %v64
    %v73 = vunpack.c.l.b16 %v65
    %v74 = vpack.c.b16 %v73, %v72
    %v79 = vunpack.c.l.b16 %v66
    %v80 = vunpack.c.l.b16 %v67
    %v81 = vunpack.c.l.b16 %v68
    %v82 = vunpack.c.l.b16 %v69
    %v83 = vpack.c.b16 %v80, %v79
    %v84 = vpack.c.b16 %v82, %v81
    %vm87 = vcmask 261120
    %v89 = vsel %vm87, %v74, 0
    %91 = vmatprep.subr.bf16.mxu0 0
    %92 = vmatpush1.bf16.msra.mxu0 %v83
    %93 = vmatprep.subr.bf16.mxu0 0
    %94 = vmatpush1.bf16.msra.mxu0 %v84
    %95 = vmatprep.subr.bf16.mxu0 0
    %96 = vmatpush1.bf16.msra.mxu0 0
    %97 = vmatprep.subr.bf16.mxu0 0
    %98 = vmatpush1.bf16.msra.mxu0 0
    %99 = vmatprep.subr.bf16.mxu0 0
    %100 = vmatpush1.bf16.msra.mxu0 0
    %101 = vmatprep.subr.bf16.mxu0 0
    %102 = vmatpush1.bf16.msra.mxu0 0
    %103 = vmatprep.subr.bf16.mxu0 0
    %104 = vmatpush1.bf16.msra.mxu0 0
    %105 = vmatprep.subr.bf16.mxu0 0
    %106 = vmatpush1.bf16.msra.mxu0 0
    %107 = vmatprep.subr.bf16.mxu0 0
    %108 = vmatpush1.bf16.msra.mxu0 0
    %109 = vmatprep.subr.bf16.mxu0 0
    %110 = vmatpush1.bf16.msra.mxu0 0
    %111 = vmatprep.subr.bf16.mxu0 0
    %112 = vmatpush1.bf16.msra.mxu0 0
    %113 = vmatprep.subr.bf16.mxu0 0
    %114 = vmatpush1.bf16.msra.mxu0 0
    %115 = vmatprep.subr.bf16.mxu0 0
    %116 = vmatpush1.bf16.msra.mxu0 0
    %117 = vmatprep.subr.bf16.mxu0 0
    %118 = vmatpush1.bf16.msra.mxu0 0
    %119 = vmatprep.subr.bf16.mxu0 0
    %120 = vmatpush1.bf16.msra.mxu0 0
    %121 = vmatprep.subr.bf16.mxu0 0
    %122 = vmatpush1.bf16.msra.mxu0 0
    %123 = vmatprep.mubr.bf16.mxu0 0
    %124 = vmatmul.mubr.bf16.gmra.mrb[0].mxu0 %v89
    %v125 = vpop.f32.mrb[0].mxu0
    %v126 = vadd.f32 0.0, %v125
    %v127 = vpop.f32.mrb[0].mxu0
    %v128 = vpop.f32.mrb[0].mxu0
    %v129 = vadd.f32 0.0, %v128
    %v130 = vpop.f32.mrb[0].mxu0
    %131 = vdwg.mxu0
    %v132 = vadd.f32 %v62, %v126
    %v133 = vadd.f32 %v63, %v129
    %vm134 = vcmask 523264
    %135 = vst.msk [vmem:[#allocation2] sm:$0xff] %vm134, %v132
    %136 = vst.msk [vmem:[#allocation2 + $0x8] sm:$0xff] %vm134, %v133
    // Predicated region
    $region30: #{_lambda_.34} parent=1 // pred_check
      %p137 = pneg %p55
    $region31: #{_lambda_.34} parent=1 // pred_check_branch
      %139 = sbr.rel (%p137) target = $region33
    $region32: #{_lambda_.34} parent=1 // pred_region
      %v140 = vld [vmem:[#allocation2] sm:$0xff]
      %v141 = vld [vmem:[#allocation2 + $0x8] sm:$0xff]
      %v142 = vld [vmem:[#allocation8] sm:$0x1]
      %v144 = vlaneseq
      %v145 = vshrl.u32 %v144, 7
      %v146 = vsub.s32 0, %v145
      %v147 = vrot.slane %v142, %v146
      %v149 = vadd.f32 %v140, %v147
      %v150 = vadd.f32 %v141, %v147
      %v151 = vpack.c.bf16 %v150, %v149
      %v153 = vunpack.c.l.b16 %v151
      %v154 = vunpack.c.h.b16 %v151
      %v155 = vpack.c.b16 %v153, %v153
      %v156 = vpack.c.b16 %v154, %v154
      %vm159 = vcmask 519168
      %160 = vst.msk [vmem:[#allocation9] sm:$0xf] %vm159, %v155
      %161 = vst.msk [vmem:[#allocation9 + $0x4] sm:$0xf] %vm159, %v156
    $region33: #{_lambda_.34} parent=1 // pred_fallthru
      _
    // Predicated region
    $region34: #{_lambda_.34} parent=1 // pred_check
      _
    $region35: #{_lambda_.34} parent=1 // pred_check_branch
      %163 = sbr.rel (0) target = $region37
    $region36: #{_lambda_.34} parent=1 // pred_region
      %s165 = ssub.s32 128, 128
      %166 = vsyncadd [#allocation5], %s165
      %s167 = sshll.u32 [#allocation9], 4
      %s168 = int_to_ptr.vmem [resolvable:$true] %s167
      %173 = dma.vmem_to_hbm [thread:$0]  %s168, 128, %s3, [#allocation5], 64, 64, 4
    $region37: #{_lambda_.34} parent=1 // pred_fallthru
      _
    // Predicated region
    $region38: #{_lambda_.34} parent=1 // pred_check
      _
    $region39: #{_lambda_.34} parent=1 // pred_check_branch
      %175 = sbr.rel (0) target = $region41
    $region40: #{_lambda_.34} parent=1 // pred_region
      %176 = dma.done [#allocation5], 128
    $region41: #{_lambda_.34} parent=1 // pred_fallthru
      _
    %177 = vsyncpa [#allocation4], 1
    %178 = vsyncpa [#allocation7], 1
    %179 = vsyncpa [#allocation5], 1

// kernel: _lambda_.45
$region0: #{_lambda_.45}
  #allocation0 [shape = 'u32[]', space=smem, size = 0x4, offset = 0x4, fixed_abs, tag = 'smem constant byte address 0x4 - core index']
  #allocation1 [shape = 'u32[144,128]{1,0:T(1,128)}', space=vmem, size = 0x12000, scoped, tag = 'internal scratch']
  #allocation2 [shape = 'f32[16,128]{1,0:T(8,128)}', space=vmem, size = 0x2000, scoped, tag = 'scratch operand']
  %s0 = inlined_call_operand.hbm [shape: bf16[16,32], index: 0, kind: input, shape index: {}]
  %s1 = inlined_call_operand.hbm [shape: bf16[32,128], index: 1, kind: input, shape index: {}]
  %s2 = inlined_call_operand.hbm [shape: f32[1,128], index: 2, kind: input, shape index: {}]
  %s3 = inlined_call_operand.hbm [shape: f32[16,128], index: 3, kind: output, shape index: {}]
  %s4 = sld [smem:[#allocation0]]
  $region42: #{_lambda_.45} parent=0
    _
  %s6 = ssub.s32 1, %s4
  %s7 = scalar_select 0, %s6, %s4
  $region1: #{_lambda_.45} parent=0
    #allocation3 [shape = 'u8[4096]{0}', space=vmem, size = 0x1000, scoped, tag = 'input window, operand 0, single buffered']
    #allocation4 [shape = 's32[1]{0}', space=sflag, size = 0x4, scoped, tag = 'scoped memory for _lambda_.45']
    #allocation5 [shape = 's32[1]{0}', space=sflag, size = 0x4, scoped, tag = 'scoped memory for _lambda_.45']
    #allocation6 [shape = 'u8[8192]{0}', space=vmem, size = 0x2000, scoped, tag = 'input window, operand 1, single buffered']
    #allocation7 [shape = 's32[1]{0}', space=sflag, size = 0x4, scoped, tag = 'scoped memory for _lambda_.45']
    #allocation8 [shape = 'u8[512]{0}', space=vmem, size = 0x400, scoped, tag = 'input window, operand 2, single buffered']
    #allocation9 [shape = 'u8[8192]{0}', space=vmem, size = 0x2000, scoped, tag = 'output window, operand 0, single buffered']
    %8 = vsyncpa [#allocation4], 0
    %9 = vsyncpa [#allocation7], 0
    %10 = vsyncpa [#allocation5], 0
    // Predicated region
    $region2: #{_lambda_.45} parent=1 // pred_check
      _
    $region3: #{_lambda_.45} parent=1 // pred_check_branch
      %12 = sbr.rel (0) target = $region5
    $region4: #{_lambda_.45} parent=1 // pred_region
      %s14 = ssub.s32 128, 128
      %15 = vsyncadd [#allocation4], %s14
      %s16 = sshll.u32 [#allocation3], 4
      %s17 = int_to_ptr.vmem [resolvable:$true] %s16
      %22 = dma.hbm_to_vmem [thread:$0]  %s0, 128, %s17, [#allocation4], 64, 64, 4
    $region5: #{_lambda_.45} parent=1 // pred_fallthru
      _
    // Predicated region
    $region6: #{_lambda_.45} parent=1 // pred_check
      _
    $region7: #{_lambda_.45} parent=1 // pred_check_branch
      %24 = sbr.rel (0) target = $region9
    $region8: #{_lambda_.45} parent=1 // pred_region
      %s26 = ssub.s32 256, 256
      %27 = vsyncadd [#allocation7], %s26
      %s28 = sshll.u32 [#allocation6], 4
      %s29 = int_to_ptr.vmem [resolvable:$true] %s28
      %34 = dma.hbm_to_vmem [thread:$0]  %s1, 256, %s29, [#allocation7], 64, 64, 4
    $region9: #{_lambda_.45} parent=1 // pred_fallthru
      _
    // Predicated region
    $region10: #{_lambda_.45} parent=1 // pred_check
      _
    $region11: #{_lambda_.45} parent=1 // pred_check_branch
      %36 = sbr.rel (0) target = $region13
    $region12: #{_lambda_.45} parent=1 // pred_region
      %s38 = ssub.s32 16, 16
      %39 = vsyncadd [#allocation7], %s38
      %s41 = sshll.u32 [#allocation8], 4
      %s42 = int_to_ptr.vmem [resolvable:$true] %s41
      %44 = dma.hbm_to_vmem [thread:$0]  %s2, 16, %s42, [#allocation7]
    $region13: #{_lambda_.45} parent=1 // pred_fallthru
      _
    // Predicated region
    $region14: #{_lambda_.45} parent=1 // pred_check
      _
    $region15: #{_lambda_.45} parent=1 // pred_check_branch
      %46 = sbr.rel (0) target = $region17
    $region16: #{_lambda_.45} parent=1 // pred_region
      %47 = dma.done [#allocation4], 128
    $region17: #{_lambda_.45} parent=1 // pred_fallthru
      _
    // Predicated region
    $region18: #{_lambda_.45} parent=1 // pred_check
      _
    $region19: #{_lambda_.45} parent=1 // pred_check_branch
      %49 = sbr.rel (0) target = $region21
    $region20: #{_lambda_.45} parent=1 // pred_region
      %50 = dma.done [#allocation7], 256
    $region21: #{_lambda_.45} parent=1 // pred_fallthru
      _
    // Predicated region
    $region22: #{_lambda_.45} parent=1 // pred_check
      _
    $region23: #{_lambda_.45} parent=1 // pred_check_branch
      %52 = sbr.rel (0) target = $region25
    $region24: #{_lambda_.45} parent=1 // pred_region
      %53 = dma.done [#allocation7], 16
    $region25: #{_lambda_.45} parent=1 // pred_fallthru
      _
    %p55 = scmp.eq.s32.totalorder 0, 0
    // Predicated region
    $region26: #{_lambda_.45} parent=1 // pred_check
      %p56 = pneg %p55
    $region27: #{_lambda_.45} parent=1 // pred_check_branch
      %58 = sbr.rel (%p56) target = $region29
    $region28: #{_lambda_.45} parent=1 // pred_region
      %59 = vst [vmem:[#allocation2] sm:$0xff] 0.0
      %60 = vst [vmem:[#allocation2 + $0x8] sm:$0xff] 0.0
    $region29: #{_lambda_.45} parent=1 // pred_fallthru
      _
    %v61 = vld [vmem:[#allocation2] sm:$0xff]
    %v62 = vld [vmem:[#allocation2 + $0x8] sm:$0xff]
    %v63 = vld [vmem:[#allocation3] sm:$0xf]
    %v64 = vld [vmem:[#allocation3 + $0x4] sm:$0xf]
    %v65 = vld [vmem:[#allocation6] sm:$0xf]
    %v66 = vld [vmem:[#allocation6 + $0x4] sm:$0xf]
    %v67 = vld [vmem:[#allocation6 + $0x8] sm:$0xf]
    %v68 = vld [vmem:[#allocation6 + $0xc] sm:$0xf]
    %v71 = vunpack.c.l.b16 %v63
    %v72 = vunpack.c.l.b16 %v64
    %v73 = vpack.c.b16 %v72, %v71
    %v78 = vunpack.c.l.b16 %v65
    %v79 = vunpack.c.l.b16 %v66
    %v80 = vunpack.c.l.b16 %v67
    %v81 = vunpack.c.l.b16 %v68
    %v82 = vpack.c.b16 %v79, %v78
    %v83 = vpack.c.b16 %v81, %v80
    %vm86 = vcmask 261120
    %v88 = vsel %vm86, %v73, 0
    %90 = vmatprep.subr.bf16.mxu0 0
    %91 = vmatpush1.bf16.msra.mxu0 %v82
    %92 = vmatprep.subr.bf16.mxu0 0
    %93 = vmatpush1.bf16.msra.mxu0 %v83
    %94 = vmatprep.subr.bf16.mxu0 0
    %95 = vmatpush1.bf16.msra.mxu0 0
    %96 = vmatprep.subr.bf16.mxu0 0
    %97 = vmatpush1.bf16.msra.mxu0 0
    %98 = vmatprep.subr.bf16.mxu0 0
    %99 = vmatpush1.bf16.msra.mxu0 0
    %100 = vmatprep.subr.bf16.mxu0 0
    %101 = vmatpush1.bf16.msra.mxu0 0
    %102 = vmatprep.subr.bf16.mxu0 0
    %103 = vmatpush1.bf16.msra.mxu0 0
    %104 = vmatprep.subr.bf16.mxu0 0
    %105 = vmatpush1.bf16.msra.mxu0 0
    %106 = vmatprep.subr.bf16.mxu0 0
    %107 = vmatpush1.bf16.msra.mxu0 0
    %108 = vmatprep.subr.bf16.mxu0 0
    %109 = vmatpush1.bf16.msra.mxu0 0
    %110 = vmatprep.subr.bf16.mxu0 0
    %111 = vmatpush1.bf16.msra.mxu0 0
    %112 = vmatprep.subr.bf16.mxu0 0
    %113 = vmatpush1.bf16.msra.mxu0 0
    %114 = vmatprep.subr.bf16.mxu0 0
    %115 = vmatpush1.bf16.msra.mxu0 0
    %116 = vmatprep.subr.bf16.mxu0 0
    %117 = vmatpush1.bf16.msra.mxu0 0
    %118 = vmatprep.subr.bf16.mxu0 0
    %119 = vmatpush1.bf16.msra.mxu0 0
    %120 = vmatprep.subr.bf16.mxu0 0
    %121 = vmatpush1.bf16.msra.mxu0 0
    %122 = vmatprep.mubr.bf16.mxu0 0
    %123 = vmatmul.mubr.bf16.gmra.mrb[0].mxu0 %v88
    %v124 = vpop.f32.mrb[0].mxu0
    %v125 = vadd.f32 0.0, %v124
    %v126 = vpop.f32.mrb[0].mxu0
    %v127 = vpop.f32.mrb[0].mxu0
    %v128 = vadd.f32 0.0, %v127
    %v129 = vpop.f32.mrb[0].mxu0
    %130 = vdwg.mxu0
    %v131 = vadd.f32 %v61, %v125
    %v132 = vadd.f32 %v62, %v128
    %133 = vst [vmem:[#allocation2] sm:$0xff] %v131
    %134 = vst [vmem:[#allocation2 + $0x8] sm:$0xff] %v132
    // Predicated region
    $region30: #{_lambda_.45} parent=1 // pred_check
      %p135 = pneg %p55
    $region31: #{_lambda_.45} parent=1 // pred_check_branch
      %137 = sbr.rel (%p135) target = $region33
    $region32: #{_lambda_.45} parent=1 // pred_region
      %v138 = vld [vmem:[#allocation2] sm:$0xff]
      %v139 = vld [vmem:[#allocation2 + $0x8] sm:$0xff]
      %v140 = vld [vmem:[#allocation8] sm:$0x1]
      %v142 = vlaneseq
      %v143 = vshrl.u32 %v142, 7
      %v144 = vsub.s32 0, %v143
      %v145 = vrot.slane %v140, %v144
      %v147 = vadd.f32 %v138, %v145
      %v148 = vadd.f32 %v139, %v145
      %149 = vst [vmem:[#allocation9] sm:$0xff] %v147
      %150 = vst [vmem:[#allocation9 + $0x8] sm:$0xff] %v148
    $region33: #{_lambda_.45} parent=1 // pred_fallthru
      _
    // Predicated region
    $region34: #{_lambda_.45} parent=1 // pred_check
      _
    $region35: #{_lambda_.45} parent=1 // pred_check_branch
      %152 = sbr.rel (0) target = $region37
    $region36: #{_lambda_.45} parent=1 // pred_region
      %s154 = ssub.s32 256, 256
      %155 = vsyncadd [#allocation5], %s154
      %s156 = sshll.u32 [#allocation9], 4
      %s157 = int_to_ptr.vmem [resolvable:$true] %s156
      %162 = dma.vmem_to_hbm [thread:$0]  %s157, 256, %s3, [#allocation5], 128, 128, 8
    $region37: #{_lambda_.45} parent=1 // pred_fallthru
      _
    // Predicated region
    $region38: #{_lambda_.45} parent=1 // pred_check
      _
    $region39: #{_lambda_.45} parent=1 // pred_check_branch
      %164 = sbr.rel (0) target = $region41
    $region40: #{_lambda_.45} parent=1 // pred_region
      %165 = dma.done [#allocation5], 256
    $region41: #{_lambda_.45} parent=1 // pred_fallthru
      _
    %166 = vsyncpa [#allocation4], 1
    %167 = vsyncpa [#allocation7], 1
    %168 = vsyncpa [#allocation5], 1

// kernel: _lambda_.35
$region0: #{_lambda_.35}
  #allocation0 [shape = 'u32[]', space=smem, size = 0x4, offset = 0x4, fixed_abs, tag = 'smem constant byte address 0x4 - core index']
  #allocation1 [shape = 'u32[144,128]{1,0:T(1,128)}', space=vmem, size = 0x12000, scoped, tag = 'internal scratch']
  %s0 = inlined_call_operand.hbm [shape: bf16[2,8,32], index: 0, kind: input, shape index: {}]
  %s1 = inlined_call_operand.hbm [shape: bf16[2,8,64], index: 1, kind: input, shape index: {}]
  %s2 = inlined_call_operand.hbm [shape: f32[2,1,8], index: 2, kind: input, shape index: {}]
  %s3 = inlined_call_operand.hbm [shape: bf16[2,8,32], index: 3, kind: input, shape index: {}]
  %s4 = inlined_call_operand.hbm [shape: bf16[32,32], index: 4, kind: input, shape index: {}]
  %s5 = inlined_call_operand.hbm [shape: f32[1,32], index: 5, kind: input, shape index: {}]
  %s6 = inlined_call_operand.hbm [shape: f32[1,32], index: 6, kind: input, shape index: {}]
  %s7 = inlined_call_operand.hbm [shape: f32[1,32], index: 7, kind: input, shape index: {}]
  %s8 = inlined_call_operand.hbm [shape: bf16[2,8,32], index: 8, kind: output, shape index: {}]
  %s9 = sld [smem:[#allocation0]]
  $region97: #{_lambda_.35} parent=0
    _
  %s11 = ssub.s32 1, %s9
  %s12 = scalar_select 0, %s11, %s9
  $region1: #{_lambda_.35} parent=0
    #allocation2 [shape = 'u8[4096]{0}', space=vmem, size = 0x1000, scoped, tag = 'input window, operand 0']
    #allocation3 [shape = 's32[2]{0}', space=sflag, size = 0x8, scoped, tag = 'scoped memory for _lambda_.35']
    #allocation4 [shape = 's32[2]{0}', space=sflag, size = 0x8, scoped, tag = 'scoped memory for _lambda_.35']
    #allocation5 [shape = 'u8[4096]{0}', space=vmem, size = 0x1000, scoped, tag = 'input window, operand 1']
    #allocation6 [shape = 's32[2]{0}', space=sflag, size = 0x8, scoped, tag = 'scoped memory for _lambda_.35']
    #allocation7 [shape = 'u8[1024]{0}', space=vmem, size = 0x400, scoped, tag = 'input window, operand 2']
    #allocation8 [shape = 'u8[4096]{0}', space=vmem, size = 0x1000, scoped, tag = 'input window, operand 3']
    #allocation9 [shape = 's32[2]{0}', space=sflag, size = 0x8, scoped, tag = 'scoped memory for _lambda_.35']
    #allocation10 [shape = 'u8[8192]{0}', space=vmem, size = 0x2000, scoped, tag = 'input window, operand 4, single buffered']
    #allocation11 [shape = 'u8[512]{0}', space=vmem, size = 0x400, scoped, tag = 'input window, operand 5, single buffered']
    #allocation12 [shape = 's32[1]{0}', space=sflag, size = 0x4, scoped, tag = 'scoped memory for _lambda_.35']
    #allocation13 [shape = 'u8[512]{0}', space=vmem, size = 0x400, scoped, tag = 'input window, operand 6, single buffered']
    #allocation14 [shape = 'u8[512]{0}', space=vmem, size = 0x400, scoped, tag = 'input window, operand 7, single buffered']
    #allocation15 [shape = 's32[1]{0}', space=sflag, size = 0x4, scoped, tag = 'scoped memory for _lambda_.35']
    #allocation16 [shape = 'u8[4096]{0}', space=vmem, size = 0x1000, scoped, tag = 'output window, operand 0']
    %13 = vsyncpa [#allocation3], 0
    %s14 = scalar_lea.sflag [#allocation3], 1
    %15 = vsyncpa %s14, 0
    %16 = vsyncpa [#allocation6], 0
    %s17 = scalar_lea.sflag [#allocation6], 1
    %18 = vsyncpa %s17, 0
    %19 = vsyncpa [#allocation9], 0
    %s20 = scalar_lea.sflag [#allocation9], 1
    %21 = vsyncpa %s20, 0
    %22 = vsyncpa [#allocation12], 0
    %23 = vsyncpa [#allocation15], 0
    %24 = vsyncpa [#allocation4], 0
    %s25 = scalar_lea.sflag [#allocation4], 1
    %26 = vsyncpa %s25, 0
    loop: start=0, step=1, limit=4
    $region2: #{_lambda_.35} parent=1 // loop_pre_header
      _
    $region3: #{_lambda_.35} parent=1 // loop_header
      %s28 = sphi 0, %s32
      %p29 = scmp.ge.s32.totalorder %s28, 4
      %s38 = sphi 0, %s40
      %s41 = sphi 0, %s38
      %s42 = sphi 0, %s41
      %s58 = sphi 0, %s42
      %s64 = sphi 0, %s66
      %s67 = sphi 0, %s64
      %s68 = sphi 0, %s67
      %s84 = sphi 0, %s68
      %s90 = sphi 0, %s92
      %s93 = sphi 0, %s90
      %s94 = sphi 0, %s93
      %s110 = sphi 0, %s94
      %s116 = sphi 0, %s118
      %s119 = sphi 0, %s116
      %s120 = sphi 0, %s119
      %s136 = sphi 0, %s120
      %s140 = sphi 0, %s140
      %s142 = sphi 0, %s140
      %s143 = sphi 0, %s142
      %s157 = sphi 0, %s143
      %s161 = sphi 0, %s161
      %s163 = sphi 0, %s161
      %s164 = sphi 0, %s163
      %s178 = sphi 0, %s164
      %s182 = sphi 0, %s182
      %s184 = sphi 0, %s182
      %s185 = sphi 0, %s184
      %s199 = sphi 0, %s185
      %s203 = sphi 0, %s203
      %s205 = sphi 0, %s203
      %s206 = sphi 0, %s205
      %s220 = sphi 0, %s206
      %s226 = sphi 0, %s228
      %s229 = sphi 0, %s226
      %s230 = sphi 0, %s229
      %s246 = sphi 0, %s230
    $region4: #{_lambda_.35} parent=1 // loop_header_branch
      %31 = sbr.rel (%p29) target = $region8
    $region5: #{_lambda_.35} parent=1 // loop_body
      %s33 = ssub.s32 %s28, 1
      %s34 = ssub.s32 %s28, 2
      %s35 = sadd.s32 %s28, 1
      %s36 = ssub.s32 %s28, %s35
      %p37 = scmp.eq.s32.totalorder %s36, 0
      %s39 = sadd.s32 %s38, 1
      %s40 = scalar_select %p37, %s38, %s39
      %p43 = pneg %p37
      %p44 = scmp.eq.s32.totalorder %s28, 1
      %p45 = por %p43, %p44
      %p46 = scmp.ne.s32.totalorder %s38, %s41
      %p47 = scmp.eq.s32.totalorder %s28, 0
      %p48 = por %p46, %p47
      %p49 = scmp.ne.s32.totalorder %s38, %s41
      %p50 = scmp.eq.s32.totalorder %s33, 1
      %p51 = por %p49, %p50
      %p52 = scmp.ne.s32.totalorder %s41, %s42
      %p53 = scmp.eq.s32.totalorder %s33, 0
      %p54 = por %p52, %p53
      %p55 = scmp.ne.s32.totalorder %s41, %s42
      %p56 = scmp.eq.s32.totalorder %s34, 1
      %p57 = por %p55, %p56
      %p59 = scmp.ne.s32.totalorder %s42, %s58
      %p60 = scmp.eq.s32.totalorder %s34, 0
      %p61 = por %p59, %p60
      %s62 = ssub.s32 %s28, %s35
      %p63 = scmp.eq.s32.totalorder %s62, 0
      %s65 = sadd.s32 %s64, 1
      %s66 = scalar_select %p63, %s64, %s65
      %p69 = pneg %p63
      %p70 = scmp.eq.s32.totalorder %s28, 1
      %p71 = por %p69, %p70
      %p72 = scmp.ne.s32.totalorder %s64, %s67
      %p73 = scmp.eq.s32.totalorder %s28, 0
      %p74 = por %p72, %p73
      %p75 = scmp.ne.s32.totalorder %s64, %s67
      %p76 = scmp.eq.s32.totalorder %s33, 1
      %p77 = por %p75, %p76
      %p78 = scmp.ne.s32.totalorder %s67, %s68
      %p79 = scmp.eq.s32.totalorder %s33, 0
      %p80 = por %p78, %p79
      %p81 = scmp.ne.s32.totalorder %s67, %s68
      %p82 = scmp.eq.s32.totalorder %s34, 1
      %p83 = por %p81, %p82
      %p85 = scmp.ne.s32.totalorder %s68, %s84
      %p86 = scmp.eq.s32.totalorder %s34, 0
      %p87 = por %p85, %p86
      %s88 = ssub.s32 %s28, %s35
      %p89 = scmp.eq.s32.totalorder %s88, 0
      %s91 = sadd.s32 %s90, 1
      %s92 = scalar_select %p89, %s90, %s91
      %p95 = pneg %p89
      %p96 = scmp.eq.s32.totalorder %s28, 1
      %p97 = por %p95, %p96
      %p98 = scmp.ne.s32.totalorder %s90, %s93
      %p99 = scmp.eq.s32.totalorder %s28, 0
      %p100 = por %p98, %p99
      %p101 = scmp.ne.s32.totalorder %s90, %s93
      %p102 = scmp.eq.s32.totalorder %s33, 1
      %p103 = por %p101, %p102
      %p104 = scmp.ne.s32.totalorder %s93, %s94
      %p105 = scmp.eq.s32.totalorder %s33, 0
      %p106 = por %p104, %p105
      %p107 = scmp.ne.s32.totalorder %s93, %s94
      %p108 = scmp.eq.s32.totalorder %s34, 1
      %p109 = por %p107, %p108
      %p111 = scmp.ne.s32.totalorder %s94, %s110
      %p112 = scmp.eq.s32.totalorder %s34, 0
      %p113 = por %p111, %p112
      %s114 = ssub.s32 %s28, %s35
      %p115 = scmp.eq.s32.totalorder %s114, 0
      %s117 = sadd.s32 %s116, 1
      %s118 = scalar_select %p115, %s116, %s117
      %p121 = pneg %p115
      %p122 = scmp.eq.s32.totalorder %s28, 1
      %p123 = por %p121, %p122
      %p124 = scmp.ne.s32.totalorder %s116, %s119
      %p125 = scmp.eq.s32.totalorder %s28, 0
      %p126 = por %p124, %p125
      %p127 = scmp.ne.s32.totalorder %s116, %s119
      %p128 = scmp.eq.s32.totalorder %s33, 1
      %p129 = por %p127, %p128
      %p130 = scmp.ne.s32.totalorder %s119, %s120
      %p131 = scmp.eq.s32.totalorder %s33, 0
      %p132 = por %p130, %p131
      %p133 = scmp.ne.s32.totalorder %s119, %s120
      %p134 = scmp.eq.s32.totalorder %s34, 1
      %p135 = por %p133, %p134
      %p137 = scmp.ne.s32.totalorder %s120, %s136
      %p138 = scmp.eq.s32.totalorder %s34, 0
      %p139 = por %p137, %p138
      %s141 = sadd.s32 %s140, 1
      %p144 = scmp.eq.s32.totalorder %s28, 1
      %p145 = scmp.ne.s32.totalorder %s140, %s142
      %p146 = scmp.eq.s32.totalorder %s28, 0
      %p147 = por %p145, %p146
      %p148 = scmp.ne.s32.totalorder %s140, %s142
      %p149 = scmp.eq.s32.totalorder %s33, 1
      %p150 = por %p148, %p149
      %p151 = scmp.ne.s32.totalorder %s142, %s143
      %p152 = scmp.eq.s32.totalorder %s33, 0
      %p153 = por %p151, %p152
      %p154 = scmp.ne.s32.totalorder %s142, %s143
      %p155 = scmp.eq.s32.totalorder %s34, 1
      %p156 = por %p154, %p155
      %p158 = scmp.ne.s32.totalorder %s143, %s157
      %p159 = scmp.eq.s32.totalorder %s34, 0
      %p160 = por %p158, %p159
      %s162 = sadd.s32 %s161, 1
      %p165 = scmp.eq.s32.totalorder %s28, 1
      %p166 = scmp.ne.s32.totalorder %s161, %s163
      %p167 = scmp.eq.s32.totalorder %s28, 0
      %p168 = por %p166, %p167
      %p169 = scmp.ne.s32.totalorder %s161, %s163
      %p170 = scmp.eq.s32.totalorder %s33, 1
      %p171 = por %p169, %p170
      %p172 = scmp.ne.s32.totalorder %s163, %s164
      %p173 = scmp.eq.s32.totalorder %s33, 0
      %p174 = por %p172, %p173
      %p175 = scmp.ne.s32.totalorder %s163, %s164
      %p176 = scmp.eq.s32.totalorder %s34, 1
      %p177 = por %p175, %p176
      %p179 = scmp.ne.s32.totalorder %s164, %s178
      %p180 = scmp.eq.s32.totalorder %s34, 0
      %p181 = por %p179, %p180
      %s183 = sadd.s32 %s182, 1
      %p186 = scmp.eq.s32.totalorder %s28, 1
      %p187 = scmp.ne.s32.totalorder %s182, %s184
      %p188 = scmp.eq.s32.totalorder %s28, 0
      %p189 = por %p187, %p188
      %p190 = scmp.ne.s32.totalorder %s182, %s184
      %p191 = scmp.eq.s32.totalorder %s33, 1
      %p192 = por %p190, %p191
      %p193 = scmp.ne.s32.totalorder %s184, %s185
      %p194 = scmp.eq.s32.totalorder %s33, 0
      %p195 = por %p193, %p194
      %p196 = scmp.ne.s32.totalorder %s184, %s185
      %p197 = scmp.eq.s32.totalorder %s34, 1
      %p198 = por %p196, %p197
      %p200 = scmp.ne.s32.totalorder %s185, %s199
      %p201 = scmp.eq.s32.totalorder %s34, 0
      %p202 = por %p200, %p201
      %s204 = sadd.s32 %s203, 1
      %p207 = scmp.eq.s32.totalorder %s28, 1
      %p208 = scmp.ne.s32.totalorder %s203, %s205
      %p209 = scmp.eq.s32.totalorder %s28, 0
      %p210 = por %p208, %p209
      %p211 = scmp.ne.s32.totalorder %s203, %s205
      %p212 = scmp.eq.s32.totalorder %s33, 1
      %p213 = por %p211, %p212
      %p214 = scmp.ne.s32.totalorder %s205, %s206
      %p215 = scmp.eq.s32.totalorder %s33, 0
      %p216 = por %p214, %p215
      %p217 = scmp.ne.s32.totalorder %s205, %s206
      %p218 = scmp.eq.s32.totalorder %s34, 1
      %p219 = por %p217, %p218
      %p221 = scmp.ne.s32.totalorder %s206, %s220
      %p222 = scmp.eq.s32.totalorder %s34, 0
      %p223 = por %p221, %p222
      %s224 = ssub.s32 %s28, %s35
      %p225 = scmp.eq.s32.totalorder %s224, 0
      %s227 = sadd.s32 %s226, 1
      %s228 = scalar_select %p225, %s226, %s227
      %p231 = pneg %p225
      %p232 = scmp.eq.s32.totalorder %s28, 1
      %p233 = por %p231, %p232
      %p234 = scmp.ne.s32.totalorder %s226, %s229
      %p235 = scmp.eq.s32.totalorder %s28, 0
      %p236 = por %p234, %p235
      %p237 = scmp.ne.s32.totalorder %s226, %s229
      %p238 = scmp.eq.s32.totalorder %s33, 1
      %p239 = por %p237, %p238
      %p240 = scmp.ne.s32.totalorder %s229, %s230
      %p241 = scmp.eq.s32.totalorder %s33, 0
      %p242 = por %p240, %p241
      %p243 = scmp.ne.s32.totalorder %s229, %s230
      %p244 = scmp.eq.s32.totalorder %s34, 1
      %p245 = por %p243, %p244
      %p247 = scmp.ne.s32.totalorder %s230, %s246
      %p248 = scmp.eq.s32.totalorder %s34, 0
      %p249 = por %p247, %p248
      %p250 = scmp.le.s32.totalorder 1, %s28
      %p251 = scmp.lt.s32.totalorder %s28, 3
      %p252 = pnand %p250, %p251
      %p253 = pneg %p252
      // Predicated region
      $region9: #{_lambda_.35} parent=5 // pred_check
        _
      $region10: #{_lambda_.35} parent=5 // pred_check_branch
        %255 = sbr.rel (%p252) target = $region12
      $region11: #{_lambda_.35} parent=5 // pred_region
        %s256 = ssub.s32 %s28, 1
        // Predicated region
        $region13: #{_lambda_.35} parent=11 // pred_check
          %p257 = pneg %p153
        $region14: #{_lambda_.35} parent=11 // pred_check_branch
          %259 = sbr.rel (%p257) target = $region16
        $region15: #{_lambda_.35} parent=11 // pred_region
          %s261 = ssub.s32 256, 256
          %262 = vsyncadd [#allocation9], %s261
          %s263 = sshll.u32 [#allocation10], 4
          %s264 = int_to_ptr.vmem [resolvable:$true] %s263
          %269 = dma.hbm_to_vmem [thread:$0]  %s4, 256, %s264, [#allocation9], 64, 64, 4
        $region16: #{_lambda_.35} parent=11 // pred_fallthru
          _
        // Predicated region
        $region17: #{_lambda_.35} parent=11 // pred_check
          %p270 = pneg %p174
        $region18: #{_lambda_.35} parent=11 // pred_check_branch
          %272 = sbr.rel (%p270) target = $region20
        $region19: #{_lambda_.35} parent=11 // pred_region
          %s274 = ssub.s32 16, 16
          %275 = vsyncadd [#allocation12], %s274
          %s277 = sshll.u32 [#allocation11], 4
          %s278 = int_to_ptr.vmem [resolvable:$true] %s277
          %280 = dma.hbm_to_vmem [thread:$0]  %s5, 16, %s278, [#allocation12]
        $region20: #{_lambda_.35} parent=11 // pred_fallthru
          _
        // Predicated region
        $region21: #{_lambda_.35} parent=11 // pred_check
          %p281 = pneg %p195
        $region22: #{_lambda_.35} parent=11 // pred_check_branch
          %283 = sbr.rel (%p281) target = $region24
        $region23: #{_lambda_.35} parent=11 // pred_region
          %s285 = ssub.s32 16, 16
          %286 = vsyncadd [#allocation12], %s285
          %s288 = sshll.u32 [#allocation13], 4
          %s289 = int_to_ptr.vmem [resolvable:$true] %s288
          %291 = dma.hbm_to_vmem [thread:$0]  %s6, 16, %s289, [#allocation12]
        $region24: #{_lambda_.35} parent=11 // pred_fallthru
          _
        // Predicated region
        $region25: #{_lambda_.35} parent=11 // pred_check
          %p292 = pneg %p216
        $region26: #{_lambda_.35} parent=11 // pred_check_branch
          %294 = sbr.rel (%p292) target = $region28
        $region27: #{_lambda_.35} parent=11 // pred_region
          %s296 = ssub.s32 16, 16
          %297 = vsyncadd [#allocation15], %s296
          %s299 = sshll.u32 [#allocation14], 4
          %s300 = int_to_ptr.vmem [resolvable:$true] %s299
          %302 = dma.hbm_to_vmem [thread:$0]  %s7, 16, %s300, [#allocation15]
        $region28: #{_lambda_.35} parent=11 // pred_fallthru
          _
      $region12: #{_lambda_.35} parent=5 // pred_fallthru
        _
      %p303 = scmp.lt.s32.totalorder %s28, 2
      // Predicated region
      $region29: #{_lambda_.35} parent=5 // pred_check
        %p304 = pneg %p303
      $region30: #{_lambda_.35} parent=5 // pred_check_branch
        %306 = sbr.rel (%p304) target = $region32
      $region31: #{_lambda_.35} parent=5 // pred_region
        // Predicated region
        $region33: #{_lambda_.35} parent=31 // pred_check
          %p307 = pneg %p48
        $region34: #{_lambda_.35} parent=31 // pred_check_branch
          %309 = sbr.rel (%p307) target = $region36
        $region35: #{_lambda_.35} parent=31 // pred_region
          %s310 = sand.u32 %s38, 1
          %s311 = scalar_lea.sflag [#allocation3], %s310
          %s312 = sand.u32 %s38, 1
          %s313 = smul.addr %s312, 4
          %s314 = scalar_lea.vmem [#allocation2], %s313
          %s316 = ssub.s32 64, 64
          %317 = vsyncadd %s311, %s316
          %s318 = smul.addr %s28, 64
          %s319 = scalar_lea.hbm %s0, %s318
          %s321 = sshll.u32 %s314, 4
          %s322 = int_to_ptr.vmem [resolvable:$true] %s321
          %324 = dma.hbm_to_vmem [thread:$0]  %s319, 64, %s322, %s311
        $region36: #{_lambda_.35} parent=31 // pred_fallthru
          _
        // Predicated region
        $region37: #{_lambda_.35} parent=31 // pred_check
          %p325 = pneg %p74
        $region38: #{_lambda_.35} parent=31 // pred_check_branch
          %327 = sbr.rel (%p325) target = $region40
        $region39: #{_lambda_.35} parent=31 // pred_region
          %s328 = sand.u32 %s28, 1
          %s329 = scalar_lea.sflag [#allocation6], %s328
          %s330 = sand.u32 %s64, 1
          %s331 = smul.addr %s330, 4
          %s332 = scalar_lea.vmem [#allocation5], %s331
          %s334 = ssub.s32 64, 64
          %335 = vsyncadd %s329, %s334
          %s336 = smul.addr %s28, 64
          %s337 = scalar_lea.hbm %s1, %s336
          %s339 = sshll.u32 %s332, 4
          %s340 = int_to_ptr.vmem [resolvable:$true] %s339
          %342 = dma.hbm_to_vmem [thread:$0]  %s337, 64, %s340, %s329
        $region40: #{_lambda_.35} parent=31 // pred_fallthru
          _
        // Predicated region
        $region41: #{_lambda_.35} parent=31 // pred_check
          %p343 = pneg %p100
        $region42: #{_lambda_.35} parent=31 // pred_check_branch
          %345 = sbr.rel (%p343) target = $region44
        $region43: #{_lambda_.35} parent=31 // pred_region
          %s346 = sand.u32 %s28, 1
          %s347 = scalar_lea.sflag [#allocation6], %s346
          %s348 = sand.u32 %s90, 1
          %s349 = scalar_lea.vmem [#allocation7], %s348
          %s351 = ssub.s32 16, 16
          %352 = vsyncadd %s347, %s351
          %s353 = smul.addr %s28, 16
          %s354 = scalar_lea.hbm %s2, %s353
          %s356 = sshll.u32 %s349, 4
          %s357 = int_to_ptr.vmem [resolvable:$true] %s356
          %359 = dma.hbm_to_vmem [thread:$0]  %s354, 16, %s357, %s347
        $region44: #{_lambda_.35} parent=31 // pred_fallthru
          _
        // Predicated region
        $region45: #{_lambda_.35} parent=31 // pred_check
          %p360 = pneg %p126
        $region46: #{_lambda_.35} parent=31 // pred_check_branch
          %362 = sbr.rel (%p360) target = $region48
        $region47: #{_lambda_.35} parent=31 // pred_region
          %s363 = sand.u32 %s28, 1
          %s364 = scalar_lea.sflag [#allocation9], %s363
          %s365 = sand.u32 %s116, 1
          %s366 = smul.addr %s365, 4
          %s367 = scalar_lea.vmem [#allocation8], %s366
          %s369 = ssub.s32 64, 64
          %370 = vsyncadd %s364, %s369
          %s371 = smul.addr %s28, 64
          %s372 = scalar_lea.hbm %s3, %s371
          %s374 = sshll.u32 %s367, 4
          %s375 = int_to_ptr.vmem [resolvable:$true] %s374
          %377 = dma.hbm_to_vmem [thread:$0]  %s372, 64, %s375, %s364
        $region48: #{_lambda_.35} parent=31 // pred_fallthru
          _
      $region32: #{_lambda_.35} parent=5 // pred_fallthru
        _
      %p378 = scmp.le.s32.totalorder 1, %s28
      %p379 = scmp.lt.s32.totalorder %s28, 3
      %p380 = pnand %p378, %p379
      %p381 = pneg %p380
      // Predicated region
      $region49: #{_lambda_.35} parent=5 // pred_check
        _
      $region50: #{_lambda_.35} parent=5 // pred_check_branch
        %383 = sbr.rel (%p380) target = $region52
      $region51: #{_lambda_.35} parent=5 // pred_region
        %s384 = ssub.s32 %s28, 1
        %s385 = sand.u32 %s41, 1
        %s386 = scalar_lea.sflag [#allocation3], %s385
        %s387 = sand.u32 %s41, 1
        %s388 = smul.addr %s387, 4
        %s389 = scalar_lea.vmem [#allocation2], %s388
        // Predicated region
        $region53: #{_lambda_.35} parent=51 // pred_check
          %p390 = pneg %p54
        $region54: #{_lambda_.35} parent=51 // pred_check_branch
          %392 = sbr.rel (%p390) target = $region56
        $region55: #{_lambda_.35} parent=51 // pred_region
          %393 = dma.done %s386, 64
        $region56: #{_lambda_.35} parent=51 // pred_fallthru
          _
        %s394 = sand.u32 %s33, 1
        %s395 = scalar_lea.sflag [#allocation6], %s394
        %s396 = sand.u32 %s67, 1
        %s397 = smul.addr %s396, 4
        %s398 = scalar_lea.vmem [#allocation5], %s397
        // Predicated region
        $region57: #{_lambda_.35} parent=51 // pred_check
          %p399 = pneg %p80
        $region58: #{_lambda_.35} parent=51 // pred_check_branch
          %401 = sbr.rel (%p399) target = $region60
        $region59: #{_lambda_.35} parent=51 // pred_region
          %402 = dma.done %s395, 64
        $region60: #{_lambda_.35} parent=51 // pred_fallthru
          _
        %s403 = sand.u32 %s33, 1
        %s404 = scalar_lea.sflag [#allocation6], %s403
        %s405 = sand.u32 %s93, 1
        %s406 = scalar_lea.vmem [#allocation7], %s405
        // Predicated region
        $region61: #{_lambda_.35} parent=51 // pred_check
          %p407 = pneg %p106
        $region62: #{_lambda_.35} parent=51 // pred_check_branch
          %409 = sbr.rel (%p407) target = $region64
        $region63: #{_lambda_.35} parent=51 // pred_region
          %410 = dma.done %s404, 16
        $region64: #{_lambda_.35} parent=51 // pred_fallthru
          _
        %s411 = sand.u32 %s33, 1
        %s412 = scalar_lea.sflag [#allocation9], %s411
        %s413 = sand.u32 %s119, 1
        %s414 = smul.addr %s413, 4
        %s415 = scalar_lea.vmem [#allocation8], %s414
        // Predicated region
        $region65: #{_lambda_.35} parent=51 // pred_check
          %p416 = pneg %p132
        $region66: #{_lambda_.35} parent=51 // pred_check_branch
          %418 = sbr.rel (%p416) target = $region68
        $region67: #{_lambda_.35} parent=51 // pred_region
          %419 = dma.done %s412, 64
        $region68: #{_lambda_.35} parent=51 // pred_fallthru
          _
        // Predicated region
        $region69: #{_lambda_.35} parent=51 // pred_check
          %p420 = pneg %p153
        $region70: #{_lambda_.35} parent=51 // pred_check_branch
          %422 = sbr.rel (%p420) target = $region72
        $region71: #{_lambda_.35} parent=51 // pred_region
          %423 = dma.done [#allocation9], 256
        $region72: #{_lambda_.35} parent=51 // pred_fallthru
          _
        // Predicated region
        $region73: #{_lambda_.35} parent=51 // pred_check
          %p424 = pneg %p174
        $region74: #{_lambda_.35} parent=51 // pred_check_branch
          %426 = sbr.rel (%p424) target = $region76
        $region75: #{_lambda_.35} parent=51 // pred_region
          %427 = dma.done [#allocation12], 16
        $region76: #{_lambda_.35} parent=51 // pred_fallthru
          _
        // Predicated region
        $region77: #{_lambda_.35} parent=51 // pred_check
          %p428 = pneg %p195
        $region78: #{_lambda_.35} parent=51 // pred_check_branch
          %430 = sbr.rel (%p428) target = $region80
        $region79: #{_lambda_.35} parent=51 // pred_region
          %431 = dma.done [#allocation12], 16
        $region80: #{_lambda_.35} parent=51 // pred_fallthru
          _
        // Predicated region
        $region81: #{_lambda_.35} parent=51 // pred_check
          %p432 = pneg %p216
        $region82: #{_lambda_.35} parent=51 // pred_check_branch
          %434 = sbr.rel (%p432) target = $region84
        $region83: #{_lambda_.35} parent=51 // pred_region
          %435 = dma.done [#allocation15], 16
        $region84: #{_lambda_.35} parent=51 // pred_fallthru
          _
        %s436 = sand.u32 %s41, 1
        %s437 = scalar_lea.sflag [#allocation3], %s436
        %s438 = sand.u32 %s41, 1
        %s439 = smul.addr %s438, 4
        %s440 = scalar_lea.vmem [#allocation2], %s439
        %p441 = pneg %p54
        %p442 = pneg %p51
        %s443 = sand.u32 %s33, 1
        %s444 = scalar_lea.sflag [#allocation6], %s443
        %s445 = sand.u32 %s67, 1
        %s446 = smul.addr %s445, 4
        %s447 = scalar_lea.vmem [#allocation5], %s446
        %p448 = pneg %p80
        %p449 = pneg %p77
        %s450 = sand.u32 %s33, 1
        %s451 = scalar_lea.sflag [#allocation6], %s450
        %s452 = sand.u32 %s93, 1
        %s453 = scalar_lea.vmem [#allocation7], %s452
        %p454 = pneg %p106
        %p455 = pneg %p103
        %s456 = sand.u32 %s33, 1
        %s457 = scalar_lea.sflag [#allocation9], %s456
        %s458 = sand.u32 %s119, 1
        %s459 = smul.addr %s458, 4
        %s460 = scalar_lea.vmem [#allocation8], %s459
        %p461 = pneg %p132
        %p462 = pneg %p129
        %p463 = pneg %p153
        %p464 = pneg %p150
        %p465 = pneg %p174
        %p466 = pneg %p171
        %p467 = pneg %p195
        %p468 = pneg %p192
        %p469 = pneg %p216
        %p470 = pneg %p213
        %p471 = pneg %p242
        %p472 = pneg %p239
        %s473 = sand.u32 %s229, 1
        %s474 = scalar_lea.sflag [#allocation4], %s473
        %s475 = sand.u32 %s229, 1
        %s476 = smul.addr %s475, 4
        %s477 = scalar_lea.vmem [#allocation16], %s476
        %v479 = vld [vmem:[%s406] sm:$0x1]
        %v480 = vld [vmem:[%s389] sm:$0xf]
        %v481 = vld [vmem:[%s398] sm:$0xf]
        %v483 = vlaneseq
        %v484 = vshrl.u32 %v483, 7
        %v485 = vsub.s32 0, %v484
        %v486 = vrot.slane %v479, %v485
        %vm488 = vcmask 64512
        %v490 = vsel %vm488, %v480, 0
        %v493 = vsel %vm488, %v481, 0
        %495 = vmatprep.subr.bf16.mxu0 0
        %496 = vmatpush1.bf16.xpose.msra.mxu0 %v493
        %497 = vmatprep.subr.bf16.mxu0 0
        %498 = vmatpush1.bf16.xpose.msra.mxu0 0
        %499 = vmatprep.subr.bf16.mxu0 0
        %500 = vmatpush1.bf16.xpose.msra.mxu0 0
        %501 = vmatprep.subr.bf16.mxu0 0
        %502 = vmatpush1.bf16.xpose.msra.mxu0 0
        %503 = vmatprep.subr.bf16.mxu0 0
        %504 = vmatpush1.bf16.xpose.msra.mxu0 0
        %505 = vmatprep.subr.bf16.mxu0 0
        %506 = vmatpush1.bf16.xpose.msra.mxu0 0
        %507 = vmatprep.subr.bf16.mxu0 0
        %508 = vmatpush1.bf16.xpose.msra.mxu0 0
        %509 = vmatprep.subr.bf16.mxu0 0
        %510 = vmatpush1.bf16.xpose.msra.mxu0 0
        %511 = vmatprep.subr.bf16.mxu0 0
        %512 = vmatpush1.bf16.xpose.msra.mxu0 0
        %513 = vmatprep.subr.bf16.mxu0 0
        %514 = vmatpush1.bf16.xpose.msra.mxu0 0
        %515 = vmatprep.subr.bf16.mxu0 0
        %516 = vmatpush1.bf16.xpose.msra.mxu0 0
        %517 = vmatprep.subr.bf16.mxu0 0
        %518 = vmatpush1.bf16.xpose.msra.mxu0 0
        %519 = vmatprep.subr.bf16.mxu0 0
        %520 = vmatpush1.bf16.xpose.msra.mxu0 0
        %521 = vmatprep.subr.bf16.mxu0 0
        %522 = vmatpush1.bf16.xpose.msra.mxu0 0
        %523 = vmatprep.subr.bf16.mxu0 0
        %524 = vmatpush1.bf16.xpose.msra.mxu0 0
        %525 = vmatprep.subr.bf16.mxu0 0
        %526 = vmatpush1.bf16.xpose.msra.mxu0 0
        %527 = vmatprep.mubr.bf16.mxu0 0
        %528 = vmatmul.mubr.bf16.gmra.mrb[0].mxu0 %v490
        %v529 = vpop.f32.mrb[0].mxu0
        %v530 = vadd.f32 %v486, %v529
        %v531 = vpop.f32.mrb[0].mxu0
        %v532 = vpop.f32.mrb[0].mxu0
        %v533 = vpop.f32.mrb[0].mxu0
        %534 = vdwg.mxu0
        %v535 = vsel %vm488, %v530, -inf
        %536 = vmax.xlane.f32.xlu0 %v535
        %v537 = vpop.xlane.xlu0 %536
        %v538 = vsub.f32 %v530, %v537
        %v539 = vmul.f32 %v538, 1.442695
        %v540 = vpow.pop %v539
        %v541 = vsel %vm488, %v540, 0.0
        %542 = vadd.xlane.f32.xlu0 %v541
        %v543 = vpop.xlane.xlu0 %542
        %v544 = vrcp.pop %v543
        %v545 = vmul.f32 %v540, %v544
        %v546 = vpack.c.bf16 %v545, %v545
        %v548 = vunpack.c.l.b16 %v481
        %v549 = vpack.c.b16 %v548, %v548
        %550 = vrot.lane.b32.xlu0 %v549, 96
        %v551 = vpop.permute.xlu0 %550
        %v553 = vsel %vm488, %v546, 0
        %vm555 = vcmask 1043456
        %v557 = vsel %vm555, %v551, 0
        %559 = vmatprep.subr.bf16.mxu0 0
        %560 = vmatpush1.bf16.msra.mxu0 %v557
        %561 = vmatprep.subr.bf16.mxu0 0
        %562 = vmatpush1.bf16.msra.mxu0 0
        %563 = vmatprep.subr.bf16.mxu0 0
        %564 = vmatpush1.bf16.msra.mxu0 0
        %565 = vmatprep.subr.bf16.mxu0 0
        %566 = vmatpush1.bf16.msra.mxu0 0
        %567 = vmatprep.subr.bf16.mxu0 0
        %568 = vmatpush1.bf16.msra.mxu0 0
        %569 = vmatprep.subr.bf16.mxu0 0
        %570 = vmatpush1.bf16.msra.mxu0 0
        %571 = vmatprep.subr.bf16.mxu0 0
        %572 = vmatpush1.bf16.msra.mxu0 0
        %573 = vmatprep.subr.bf16.mxu0 0
        %574 = vmatpush1.bf16.msra.mxu0 0
        %575 = vmatprep.subr.bf16.mxu0 0
        %576 = vmatpush1.bf16.msra.mxu0 0
        %577 = vmatprep.subr.bf16.mxu0 0
        %578 = vmatpush1.bf16.msra.mxu0 0
        %579 = vmatprep.subr.bf16.mxu0 0
        %580 = vmatpush1.bf16.msra.mxu0 0
        %581 = vmatprep.subr.bf16.mxu0 0
        %582 = vmatpush1.bf16.msra.mxu0 0
        %583 = vmatprep.subr.bf16.mxu0 0
        %584 = vmatpush1.bf16.msra.mxu0 0
        %585 = vmatprep.subr.bf16.mxu0 0
        %586 = vmatpush1.bf16.msra.mxu0 0
        %587 = vmatprep.subr.bf16.mxu0 0
        %588 = vmatpush1.bf16.msra.mxu0 0
        %589 = vmatprep.subr.bf16.mxu0 0
        %590 = vmatpush1.bf16.msra.mxu0 0
        %591 = vmatprep.mubr.bf16.mxu0 0
        %592 = vmatmul.mubr.bf16.gmra.mrb[0].mxu0 %v553
        %v593 = vpop.f32.mrb[0].mxu0
        %v594 = vadd.f32 0.0, %v593
        %v595 = vpop.f32.mrb[0].mxu0
        %v596 = vpop.f32.mrb[0].mxu0
        %v597 = vpop.f32.mrb[0].mxu0
        %598 = vdwg.mxu0
        %v599 = vpack.c.bf16 %v594, %v594
        %v600 = vld [vmem:[#allocation10] sm:$0xf]
        %v602 = vunpack.c.l.b16 %v480
        %v603 = vpack.c.b16 %v602, %v602
        %604 = vrot.lane.b32.xlu0 %v603, 120
        %v605 = vpop.permute.xlu0 %604
        %606 = vrot.lane.b32.xlu0 %v549, 120
        %v607 = vpop.permute.xlu0 %606
        %v609 = vsel %vm488, %v605, 0
        %v612 = vsel %vm488, %v607, 0
        %614 = vmatprep.subr.bf16.mxu0 0
        %615 = vmatpush1.bf16.xpose.msra.mxu0 %v612
        %616 = vmatprep.subr.bf16.mxu0 0
        %617 = vmatpush1.bf16.xpose.msra.mxu0 0
        %618 = vmatprep.subr.bf16.mxu0 0
        %619 = vmatpush1.bf16.xpose.msra.mxu0 0
        %620 = vmatprep.subr.bf16.mxu0 0
        %621 = vmatpush1.bf16.xpose.msra.mxu0 0
        %622 = vmatprep.subr.bf16.mxu0 0
        %623 = vmatpush1.bf16.xpose.msra.mxu0 0
        %624 = vmatprep.subr.bf16.mxu0 0
        %625 = vmatpush1.bf16.xpose.msra.mxu0 0
        %626 = vmatprep.subr.bf16.mxu0 0
        %627 = vmatpush1.bf16.xpose.msra.mxu0 0
        %628 = vmatprep.subr.bf16.mxu0 0
        %629 = vmatpush1.bf16.xpose.msra.mxu0 0
        %630 = vmatprep.subr.bf16.mxu0 0
        %631 = vmatpush1.bf16.xpose.msra.mxu0 0
        %632 = vmatprep.subr.bf16.mxu0 0
        %633 = vmatpush1.bf16.xpose.msra.mxu0 0
        %634 = vmatprep.subr.bf16.mxu0 0
        %635 = vmatpush1.bf16.xpose.msra.mxu0 0
        %636 = vmatprep.subr.bf16.mxu0 0
        %637 = vmatpush1.bf16.xpose.msra.mxu0 0
        %638 = vmatprep.subr.bf16.mxu0 0
        %639 = vmatpush1.bf16.xpose.msra.mxu0 0
        %640 = vmatprep.subr.bf16.mxu0 0
        %641 = vmatpush1.bf16.xpose.msra.mxu0 0
        %642 = vmatprep.subr.bf16.mxu0 0
        %643 = vmatpush1.bf16.xpose.msra.mxu0 0
        %644 = vmatprep.subr.bf16.mxu0 0
        %645 = vmatpush1.bf16.xpose.msra.mxu0 0
        %646 = vmatprep.mubr.bf16.mxu0 0
        %647 = vmatmul.mubr.bf16.gmra.mrb[0].mxu0 %v609
        %v648 = vpop.f32.mrb[0].mxu0
        %v649 = vadd.f32 %v486, %v648
        %v650 = vpop.f32.mrb[0].mxu0
        %v651 = vpop.f32.mrb[0].mxu0
        %v652 = vpop.f32.mrb[0].mxu0
        %653 = vdwg.mxu0
        %v654 = vsel %vm488, %v649, -inf
        %655 = vmax.xlane.f32.xlu0 %v654
        %v656 = vpop.xlane.xlu0 %655
        %v657 = vsub.f32 %v649, %v656
        %v658 = vmul.f32 %v657, 1.442695
        %v659 = vpow.pop %v658
        %v660 = vsel %vm488, %v659, 0.0
        %661 = vadd.xlane.f32.xlu0 %v660
        %v662 = vpop.xlane.xlu0 %661
        %v663 = vrcp.pop %v662
        %v664 = vmul.f32 %v659, %v663
        %v665 = vpack.c.bf16 %v664, %v664
        %666 = vrot.lane.b32.xlu0 %v549, 88
        %v667 = vpop.permute.xlu0 %666
        %v669 = vsel %vm488, %v665, 0
        %v672 = vsel %vm555, %v667, 0
        %674 = vmatprep.subr.bf16.mxu0 0
        %675 = vmatpush1.bf16.msra.mxu0 %v672
        %676 = vmatprep.subr.bf16.mxu0 0
        %677 = vmatpush1.bf16.msra.mxu0 0
        %678 = vmatprep.subr.bf16.mxu0 0
        %679 = vmatpush1.bf16.msra.mxu0 0
        %680 = vmatprep.subr.bf16.mxu0 0
        %681 = vmatpush1.bf16.msra.mxu0 0
        %682 = vmatprep.subr.bf16.mxu0 0
        %683 = vmatpush1.bf16.msra.mxu0 0
        %684 = vmatprep.subr.bf16.mxu0 0
        %685 = vmatpush1.bf16.msra.mxu0 0
        %686 = vmatprep.subr.bf16.mxu0 0
        %687 = vmatpush1.bf16.msra.mxu0 0
        %688 = vmatprep.subr.bf16.mxu0 0
        %689 = vmatpush1.bf16.msra.mxu0 0
        %690 = vmatprep.subr.bf16.mxu0 0
        %691 = vmatpush1.bf16.msra.mxu0 0
        %692 = vmatprep.subr.bf16.mxu0 0
        %693 = vmatpush1.bf16.msra.mxu0 0
        %694 = vmatprep.subr.bf16.mxu0 0
        %695 = vmatpush1.bf16.msra.mxu0 0
        %696 = vmatprep.subr.bf16.mxu0 0
        %697 = vmatpush1.bf16.msra.mxu0 0
        %698 = vmatprep.subr.bf16.mxu0 0
        %699 = vmatpush1.bf16.msra.mxu0 0
        %700 = vmatprep.subr.bf16.mxu0 0
        %701 = vmatpush1.bf16.msra.mxu0 0
        %702 = vmatprep.subr.bf16.mxu0 0
        %703 = vmatpush1.bf16.msra.mxu0 0
        %704 = vmatprep.subr.bf16.mxu0 0
        %705 = vmatpush1.bf16.msra.mxu0 0
        %706 = vmatprep.mubr.bf16.mxu0 0
        %707 = vmatmul.mubr.bf16.gmra.mrb[0].mxu0 %v669
        %v708 = vpop.f32.mrb[0].mxu0
        %v709 = vadd.f32 0.0, %v708
        %v710 = vpop.f32.mrb[0].mxu0
        %v711 = vpop.f32.mrb[0].mxu0
        %v712 = vpop.f32.mrb[0].mxu0
        %713 = vdwg.mxu0
        %v714 = vpack.c.bf16 %v709, %v709
        %v715 = vld [vmem:[#allocation10 + $0x4] sm:$0xf]
        %v717 = vsel %vm488, %v714, 0
        %v720 = vsel %vm555, %v715, 0
        %722 = vmatprep.subr.bf16.mxu0 0
        %723 = vmatpush1.bf16.msra.mxu0 %v720
        %724 = vmatprep.subr.bf16.mxu0 0
        %725 = vmatpush1.bf16.msra.mxu0 0
        %726 = vmatprep.subr.bf16.mxu0 0
        %727 = vmatpush1.bf16.msra.mxu0 0
        %728 = vmatprep.subr.bf16.mxu0 0
        %729 = vmatpush1.bf16.msra.mxu0 0
        %730 = vmatprep.subr.bf16.mxu0 0
        %731 = vmatpush1.bf16.msra.mxu0 0
        %732 = vmatprep.subr.bf16.mxu0 0
        %733 = vmatpush1.bf16.msra.mxu0 0
        %734 = vmatprep.subr.bf16.mxu0 0
        %735 = vmatpush1.bf16.msra.mxu0 0
        %736 = vmatprep.subr.bf16.mxu0 0
        %737 = vmatpush1.bf16.msra.mxu0 0
        %738 = vmatprep.subr.bf16.mxu0 0
        %739 = vmatpush1.bf16.msra.mxu0 0
        %740 = vmatprep.subr.bf16.mxu0 0
        %741 = vmatpush1.bf16.msra.mxu0 0
        %742 = vmatprep.subr.bf16.mxu0 0
        %743 = vmatpush1.bf16.msra.mxu0 0
        %744 = vmatprep.subr.bf16.mxu0 0
        %745 = vmatpush1.bf16.msra.mxu0 0
        %746 = vmatprep.subr.bf16.mxu0 0
        %747 = vmatpush1.bf16.msra.mxu0 0
        %748 = vmatprep.subr.bf16.mxu0 0
        %749 = vmatpush1.bf16.msra.mxu0 0
        %750 = vmatprep.subr.bf16.mxu0 0
        %751 = vmatpush1.bf16.msra.mxu0 0
        %752 = vmatprep.subr.bf16.mxu0 0
        %753 = vmatpush1.bf16.msra.mxu0 0
        %754 = vmatprep.mubr.bf16.mxu0 0
        %755 = vmatmul.mubr.bf16.gmra.mrb[0].mxu0 %v717
        %v756 = vpop.f32.mrb[0].mxu0
        %v757 = vadd.f32 0.0, %v756
        %v758 = vpop.f32.mrb[0].mxu0
        %v759 = vpop.f32.mrb[0].mxu0
        %v760 = vpop.f32.mrb[0].mxu0
        %761 = vdwg.mxu0
        %v763 = vsel %vm488, %v599, 0
        %v766 = vsel %vm555, %v600, 0
        %768 = vmatprep.subr.bf16.mxu0 0
        %769 = vmatpush1.bf16.msra.mxu0 %v766
        %770 = vmatprep.subr.bf16.mxu0 0
        %771 = vmatpush1.bf16.msra.mxu0 0
        %772 = vmatprep.subr.bf16.mxu0 0
        %773 = vmatpush1.bf16.msra.mxu0 0
        %774 = vmatprep.subr.bf16.mxu0 0
        %775 = vmatpush1.bf16.msra.mxu0 0
        %776 = vmatprep.subr.bf16.mxu0 0
        %777 = vmatpush1.bf16.msra.mxu0 0
        %778 = vmatprep.subr.bf16.mxu0 0
        %779 = vmatpush1.bf16.msra.mxu0 0
        %780 = vmatprep.subr.bf16.mxu0 0
        %781 = vmatpush1.bf16.msra.mxu0 0
        %782 = vmatprep.subr.bf16.mxu0 0
        %783 = vmatpush1.bf16.msra.mxu0 0
        %784 = vmatprep.subr.bf16.mxu0 0
        %785 = vmatpush1.bf16.msra.mxu0 0
        %786 = vmatprep.subr.bf16.mxu0 0
        %787 = vmatpush1.bf16.msra.mxu0 0
        %788 = vmatprep.subr.bf16.mxu0 0
        %789 = vmatpush1.bf16.msra.mxu0 0
        %790 = vmatprep.subr.bf16.mxu0 0
        %791 = vmatpush1.bf16.msra.mxu0 0
        %792 = vmatprep.subr.bf16.mxu0 0
        %793 = vmatpush1.bf16.msra.mxu0 0
        %794 = vmatprep.subr.bf16.mxu0 0
        %795 = vmatpush1.bf16.msra.mxu0 0
        %796 = vmatprep.subr.bf16.mxu0 0
        %797 = vmatpush1.bf16.msra.mxu0 0
        %798 = vmatprep.subr.bf16.mxu0 0
        %799 = vmatpush1.bf16.msra.mxu0 0
        %800 = vmatprep.mubr.bf16.mxu0 0
        %801 = vmatmul.mubr.bf16.gmra.mrb[0].mxu0 %v763
        %v802 = vpop.f32.mrb[0].mxu0
        %v803 = vadd.f32 %v757, %v802
        %v804 = vpop.f32.mrb[0].mxu0
        %v805 = vpop.f32.mrb[0].mxu0
        %v806 = vpop.f32.mrb[0].mxu0
        %807 = vdwg.mxu0
        %808 = vrot.lane.b32.xlu0 %v603, 112
        %v809 = vpop.permute.xlu0 %808
        %810 = vrot.lane.b32.xlu0 %v549, 112
        %v811 = vpop.permute.xlu0 %810
        %v813 = vsel %vm488, %v809, 0
        %v816 = vsel %vm488, %v811, 0
        %818 = vmatprep.subr.bf16.mxu0 0
        %819 = vmatpush1.bf16.xpose.msra.mxu0 %v816
        %820 = vmatprep.subr.bf16.mxu0 0
        %821 = vmatpush1.bf16.xpose.msra.mxu0 0
        %822 = vmatprep.subr.bf16.mxu0 0
        %823 = vmatpush1.bf16.xpose.msra.mxu0 0
        %824 = vmatprep.subr.bf16.mxu0 0
        %825 = vmatpush1.bf16.xpose.msra.mxu0 0
        %826 = vmatprep.subr.bf16.mxu0 0
        %827 = vmatpush1.bf16.xpose.msra.mxu0 0
        %828 = vmatprep.subr.bf16.mxu0 0
        %829 = vmatpush1.bf16.xpose.msra.mxu0 0
        %830 = vmatprep.subr.bf16.mxu0 0
        %831 = vmatpush1.bf16.xpose.msra.mxu0 0
        %832 = vmatprep.subr.bf16.mxu0 0
        %833 = vmatpush1.bf16.xpose.msra.mxu0 0
        %834 = vmatprep.subr.bf16.mxu0 0
        %835 = vmatpush1.bf16.xpose.msra.mxu0 0
        %836 = vmatprep.subr.bf16.mxu0 0
        %837 = vmatpush1.bf16.xpose.msra.mxu0 0
        %838 = vmatprep.subr.bf16.mxu0 0
        %839 = vmatpush1.bf16.xpose.msra.mxu0 0
        %840 = vmatprep.subr.bf16.mxu0 0
        %841 = vmatpush1.bf16.xpose.msra.mxu0 0
        %842 = vmatprep.subr.bf16.mxu0 0
        %843 = vmatpush1.bf16.xpose.msra.mxu0 0
        %844 = vmatprep.subr.bf16.mxu0 0
        %845 = vmatpush1.bf16.xpose.msra.mxu0 0
        %846 = vmatprep.subr.bf16.mxu0 0
        %847 = vmatpush1.bf16.xpose.msra.mxu0 0
        %848 = vmatprep.subr.bf16.mxu0 0
        %849 = vmatpush1.bf16.xpose.msra.mxu0 0
        %850 = vmatprep.mubr.bf16.mxu0 0
        %851 = vmatmul.mubr.bf16.gmra.mrb[0].mxu0 %v813
        %v852 = vpop.f32.mrb[0].mxu0
        %v853 = vadd.f32 %v486, %v852
        %v854 = vpop.f32.mrb[0].mxu0
        %v855 = vpop.f32.mrb[0].mxu0
        %v856 = vpop.f32.mrb[0].mxu0
        %857 = vdwg.mxu0
        %v858 = vsel %vm488, %v853, -inf
        %859 = vmax.xlane.f32.xlu0 %v858
        %v860 = vpop.xlane.xlu0 %859
        %v861 = vsub.f32 %v853, %v860
        %v862 = vmul.f32 %v861, 1.442695
        %v863 = vpow.pop %v862
        %v864 = vsel %vm488, %v863, 0.0
        %865 = vadd.xlane.f32.xlu0 %v864
        %v866 = vpop.xlane.xlu0 %865
        %v867 = vrcp.pop %v866
        %v868 = vmul.f32 %v863, %v867
        %v869 = vpack.c.bf16 %v868, %v868
        %870 = vrot.lane.b32.xlu0 %v549, 80
        %v871 = vpop.permute.xlu0 %870
        %v873 = vsel %vm488, %v869, 0
        %v876 = vsel %vm555, %v871, 0
        %878 = vmatprep.subr.bf16.mxu0 0
        %879 = vmatpush1.bf16.msra.mxu0 %v876
        %880 = vmatprep.subr.bf16.mxu0 0
        %881 = vmatpush1.bf16.msra.mxu0 0
        %882 = vmatprep.subr.bf16.mxu0 0
        %883 = vmatpush1.bf16.msra.mxu0 0
        %884 = vmatprep.subr.bf16.mxu0 0
        %885 = vmatpush1.bf16.msra.mxu0 0
        %886 = vmatprep.subr.bf16.mxu0 0
        %887 = vmatpush1.bf16.msra.mxu0 0
        %888 = vmatprep.subr.bf16.mxu0 0
        %889 = vmatpush1.bf16.msra.mxu0 0
        %890 = vmatprep.subr.bf16.mxu0 0
        %891 = vmatpush1.bf16.msra.mxu0 0
        %892 = vmatprep.subr.bf16.mxu0 0
        %893 = vmatpush1.bf16.msra.mxu0 0
        %894 = vmatprep.subr.bf16.mxu0 0
        %895 = vmatpush1.bf16.msra.mxu0 0
        %896 = vmatprep.subr.bf16.mxu0 0
        %897 = vmatpush1.bf16.msra.mxu0 0
        %898 = vmatprep.subr.bf16.mxu0 0
        %899 = vmatpush1.bf16.msra.mxu0 0
        %900 = vmatprep.subr.bf16.mxu0 0
        %901 = vmatpush1.bf16.msra.mxu0 0
        %902 = vmatprep.subr.bf16.mxu0 0
        %903 = vmatpush1.bf16.msra.mxu0 0
        %904 = vmatprep.subr.bf16.mxu0 0
        %905 = vmatpush1.bf16.msra.mxu0 0
        %906 = vmatprep.subr.bf16.mxu0 0
        %907 = vmatpush1.bf16.msra.mxu0 0
        %908 = vmatprep.subr.bf16.mxu0 0
        %909 = vmatpush1.bf16.msra.mxu0 0
        %910 = vmatprep.mubr.bf16.mxu0 0
        %911 = vmatmul.mubr.bf16.gmra.mrb[0].mxu0 %v873
        %v912 = vpop.f32.mrb[0].mxu0
        %v913 = vadd.f32 0.0, %v912
        %v914 = vpop.f32.mrb[0].mxu0
        %v915 = vpop.f32.mrb[0].mxu0
        %v916 = vpop.f32.mrb[0].mxu0
        %917 = vdwg.mxu0
        %v918 = vpack.c.bf16 %v913, %v913
        %v919 = vld [vmem:[#allocation10 + $0x8] sm:$0xf]
        %v921 = vsel %vm488, %v918, 0
        %v924 = vsel %vm555, %v919, 0
        %926 = vmatprep.subr.bf16.mxu0 0
        %927 = vmatpush1.bf16.msra.mxu0 %v924
        %928 = vmatprep.subr.bf16.mxu0 0
        %929 = vmatpush1.bf16.msra.mxu0 0
        %930 = vmatprep.subr.bf16.mxu0 0
        %931 = vmatpush1.bf16.msra.mxu0 0
        %932 = vmatprep.subr.bf16.mxu0 0
        %933 = vmatpush1.bf16.msra.mxu0 0
        %934 = vmatprep.subr.bf16.mxu0 0
        %935 = vmatpush1.bf16.msra.mxu0 0
        %936 = vmatprep.subr.bf16.mxu0 0
        %937 = vmatpush1.bf16.msra.mxu0 0
        %938 = vmatprep.subr.bf16.mxu0 0
        %939 = vmatpush1.bf16.msra.mxu0 0
        %940 = vmatprep.subr.bf16.mxu0 0
        %941 = vmatpush1.bf16.msra.mxu0 0
        %942 = vmatprep.subr.bf16.mxu0 0
        %943 = vmatpush1.bf16.msra.mxu0 0
        %944 = vmatprep.subr.bf16.mxu0 0
        %945 = vmatpush1.bf16.msra.mxu0 0
        %946 = vmatprep.subr.bf16.mxu0 0
        %947 = vmatpush1.bf16.msra.mxu0 0
        %948 = vmatprep.subr.bf16.mxu0 0
        %949 = vmatpush1.bf16.msra.mxu0 0
        %950 = vmatprep.subr.bf16.mxu0 0
        %951 = vmatpush1.bf16.msra.mxu0 0
        %952 = vmatprep.subr.bf16.mxu0 0
        %953 = vmatpush1.bf16.msra.mxu0 0
        %954 = vmatprep.subr.bf16.mxu0 0
        %955 = vmatpush1.bf16.msra.mxu0 0
        %956 = vmatprep.subr.bf16.mxu0 0
        %957 = vmatpush1.bf16.msra.mxu0 0
        %958 = vmatprep.mubr.bf16.mxu0 0
        %959 = vmatmul.mubr.bf16.gmra.mrb[0].mxu0 %v921
        %v960 = vpop.f32.mrb[0].mxu0
        %v961 = vadd.f32 0.0, %v960
        %v962 = vpop.f32.mrb[0].mxu0
        %v963 = vpop.f32.mrb[0].mxu0
        %v964 = vpop.f32.mrb[0].mxu0
        %965 = vdwg.mxu0
        %v966 = vadd.f32 %v803, %v961
        %967 = vrot.lane.b32.xlu0 %v603, 104
        %v968 = vpop.permute.xlu0 %967
        %969 = vrot.lane.b32.xlu0 %v549, 104
        %v970 = vpop.permute.xlu0 %969
        %v972 = vsel %vm488, %v968, 0
        %v975 = vsel %vm488, %v970, 0
        %977 = vmatprep.subr.bf16.mxu0 0
        %978 = vmatpush1.bf16.xpose.msra.mxu0 %v975
        %979 = vmatprep.subr.bf16.mxu0 0
        %980 = vmatpush1.bf16.xpose.msra.mxu0 0
        %981 = vmatprep.subr.bf16.mxu0 0
        %982 = vmatpush1.bf16.xpose.msra.mxu0 0
        %983 = vmatprep.subr.bf16.mxu0 0
        %984 = vmatpush1.bf16.xpose.msra.mxu0 0
        %985 = vmatprep.subr.bf16.mxu0 0
        %986 = vmatpush1.bf16.xpose.msra.mxu0 0
        %987 = vmatprep.subr.bf16.mxu0 0
        %988 = vmatpush1.bf16.xpose.msra.mxu0 0
        %989 = vmatprep.subr.bf16.mxu0 0
        %990 = vmatpush1.bf16.xpose.msra.mxu0 0
        %991 = vmatprep.subr.bf16.mxu0 0
        %992 = vmatpush1.bf16.xpose.msra.mxu0 0
        %993 = vmatprep.subr.bf16.mxu0 0
        %994 = vmatpush1.bf16.xpose.msra.mxu0 0
        %995 = vmatprep.subr.bf16.mxu0 0
        %996 = vmatpush1.bf16.xpose.msra.mxu0 0
        %997 = vmatprep.subr.bf16.mxu0 0
        %998 = vmatpush1.bf16.xpose.msra.mxu0 0
        %999 = vmatprep.subr.bf16.mxu0 0
        %1000 = vmatpush1.bf16.xpose.msra.mxu0 0
        %1001 = vmatprep.subr.bf16.mxu0 0
        %1002 = vmatpush1.bf16.xpose.msra.mxu0 0
        %1003 = vmatprep.subr.bf16.mxu0 0
        %1004 = vmatpush1.bf16.xpose.msra.mxu0 0
        %1005 = vmatprep.subr.bf16.mxu0 0
        %1006 = vmatpush1.bf16.xpose.msra.mxu0 0
        %1007 = vmatprep.subr.bf16.mxu0 0
        %1008 = vmatpush1.bf16.xpose.msra.mxu0 0
        %1009 = vmatprep.mubr.bf16.mxu0 0
        %1010 = vmatmul.mubr.bf16.gmra.mrb[0].mxu0 %v972
        %v1011 = vpop.f32.mrb[0].mxu0
        %v1012 = vadd.f32 %v486, %v1011
        %v1013 = vpop.f32.mrb[0].mxu0
        %v1014 = vpop.f32.mrb[0].mxu0
        %v1015 = vpop.f32.mrb[0].mxu0
        %1016 = vdwg.mxu0
        %v1017 = vsel %vm488, %v1012, -inf
        %1018 = vmax.xlane.f32.xlu0 %v1017
        %v1019 = vpop.xlane.xlu0 %1018
        %v1020 = vsub.f32 %v1012, %v1019
        %v1021 = vmul.f32 %v1020, 1.442695
        %v1022 = vpow.pop %v1021
        %v1023 = vsel %vm488, %v1022, 0.0
        %1024 = vadd.xlane.f32.xlu0 %v1023
        %v1025 = vpop.xlane.xlu0 %1024
        %v1026 = vrcp.pop %v1025
        %v1027 = vmul.f32 %v1022, %v1026
        %v1028 = vpack.c.bf16 %v1027, %v1027
        %1029 = vrot.lane.b32.xlu0 %v549, 72
        %v1030 = vpop.permute.xlu0 %1029
        %v1032 = vsel %vm488, %v1028, 0
        %v1035 = vsel %vm555, %v1030, 0
        %1037 = vmatprep.subr.bf16.mxu0 0
        %1038 = vmatpush1.bf16.msra.mxu0 %v1035
        %1039 = vmatprep.subr.bf16.mxu0 0
        %1040 = vmatpush1.bf16.msra.mxu0 0
        %1041 = vmatprep.subr.bf16.mxu0 0
        %1042 = vmatpush1.bf16.msra.mxu0 0
        %1043 = vmatprep.subr.bf16.mxu0 0
        %1044 = vmatpush1.bf16.msra.mxu0 0
        %1045 = vmatprep.subr.bf16.mxu0 0
        %1046 = vmatpush1.bf16.msra.mxu0 0
        %1047 = vmatprep.subr.bf16.mxu0 0
        %1048 = vmatpush1.bf16.msra.mxu0 0
        %1049 = vmatprep.subr.bf16.mxu0 0
        %1050 = vmatpush1.bf16.msra.mxu0 0
        %1051 = vmatprep.subr.bf16.mxu0 0
        %1052 = vmatpush1.bf16.msra.mxu0 0
        %1053 = vmatprep.subr.bf16.mxu0 0
        %1054 = vmatpush1.bf16.msra.mxu0 0
        %1055 = vmatprep.subr.bf16.mxu0 0
        %1056 = vmatpush1.bf16.msra.mxu0 0
        %1057 = vmatprep.subr.bf16.mxu0 0
        %1058 = vmatpush1.bf16.msra.mxu0 0
        %1059 = vmatprep.subr.bf16.mxu0 0
        %1060 = vmatpush1.bf16.msra.mxu0 0
        %1061 = vmatprep.subr.bf16.mxu0 0
        %1062 = vmatpush1.bf16.msra.mxu0 0
        %1063 = vmatprep.subr.bf16.mxu0 0
        %1064 = vmatpush1.bf16.msra.mxu0 0
        %1065 = vmatprep.subr.bf16.mxu0 0
        %1066 = vmatpush1.bf16.msra.mxu0 0
        %1067 = vmatprep.subr.bf16.mxu0 0
        %1068 = vmatpush1.bf16.msra.mxu0 0
        %1069 = vmatprep.mubr.bf16.mxu0 0
        %1070 = vmatmul.mubr.bf16.gmra.mrb[0].mxu0 %v1032
        %v1071 = vpop.f32.mrb[0].mxu0
        %v1072 = vadd.f32 0.0, %v1071
        %v1073 = vpop.f32.mrb[0].mxu0
        %v1074 = vpop.f32.mrb[0].mxu0
        %v1075 = vpop.f32.mrb[0].mxu0
        %1076 = vdwg.mxu0
        %v1077 = vpack.c.bf16 %v1072, %v1072
        %v1078 = vld [vmem:[#allocation10 + $0xc] sm:$0xf]
        %v1080 = vsel %vm488, %v1077, 0
        %v1083 = vsel %vm555, %v1078, 0
        %1085 = vmatprep.subr.bf16.mxu0 0
        %1086 = vmatpush1.bf16.msra.mxu0 %v1083
        %1087 = vmatprep.subr.bf16.mxu0 0
        %1088 = vmatpush1.bf16.msra.mxu0 0
        %1089 = vmatprep.subr.bf16.mxu0 0
        %1090 = vmatpush1.bf16.msra.mxu0 0
        %1091 = vmatprep.subr.bf16.mxu0 0
        %1092 = vmatpush1.bf16.msra.mxu0 0
        %1093 = vmatprep.subr.bf16.mxu0 0
        %1094 = vmatpush1.bf16.msra.mxu0 0
        %1095 = vmatprep.subr.bf16.mxu0 0
        %1096 = vmatpush1.bf16.msra.mxu0 0
        %1097 = vmatprep.subr.bf16.mxu0 0
        %1098 = vmatpush1.bf16.msra.mxu0 0
        %1099 = vmatprep.subr.bf16.mxu0 0
        %1100 = vmatpush1.bf16.msra.mxu0 0
        %1101 = vmatprep.subr.bf16.mxu0 0
        %1102 = vmatpush1.bf16.msra.mxu0 0
        %1103 = vmatprep.subr.bf16.mxu0 0
        %1104 = vmatpush1.bf16.msra.mxu0 0
        %1105 = vmatprep.subr.bf16.mxu0 0
        %1106 = vmatpush1.bf16.msra.mxu0 0
        %1107 = vmatprep.subr.bf16.mxu0 0
        %1108 = vmatpush1.bf16.msra.mxu0 0
        %1109 = vmatprep.subr.bf16.mxu0 0
        %1110 = vmatpush1.bf16.msra.mxu0 0
        %1111 = vmatprep.subr.bf16.mxu0 0
        %1112 = vmatpush1.bf16.msra.mxu0 0
        %1113 = vmatprep.subr.bf16.mxu0 0
        %1114 = vmatpush1.bf16.msra.mxu0 0
        %1115 = vmatprep.subr.bf16.mxu0 0
        %1116 = vmatpush1.bf16.msra.mxu0 0
        %1117 = vmatprep.mubr.bf16.mxu0 0
        %1118 = vmatmul.mubr.bf16.gmra.mrb[0].mxu0 %v1080
        %v1119 = vpop.f32.mrb[0].mxu0
        %v1120 = vadd.f32 0.0, %v1119
        %v1121 = vpop.f32.mrb[0].mxu0
        %v1122 = vpop.f32.mrb[0].mxu0
        %v1123 = vpop.f32.mrb[0].mxu0
        %1124 = vdwg.mxu0
        %v1125 = vadd.f32 %v966, %v1120
        %v1126 = vld [vmem:[#allocation11] sm:$0x1]
        %v1128 = vlaneseq
        %v1129 = vshrl.u32 %v1128, 7
        %v1130 = vsub.s32 0, %v1129
        %v1131 = vrot.slane %v1126, %v1130
        %v1133 = vadd.f32 %v1125, %v1131
        %v1134 = vld [vmem:[%s415] sm:$0xf]
        %v1135 = vunpack.c.l.bf16 %v1134
        %v1136 = vadd.f32 %v1133, %v1135
        %vm1137 = vcmask 261120
        %v1138 = vsel %vm1137, %v1136, 0.0
        %1139 = vadd.xlane.f32.xlu0 %v1138
        %v1140 = vpop.xlane.xlu0 %1139
        %v1141 = vrcp.pop 32.0
        %v1142 = vmul.f32 %v1140, %v1141
        %v1143 = vmul.f32 %v1136, %v1136
        %v1144 = vsel %vm1137, %v1143, 0.0
        %1145 = vadd.xlane.f32.xlu0 %v1144
        %v1146 = vpop.xlane.xlu0 %1145
        %v1147 = vmul.f32 %v1146, %v1141
        %v1148 = vmul.f32 %v1142, %v1142
        %v1149 = vsub.f32 %v1147, %v1148
        %v1150 = vsub.f32 %v1136, %v1142
        %v1151 = vadd.f32 %v1149, 1e-05
        %v1152 = vrsqrt.pop %v1151
        %v1153 = vmul.f32 %v1150, %v1152
        %v1154 = vld [vmem:[#allocation13] sm:$0x1]
        %v1156 = vlaneseq
        %v1157 = vshrl.u32 %v1156, 7
        %v1158 = vsub.s32 0, %v1157
        %v1159 = vrot.slane %v1154, %v1158
        %v1161 = vmul.f32 %v1153, %v1159
        %v1162 = vld [vmem:[#allocation14] sm:$0x1]
        %v1164 = vlaneseq
        %v1165 = vshrl.u32 %v1164, 7
        %v1166 = vsub.s32 0, %v1165
        %v1167 = vrot.slane %v1162, %v1166
        %v1169 = vadd.f32 %v1161, %v1167
        %v1170 = vpack.c.bf16 %v1169, %v1169
        %vm1171 = vcmask 257024
        %1172 = vst.msk [vmem:[%s477] sm:$0xf] %vm1171, %v1170
        %s1173 = sand.u32 %s229, 1
        %s1174 = scalar_lea.sflag [#allocation4], %s1173
        %s1175 = sand.u32 %s229, 1
        %s1176 = smul.addr %s1175, 4
        %s1177 = scalar_lea.vmem [#allocation16], %s1176
        // Predicated region
        $region85: #{_lambda_.35} parent=51 // pred_check
          %p1178 = pneg %p239
        $region86: #{_lambda_.35} parent=51 // pred_check_branch
          %1180 = sbr.rel (%p1178) target = $region88
        $region87: #{_lambda_.35} parent=51 // pred_region
          %s1182 = ssub.s32 64, 64
          %1183 = vsyncadd %s1174, %s1182
          %s1184 = smul.addr %s33, 64
          %s1185 = scalar_lea.hbm %s8, %s1184
          %s1187 = sshll.u32 %s1177, 4
          %s1188 = int_to_ptr.vmem [resolvable:$true] %s1187
          %1190 = dma.vmem_to_hbm [thread:$0]  %s1188, 64, %s1185, %s1174
        $region88: #{_lambda_.35} parent=51 // pred_fallthru
          _
      $region52: #{_lambda_.35} parent=5 // pred_fallthru
        _
      %p1191 = scmp.le.s32.totalorder 2, %s28
      // Predicated region
      $region89: #{_lambda_.35} parent=5 // pred_check
        %p1192 = pneg %p1191
      $region90: #{_lambda_.35} parent=5 // pred_check_branch
        %1194 = sbr.rel (%p1192) target = $region92
      $region91: #{_lambda_.35} parent=5 // pred_region
        %s1195 = ssub.s32 %s28, 2
        // Predicated region
        $region93: #{_lambda_.35} parent=91 // pred_check
          %p1196 = pneg %p245
        $region94: #{_lambda_.35} parent=91 // pred_check_branch
          %1198 = sbr.rel (%p1196) target = $region96
        $region95: #{_lambda_.35} parent=91 // pred_region
          %s1199 = sand.u32 %s230, 1
          %s1200 = scalar_lea.sflag [#allocation4], %s1199
          %s1201 = sand.u32 %s230, 1
          %s1202 = smul.addr %s1201, 4
          %s1203 = scalar_lea.vmem [#allocation16], %s1202
          %1204 = dma.done %s1200, 64
        $region96: #{_lambda_.35} parent=91 // pred_fallthru
          _
      $region92: #{_lambda_.35} parent=5 // pred_fallthru
        _
    $region6: #{_lambda_.35} parent=1 // loop_footer
      %s32 = sadd.s32 1, %s28
    $region7: #{_lambda_.35} parent=1 // loop_footer_branch
      %27 = sbr.rel target = $region3
    $region8: #{_lambda_.35} parent=1 // loop_exit
      _
    %1205 = vsyncpa [#allocation3], 1
    %s1206 = scalar_lea.sflag [#allocation3], 1
    %1207 = vsyncpa %s1206, 1
    %1208 = vsyncpa [#allocation6], 1
    %s1209 = scalar_lea.sflag [#allocation6], 1
    %1210 = vsyncpa %s1209, 1
    %1211 = vsyncpa [#allocation9], 1
    %s1212 = scalar_lea.sflag [#allocation9], 1
    %1213 = vsyncpa %s1212, 1
    %1214 = vsyncpa [#allocation12], 1
    %1215 = vsyncpa [#allocation15], 1
    %1216 = vsyncpa [#allocation4], 1
    %s1217 = scalar_lea.sflag [#allocation4], 1
    %1218 = vsyncpa %s1217, 1

</llo_original>
